<compile_context>
chip_gen: v7x
topology: tpu7x:2x2x1
jax: 0.10.0
libtpu: 0.0.40
codegen_flags: <defaults>
</compile_context>

<pallas_src>
import functools

import jax
import jax.numpy as jnp
from jax import lax
from jax.experimental import pallas as pl
from jax.experimental.pallas import tpu as pltpu

BN_EPS = 1e-5


def _double_conv_kernel(x_ref, m_ref, w1_ref, g1_ref, b1_ref,
                        w2_ref, g2_ref, b2_ref, out_ref, h1_ref,
                        *, T, G, Wp, inv_count, Cmid):
    # x_ref : (T + 2G, Cin)  bf16, flat zero-padded NHWC rows + guard rows
    # m_ref : (T, 1)         f32, 1.0 on interior (valid output) rows, 0.0 on halo
    # w*_ref: (9*C, Cnext)   bf16, 3x3 taps folded into the contraction dim
    # h1_ref: (T + 2G, Cmid) bf16 VMEM scratch for the conv1->conv2 intermediate
    offs = [(dy - 1) * Wp + (dx - 1) for dy in range(3) for dx in range(3)]
    maskf = m_ref[...]

    def im2col(ref):
        # 9 contiguous row-shifted slices of the flat padded buffer, joined on
        # lanes -> a single (T, 9*C) patch matrix for one MXU matmul.
        return jnp.concatenate(
            [ref[pl.ds(G + o, T), :].astype(jnp.float32) for o in offs],
            axis=-1).astype(jnp.bfloat16)

    def bn_relu(acc, g_ref, b_ref):
        # one-pass training-mode batch statistics over the interior rows only
        am = acc * maskf
        s = jnp.sum(am, axis=0, keepdims=True)           # sum
        q = jnp.sum(am * acc, axis=0, keepdims=True)     # sum of squares
        mu = s * inv_count
        var = jnp.maximum(q * inv_count - mu * mu, 0.0)
        scale = g_ref[...] * lax.rsqrt(var + BN_EPS)
        shift = b_ref[...] - mu * scale
        return jnp.maximum(acc * scale + shift, 0.0)

    # ---- conv1: single bf16 im2col matmul, f32 accumulate ----
    acc1 = jnp.dot(im2col(x_ref), w1_ref[...],
                   preferred_element_type=jnp.float32)
    h1 = bn_relu(acc1, g1_ref, b1_ref) * maskf   # zero halo rows => conv2 zero-pad

    # stage intermediate in VMEM (bf16); zero only the small guard bands
    zeros_g = jnp.zeros((G, Cmid), jnp.bfloat16)
    h1_ref[pl.ds(0, G), :] = zeros_g
    h1_ref[pl.ds(G + T, G), :] = zeros_g
    h1_ref[pl.ds(G, T), :] = h1.astype(jnp.bfloat16)

    # ---- conv2: single bf16 im2col matmul, f32 accumulate ----
    acc2 = jnp.dot(im2col(h1_ref), w2_ref[...],
                   preferred_element_type=jnp.float32)
    out_ref[...] = bn_relu(acc2, g2_ref, b2_ref)


def double_conv_pallas(x_nhwc, w1, g1, b1, w2, g2, b2):
    N, H, W, Cin = x_nhwc.shape
    Cmid = w1.shape[-1]
    Cout = w2.shape[-1]
    Hp, Wp = H + 2, W + 2
    T = N * Hp * Wp
    G = ((Wp + 1 + 7) // 8) * 8        # guard rows, sublane-aligned, >= Wp+1

    # spatial zero-pad -> flatten rows -> add guard rows; bf16 activations
    xp = jnp.pad(x_nhwc, ((0, 0), (1, 1), (1, 1), (0, 0)))
    xflat = jnp.pad(xp.reshape(T, Cin), ((G, G), (0, 0))).astype(jnp.bfloat16)

    # interior-row mask (1 for valid output pixels, 0 for halo rows)
    r = jnp.arange(T, dtype=jnp.int32)
    rr = r % (Hp * Wp)
    ii = rr // Wp
    jj = rr % Wp
    mask = ((ii >= 1) & (ii <= H) & (jj >= 1) & (jj <= W))
    mask = mask.astype(jnp.float32).reshape(T, 1)

    # fold the 3x3 taps into the contraction dim: (3,3,Ci,Co) -> (9*Ci, Co)
    w1f = w1.reshape(9 * Cin, Cmid).astype(jnp.bfloat16)
    w2f = w2.reshape(9 * Cmid, Cout).astype(jnp.bfloat16)

    rows = T + 2 * G
    need = (rows * Cin * 2 + T * 4 + w1f.size * 2 + w2f.size * 2
            + rows * Cmid * 2 + T * Cout * 4
            + T * (9 * Cin + 9 * Cmid + Cmid + Cout) * 4)
    vmem_limit = int(min(max(4 * need, 8 * 2**20), 64 * 2**20))

    vmem = pl.BlockSpec(memory_space=pltpu.MemorySpace.VMEM)
    kernel = functools.partial(
        _double_conv_kernel, T=T, G=G, Wp=Wp,
        inv_count=1.0 / float(N * H * W), Cmid=Cmid)

    out_flat = pl.pallas_call(
        kernel,
        out_shape=jax.ShapeDtypeStruct((T, Cout), jnp.float32),
        in_specs=[vmem] * 8,
        out_specs=vmem,
        scratch_shapes=[pltpu.VMEM((rows, Cmid), jnp.bfloat16)],
        compiler_params=pltpu.CompilerParams(vmem_limit_bytes=vmem_limit),
    )(xflat, mask, w1f, g1.reshape(1, -1), b1.reshape(1, -1),
      w2f, g2.reshape(1, -1), b2.reshape(1, -1))

    # drop halo rows, back to NHWC
    return out_flat.reshape(N, Hp, Wp, Cout)[:, 1:H + 1, 1:W + 1, :]


def double_conv_forward(params, x_nchw):
    x = jnp.transpose(x_nchw, (0, 2, 3, 1))          # NCHW -> NHWC
    y = double_conv_pallas(x, params['w1'], params['g1'], params['b1'],
                           params['w2'], params['g2'], params['b2'])
    return jnp.transpose(y, (0, 3, 1, 2))            # NHWC -> NCHW


# ---------------- deterministic parameter init (matches __init__) -----------

def init_double_conv_params(key, in_channels, out_channels, mid_channels=None):
    if not mid_channels:
        mid_channels = out_channels
    k1, k2 = jax.random.split(key)

    def kaiming(k, cin, cout):
        fan_in = cin * 3 * 3
        std = (2.0 / fan_in) ** 0.5      # kaiming_normal_, nonlinearity='relu'
        return jax.random.normal(k, (3, 3, cin, cout), jnp.float32) * std  # HWIO

    return dict(
        w1=kaiming(k1, in_channels, mid_channels),
        g1=jnp.ones((mid_channels,), jnp.float32),
        b1=jnp.zeros((mid_channels,), jnp.float32),
        w2=kaiming(k2, mid_channels, out_channels),
        g2=jnp.ones((out_channels,), jnp.float32),
        b2=jnp.zeros((out_channels,), jnp.float32),
    )


# ---------------- plain-JAX reference for a correctness sanity check --------

def double_conv_ref(x_nhwc, w1, g1, b1, w2, g2, b2):
    def conv(x, w):
        # same bf16 input rounding as the kernel, exact f32 accumulation
        return lax.conv_general_dilated(
            x.astype(jnp.bfloat16).astype(jnp.float32),
            w.astype(jnp.bfloat16).astype(jnp.float32),
            (1, 1), 'SAME',
            dimension_numbers=('NHWC', 'HWIO', 'NHWC'),
            precision=lax.Precision.HIGHEST)

    def bn_relu(h, g, b):
        mu = jnp.mean(h, axis=(0, 1, 2), keepdims=True)
        var = jnp.mean((h - mu) ** 2, axis=(0, 1, 2), keepdims=True)
        return jnp.maximum((h - mu) * lax.rsqrt(var + BN_EPS) * g + b, 0.0)

    h = bn_relu(conv(x_nhwc, w1), g1, b1)
    h = h.astype(jnp.bfloat16).astype(jnp.float32)   # match kernel's bf16 staging
    return bn_relu(conv(h, w2), g2, b2)


if __name__ == "__main__":
    key = jax.random.PRNGKey(0)
    kp, kx = jax.random.split(key)

    in_channels, out_channels = 4, 8
    params = init_double_conv_params(kp, in_channels, out_channels)

    x = jax.random.normal(kx, (2, in_channels, 16, 16), jnp.float32)

    y = double_conv_forward(params, x)
    y = jax.block_until_ready(y)
    assert y.shape == (2, out_channels, 16, 16), y.shape

    # sanity check against a pure-JAX reference of the same forward pass
    x_nhwc = jnp.transpose(x, (0, 2, 3, 1))
    ref = double_conv_ref(x_nhwc, params['w1'], params['g1'], params['b1'],
                          params['w2'], params['g2'], params['b2'])
    ref = jnp.transpose(ref, (0, 3, 1, 2))
    max_err = float(jnp.max(jnp.abs(y - ref)))
    assert max_err < 5e-3, max_err

    print("KERNEL_OK")
</pallas_src>

<mosaic_0001>
module attributes {stable_mosaic.version = 11 : i64} {
  func.func @_double_conv_kernel(%arg0: memref<696x4xbf16, #tpu.memory_space<vmem>>, %arg1: memref<648x1xf32, #tpu.memory_space<vmem>>, %arg2: memref<36x8xbf16, #tpu.memory_space<vmem>>, %arg3: memref<1x8xf32, #tpu.memory_space<vmem>>, %arg4: memref<1x8xf32, #tpu.memory_space<vmem>>, %arg5: memref<72x8xbf16, #tpu.memory_space<vmem>>, %arg6: memref<1x8xf32, #tpu.memory_space<vmem>>, %arg7: memref<1x8xf32, #tpu.memory_space<vmem>>, %arg8: memref<648x8xf32, #tpu.memory_space<vmem>>, %arg9: memref<696x8xbf16, #tpu.memory_space<vmem>>) attributes {dimension_semantics = [], scalar_prefetch = 0 : i64, scratch_operands = 1 : i64, tpu.core_type = #tpu.core_type<tc>} {
    %c0 = arith.constant 0 : index
    %c0_0 = arith.constant 0 : index
    %0 = vector.load %arg1[%c0, %c0_0] : memref<648x1xf32, #tpu.memory_space<vmem>>, vector<648x1xf32>
    %c5 = arith.constant 5 : index
    %c0_1 = arith.constant 0 : index
    %1 = vector.load %arg0[%c5, %c0_1] : memref<696x4xbf16, #tpu.memory_space<vmem>>, vector<648x4xbf16>
    %2 = arith.extf %1 : vector<648x4xbf16> to vector<648x4xf32>
    %c6 = arith.constant 6 : index
    %c0_2 = arith.constant 0 : index
    %3 = vector.load %arg0[%c6, %c0_2] : memref<696x4xbf16, #tpu.memory_space<vmem>>, vector<648x4xbf16>
    %4 = arith.extf %3 : vector<648x4xbf16> to vector<648x4xf32>
    %c7 = arith.constant 7 : index
    %c0_3 = arith.constant 0 : index
    %5 = vector.load %arg0[%c7, %c0_3] : memref<696x4xbf16, #tpu.memory_space<vmem>>, vector<648x4xbf16>
    %6 = arith.extf %5 : vector<648x4xbf16> to vector<648x4xf32>
    %c23 = arith.constant 23 : index
    %c0_4 = arith.constant 0 : index
    %7 = vector.load %arg0[%c23, %c0_4] : memref<696x4xbf16, #tpu.memory_space<vmem>>, vector<648x4xbf16>
    %8 = arith.extf %7 : vector<648x4xbf16> to vector<648x4xf32>
    %c24 = arith.constant 24 : index
    %c0_5 = arith.constant 0 : index
    %9 = vector.load %arg0[%c24, %c0_5] : memref<696x4xbf16, #tpu.memory_space<vmem>>, vector<648x4xbf16>
    %10 = arith.extf %9 : vector<648x4xbf16> to vector<648x4xf32>
    %c25 = arith.constant 25 : index
    %c0_6 = arith.constant 0 : index
    %11 = vector.load %arg0[%c25, %c0_6] : memref<696x4xbf16, #tpu.memory_space<vmem>>, vector<648x4xbf16>
    %12 = arith.extf %11 : vector<648x4xbf16> to vector<648x4xf32>
    %c41 = arith.constant 41 : index
    %c0_7 = arith.constant 0 : index
    %13 = vector.load %arg0[%c41, %c0_7] : memref<696x4xbf16, #tpu.memory_space<vmem>>, vector<648x4xbf16>
    %14 = arith.extf %13 : vector<648x4xbf16> to vector<648x4xf32>
    %c42 = arith.constant 42 : index
    %c0_8 = arith.constant 0 : index
    %15 = vector.load %arg0[%c42, %c0_8] : memref<696x4xbf16, #tpu.memory_space<vmem>>, vector<648x4xbf16>
    %16 = arith.extf %15 : vector<648x4xbf16> to vector<648x4xf32>
    %c43 = arith.constant 43 : index
    %c0_9 = arith.constant 0 : index
    %17 = vector.load %arg0[%c43, %c0_9] : memref<696x4xbf16, #tpu.memory_space<vmem>>, vector<648x4xbf16>
    %18 = arith.extf %17 : vector<648x4xbf16> to vector<648x4xf32>
    %19 = tpu.concatenate %2, %4, %6, %8, %10, %12, %14, %16, %18 in 1 : vector<648x4xf32>, vector<648x4xf32>, vector<648x4xf32>, vector<648x4xf32>, vector<648x4xf32>, vector<648x4xf32>, vector<648x4xf32>, vector<648x4xf32>, vector<648x4xf32> -> vector<648x36xf32>
    %20 = arith.truncf %19 : vector<648x36xf32> to vector<648x36xbf16>
    %c0_10 = arith.constant 0 : index
    %c0_11 = arith.constant 0 : index
    %21 = vector.load %arg2[%c0_10, %c0_11] : memref<36x8xbf16, #tpu.memory_space<vmem>>, vector<36x8xbf16>
    %cst = arith.constant dense<0.000000e+00> : vector<648x8xf32>
    %22 = tpu.matmul %20, %21, %cst {dimension_numbers = #tpu.dot_dimension_numbers<[1], [0], [0], [1], [0, 0, 1, 1], [], []>} : vector<648x36xbf16>, vector<36x8xbf16>, vector<648x8xf32> -> vector<648x8xf32>
    %23 = vector.broadcast %0 : vector<648x1xf32> to vector<648x8xf32>
    %24 = arith.mulf %22, %23 : vector<648x8xf32>
    %cst_12 = arith.constant dense<0.000000e+00> : vector<8xf32>
    %25 = vector.multi_reduction <add>, %24, %cst_12 [0] : vector<648x8xf32> to vector<8xf32>
    %26 = vector.shape_cast %25 : vector<8xf32> to vector<1x8xf32>
    %27 = arith.mulf %24, %22 : vector<648x8xf32>
    %cst_13 = arith.constant dense<0.000000e+00> : vector<8xf32>
    %28 = vector.multi_reduction <add>, %27, %cst_13 [0] : vector<648x8xf32> to vector<8xf32>
    %29 = vector.shape_cast %28 : vector<8xf32> to vector<1x8xf32>
    %cst_14 = arith.constant 0.001953125 : f32
    %30 = vector.broadcast %cst_14 : f32 to vector<1x8xf32>
    %31 = arith.mulf %26, %30 : vector<1x8xf32>
    %cst_15 = arith.constant 0.001953125 : f32
    %32 = vector.broadcast %cst_15 : f32 to vector<1x8xf32>
    %33 = arith.mulf %29, %32 : vector<1x8xf32>
    %34 = arith.mulf %31, %31 : vector<1x8xf32>
    %35 = arith.subf %33, %34 : vector<1x8xf32>
    %cst_16 = arith.constant 0.000000e+00 : f32
    %36 = vector.broadcast %cst_16 : f32 to vector<1x8xf32>
    %37 = arith.maximumf %35, %36 : vector<1x8xf32>
    %c0_17 = arith.constant 0 : index
    %c0_18 = arith.constant 0 : index
    %38 = vector.load %arg3[%c0_17, %c0_18] : memref<1x8xf32, #tpu.memory_space<vmem>>, vector<1x8xf32>
    %cst_19 = arith.constant 9.99999974E-6 : f32
    %39 = vector.broadcast %cst_19 : f32 to vector<1x8xf32>
    %40 = arith.addf %37, %39 : vector<1x8xf32>
    %41 = math.rsqrt %40 : vector<1x8xf32>
    %42 = arith.mulf %38, %41 : vector<1x8xf32>
    %c0_20 = arith.constant 0 : index
    %c0_21 = arith.constant 0 : index
    %43 = vector.load %arg4[%c0_20, %c0_21] : memref<1x8xf32, #tpu.memory_space<vmem>>, vector<1x8xf32>
    %44 = arith.mulf %31, %42 : vector<1x8xf32>
    %45 = arith.subf %43, %44 : vector<1x8xf32>
    %46 = vector.broadcast %42 : vector<1x8xf32> to vector<648x8xf32>
    %47 = arith.mulf %22, %46 : vector<648x8xf32>
    %48 = vector.broadcast %45 : vector<1x8xf32> to vector<648x8xf32>
    %49 = arith.addf %47, %48 : vector<648x8xf32>
    %cst_22 = arith.constant 0.000000e+00 : f32
    %50 = vector.broadcast %cst_22 : f32 to vector<648x8xf32>
    %51 = arith.maximumf %49, %50 : vector<648x8xf32>
    %52 = vector.broadcast %0 : vector<648x1xf32> to vector<648x8xf32>
    %53 = arith.mulf %51, %52 : vector<648x8xf32>
    %cst_23 = arith.constant 0.000000e+00 : bf16
    %54 = vector.broadcast %cst_23 : bf16 to vector<24x8xbf16>
    %c0_24 = arith.constant 0 : index
    %c0_25 = arith.constant 0 : index
    %55 = vector.load %arg9[%c0_24, %c0_25] : memref<696x8xbf16, #tpu.memory_space<vmem>>, vector<24x8xbf16>
    tpu.vector_store %arg9[%c0_24, %c0_25], %54 {strides = array<i32>} : memref<696x8xbf16, #tpu.memory_space<vmem>>, vector<24x8xbf16>,
    %c672 = arith.constant 672 : index
    %c0_26 = arith.constant 0 : index
    %56 = vector.load %arg9[%c672, %c0_26] : memref<696x8xbf16, #tpu.memory_space<vmem>>, vector<24x8xbf16>
    tpu.vector_store %arg9[%c672, %c0_26], %54 {strides = array<i32>} : memref<696x8xbf16, #tpu.memory_space<vmem>>, vector<24x8xbf16>,
    %57 = arith.truncf %53 : vector<648x8xf32> to vector<648x8xbf16>
    %c24_27 = arith.constant 24 : index
    %c0_28 = arith.constant 0 : index
    %58 = vector.load %arg9[%c24_27, %c0_28] : memref<696x8xbf16, #tpu.memory_space<vmem>>, vector<648x8xbf16>
    tpu.vector_store %arg9[%c24_27, %c0_28], %57 {strides = array<i32>} : memref<696x8xbf16, #tpu.memory_space<vmem>>, vector<648x8xbf16>,
    %c5_29 = arith.constant 5 : index
    %c0_30 = arith.constant 0 : index
    %59 = vector.load %arg9[%c5_29, %c0_30] : memref<696x8xbf16, #tpu.memory_space<vmem>>, vector<648x8xbf16>
    %60 = arith.extf %59 : vector<648x8xbf16> to vector<648x8xf32>
    %c6_31 = arith.constant 6 : index
    %c0_32 = arith.constant 0 : index
    %61 = vector.load %arg9[%c6_31, %c0_32] : memref<696x8xbf16, #tpu.memory_space<vmem>>, vector<648x8xbf16>
    %62 = arith.extf %61 : vector<648x8xbf16> to vector<648x8xf32>
    %c7_33 = arith.constant 7 : index
    %c0_34 = arith.constant 0 : index
    %63 = vector.load %arg9[%c7_33, %c0_34] : memref<696x8xbf16, #tpu.memory_space<vmem>>, vector<648x8xbf16>
    %64 = arith.extf %63 : vector<648x8xbf16> to vector<648x8xf32>
    %c23_35 = arith.constant 23 : index
    %c0_36 = arith.constant 0 : index
    %65 = vector.load %arg9[%c23_35, %c0_36] : memref<696x8xbf16, #tpu.memory_space<vmem>>, vector<648x8xbf16>
    %66 = arith.extf %65 : vector<648x8xbf16> to vector<648x8xf32>
    %c24_37 = arith.constant 24 : index
    %c0_38 = arith.constant 0 : index
    %67 = vector.load %arg9[%c24_37, %c0_38] : memref<696x8xbf16, #tpu.memory_space<vmem>>, vector<648x8xbf16>
    %68 = arith.extf %67 : vector<648x8xbf16> to vector<648x8xf32>
    %c25_39 = arith.constant 25 : index
    %c0_40 = arith.constant 0 : index
    %69 = vector.load %arg9[%c25_39, %c0_40] : memref<696x8xbf16, #tpu.memory_space<vmem>>, vector<648x8xbf16>
    %70 = arith.extf %69 : vector<648x8xbf16> to vector<648x8xf32>
    %c41_41 = arith.constant 41 : index
    %c0_42 = arith.constant 0 : index
    %71 = vector.load %arg9[%c41_41, %c0_42] : memref<696x8xbf16, #tpu.memory_space<vmem>>, vector<648x8xbf16>
    %72 = arith.extf %71 : vector<648x8xbf16> to vector<648x8xf32>
    %c42_43 = arith.constant 42 : index
    %c0_44 = arith.constant 0 : index
    %73 = vector.load %arg9[%c42_43, %c0_44] : memref<696x8xbf16, #tpu.memory_space<vmem>>, vector<648x8xbf16>
    %74 = arith.extf %73 : vector<648x8xbf16> to vector<648x8xf32>
    %c43_45 = arith.constant 43 : index
    %c0_46 = arith.constant 0 : index
    %75 = vector.load %arg9[%c43_45, %c0_46] : memref<696x8xbf16, #tpu.memory_space<vmem>>, vector<648x8xbf16>
    %76 = arith.extf %75 : vector<648x8xbf16> to vector<648x8xf32>
    %77 = tpu.concatenate %60, %62, %64, %66, %68, %70, %72, %74, %76 in 1 : vector<648x8xf32>, vector<648x8xf32>, vector<648x8xf32>, vector<648x8xf32>, vector<648x8xf32>, vector<648x8xf32>, vector<648x8xf32>, vector<648x8xf32>, vector<648x8xf32> -> vector<648x72xf32>
    %78 = arith.truncf %77 : vector<648x72xf32> to vector<648x72xbf16>
    %c0_47 = arith.constant 0 : index
    %c0_48 = arith.constant 0 : index
    %79 = vector.load %arg5[%c0_47, %c0_48] : memref<72x8xbf16, #tpu.memory_space<vmem>>, vector<72x8xbf16>
    %cst_49 = arith.constant dense<0.000000e+00> : vector<648x8xf32>
    %80 = tpu.matmul %78, %79, %cst_49 {dimension_numbers = #tpu.dot_dimension_numbers<[1], [0], [0], [1], [0, 0, 1, 1], [], []>} : vector<648x72xbf16>, vector<72x8xbf16>, vector<648x8xf32> -> vector<648x8xf32>
    %81 = vector.broadcast %0 : vector<648x1xf32> to vector<648x8xf32>
    %82 = arith.mulf %80, %81 : vector<648x8xf32>
    %cst_50 = arith.constant dense<0.000000e+00> : vector<8xf32>
    %83 = vector.multi_reduction <add>, %82, %cst_50 [0] : vector<648x8xf32> to vector<8xf32>
    %84 = vector.shape_cast %83 : vector<8xf32> to vector<1x8xf32>
    %85 = arith.mulf %82, %80 : vector<648x8xf32>
    %cst_51 = arith.constant dense<0.000000e+00> : vector<8xf32>
    %86 = vector.multi_reduction <add>, %85, %cst_51 [0] : vector<648x8xf32> to vector<8xf32>
    %87 = vector.shape_cast %86 : vector<8xf32> to vector<1x8xf32>
    %cst_52 = arith.constant 0.001953125 : f32
    %88 = vector.broadcast %cst_52 : f32 to vector<1x8xf32>
    %89 = arith.mulf %84, %88 : vector<1x8xf32>
    %cst_53 = arith.constant 0.001953125 : f32
    %90 = vector.broadcast %cst_53 : f32 to vector<1x8xf32>
    %91 = arith.mulf %87, %90 : vector<1x8xf32>
    %92 = arith.mulf %89, %89 : vector<1x8xf32>
    %93 = arith.subf %91, %92 : vector<1x8xf32>
    %cst_54 = arith.constant 0.000000e+00 : f32
    %94 = vector.broadcast %cst_54 : f32 to vector<1x8xf32>
    %95 = arith.maximumf %93, %94 : vector<1x8xf32>
    %c0_55 = arith.constant 0 : index
    %c0_56 = arith.constant 0 : index
    %96 = vector.load %arg6[%c0_55, %c0_56] : memref<1x8xf32, #tpu.memory_space<vmem>>, vector<1x8xf32>
    %cst_57 = arith.constant 9.99999974E-6 : f32
    %97 = vector.broadcast %cst_57 : f32 to vector<1x8xf32>
    %98 = arith.addf %95, %97 : vector<1x8xf32>
    %99 = math.rsqrt %98 : vector<1x8xf32>
    %100 = arith.mulf %96, %99 : vector<1x8xf32>
    %c0_58 = arith.constant 0 : index
    %c0_59 = arith.constant 0 : index
    %101 = vector.load %arg7[%c0_58, %c0_59] : memref<1x8xf32, #tpu.memory_space<vmem>>, vector<1x8xf32>
    %102 = arith.mulf %89, %100 : vector<1x8xf32>
    %103 = arith.subf %101, %102 : vector<1x8xf32>
    %104 = vector.broadcast %100 : vector<1x8xf32> to vector<648x8xf32>
    %105 = arith.mulf %80, %104 : vector<648x8xf32>
    %106 = vector.broadcast %103 : vector<1x8xf32> to vector<648x8xf32>
    %107 = arith.addf %105, %106 : vector<648x8xf32>
    %cst_60 = arith.constant 0.000000e+00 : f32
    %108 = vector.broadcast %cst_60 : f32 to vector<648x8xf32>
    %109 = arith.maximumf %107, %108 : vector<648x8xf32>
    %c0_61 = arith.constant 0 : index
    %c0_62 = arith.constant 0 : index
    %110 = vector.load %arg8[%c0_61, %c0_62] : memref<648x8xf32, #tpu.memory_space<vmem>>, vector<648x8xf32>
    tpu.vector_store %arg8[%c0_61, %c0_62], %109 {strides = array<i32>} : memref<648x8xf32, #tpu.memory_space<vmem>>, vector<648x8xf32>,
    return
  }
}

</mosaic_0001>

<llo_original>
// kernel: tpu_custom_call.1
$region0: #{tpu_custom_call.1}
  #allocation0 [shape = 'u32[]', space=smem, size = 0x4, offset = 0x4, fixed_abs, tag = 'smem constant byte address 0x4 - core index']
  #allocation1 [shape = 'u32[144,128]{1,0:T(1,128)}', space=vmem, size = 0x12000, scoped, tag = 'internal scratch']
  #allocation2 [shape = 'bf16[696,8]{1,0:T(8,128)(2,1)}', space=vmem, size = 0x2b800, scoped, tag = 'scratch operand']
  %s0 = inlined_call_operand.vmem [shape: bf16[696,4], index: 0, kind: input, shape index: {}]
  %s1 = inlined_call_operand.vmem [shape: f32[648,1], index: 1, kind: input, shape index: {}]
  %s2 = inlined_call_operand.vmem [shape: bf16[36,8], index: 2, kind: input, shape index: {}]
  %s3 = inlined_call_operand.vmem [shape: f32[1,8], index: 3, kind: input, shape index: {}]
  %s4 = inlined_call_operand.vmem [shape: f32[1,8], index: 4, kind: input, shape index: {}]
  %s5 = inlined_call_operand.vmem [shape: bf16[72,8], index: 5, kind: input, shape index: {}]
  %s6 = inlined_call_operand.vmem [shape: f32[1,8], index: 6, kind: input, shape index: {}]
  %s7 = inlined_call_operand.vmem [shape: f32[1,8], index: 7, kind: input, shape index: {}]
  %s8 = inlined_call_operand.vmem [shape: f32[648,8], index: 8, kind: output, shape index: {}]
  %s9 = sld [smem:[#allocation0]]
  $region42: #{tpu_custom_call.1} parent=0
    _
  %s11 = ssub.s32 1, %s9
  %s12 = scalar_select 0, %s11, %s9
  // Predicated region
  $region2: #{tpu_custom_call.1} parent=0 // pred_check
    _
  $region3: #{tpu_custom_call.1} parent=0 // pred_check_branch
    %14 = sbr.rel (0) target = $region5
  $region4: #{tpu_custom_call.1} parent=0 // pred_region
    _
  $region5: #{tpu_custom_call.1} parent=0 // pred_fallthru
    _
  // Predicated region
  $region6: #{tpu_custom_call.1} parent=0 // pred_check
    _
  $region7: #{tpu_custom_call.1} parent=0 // pred_check_branch
    %16 = sbr.rel (0) target = $region9
  $region8: #{tpu_custom_call.1} parent=0 // pred_region
    _
  $region9: #{tpu_custom_call.1} parent=0 // pred_fallthru
    _
  // Predicated region
  $region10: #{tpu_custom_call.1} parent=0 // pred_check
    _
  $region11: #{tpu_custom_call.1} parent=0 // pred_check_branch
    %18 = sbr.rel (0) target = $region13
  $region12: #{tpu_custom_call.1} parent=0 // pred_region
    _
  $region13: #{tpu_custom_call.1} parent=0 // pred_fallthru
    _
  // Predicated region
  $region14: #{tpu_custom_call.1} parent=0 // pred_check
    _
  $region15: #{tpu_custom_call.1} parent=0 // pred_check_branch
    %20 = sbr.rel (0) target = $region17
  $region16: #{tpu_custom_call.1} parent=0 // pred_region
    _
  $region17: #{tpu_custom_call.1} parent=0 // pred_fallthru
    _
  // Predicated region
  $region18: #{tpu_custom_call.1} parent=0 // pred_check
    _
  $region19: #{tpu_custom_call.1} parent=0 // pred_check_branch
    %22 = sbr.rel (0) target = $region21
  $region20: #{tpu_custom_call.1} parent=0 // pred_region
    _
  $region21: #{tpu_custom_call.1} parent=0 // pred_fallthru
    _
  // Predicated region
  $region22: #{tpu_custom_call.1} parent=0 // pred_check
    _
  $region23: #{tpu_custom_call.1} parent=0 // pred_check_branch
    %24 = sbr.rel (0) target = $region25
  $region24: #{tpu_custom_call.1} parent=0 // pred_region
    _
  $region25: #{tpu_custom_call.1} parent=0 // pred_fallthru
    _
  // Predicated region
  $region26: #{tpu_custom_call.1} parent=0 // pred_check
    _
  $region27: #{tpu_custom_call.1} parent=0 // pred_check_branch
    %26 = sbr.rel (0) target = $region29
  $region28: #{tpu_custom_call.1} parent=0 // pred_region
    _
  $region29: #{tpu_custom_call.1} parent=0 // pred_fallthru
    _
  // Predicated region
  $region30: #{tpu_custom_call.1} parent=0 // pred_check
    _
  $region31: #{tpu_custom_call.1} parent=0 // pred_check_branch
    %28 = sbr.rel (0) target = $region33
  $region32: #{tpu_custom_call.1} parent=0 // pred_region
    _
  $region33: #{tpu_custom_call.1} parent=0 // pred_fallthru
    _
  %v30 = vld [vmem:[%s1] sm:$0xff]
  %v31 = vld [vmem:[%s1 + $0x8] sm:$0xff]
  %v32 = vld [vmem:[%s1 + $0x10] sm:$0xff]
  %v33 = vld [vmem:[%s1 + $0x18] sm:$0xff]
  %v34 = vld [vmem:[%s1 + $0x20] sm:$0xff]
  %v35 = vld [vmem:[%s1 + $0x28] sm:$0xff]
  %v36 = vld [vmem:[%s1 + $0x30] sm:$0xff]
  %v37 = vld [vmem:[%s1 + $0x38] sm:$0xff]
  %v38 = vld [vmem:[%s1 + $0x40] sm:$0xff]
  %v39 = vld [vmem:[%s1 + $0x48] sm:$0xff]
  %v40 = vld [vmem:[%s1 + $0x50] sm:$0xff]
  %v41 = vld [vmem:[%s1 + $0x58] sm:$0xff]
  %v42 = vld [vmem:[%s1 + $0x60] sm:$0xff]
  %v43 = vld [vmem:[%s1 + $0x68] sm:$0xff]
  %v44 = vld [vmem:[%s1 + $0x70] sm:$0xff]
  %v45 = vld [vmem:[%s1 + $0x78] sm:$0xff]
  %v46 = vld [vmem:[%s1 + $0x80] sm:$0xff]
  %v47 = vld [vmem:[%s1 + $0x88] sm:$0xff]
  %v48 = vld [vmem:[%s1 + $0x90] sm:$0xff]
  %v49 = vld [vmem:[%s1 + $0x98] sm:$0xff]
  %v50 = vld [vmem:[%s1 + $0xa0] sm:$0xff]
  %v51 = vld [vmem:[%s1 + $0xa8] sm:$0xff]
  %v52 = vld [vmem:[%s1 + $0xb0] sm:$0xff]
  %v53 = vld [vmem:[%s1 + $0xb8] sm:$0xff]
  %v54 = vld [vmem:[%s1 + $0xc0] sm:$0xff]
  %v55 = vld [vmem:[%s1 + $0xc8] sm:$0xff]
  %v56 = vld [vmem:[%s1 + $0xd0] sm:$0xff]
  %v57 = vld [vmem:[%s1 + $0xd8] sm:$0xff]
  %v58 = vld [vmem:[%s1 + $0xe0] sm:$0xff]
  %v59 = vld [vmem:[%s1 + $0xe8] sm:$0xff]
  %v60 = vld [vmem:[%s1 + $0xf0] sm:$0xff]
  %v61 = vld [vmem:[%s1 + $0xf8] sm:$0xff]
  %v62 = vld [vmem:[%s1 + $0x100] sm:$0xff]
  %v63 = vld [vmem:[%s1 + $0x108] sm:$0xff]
  %v64 = vld [vmem:[%s1 + $0x110] sm:$0xff]
  %v65 = vld [vmem:[%s1 + $0x118] sm:$0xff]
  %v66 = vld [vmem:[%s1 + $0x120] sm:$0xff]
  %v67 = vld [vmem:[%s1 + $0x128] sm:$0xff]
  %v68 = vld [vmem:[%s1 + $0x130] sm:$0xff]
  %v69 = vld [vmem:[%s1 + $0x138] sm:$0xff]
  %v70 = vld [vmem:[%s1 + $0x140] sm:$0xff]
  %v71 = vld [vmem:[%s1 + $0x148] sm:$0xff]
  %v72 = vld [vmem:[%s1 + $0x150] sm:$0xff]
  %v73 = vld [vmem:[%s1 + $0x158] sm:$0xff]
  %v74 = vld [vmem:[%s1 + $0x160] sm:$0xff]
  %v75 = vld [vmem:[%s1 + $0x168] sm:$0xff]
  %v76 = vld [vmem:[%s1 + $0x170] sm:$0xff]
  %v77 = vld [vmem:[%s1 + $0x178] sm:$0xff]
  %v78 = vld [vmem:[%s1 + $0x180] sm:$0xff]
  %v79 = vld [vmem:[%s1 + $0x188] sm:$0xff]
  %v80 = vld [vmem:[%s1 + $0x190] sm:$0xff]
  %v81 = vld [vmem:[%s1 + $0x198] sm:$0xff]
  %v82 = vld [vmem:[%s1 + $0x1a0] sm:$0xff]
  %v83 = vld [vmem:[%s1 + $0x1a8] sm:$0xff]
  %v84 = vld [vmem:[%s1 + $0x1b0] sm:$0xff]
  %v85 = vld [vmem:[%s1 + $0x1b8] sm:$0xff]
  %v86 = vld [vmem:[%s1 + $0x1c0] sm:$0xff]
  %v87 = vld [vmem:[%s1 + $0x1c8] sm:$0xff]
  %v88 = vld [vmem:[%s1 + $0x1d0] sm:$0xff]
  %v89 = vld [vmem:[%s1 + $0x1d8] sm:$0xff]
  %v90 = vld [vmem:[%s1 + $0x1e0] sm:$0xff]
  %v91 = vld [vmem:[%s1 + $0x1e8] sm:$0xff]
  %v92 = vld [vmem:[%s1 + $0x1f0] sm:$0xff]
  %v93 = vld [vmem:[%s1 + $0x1f8] sm:$0xff]
  %v94 = vld [vmem:[%s1 + $0x200] sm:$0xff]
  %v95 = vld [vmem:[%s1 + $0x208] sm:$0xff]
  %v96 = vld [vmem:[%s1 + $0x210] sm:$0xff]
  %v97 = vld [vmem:[%s1 + $0x218] sm:$0xff]
  %v98 = vld [vmem:[%s1 + $0x220] sm:$0xff]
  %v99 = vld [vmem:[%s1 + $0x228] sm:$0xff]
  %v100 = vld [vmem:[%s1 + $0x230] sm:$0xff]
  %v101 = vld [vmem:[%s1 + $0x238] sm:$0xff]
  %v102 = vld [vmem:[%s1 + $0x240] sm:$0xff]
  %v103 = vld [vmem:[%s1 + $0x248] sm:$0xff]
  %v104 = vld [vmem:[%s1 + $0x250] sm:$0xff]
  %v105 = vld [vmem:[%s1 + $0x258] sm:$0xff]
  %v106 = vld [vmem:[%s1 + $0x260] sm:$0xff]
  %v107 = vld [vmem:[%s1 + $0x268] sm:$0xff]
  %v108 = vld [vmem:[%s1 + $0x270] sm:$0xff]
  %v109 = vld [vmem:[%s1 + $0x278] sm:$0xff]
  %v110 = vld [vmem:[%s1 + $0x280] sm:$0xff]
  %v111 = vld [vmem:[%s0] sm:$0xc]
  %v112 = vld [vmem:[%s0 + $0x4] sm:$0xf]
  %v113 = vld [vmem:[%s0 + $0x8] sm:$0xf]
  %v114 = vld [vmem:[%s0 + $0xc] sm:$0xf]
  %v115 = vld [vmem:[%s0 + $0x10] sm:$0xf]
  %v116 = vld [vmem:[%s0 + $0x14] sm:$0xf]
  %v117 = vld [vmem:[%s0 + $0x18] sm:$0xf]
  %v118 = vld [vmem:[%s0 + $0x1c] sm:$0xf]
  %v119 = vld [vmem:[%s0 + $0x20] sm:$0xf]
  %v120 = vld [vmem:[%s0 + $0x24] sm:$0xf]
  %v121 = vld [vmem:[%s0 + $0x28] sm:$0xf]
  %v122 = vld [vmem:[%s0 + $0x2c] sm:$0xf]
  %v123 = vld [vmem:[%s0 + $0x30] sm:$0xf]
  %v124 = vld [vmem:[%s0 + $0x34] sm:$0xf]
  %v125 = vld [vmem:[%s0 + $0x38] sm:$0xf]
  %v126 = vld [vmem:[%s0 + $0x3c] sm:$0xf]
  %v127 = vld [vmem:[%s0 + $0x40] sm:$0xf]
  %v128 = vld [vmem:[%s0 + $0x44] sm:$0xf]
  %v129 = vld [vmem:[%s0 + $0x48] sm:$0xf]
  %v130 = vld [vmem:[%s0 + $0x4c] sm:$0xf]
  %v131 = vld [vmem:[%s0 + $0x50] sm:$0xf]
  %v132 = vld [vmem:[%s0 + $0x54] sm:$0xf]
  %v133 = vld [vmem:[%s0 + $0x58] sm:$0xf]
  %v134 = vld [vmem:[%s0 + $0x5c] sm:$0xf]
  %v135 = vld [vmem:[%s0 + $0x60] sm:$0xf]
  %v136 = vld [vmem:[%s0 + $0x64] sm:$0xf]
  %v137 = vld [vmem:[%s0 + $0x68] sm:$0xf]
  %v138 = vld [vmem:[%s0 + $0x6c] sm:$0xf]
  %v139 = vld [vmem:[%s0 + $0x70] sm:$0xf]
  %v140 = vld [vmem:[%s0 + $0x74] sm:$0xf]
  %v141 = vld [vmem:[%s0 + $0x78] sm:$0xf]
  %v142 = vld [vmem:[%s0 + $0x7c] sm:$0xf]
  %v143 = vld [vmem:[%s0 + $0x80] sm:$0xf]
  %v144 = vld [vmem:[%s0 + $0x84] sm:$0xf]
  %v145 = vld [vmem:[%s0 + $0x88] sm:$0xf]
  %v146 = vld [vmem:[%s0 + $0x8c] sm:$0xf]
  %v147 = vld [vmem:[%s0 + $0x90] sm:$0xf]
  %v148 = vld [vmem:[%s0 + $0x94] sm:$0xf]
  %v149 = vld [vmem:[%s0 + $0x98] sm:$0xf]
  %v150 = vld [vmem:[%s0 + $0x9c] sm:$0xf]
  %v151 = vld [vmem:[%s0 + $0xa0] sm:$0xf]
  %v152 = vld [vmem:[%s0 + $0xa4] sm:$0xf]
  %v153 = vld [vmem:[%s0 + $0xa8] sm:$0xf]
  %v154 = vld [vmem:[%s0 + $0xac] sm:$0xf]
  %v155 = vld [vmem:[%s0 + $0xb0] sm:$0xf]
  %v156 = vld [vmem:[%s0 + $0xb4] sm:$0xf]
  %v157 = vld [vmem:[%s0 + $0xb8] sm:$0xf]
  %v158 = vld [vmem:[%s0 + $0xbc] sm:$0xf]
  %v159 = vld [vmem:[%s0 + $0xc0] sm:$0xf]
  %v160 = vld [vmem:[%s0 + $0xc4] sm:$0xf]
  %v161 = vld [vmem:[%s0 + $0xc8] sm:$0xf]
  %v162 = vld [vmem:[%s0 + $0xcc] sm:$0xf]
  %v163 = vld [vmem:[%s0 + $0xd0] sm:$0xf]
  %v164 = vld [vmem:[%s0 + $0xd4] sm:$0xf]
  %v165 = vld [vmem:[%s0 + $0xd8] sm:$0xf]
  %v166 = vld [vmem:[%s0 + $0xdc] sm:$0xf]
  %v167 = vld [vmem:[%s0 + $0xe0] sm:$0xf]
  %v168 = vld [vmem:[%s0 + $0xe4] sm:$0xf]
  %v169 = vld [vmem:[%s0 + $0xe8] sm:$0xf]
  %v170 = vld [vmem:[%s0 + $0xec] sm:$0xf]
  %v171 = vld [vmem:[%s0 + $0xf0] sm:$0xf]
  %v172 = vld [vmem:[%s0 + $0xf4] sm:$0xf]
  %v173 = vld [vmem:[%s0 + $0xf8] sm:$0xf]
  %v174 = vld [vmem:[%s0 + $0xfc] sm:$0xf]
  %v175 = vld [vmem:[%s0 + $0x100] sm:$0xf]
  %v176 = vld [vmem:[%s0 + $0x104] sm:$0xf]
  %v177 = vld [vmem:[%s0 + $0x108] sm:$0xf]
  %v178 = vld [vmem:[%s0 + $0x10c] sm:$0xf]
  %v179 = vld [vmem:[%s0 + $0x110] sm:$0xf]
  %v180 = vld [vmem:[%s0 + $0x114] sm:$0xf]
  %v181 = vld [vmem:[%s0 + $0x118] sm:$0xf]
  %v182 = vld [vmem:[%s0 + $0x11c] sm:$0xf]
  %v183 = vld [vmem:[%s0 + $0x120] sm:$0xf]
  %v184 = vld [vmem:[%s0 + $0x124] sm:$0xf]
  %v185 = vld [vmem:[%s0 + $0x128] sm:$0xf]
  %v186 = vld [vmem:[%s0 + $0x12c] sm:$0xf]
  %v187 = vld [vmem:[%s0 + $0x130] sm:$0xf]
  %v188 = vld [vmem:[%s0 + $0x134] sm:$0xf]
  %v189 = vld [vmem:[%s0 + $0x138] sm:$0xf]
  %v190 = vld [vmem:[%s0 + $0x13c] sm:$0xf]
  %v191 = vld [vmem:[%s0 + $0x140] sm:$0xf]
  %v192 = vld [vmem:[%s0 + $0x144] sm:$0x7]
  %v193 = vunpack.c.l.bf16 %v111
  %v194 = vunpack.c.l.bf16 %v112
  %v195 = vunpack.c.l.bf16 %v113
  %v196 = vunpack.c.l.bf16 %v114
  %v197 = vunpack.c.l.bf16 %v115
  %v198 = vunpack.c.l.bf16 %v116
  %v199 = vunpack.c.l.bf16 %v117
  %v200 = vunpack.c.l.bf16 %v118
  %v201 = vunpack.c.l.bf16 %v119
  %v202 = vunpack.c.l.bf16 %v120
  %v203 = vunpack.c.l.bf16 %v121
  %v204 = vunpack.c.l.bf16 %v122
  %v205 = vunpack.c.l.bf16 %v123
  %v206 = vunpack.c.l.bf16 %v124
  %v207 = vunpack.c.l.bf16 %v125
  %v208 = vunpack.c.l.bf16 %v126
  %v209 = vunpack.c.l.bf16 %v127
  %v210 = vunpack.c.l.bf16 %v128
  %v211 = vunpack.c.l.bf16 %v129
  %v212 = vunpack.c.l.bf16 %v130
  %v213 = vunpack.c.l.bf16 %v131
  %v214 = vunpack.c.l.bf16 %v132
  %v215 = vunpack.c.l.bf16 %v133
  %v216 = vunpack.c.l.bf16 %v134
  %v217 = vunpack.c.l.bf16 %v135
  %v218 = vunpack.c.l.bf16 %v136
  %v219 = vunpack.c.l.bf16 %v137
  %v220 = vunpack.c.l.bf16 %v138
  %v221 = vunpack.c.l.bf16 %v139
  %v222 = vunpack.c.l.bf16 %v140
  %v223 = vunpack.c.l.bf16 %v141
  %v224 = vunpack.c.l.bf16 %v142
  %v225 = vunpack.c.l.bf16 %v143
  %v226 = vunpack.c.l.bf16 %v144
  %v227 = vunpack.c.l.bf16 %v145
  %v228 = vunpack.c.l.bf16 %v146
  %v229 = vunpack.c.l.bf16 %v147
  %v230 = vunpack.c.l.bf16 %v148
  %v231 = vunpack.c.l.bf16 %v149
  %v232 = vunpack.c.l.bf16 %v150
  %v233 = vunpack.c.l.bf16 %v151
  %v234 = vunpack.c.l.bf16 %v152
  %v235 = vunpack.c.l.bf16 %v153
  %v236 = vunpack.c.l.bf16 %v154
  %v237 = vunpack.c.l.bf16 %v155
  %v238 = vunpack.c.l.bf16 %v156
  %v239 = vunpack.c.l.bf16 %v157
  %v240 = vunpack.c.l.bf16 %v158
  %v241 = vunpack.c.l.bf16 %v159
  %v242 = vunpack.c.l.bf16 %v160
  %v243 = vunpack.c.l.bf16 %v161
  %v244 = vunpack.c.l.bf16 %v162
  %v245 = vunpack.c.l.bf16 %v163
  %v246 = vunpack.c.l.bf16 %v164
  %v247 = vunpack.c.l.bf16 %v165
  %v248 = vunpack.c.l.bf16 %v166
  %v249 = vunpack.c.l.bf16 %v167
  %v250 = vunpack.c.l.bf16 %v168
  %v251 = vunpack.c.l.bf16 %v169
  %v252 = vunpack.c.l.bf16 %v170
  %v253 = vunpack.c.l.bf16 %v171
  %v254 = vunpack.c.l.bf16 %v172
  %v255 = vunpack.c.l.bf16 %v173
  %v256 = vunpack.c.l.bf16 %v174
  %v257 = vunpack.c.l.bf16 %v175
  %v258 = vunpack.c.l.bf16 %v176
  %v259 = vunpack.c.l.bf16 %v177
  %v260 = vunpack.c.l.bf16 %v178
  %v261 = vunpack.c.l.bf16 %v179
  %v262 = vunpack.c.l.bf16 %v180
  %v263 = vunpack.c.l.bf16 %v181
  %v264 = vunpack.c.l.bf16 %v182
  %v265 = vunpack.c.l.bf16 %v183
  %v266 = vunpack.c.l.bf16 %v184
  %v267 = vunpack.c.l.bf16 %v185
  %v268 = vunpack.c.l.bf16 %v186
  %v269 = vunpack.c.l.bf16 %v187
  %v270 = vunpack.c.l.bf16 %v188
  %v271 = vunpack.c.l.bf16 %v189
  %v272 = vunpack.c.l.bf16 %v190
  %v273 = vunpack.c.l.bf16 %v191
  %v274 = vunpack.c.l.bf16 %v192
  %v275 = vld [vmem:[%s0] sm:$0x8]
  %v276 = vunpack.c.l.bf16 %v275
  %v277 = vld [vmem:[%s0 + $0x144] sm:$0xf]
  %v278 = vunpack.c.l.bf16 %v277
  %v279 = vld [vmem:[%s0 + $0x8] sm:$0x8]
  %v280 = vld [vmem:[%s0 + $0x148] sm:$0xf]
  %v281 = vld [vmem:[%s0 + $0x14c] sm:$0xf]
  %v282 = vunpack.c.l.bf16 %v279
  %v283 = vunpack.c.l.bf16 %v280
  %v284 = vunpack.c.l.bf16 %v281
  %v285 = vld [vmem:[%s0 + $0x150] sm:$0x1]
  %v286 = vunpack.c.l.bf16 %v285
  %v287 = vld [vmem:[%s0 + $0x150] sm:$0xf]
  %v288 = vld [vmem:[%s0 + $0x154] sm:$0xf]
  %v289 = vld [vmem:[%s0 + $0x158] sm:$0x1]
  %v290 = vunpack.c.l.bf16 %v287
  %v291 = vunpack.c.l.bf16 %v288
  %v292 = vunpack.c.l.bf16 %v289
  %v293 = vld [vmem:[%s0 + $0x14] sm:$0xe]
  %v294 = vunpack.c.l.bf16 %v293
  %v295 = vld [vmem:[%s0 + $0x158] sm:$0x3]
  %v296 = vunpack.c.l.bf16 %v295
  %vm379 = vcmask 1046528
  %v380 = vrot.slane %v276, 1
  %v381 = vrot.slane %v194, 1
  %v382 = vsel %vm379, %v380, %v381
  %v383 = vrot.slane %v195, 1
  %v384 = vsel %vm379, %v381, %v383
  %v385 = vrot.slane %v196, 1
  %v386 = vsel %vm379, %v383, %v385
  %v387 = vrot.slane %v197, 1
  %v388 = vsel %vm379, %v385, %v387
  %v389 = vrot.slane %v198, 1
  %v390 = vsel %vm379, %v387, %v389
  %v391 = vrot.slane %v199, 1
  %v392 = vsel %vm379, %v389, %v391
  %v393 = vrot.slane %v200, 1
  %v394 = vsel %vm379, %v391, %v393
  %v395 = vrot.slane %v201, 1
  %v396 = vsel %vm379, %v393, %v395
  %v397 = vrot.slane %v202, 1
  %v398 = vsel %vm379, %v395, %v397
  %v399 = vrot.slane %v203, 1
  %v400 = vsel %vm379, %v397, %v399
  %v401 = vrot.slane %v204, 1
  %v402 = vsel %vm379, %v399, %v401
  %v403 = vrot.slane %v205, 1
  %v404 = vsel %vm379, %v401, %v403
  %v405 = vrot.slane %v206, 1
  %v406 = vsel %vm379, %v403, %v405
  %v407 = vrot.slane %v207, 1
  %v408 = vsel %vm379, %v405, %v407
  %v409 = vrot.slane %v208, 1
  %v410 = vsel %vm379, %v407, %v409
  %v411 = vrot.slane %v209, 1
  %v412 = vsel %vm379, %v409, %v411
  %v413 = vrot.slane %v210, 1
  %v414 = vsel %vm379, %v411, %v413
  %v415 = vrot.slane %v211, 1
  %v416 = vsel %vm379, %v413, %v415
  %v417 = vrot.slane %v212, 1
  %v418 = vsel %vm379, %v415, %v417
  %v419 = vrot.slane %v213, 1
  %v420 = vsel %vm379, %v417, %v419
  %v421 = vrot.slane %v214, 1
  %v422 = vsel %vm379, %v419, %v421
  %v423 = vrot.slane %v215, 1
  %v424 = vsel %vm379, %v421, %v423
  %v425 = vrot.slane %v216, 1
  %v426 = vsel %vm379, %v423, %v425
  %v427 = vrot.slane %v217, 1
  %v428 = vsel %vm379, %v425, %v427
  %v429 = vrot.slane %v218, 1
  %v430 = vsel %vm379, %v427, %v429
  %v431 = vrot.slane %v219, 1
  %v432 = vsel %vm379, %v429, %v431
  %v433 = vrot.slane %v220, 1
  %v434 = vsel %vm379, %v431, %v433
  %v435 = vrot.slane %v221, 1
  %v436 = vsel %vm379, %v433, %v435
  %v437 = vrot.slane %v222, 1
  %v438 = vsel %vm379, %v435, %v437
  %v439 = vrot.slane %v223, 1
  %v440 = vsel %vm379, %v437, %v439
  %v441 = vrot.slane %v224, 1
  %v442 = vsel %vm379, %v439, %v441
  %v443 = vrot.slane %v225, 1
  %v444 = vsel %vm379, %v441, %v443
  %v445 = vrot.slane %v226, 1
  %v446 = vsel %vm379, %v443, %v445
  %v447 = vrot.slane %v227, 1
  %v448 = vsel %vm379, %v445, %v447
  %v449 = vrot.slane %v228, 1
  %v450 = vsel %vm379, %v447, %v449
  %v451 = vrot.slane %v229, 1
  %v452 = vsel %vm379, %v449, %v451
  %v453 = vrot.slane %v230, 1
  %v454 = vsel %vm379, %v451, %v453
  %v455 = vrot.slane %v231, 1
  %v456 = vsel %vm379, %v453, %v455
  %v457 = vrot.slane %v232, 1
  %v458 = vsel %vm379, %v455, %v457
  %v459 = vrot.slane %v233, 1
  %v460 = vsel %vm379, %v457, %v459
  %v461 = vrot.slane %v234, 1
  %v462 = vsel %vm379, %v459, %v461
  %v463 = vrot.slane %v235, 1
  %v464 = vsel %vm379, %v461, %v463
  %v465 = vrot.slane %v236, 1
  %v466 = vsel %vm379, %v463, %v465
  %v467 = vrot.slane %v237, 1
  %v468 = vsel %vm379, %v465, %v467
  %v469 = vrot.slane %v238, 1
  %v470 = vsel %vm379, %v467, %v469
  %v471 = vrot.slane %v239, 1
  %v472 = vsel %vm379, %v469, %v471
  %v473 = vrot.slane %v240, 1
  %v474 = vsel %vm379, %v471, %v473
  %v475 = vrot.slane %v241, 1
  %v476 = vsel %vm379, %v473, %v475
  %v477 = vrot.slane %v242, 1
  %v478 = vsel %vm379, %v475, %v477
  %v479 = vrot.slane %v243, 1
  %v480 = vsel %vm379, %v477, %v479
  %v481 = vrot.slane %v244, 1
  %v482 = vsel %vm379, %v479, %v481
  %v483 = vrot.slane %v245, 1
  %v484 = vsel %vm379, %v481, %v483
  %v485 = vrot.slane %v246, 1
  %v486 = vsel %vm379, %v483, %v485
  %v487 = vrot.slane %v247, 1
  %v488 = vsel %vm379, %v485, %v487
  %v489 = vrot.slane %v248, 1
  %v490 = vsel %vm379, %v487, %v489
  %v491 = vrot.slane %v249, 1
  %v492 = vsel %vm379, %v489, %v491
  %v493 = vrot.slane %v250, 1
  %v494 = vsel %vm379, %v491, %v493
  %v495 = vrot.slane %v251, 1
  %v496 = vsel %vm379, %v493, %v495
  %v497 = vrot.slane %v252, 1
  %v498 = vsel %vm379, %v495, %v497
  %v499 = vrot.slane %v253, 1
  %v500 = vsel %vm379, %v497, %v499
  %v501 = vrot.slane %v254, 1
  %v502 = vsel %vm379, %v499, %v501
  %v503 = vrot.slane %v255, 1
  %v504 = vsel %vm379, %v501, %v503
  %v505 = vrot.slane %v256, 1
  %v506 = vsel %vm379, %v503, %v505
  %v507 = vrot.slane %v257, 1
  %v508 = vsel %vm379, %v505, %v507
  %v509 = vrot.slane %v258, 1
  %v510 = vsel %vm379, %v507, %v509
  %v511 = vrot.slane %v259, 1
  %v512 = vsel %vm379, %v509, %v511
  %v513 = vrot.slane %v260, 1
  %v514 = vsel %vm379, %v511, %v513
  %v515 = vrot.slane %v261, 1
  %v516 = vsel %vm379, %v513, %v515
  %v517 = vrot.slane %v262, 1
  %v518 = vsel %vm379, %v515, %v517
  %v519 = vrot.slane %v263, 1
  %v520 = vsel %vm379, %v517, %v519
  %v521 = vrot.slane %v264, 1
  %v522 = vsel %vm379, %v519, %v521
  %v523 = vrot.slane %v265, 1
  %v524 = vsel %vm379, %v521, %v523
  %v525 = vrot.slane %v266, 1
  %v526 = vsel %vm379, %v523, %v525
  %v527 = vrot.slane %v267, 1
  %v528 = vsel %vm379, %v525, %v527
  %v529 = vrot.slane %v268, 1
  %v530 = vsel %vm379, %v527, %v529
  %v531 = vrot.slane %v269, 1
  %v532 = vsel %vm379, %v529, %v531
  %v533 = vrot.slane %v270, 1
  %v534 = vsel %vm379, %v531, %v533
  %v535 = vrot.slane %v271, 1
  %v536 = vsel %vm379, %v533, %v535
  %v537 = vrot.slane %v272, 1
  %v538 = vsel %vm379, %v535, %v537
  %v539 = vrot.slane %v273, 1
  %v540 = vsel %vm379, %v537, %v539
  %v541 = vrot.slane %v274, 1
  %v542 = vsel %vm379, %v539, %v541
  %543 = vrot.lane.b32.xlu0 %v382, 4
  %v544 = vpop.permute.xlu0 %543
  %545 = vrot.lane.b32.xlu0 %v384, 4
  %v546 = vpop.permute.xlu0 %545
  %547 = vrot.lane.b32.xlu0 %v386, 4
  %v548 = vpop.permute.xlu0 %547
  %549 = vrot.lane.b32.xlu0 %v388, 4
  %v550 = vpop.permute.xlu0 %549
  %551 = vrot.lane.b32.xlu0 %v390, 4
  %v552 = vpop.permute.xlu0 %551
  %553 = vrot.lane.b32.xlu0 %v392, 4
  %v554 = vpop.permute.xlu0 %553
  %555 = vrot.lane.b32.xlu0 %v394, 4
  %v556 = vpop.permute.xlu0 %555
  %557 = vrot.lane.b32.xlu0 %v396, 4
  %v558 = vpop.permute.xlu0 %557
  %559 = vrot.lane.b32.xlu0 %v398, 4
  %v560 = vpop.permute.xlu0 %559
  %561 = vrot.lane.b32.xlu0 %v400, 4
  %v562 = vpop.permute.xlu0 %561
  %563 = vrot.lane.b32.xlu0 %v402, 4
  %v564 = vpop.permute.xlu0 %563
  %565 = vrot.lane.b32.xlu0 %v404, 4
  %v566 = vpop.permute.xlu0 %565
  %567 = vrot.lane.b32.xlu0 %v406, 4
  %v568 = vpop.permute.xlu0 %567
  %569 = vrot.lane.b32.xlu0 %v408, 4
  %v570 = vpop.permute.xlu0 %569
  %571 = vrot.lane.b32.xlu0 %v410, 4
  %v572 = vpop.permute.xlu0 %571
  %573 = vrot.lane.b32.xlu0 %v412, 4
  %v574 = vpop.permute.xlu0 %573
  %575 = vrot.lane.b32.xlu0 %v414, 4
  %v576 = vpop.permute.xlu0 %575
  %577 = vrot.lane.b32.xlu0 %v416, 4
  %v578 = vpop.permute.xlu0 %577
  %579 = vrot.lane.b32.xlu0 %v418, 4
  %v580 = vpop.permute.xlu0 %579
  %581 = vrot.lane.b32.xlu0 %v420, 4
  %v582 = vpop.permute.xlu0 %581
  %583 = vrot.lane.b32.xlu0 %v422, 4
  %v584 = vpop.permute.xlu0 %583
  %585 = vrot.lane.b32.xlu0 %v424, 4
  %v586 = vpop.permute.xlu0 %585
  %587 = vrot.lane.b32.xlu0 %v426, 4
  %v588 = vpop.permute.xlu0 %587
  %589 = vrot.lane.b32.xlu0 %v428, 4
  %v590 = vpop.permute.xlu0 %589
  %591 = vrot.lane.b32.xlu0 %v430, 4
  %v592 = vpop.permute.xlu0 %591
  %593 = vrot.lane.b32.xlu0 %v432, 4
  %v594 = vpop.permute.xlu0 %593
  %595 = vrot.lane.b32.xlu0 %v434, 4
  %v596 = vpop.permute.xlu0 %595
  %597 = vrot.lane.b32.xlu0 %v436, 4
  %v598 = vpop.permute.xlu0 %597
  %599 = vrot.lane.b32.xlu0 %v438, 4
  %v600 = vpop.permute.xlu0 %599
  %601 = vrot.lane.b32.xlu0 %v440, 4
  %v602 = vpop.permute.xlu0 %601
  %603 = vrot.lane.b32.xlu0 %v442, 4
  %v604 = vpop.permute.xlu0 %603
  %605 = vrot.lane.b32.xlu0 %v444, 4
  %v606 = vpop.permute.xlu0 %605
  %607 = vrot.lane.b32.xlu0 %v446, 4
  %v608 = vpop.permute.xlu0 %607
  %609 = vrot.lane.b32.xlu0 %v448, 4
  %v610 = vpop.permute.xlu0 %609
  %611 = vrot.lane.b32.xlu0 %v450, 4
  %v612 = vpop.permute.xlu0 %611
  %613 = vrot.lane.b32.xlu0 %v452, 4
  %v614 = vpop.permute.xlu0 %613
  %615 = vrot.lane.b32.xlu0 %v454, 4
  %v616 = vpop.permute.xlu0 %615
  %617 = vrot.lane.b32.xlu0 %v456, 4
  %v618 = vpop.permute.xlu0 %617
  %619 = vrot.lane.b32.xlu0 %v458, 4
  %v620 = vpop.permute.xlu0 %619
  %621 = vrot.lane.b32.xlu0 %v460, 4
  %v622 = vpop.permute.xlu0 %621
  %623 = vrot.lane.b32.xlu0 %v462, 4
  %v624 = vpop.permute.xlu0 %623
  %625 = vrot.lane.b32.xlu0 %v464, 4
  %v626 = vpop.permute.xlu0 %625
  %627 = vrot.lane.b32.xlu0 %v466, 4
  %v628 = vpop.permute.xlu0 %627
  %629 = vrot.lane.b32.xlu0 %v468, 4
  %v630 = vpop.permute.xlu0 %629
  %631 = vrot.lane.b32.xlu0 %v470, 4
  %v632 = vpop.permute.xlu0 %631
  %633 = vrot.lane.b32.xlu0 %v472, 4
  %v634 = vpop.permute.xlu0 %633
  %635 = vrot.lane.b32.xlu0 %v474, 4
  %v636 = vpop.permute.xlu0 %635
  %637 = vrot.lane.b32.xlu0 %v476, 4
  %v638 = vpop.permute.xlu0 %637
  %639 = vrot.lane.b32.xlu0 %v478, 4
  %v640 = vpop.permute.xlu0 %639
  %641 = vrot.lane.b32.xlu0 %v480, 4
  %v642 = vpop.permute.xlu0 %641
  %643 = vrot.lane.b32.xlu0 %v482, 4
  %v644 = vpop.permute.xlu0 %643
  %645 = vrot.lane.b32.xlu0 %v484, 4
  %v646 = vpop.permute.xlu0 %645
  %647 = vrot.lane.b32.xlu0 %v486, 4
  %v648 = vpop.permute.xlu0 %647
  %649 = vrot.lane.b32.xlu0 %v488, 4
  %v650 = vpop.permute.xlu0 %649
  %651 = vrot.lane.b32.xlu0 %v490, 4
  %v652 = vpop.permute.xlu0 %651
  %653 = vrot.lane.b32.xlu0 %v492, 4
  %v654 = vpop.permute.xlu0 %653
  %655 = vrot.lane.b32.xlu0 %v494, 4
  %v656 = vpop.permute.xlu0 %655
  %657 = vrot.lane.b32.xlu0 %v496, 4
  %v658 = vpop.permute.xlu0 %657
  %659 = vrot.lane.b32.xlu0 %v498, 4
  %v660 = vpop.permute.xlu0 %659
  %661 = vrot.lane.b32.xlu0 %v500, 4
  %v662 = vpop.permute.xlu0 %661
  %663 = vrot.lane.b32.xlu0 %v502, 4
  %v664 = vpop.permute.xlu0 %663
  %665 = vrot.lane.b32.xlu0 %v504, 4
  %v666 = vpop.permute.xlu0 %665
  %667 = vrot.lane.b32.xlu0 %v506, 4
  %v668 = vpop.permute.xlu0 %667
  %669 = vrot.lane.b32.xlu0 %v508, 4
  %v670 = vpop.permute.xlu0 %669
  %671 = vrot.lane.b32.xlu0 %v510, 4
  %v672 = vpop.permute.xlu0 %671
  %673 = vrot.lane.b32.xlu0 %v512, 4
  %v674 = vpop.permute.xlu0 %673
  %675 = vrot.lane.b32.xlu0 %v514, 4
  %v676 = vpop.permute.xlu0 %675
  %677 = vrot.lane.b32.xlu0 %v516, 4
  %v678 = vpop.permute.xlu0 %677
  %679 = vrot.lane.b32.xlu0 %v518, 4
  %v680 = vpop.permute.xlu0 %679
  %681 = vrot.lane.b32.xlu0 %v520, 4
  %v682 = vpop.permute.xlu0 %681
  %683 = vrot.lane.b32.xlu0 %v522, 4
  %v684 = vpop.permute.xlu0 %683
  %685 = vrot.lane.b32.xlu0 %v524, 4
  %v686 = vpop.permute.xlu0 %685
  %687 = vrot.lane.b32.xlu0 %v526, 4
  %v688 = vpop.permute.xlu0 %687
  %689 = vrot.lane.b32.xlu0 %v528, 4
  %v690 = vpop.permute.xlu0 %689
  %691 = vrot.lane.b32.xlu0 %v530, 4
  %v692 = vpop.permute.xlu0 %691
  %693 = vrot.lane.b32.xlu0 %v532, 4
  %v694 = vpop.permute.xlu0 %693
  %695 = vrot.lane.b32.xlu0 %v534, 4
  %v696 = vpop.permute.xlu0 %695
  %697 = vrot.lane.b32.xlu0 %v536, 4
  %v698 = vpop.permute.xlu0 %697
  %699 = vrot.lane.b32.xlu0 %v538, 4
  %v700 = vpop.permute.xlu0 %699
  %701 = vrot.lane.b32.xlu0 %v540, 4
  %v702 = vpop.permute.xlu0 %701
  %703 = vrot.lane.b32.xlu0 %v542, 4
  %v704 = vpop.permute.xlu0 %703
  %705 = vrot.lane.b32.xlu0 %v541, 4
  %v706 = vpop.permute.xlu0 %705
  %vm790 = vcmask 1045504
  %v791 = vrot.slane %v276, 2
  %v792 = vrot.slane %v194, 2
  %v793 = vsel %vm790, %v791, %v792
  %v794 = vrot.slane %v195, 2
  %v795 = vsel %vm790, %v792, %v794
  %v796 = vrot.slane %v196, 2
  %v797 = vsel %vm790, %v794, %v796
  %v798 = vrot.slane %v197, 2
  %v799 = vsel %vm790, %v796, %v798
  %v800 = vrot.slane %v198, 2
  %v801 = vsel %vm790, %v798, %v800
  %v802 = vrot.slane %v199, 2
  %v803 = vsel %vm790, %v800, %v802
  %v804 = vrot.slane %v200, 2
  %v805 = vsel %vm790, %v802, %v804
  %v806 = vrot.slane %v201, 2
  %v807 = vsel %vm790, %v804, %v806
  %v808 = vrot.slane %v202, 2
  %v809 = vsel %vm790, %v806, %v808
  %v810 = vrot.slane %v203, 2
  %v811 = vsel %vm790, %v808, %v810
  %v812 = vrot.slane %v204, 2
  %v813 = vsel %vm790, %v810, %v812
  %v814 = vrot.slane %v205, 2
  %v815 = vsel %vm790, %v812, %v814
  %v816 = vrot.slane %v206, 2
  %v817 = vsel %vm790, %v814, %v816
  %v818 = vrot.slane %v207, 2
  %v819 = vsel %vm790, %v816, %v818
  %v820 = vrot.slane %v208, 2
  %v821 = vsel %vm790, %v818, %v820
  %v822 = vrot.slane %v209, 2
  %v823 = vsel %vm790, %v820, %v822
  %v824 = vrot.slane %v210, 2
  %v825 = vsel %vm790, %v822, %v824
  %v826 = vrot.slane %v211, 2
  %v827 = vsel %vm790, %v824, %v826
  %v828 = vrot.slane %v212, 2
  %v829 = vsel %vm790, %v826, %v828
  %v830 = vrot.slane %v213, 2
  %v831 = vsel %vm790, %v828, %v830
  %v832 = vrot.slane %v214, 2
  %v833 = vsel %vm790, %v830, %v832
  %v834 = vrot.slane %v215, 2
  %v835 = vsel %vm790, %v832, %v834
  %v836 = vrot.slane %v216, 2
  %v837 = vsel %vm790, %v834, %v836
  %v838 = vrot.slane %v217, 2
  %v839 = vsel %vm790, %v836, %v838
  %v840 = vrot.slane %v218, 2
  %v841 = vsel %vm790, %v838, %v840
  %v842 = vrot.slane %v219, 2
  %v843 = vsel %vm790, %v840, %v842
  %v844 = vrot.slane %v220, 2
  %v845 = vsel %vm790, %v842, %v844
  %v846 = vrot.slane %v221, 2
  %v847 = vsel %vm790, %v844, %v846
  %v848 = vrot.slane %v222, 2
  %v849 = vsel %vm790, %v846, %v848
  %v850 = vrot.slane %v223, 2
  %v851 = vsel %vm790, %v848, %v850
  %v852 = vrot.slane %v224, 2
  %v853 = vsel %vm790, %v850, %v852
  %v854 = vrot.slane %v225, 2
  %v855 = vsel %vm790, %v852, %v854
  %v856 = vrot.slane %v226, 2
  %v857 = vsel %vm790, %v854, %v856
  %v858 = vrot.slane %v227, 2
  %v859 = vsel %vm790, %v856, %v858
  %v860 = vrot.slane %v228, 2
  %v861 = vsel %vm790, %v858, %v860
  %v862 = vrot.slane %v229, 2
  %v863 = vsel %vm790, %v860, %v862
  %v864 = vrot.slane %v230, 2
  %v865 = vsel %vm790, %v862, %v864
  %v866 = vrot.slane %v231, 2
  %v867 = vsel %vm790, %v864, %v866
  %v868 = vrot.slane %v232, 2
  %v869 = vsel %vm790, %v866, %v868
  %v870 = vrot.slane %v233, 2
  %v871 = vsel %vm790, %v868, %v870
  %v872 = vrot.slane %v234, 2
  %v873 = vsel %vm790, %v870, %v872
  %v874 = vrot.slane %v235, 2
  %v875 = vsel %vm790, %v872, %v874
  %v876 = vrot.slane %v236, 2
  %v877 = vsel %vm790, %v874, %v876
  %v878 = vrot.slane %v237, 2
  %v879 = vsel %vm790, %v876, %v878
  %v880 = vrot.slane %v238, 2
  %v881 = vsel %vm790, %v878, %v880
  %v882 = vrot.slane %v239, 2
  %v883 = vsel %vm790, %v880, %v882
  %v884 = vrot.slane %v240, 2
  %v885 = vsel %vm790, %v882, %v884
  %v886 = vrot.slane %v241, 2
  %v887 = vsel %vm790, %v884, %v886
  %v888 = vrot.slane %v242, 2
  %v889 = vsel %vm790, %v886, %v888
  %v890 = vrot.slane %v243, 2
  %v891 = vsel %vm790, %v888, %v890
  %v892 = vrot.slane %v244, 2
  %v893 = vsel %vm790, %v890, %v892
  %v894 = vrot.slane %v245, 2
  %v895 = vsel %vm790, %v892, %v894
  %v896 = vrot.slane %v246, 2
  %v897 = vsel %vm790, %v894, %v896
  %v898 = vrot.slane %v247, 2
  %v899 = vsel %vm790, %v896, %v898
  %v900 = vrot.slane %v248, 2
  %v901 = vsel %vm790, %v898, %v900
  %v902 = vrot.slane %v249, 2
  %v903 = vsel %vm790, %v900, %v902
  %v904 = vrot.slane %v250, 2
  %v905 = vsel %vm790, %v902, %v904
  %v906 = vrot.slane %v251, 2
  %v907 = vsel %vm790, %v904, %v906
  %v908 = vrot.slane %v252, 2
  %v909 = vsel %vm790, %v906, %v908
  %v910 = vrot.slane %v253, 2
  %v911 = vsel %vm790, %v908, %v910
  %v912 = vrot.slane %v254, 2
  %v913 = vsel %vm790, %v910, %v912
  %v914 = vrot.slane %v255, 2
  %v915 = vsel %vm790, %v912, %v914
  %v916 = vrot.slane %v256, 2
  %v917 = vsel %vm790, %v914, %v916
  %v918 = vrot.slane %v257, 2
  %v919 = vsel %vm790, %v916, %v918
  %v920 = vrot.slane %v258, 2
  %v921 = vsel %vm790, %v918, %v920
  %v922 = vrot.slane %v259, 2
  %v923 = vsel %vm790, %v920, %v922
  %v924 = vrot.slane %v260, 2
  %v925 = vsel %vm790, %v922, %v924
  %v926 = vrot.slane %v261, 2
  %v927 = vsel %vm790, %v924, %v926
  %v928 = vrot.slane %v262, 2
  %v929 = vsel %vm790, %v926, %v928
  %v930 = vrot.slane %v263, 2
  %v931 = vsel %vm790, %v928, %v930
  %v932 = vrot.slane %v264, 2
  %v933 = vsel %vm790, %v930, %v932
  %v934 = vrot.slane %v265, 2
  %v935 = vsel %vm790, %v932, %v934
  %v936 = vrot.slane %v266, 2
  %v937 = vsel %vm790, %v934, %v936
  %v938 = vrot.slane %v267, 2
  %v939 = vsel %vm790, %v936, %v938
  %v940 = vrot.slane %v268, 2
  %v941 = vsel %vm790, %v938, %v940
  %v942 = vrot.slane %v269, 2
  %v943 = vsel %vm790, %v940, %v942
  %v944 = vrot.slane %v270, 2
  %v945 = vsel %vm790, %v942, %v944
  %v946 = vrot.slane %v271, 2
  %v947 = vsel %vm790, %v944, %v946
  %v948 = vrot.slane %v272, 2
  %v949 = vsel %vm790, %v946, %v948
  %v950 = vrot.slane %v273, 2
  %v951 = vsel %vm790, %v948, %v950
  %v952 = vrot.slane %v278, 2
  %v953 = vsel %vm790, %v950, %v952
  %954 = vrot.lane.b32.xlu0 %v793, 8
  %v955 = vpop.permute.xlu0 %954
  %956 = vrot.lane.b32.xlu0 %v795, 8
  %v957 = vpop.permute.xlu0 %956
  %958 = vrot.lane.b32.xlu0 %v797, 8
  %v959 = vpop.permute.xlu0 %958
  %960 = vrot.lane.b32.xlu0 %v799, 8
  %v961 = vpop.permute.xlu0 %960
  %962 = vrot.lane.b32.xlu0 %v801, 8
  %v963 = vpop.permute.xlu0 %962
  %964 = vrot.lane.b32.xlu0 %v803, 8
  %v965 = vpop.permute.xlu0 %964
  %966 = vrot.lane.b32.xlu0 %v805, 8
  %v967 = vpop.permute.xlu0 %966
  %968 = vrot.lane.b32.xlu0 %v807, 8
  %v969 = vpop.permute.xlu0 %968
  %970 = vrot.lane.b32.xlu0 %v809, 8
  %v971 = vpop.permute.xlu0 %970
  %972 = vrot.lane.b32.xlu0 %v811, 8
  %v973 = vpop.permute.xlu0 %972
  %974 = vrot.lane.b32.xlu0 %v813, 8
  %v975 = vpop.permute.xlu0 %974
  %976 = vrot.lane.b32.xlu0 %v815, 8
  %v977 = vpop.permute.xlu0 %976
  %978 = vrot.lane.b32.xlu0 %v817, 8
  %v979 = vpop.permute.xlu0 %978
  %980 = vrot.lane.b32.xlu0 %v819, 8
  %v981 = vpop.permute.xlu0 %980
  %982 = vrot.lane.b32.xlu0 %v821, 8
  %v983 = vpop.permute.xlu0 %982
  %984 = vrot.lane.b32.xlu0 %v823, 8
  %v985 = vpop.permute.xlu0 %984
  %986 = vrot.lane.b32.xlu0 %v825, 8
  %v987 = vpop.permute.xlu0 %986
  %988 = vrot.lane.b32.xlu0 %v827, 8
  %v989 = vpop.permute.xlu0 %988
  %990 = vrot.lane.b32.xlu0 %v829, 8
  %v991 = vpop.permute.xlu0 %990
  %992 = vrot.lane.b32.xlu0 %v831, 8
  %v993 = vpop.permute.xlu0 %992
  %994 = vrot.lane.b32.xlu0 %v833, 8
  %v995 = vpop.permute.xlu0 %994
  %996 = vrot.lane.b32.xlu0 %v835, 8
  %v997 = vpop.permute.xlu0 %996
  %998 = vrot.lane.b32.xlu0 %v837, 8
  %v999 = vpop.permute.xlu0 %998
  %1000 = vrot.lane.b32.xlu0 %v839, 8
  %v1001 = vpop.permute.xlu0 %1000
  %1002 = vrot.lane.b32.xlu0 %v841, 8
  %v1003 = vpop.permute.xlu0 %1002
  %1004 = vrot.lane.b32.xlu0 %v843, 8
  %v1005 = vpop.permute.xlu0 %1004
  %1006 = vrot.lane.b32.xlu0 %v845, 8
  %v1007 = vpop.permute.xlu0 %1006
  %1008 = vrot.lane.b32.xlu0 %v847, 8
  %v1009 = vpop.permute.xlu0 %1008
  %1010 = vrot.lane.b32.xlu0 %v849, 8
  %v1011 = vpop.permute.xlu0 %1010
  %1012 = vrot.lane.b32.xlu0 %v851, 8
  %v1013 = vpop.permute.xlu0 %1012
  %1014 = vrot.lane.b32.xlu0 %v853, 8
  %v1015 = vpop.permute.xlu0 %1014
  %1016 = vrot.lane.b32.xlu0 %v855, 8
  %v1017 = vpop.permute.xlu0 %1016
  %1018 = vrot.lane.b32.xlu0 %v857, 8
  %v1019 = vpop.permute.xlu0 %1018
  %1020 = vrot.lane.b32.xlu0 %v859, 8
  %v1021 = vpop.permute.xlu0 %1020
  %1022 = vrot.lane.b32.xlu0 %v861, 8
  %v1023 = vpop.permute.xlu0 %1022
  %1024 = vrot.lane.b32.xlu0 %v863, 8
  %v1025 = vpop.permute.xlu0 %1024
  %1026 = vrot.lane.b32.xlu0 %v865, 8
  %v1027 = vpop.permute.xlu0 %1026
  %1028 = vrot.lane.b32.xlu0 %v867, 8
  %v1029 = vpop.permute.xlu0 %1028
  %1030 = vrot.lane.b32.xlu0 %v869, 8
  %v1031 = vpop.permute.xlu0 %1030
  %1032 = vrot.lane.b32.xlu0 %v871, 8
  %v1033 = vpop.permute.xlu0 %1032
  %1034 = vrot.lane.b32.xlu0 %v873, 8
  %v1035 = vpop.permute.xlu0 %1034
  %1036 = vrot.lane.b32.xlu0 %v875, 8
  %v1037 = vpop.permute.xlu0 %1036
  %1038 = vrot.lane.b32.xlu0 %v877, 8
  %v1039 = vpop.permute.xlu0 %1038
  %1040 = vrot.lane.b32.xlu0 %v879, 8
  %v1041 = vpop.permute.xlu0 %1040
  %1042 = vrot.lane.b32.xlu0 %v881, 8
  %v1043 = vpop.permute.xlu0 %1042
  %1044 = vrot.lane.b32.xlu0 %v883, 8
  %v1045 = vpop.permute.xlu0 %1044
  %1046 = vrot.lane.b32.xlu0 %v885, 8
  %v1047 = vpop.permute.xlu0 %1046
  %1048 = vrot.lane.b32.xlu0 %v887, 8
  %v1049 = vpop.permute.xlu0 %1048
  %1050 = vrot.lane.b32.xlu0 %v889, 8
  %v1051 = vpop.permute.xlu0 %1050
  %1052 = vrot.lane.b32.xlu0 %v891, 8
  %v1053 = vpop.permute.xlu0 %1052
  %1054 = vrot.lane.b32.xlu0 %v893, 8
  %v1055 = vpop.permute.xlu0 %1054
  %1056 = vrot.lane.b32.xlu0 %v895, 8
  %v1057 = vpop.permute.xlu0 %1056
  %1058 = vrot.lane.b32.xlu0 %v897, 8
  %v1059 = vpop.permute.xlu0 %1058
  %1060 = vrot.lane.b32.xlu0 %v899, 8
  %v1061 = vpop.permute.xlu0 %1060
  %1062 = vrot.lane.b32.xlu0 %v901, 8
  %v1063 = vpop.permute.xlu0 %1062
  %1064 = vrot.lane.b32.xlu0 %v903, 8
  %v1065 = vpop.permute.xlu0 %1064
  %1066 = vrot.lane.b32.xlu0 %v905, 8
  %v1067 = vpop.permute.xlu0 %1066
  %1068 = vrot.lane.b32.xlu0 %v907, 8
  %v1069 = vpop.permute.xlu0 %1068
  %1070 = vrot.lane.b32.xlu0 %v909, 8
  %v1071 = vpop.permute.xlu0 %1070
  %1072 = vrot.lane.b32.xlu0 %v911, 8
  %v1073 = vpop.permute.xlu0 %1072
  %1074 = vrot.lane.b32.xlu0 %v913, 8
  %v1075 = vpop.permute.xlu0 %1074
  %1076 = vrot.lane.b32.xlu0 %v915, 8
  %v1077 = vpop.permute.xlu0 %1076
  %1078 = vrot.lane.b32.xlu0 %v917, 8
  %v1079 = vpop.permute.xlu0 %1078
  %1080 = vrot.lane.b32.xlu0 %v919, 8
  %v1081 = vpop.permute.xlu0 %1080
  %1082 = vrot.lane.b32.xlu0 %v921, 8
  %v1083 = vpop.permute.xlu0 %1082
  %1084 = vrot.lane.b32.xlu0 %v923, 8
  %v1085 = vpop.permute.xlu0 %1084
  %1086 = vrot.lane.b32.xlu0 %v925, 8
  %v1087 = vpop.permute.xlu0 %1086
  %1088 = vrot.lane.b32.xlu0 %v927, 8
  %v1089 = vpop.permute.xlu0 %1088
  %1090 = vrot.lane.b32.xlu0 %v929, 8
  %v1091 = vpop.permute.xlu0 %1090
  %1092 = vrot.lane.b32.xlu0 %v931, 8
  %v1093 = vpop.permute.xlu0 %1092
  %1094 = vrot.lane.b32.xlu0 %v933, 8
  %v1095 = vpop.permute.xlu0 %1094
  %1096 = vrot.lane.b32.xlu0 %v935, 8
  %v1097 = vpop.permute.xlu0 %1096
  %1098 = vrot.lane.b32.xlu0 %v937, 8
  %v1099 = vpop.permute.xlu0 %1098
  %1100 = vrot.lane.b32.xlu0 %v939, 8
  %v1101 = vpop.permute.xlu0 %1100
  %1102 = vrot.lane.b32.xlu0 %v941, 8
  %v1103 = vpop.permute.xlu0 %1102
  %1104 = vrot.lane.b32.xlu0 %v943, 8
  %v1105 = vpop.permute.xlu0 %1104
  %1106 = vrot.lane.b32.xlu0 %v945, 8
  %v1107 = vpop.permute.xlu0 %1106
  %1108 = vrot.lane.b32.xlu0 %v947, 8
  %v1109 = vpop.permute.xlu0 %1108
  %1110 = vrot.lane.b32.xlu0 %v949, 8
  %v1111 = vpop.permute.xlu0 %1110
  %1112 = vrot.lane.b32.xlu0 %v951, 8
  %v1113 = vpop.permute.xlu0 %1112
  %1114 = vrot.lane.b32.xlu0 %v953, 8
  %v1115 = vpop.permute.xlu0 %1114
  %1116 = vrot.lane.b32.xlu0 %v952, 8
  %v1117 = vpop.permute.xlu0 %1116
  %v1203 = vrot.slane %v282, 2
  %v1204 = vsel %vm790, %v1203, %v796
  %v1205 = vrot.slane %v283, 2
  %v1206 = vsel %vm790, %v952, %v1205
  %v1207 = vrot.slane %v284, 2
  %v1208 = vsel %vm790, %v1205, %v1207
  %1209 = vrot.lane.b32.xlu0 %v1204, 12
  %v1210 = vpop.permute.xlu0 %1209
  %1211 = vrot.lane.b32.xlu0 %v799, 12
  %v1212 = vpop.permute.xlu0 %1211
  %1213 = vrot.lane.b32.xlu0 %v801, 12
  %v1214 = vpop.permute.xlu0 %1213
  %1215 = vrot.lane.b32.xlu0 %v803, 12
  %v1216 = vpop.permute.xlu0 %1215
  %1217 = vrot.lane.b32.xlu0 %v805, 12
  %v1218 = vpop.permute.xlu0 %1217
  %1219 = vrot.lane.b32.xlu0 %v807, 12
  %v1220 = vpop.permute.xlu0 %1219
  %1221 = vrot.lane.b32.xlu0 %v809, 12
  %v1222 = vpop.permute.xlu0 %1221
  %1223 = vrot.lane.b32.xlu0 %v811, 12
  %v1224 = vpop.permute.xlu0 %1223
  %1225 = vrot.lane.b32.xlu0 %v813, 12
  %v1226 = vpop.permute.xlu0 %1225
  %1227 = vrot.lane.b32.xlu0 %v815, 12
  %v1228 = vpop.permute.xlu0 %1227
  %1229 = vrot.lane.b32.xlu0 %v817, 12
  %v1230 = vpop.permute.xlu0 %1229
  %1231 = vrot.lane.b32.xlu0 %v819, 12
  %v1232 = vpop.permute.xlu0 %1231
  %1233 = vrot.lane.b32.xlu0 %v821, 12
  %v1234 = vpop.permute.xlu0 %1233
  %1235 = vrot.lane.b32.xlu0 %v823, 12
  %v1236 = vpop.permute.xlu0 %1235
  %1237 = vrot.lane.b32.xlu0 %v825, 12
  %v1238 = vpop.permute.xlu0 %1237
  %1239 = vrot.lane.b32.xlu0 %v827, 12
  %v1240 = vpop.permute.xlu0 %1239
  %1241 = vrot.lane.b32.xlu0 %v829, 12
  %v1242 = vpop.permute.xlu0 %1241
  %1243 = vrot.lane.b32.xlu0 %v831, 12
  %v1244 = vpop.permute.xlu0 %1243
  %1245 = vrot.lane.b32.xlu0 %v833, 12
  %v1246 = vpop.permute.xlu0 %1245
  %1247 = vrot.lane.b32.xlu0 %v835, 12
  %v1248 = vpop.permute.xlu0 %1247
  %1249 = vrot.lane.b32.xlu0 %v837, 12
  %v1250 = vpop.permute.xlu0 %1249
  %1251 = vrot.lane.b32.xlu0 %v839, 12
  %v1252 = vpop.permute.xlu0 %1251
  %1253 = vrot.lane.b32.xlu0 %v841, 12
  %v1254 = vpop.permute.xlu0 %1253
  %1255 = vrot.lane.b32.xlu0 %v843, 12
  %v1256 = vpop.permute.xlu0 %1255
  %1257 = vrot.lane.b32.xlu0 %v845, 12
  %v1258 = vpop.permute.xlu0 %1257
  %1259 = vrot.lane.b32.xlu0 %v847, 12
  %v1260 = vpop.permute.xlu0 %1259
  %1261 = vrot.lane.b32.xlu0 %v849, 12
  %v1262 = vpop.permute.xlu0 %1261
  %1263 = vrot.lane.b32.xlu0 %v851, 12
  %v1264 = vpop.permute.xlu0 %1263
  %1265 = vrot.lane.b32.xlu0 %v853, 12
  %v1266 = vpop.permute.xlu0 %1265
  %1267 = vrot.lane.b32.xlu0 %v855, 12
  %v1268 = vpop.permute.xlu0 %1267
  %1269 = vrot.lane.b32.xlu0 %v857, 12
  %v1270 = vpop.permute.xlu0 %1269
  %1271 = vrot.lane.b32.xlu0 %v859, 12
  %v1272 = vpop.permute.xlu0 %1271
  %1273 = vrot.lane.b32.xlu0 %v861, 12
  %v1274 = vpop.permute.xlu0 %1273
  %1275 = vrot.lane.b32.xlu0 %v863, 12
  %v1276 = vpop.permute.xlu0 %1275
  %1277 = vrot.lane.b32.xlu0 %v865, 12
  %v1278 = vpop.permute.xlu0 %1277
  %1279 = vrot.lane.b32.xlu0 %v867, 12
  %v1280 = vpop.permute.xlu0 %1279
  %1281 = vrot.lane.b32.xlu0 %v869, 12
  %v1282 = vpop.permute.xlu0 %1281
  %1283 = vrot.lane.b32.xlu0 %v871, 12
  %v1284 = vpop.permute.xlu0 %1283
  %1285 = vrot.lane.b32.xlu0 %v873, 12
  %v1286 = vpop.permute.xlu0 %1285
  %1287 = vrot.lane.b32.xlu0 %v875, 12
  %v1288 = vpop.permute.xlu0 %1287
  %1289 = vrot.lane.b32.xlu0 %v877, 12
  %v1290 = vpop.permute.xlu0 %1289
  %1291 = vrot.lane.b32.xlu0 %v879, 12
  %v1292 = vpop.permute.xlu0 %1291
  %1293 = vrot.lane.b32.xlu0 %v881, 12
  %v1294 = vpop.permute.xlu0 %1293
  %1295 = vrot.lane.b32.xlu0 %v883, 12
  %v1296 = vpop.permute.xlu0 %1295
  %1297 = vrot.lane.b32.xlu0 %v885, 12
  %v1298 = vpop.permute.xlu0 %1297
  %1299 = vrot.lane.b32.xlu0 %v887, 12
  %v1300 = vpop.permute.xlu0 %1299
  %1301 = vrot.lane.b32.xlu0 %v889, 12
  %v1302 = vpop.permute.xlu0 %1301
  %1303 = vrot.lane.b32.xlu0 %v891, 12
  %v1304 = vpop.permute.xlu0 %1303
  %1305 = vrot.lane.b32.xlu0 %v893, 12
  %v1306 = vpop.permute.xlu0 %1305
  %1307 = vrot.lane.b32.xlu0 %v895, 12
  %v1308 = vpop.permute.xlu0 %1307
  %1309 = vrot.lane.b32.xlu0 %v897, 12
  %v1310 = vpop.permute.xlu0 %1309
  %1311 = vrot.lane.b32.xlu0 %v899, 12
  %v1312 = vpop.permute.xlu0 %1311
  %1313 = vrot.lane.b32.xlu0 %v901, 12
  %v1314 = vpop.permute.xlu0 %1313
  %1315 = vrot.lane.b32.xlu0 %v903, 12
  %v1316 = vpop.permute.xlu0 %1315
  %1317 = vrot.lane.b32.xlu0 %v905, 12
  %v1318 = vpop.permute.xlu0 %1317
  %1319 = vrot.lane.b32.xlu0 %v907, 12
  %v1320 = vpop.permute.xlu0 %1319
  %1321 = vrot.lane.b32.xlu0 %v909, 12
  %v1322 = vpop.permute.xlu0 %1321
  %1323 = vrot.lane.b32.xlu0 %v911, 12
  %v1324 = vpop.permute.xlu0 %1323
  %1325 = vrot.lane.b32.xlu0 %v913, 12
  %v1326 = vpop.permute.xlu0 %1325
  %1327 = vrot.lane.b32.xlu0 %v915, 12
  %v1328 = vpop.permute.xlu0 %1327
  %1329 = vrot.lane.b32.xlu0 %v917, 12
  %v1330 = vpop.permute.xlu0 %1329
  %1331 = vrot.lane.b32.xlu0 %v919, 12
  %v1332 = vpop.permute.xlu0 %1331
  %1333 = vrot.lane.b32.xlu0 %v921, 12
  %v1334 = vpop.permute.xlu0 %1333
  %1335 = vrot.lane.b32.xlu0 %v923, 12
  %v1336 = vpop.permute.xlu0 %1335
  %1337 = vrot.lane.b32.xlu0 %v925, 12
  %v1338 = vpop.permute.xlu0 %1337
  %1339 = vrot.lane.b32.xlu0 %v927, 12
  %v1340 = vpop.permute.xlu0 %1339
  %1341 = vrot.lane.b32.xlu0 %v929, 12
  %v1342 = vpop.permute.xlu0 %1341
  %1343 = vrot.lane.b32.xlu0 %v931, 12
  %v1344 = vpop.permute.xlu0 %1343
  %1345 = vrot.lane.b32.xlu0 %v933, 12
  %v1346 = vpop.permute.xlu0 %1345
  %1347 = vrot.lane.b32.xlu0 %v935, 12
  %v1348 = vpop.permute.xlu0 %1347
  %1349 = vrot.lane.b32.xlu0 %v937, 12
  %v1350 = vpop.permute.xlu0 %1349
  %1351 = vrot.lane.b32.xlu0 %v939, 12
  %v1352 = vpop.permute.xlu0 %1351
  %1353 = vrot.lane.b32.xlu0 %v941, 12
  %v1354 = vpop.permute.xlu0 %1353
  %1355 = vrot.lane.b32.xlu0 %v943, 12
  %v1356 = vpop.permute.xlu0 %1355
  %1357 = vrot.lane.b32.xlu0 %v945, 12
  %v1358 = vpop.permute.xlu0 %1357
  %1359 = vrot.lane.b32.xlu0 %v947, 12
  %v1360 = vpop.permute.xlu0 %1359
  %1361 = vrot.lane.b32.xlu0 %v949, 12
  %v1362 = vpop.permute.xlu0 %1361
  %1363 = vrot.lane.b32.xlu0 %v951, 12
  %v1364 = vpop.permute.xlu0 %1363
  %1365 = vrot.lane.b32.xlu0 %v953, 12
  %v1366 = vpop.permute.xlu0 %1365
  %1367 = vrot.lane.b32.xlu0 %v1206, 12
  %v1368 = vpop.permute.xlu0 %1367
  %1369 = vrot.lane.b32.xlu0 %v1208, 12
  %v1370 = vpop.permute.xlu0 %1369
  %1371 = vrot.lane.b32.xlu0 %v1207, 12
  %v1372 = vpop.permute.xlu0 %1371
  %vm1455 = vcmask 1044480
  %v1456 = vrot.slane %v196, 3
  %v1457 = vrot.slane %v197, 3
  %v1458 = vsel %vm1455, %v1456, %v1457
  %v1459 = vrot.slane %v198, 3
  %v1460 = vsel %vm1455, %v1457, %v1459
  %v1461 = vrot.slane %v199, 3
  %v1462 = vsel %vm1455, %v1459, %v1461
  %v1463 = vrot.slane %v200, 3
  %v1464 = vsel %vm1455, %v1461, %v1463
  %v1465 = vrot.slane %v201, 3
  %v1466 = vsel %vm1455, %v1463, %v1465
  %v1467 = vrot.slane %v202, 3
  %v1468 = vsel %vm1455, %v1465, %v1467
  %v1469 = vrot.slane %v203, 3
  %v1470 = vsel %vm1455, %v1467, %v1469
  %v1471 = vrot.slane %v204, 3
  %v1472 = vsel %vm1455, %v1469, %v1471
  %v1473 = vrot.slane %v205, 3
  %v1474 = vsel %vm1455, %v1471, %v1473
  %v1475 = vrot.slane %v206, 3
  %v1476 = vsel %vm1455, %v1473, %v1475
  %v1477 = vrot.slane %v207, 3
  %v1478 = vsel %vm1455, %v1475, %v1477
  %v1479 = vrot.slane %v208, 3
  %v1480 = vsel %vm1455, %v1477, %v1479
  %v1481 = vrot.slane %v209, 3
  %v1482 = vsel %vm1455, %v1479, %v1481
  %v1483 = vrot.slane %v210, 3
  %v1484 = vsel %vm1455, %v1481, %v1483
  %v1485 = vrot.slane %v211, 3
  %v1486 = vsel %vm1455, %v1483, %v1485
  %v1487 = vrot.slane %v212, 3
  %v1488 = vsel %vm1455, %v1485, %v1487
  %v1489 = vrot.slane %v213, 3
  %v1490 = vsel %vm1455, %v1487, %v1489
  %v1491 = vrot.slane %v214, 3
  %v1492 = vsel %vm1455, %v1489, %v1491
  %v1493 = vrot.slane %v215, 3
  %v1494 = vsel %vm1455, %v1491, %v1493
  %v1495 = vrot.slane %v216, 3
  %v1496 = vsel %vm1455, %v1493, %v1495
  %v1497 = vrot.slane %v217, 3
  %v1498 = vsel %vm1455, %v1495, %v1497
  %v1499 = vrot.slane %v218, 3
  %v1500 = vsel %vm1455, %v1497, %v1499
  %v1501 = vrot.slane %v219, 3
  %v1502 = vsel %vm1455, %v1499, %v1501
  %v1503 = vrot.slane %v220, 3
  %v1504 = vsel %vm1455, %v1501, %v1503
  %v1505 = vrot.slane %v221, 3
  %v1506 = vsel %vm1455, %v1503, %v1505
  %v1507 = vrot.slane %v222, 3
  %v1508 = vsel %vm1455, %v1505, %v1507
  %v1509 = vrot.slane %v223, 3
  %v1510 = vsel %vm1455, %v1507, %v1509
  %v1511 = vrot.slane %v224, 3
  %v1512 = vsel %vm1455, %v1509, %v1511
  %v1513 = vrot.slane %v225, 3
  %v1514 = vsel %vm1455, %v1511, %v1513
  %v1515 = vrot.slane %v226, 3
  %v1516 = vsel %vm1455, %v1513, %v1515
  %v1517 = vrot.slane %v227, 3
  %v1518 = vsel %vm1455, %v1515, %v1517
  %v1519 = vrot.slane %v228, 3
  %v1520 = vsel %vm1455, %v1517, %v1519
  %v1521 = vrot.slane %v229, 3
  %v1522 = vsel %vm1455, %v1519, %v1521
  %v1523 = vrot.slane %v230, 3
  %v1524 = vsel %vm1455, %v1521, %v1523
  %v1525 = vrot.slane %v231, 3
  %v1526 = vsel %vm1455, %v1523, %v1525
  %v1527 = vrot.slane %v232, 3
  %v1528 = vsel %vm1455, %v1525, %v1527
  %v1529 = vrot.slane %v233, 3
  %v1530 = vsel %vm1455, %v1527, %v1529
  %v1531 = vrot.slane %v234, 3
  %v1532 = vsel %vm1455, %v1529, %v1531
  %v1533 = vrot.slane %v235, 3
  %v1534 = vsel %vm1455, %v1531, %v1533
  %v1535 = vrot.slane %v236, 3
  %v1536 = vsel %vm1455, %v1533, %v1535
  %v1537 = vrot.slane %v237, 3
  %v1538 = vsel %vm1455, %v1535, %v1537
  %v1539 = vrot.slane %v238, 3
  %v1540 = vsel %vm1455, %v1537, %v1539
  %v1541 = vrot.slane %v239, 3
  %v1542 = vsel %vm1455, %v1539, %v1541
  %v1543 = vrot.slane %v240, 3
  %v1544 = vsel %vm1455, %v1541, %v1543
  %v1545 = vrot.slane %v241, 3
  %v1546 = vsel %vm1455, %v1543, %v1545
  %v1547 = vrot.slane %v242, 3
  %v1548 = vsel %vm1455, %v1545, %v1547
  %v1549 = vrot.slane %v243, 3
  %v1550 = vsel %vm1455, %v1547, %v1549
  %v1551 = vrot.slane %v244, 3
  %v1552 = vsel %vm1455, %v1549, %v1551
  %v1553 = vrot.slane %v245, 3
  %v1554 = vsel %vm1455, %v1551, %v1553
  %v1555 = vrot.slane %v246, 3
  %v1556 = vsel %vm1455, %v1553, %v1555
  %v1557 = vrot.slane %v247, 3
  %v1558 = vsel %vm1455, %v1555, %v1557
  %v1559 = vrot.slane %v248, 3
  %v1560 = vsel %vm1455, %v1557, %v1559
  %v1561 = vrot.slane %v249, 3
  %v1562 = vsel %vm1455, %v1559, %v1561
  %v1563 = vrot.slane %v250, 3
  %v1564 = vsel %vm1455, %v1561, %v1563
  %v1565 = vrot.slane %v251, 3
  %v1566 = vsel %vm1455, %v1563, %v1565
  %v1567 = vrot.slane %v252, 3
  %v1568 = vsel %vm1455, %v1565, %v1567
  %v1569 = vrot.slane %v253, 3
  %v1570 = vsel %vm1455, %v1567, %v1569
  %v1571 = vrot.slane %v254, 3
  %v1572 = vsel %vm1455, %v1569, %v1571
  %v1573 = vrot.slane %v255, 3
  %v1574 = vsel %vm1455, %v1571, %v1573
  %v1575 = vrot.slane %v256, 3
  %v1576 = vsel %vm1455, %v1573, %v1575
  %v1577 = vrot.slane %v257, 3
  %v1578 = vsel %vm1455, %v1575, %v1577
  %v1579 = vrot.slane %v258, 3
  %v1580 = vsel %vm1455, %v1577, %v1579
  %v1581 = vrot.slane %v259, 3
  %v1582 = vsel %vm1455, %v1579, %v1581
  %v1583 = vrot.slane %v260, 3
  %v1584 = vsel %vm1455, %v1581, %v1583
  %v1585 = vrot.slane %v261, 3
  %v1586 = vsel %vm1455, %v1583, %v1585
  %v1587 = vrot.slane %v262, 3
  %v1588 = vsel %vm1455, %v1585, %v1587
  %v1589 = vrot.slane %v263, 3
  %v1590 = vsel %vm1455, %v1587, %v1589
  %v1591 = vrot.slane %v264, 3
  %v1592 = vsel %vm1455, %v1589, %v1591
  %v1593 = vrot.slane %v265, 3
  %v1594 = vsel %vm1455, %v1591, %v1593
  %v1595 = vrot.slane %v266, 3
  %v1596 = vsel %vm1455, %v1593, %v1595
  %v1597 = vrot.slane %v267, 3
  %v1598 = vsel %vm1455, %v1595, %v1597
  %v1599 = vrot.slane %v268, 3
  %v1600 = vsel %vm1455, %v1597, %v1599
  %v1601 = vrot.slane %v269, 3
  %v1602 = vsel %vm1455, %v1599, %v1601
  %v1603 = vrot.slane %v270, 3
  %v1604 = vsel %vm1455, %v1601, %v1603
  %v1605 = vrot.slane %v271, 3
  %v1606 = vsel %vm1455, %v1603, %v1605
  %v1607 = vrot.slane %v272, 3
  %v1608 = vsel %vm1455, %v1605, %v1607
  %v1609 = vrot.slane %v273, 3
  %v1610 = vsel %vm1455, %v1607, %v1609
  %v1611 = vrot.slane %v278, 3
  %v1612 = vsel %vm1455, %v1609, %v1611
  %v1613 = vrot.slane %v283, 3
  %v1614 = vsel %vm1455, %v1611, %v1613
  %v1615 = vrot.slane %v284, 3
  %v1616 = vsel %vm1455, %v1613, %v1615
  %1617 = vrot.lane.b32.xlu0 %v1456, 16
  %v1618 = vpop.permute.xlu0 %1617
  %1619 = vrot.lane.b32.xlu0 %v1458, 16
  %v1620 = vpop.permute.xlu0 %1619
  %1621 = vrot.lane.b32.xlu0 %v1460, 16
  %v1622 = vpop.permute.xlu0 %1621
  %1623 = vrot.lane.b32.xlu0 %v1462, 16
  %v1624 = vpop.permute.xlu0 %1623
  %1625 = vrot.lane.b32.xlu0 %v1464, 16
  %v1626 = vpop.permute.xlu0 %1625
  %1627 = vrot.lane.b32.xlu0 %v1466, 16
  %v1628 = vpop.permute.xlu0 %1627
  %1629 = vrot.lane.b32.xlu0 %v1468, 16
  %v1630 = vpop.permute.xlu0 %1629
  %1631 = vrot.lane.b32.xlu0 %v1470, 16
  %v1632 = vpop.permute.xlu0 %1631
  %1633 = vrot.lane.b32.xlu0 %v1472, 16
  %v1634 = vpop.permute.xlu0 %1633
  %1635 = vrot.lane.b32.xlu0 %v1474, 16
  %v1636 = vpop.permute.xlu0 %1635
  %1637 = vrot.lane.b32.xlu0 %v1476, 16
  %v1638 = vpop.permute.xlu0 %1637
  %1639 = vrot.lane.b32.xlu0 %v1478, 16
  %v1640 = vpop.permute.xlu0 %1639
  %1641 = vrot.lane.b32.xlu0 %v1480, 16
  %v1642 = vpop.permute.xlu0 %1641
  %1643 = vrot.lane.b32.xlu0 %v1482, 16
  %v1644 = vpop.permute.xlu0 %1643
  %1645 = vrot.lane.b32.xlu0 %v1484, 16
  %v1646 = vpop.permute.xlu0 %1645
  %1647 = vrot.lane.b32.xlu0 %v1486, 16
  %v1648 = vpop.permute.xlu0 %1647
  %1649 = vrot.lane.b32.xlu0 %v1488, 16
  %v1650 = vpop.permute.xlu0 %1649
  %1651 = vrot.lane.b32.xlu0 %v1490, 16
  %v1652 = vpop.permute.xlu0 %1651
  %1653 = vrot.lane.b32.xlu0 %v1492, 16
  %v1654 = vpop.permute.xlu0 %1653
  %1655 = vrot.lane.b32.xlu0 %v1494, 16
  %v1656 = vpop.permute.xlu0 %1655
  %1657 = vrot.lane.b32.xlu0 %v1496, 16
  %v1658 = vpop.permute.xlu0 %1657
  %1659 = vrot.lane.b32.xlu0 %v1498, 16
  %v1660 = vpop.permute.xlu0 %1659
  %1661 = vrot.lane.b32.xlu0 %v1500, 16
  %v1662 = vpop.permute.xlu0 %1661
  %1663 = vrot.lane.b32.xlu0 %v1502, 16
  %v1664 = vpop.permute.xlu0 %1663
  %1665 = vrot.lane.b32.xlu0 %v1504, 16
  %v1666 = vpop.permute.xlu0 %1665
  %1667 = vrot.lane.b32.xlu0 %v1506, 16
  %v1668 = vpop.permute.xlu0 %1667
  %1669 = vrot.lane.b32.xlu0 %v1508, 16
  %v1670 = vpop.permute.xlu0 %1669
  %1671 = vrot.lane.b32.xlu0 %v1510, 16
  %v1672 = vpop.permute.xlu0 %1671
  %1673 = vrot.lane.b32.xlu0 %v1512, 16
  %v1674 = vpop.permute.xlu0 %1673
  %1675 = vrot.lane.b32.xlu0 %v1514, 16
  %v1676 = vpop.permute.xlu0 %1675
  %1677 = vrot.lane.b32.xlu0 %v1516, 16
  %v1678 = vpop.permute.xlu0 %1677
  %1679 = vrot.lane.b32.xlu0 %v1518, 16
  %v1680 = vpop.permute.xlu0 %1679
  %1681 = vrot.lane.b32.xlu0 %v1520, 16
  %v1682 = vpop.permute.xlu0 %1681
  %1683 = vrot.lane.b32.xlu0 %v1522, 16
  %v1684 = vpop.permute.xlu0 %1683
  %1685 = vrot.lane.b32.xlu0 %v1524, 16
  %v1686 = vpop.permute.xlu0 %1685
  %1687 = vrot.lane.b32.xlu0 %v1526, 16
  %v1688 = vpop.permute.xlu0 %1687
  %1689 = vrot.lane.b32.xlu0 %v1528, 16
  %v1690 = vpop.permute.xlu0 %1689
  %1691 = vrot.lane.b32.xlu0 %v1530, 16
  %v1692 = vpop.permute.xlu0 %1691
  %1693 = vrot.lane.b32.xlu0 %v1532, 16
  %v1694 = vpop.permute.xlu0 %1693
  %1695 = vrot.lane.b32.xlu0 %v1534, 16
  %v1696 = vpop.permute.xlu0 %1695
  %1697 = vrot.lane.b32.xlu0 %v1536, 16
  %v1698 = vpop.permute.xlu0 %1697
  %1699 = vrot.lane.b32.xlu0 %v1538, 16
  %v1700 = vpop.permute.xlu0 %1699
  %1701 = vrot.lane.b32.xlu0 %v1540, 16
  %v1702 = vpop.permute.xlu0 %1701
  %1703 = vrot.lane.b32.xlu0 %v1542, 16
  %v1704 = vpop.permute.xlu0 %1703
  %1705 = vrot.lane.b32.xlu0 %v1544, 16
  %v1706 = vpop.permute.xlu0 %1705
  %1707 = vrot.lane.b32.xlu0 %v1546, 16
  %v1708 = vpop.permute.xlu0 %1707
  %1709 = vrot.lane.b32.xlu0 %v1548, 16
  %v1710 = vpop.permute.xlu0 %1709
  %1711 = vrot.lane.b32.xlu0 %v1550, 16
  %v1712 = vpop.permute.xlu0 %1711
  %1713 = vrot.lane.b32.xlu0 %v1552, 16
  %v1714 = vpop.permute.xlu0 %1713
  %1715 = vrot.lane.b32.xlu0 %v1554, 16
  %v1716 = vpop.permute.xlu0 %1715
  %1717 = vrot.lane.b32.xlu0 %v1556, 16
  %v1718 = vpop.permute.xlu0 %1717
  %1719 = vrot.lane.b32.xlu0 %v1558, 16
  %v1720 = vpop.permute.xlu0 %1719
  %1721 = vrot.lane.b32.xlu0 %v1560, 16
  %v1722 = vpop.permute.xlu0 %1721
  %1723 = vrot.lane.b32.xlu0 %v1562, 16
  %v1724 = vpop.permute.xlu0 %1723
  %1725 = vrot.lane.b32.xlu0 %v1564, 16
  %v1726 = vpop.permute.xlu0 %1725
  %1727 = vrot.lane.b32.xlu0 %v1566, 16
  %v1728 = vpop.permute.xlu0 %1727
  %1729 = vrot.lane.b32.xlu0 %v1568, 16
  %v1730 = vpop.permute.xlu0 %1729
  %1731 = vrot.lane.b32.xlu0 %v1570, 16
  %v1732 = vpop.permute.xlu0 %1731
  %1733 = vrot.lane.b32.xlu0 %v1572, 16
  %v1734 = vpop.permute.xlu0 %1733
  %1735 = vrot.lane.b32.xlu0 %v1574, 16
  %v1736 = vpop.permute.xlu0 %1735
  %1737 = vrot.lane.b32.xlu0 %v1576, 16
  %v1738 = vpop.permute.xlu0 %1737
  %1739 = vrot.lane.b32.xlu0 %v1578, 16
  %v1740 = vpop.permute.xlu0 %1739
  %1741 = vrot.lane.b32.xlu0 %v1580, 16
  %v1742 = vpop.permute.xlu0 %1741
  %1743 = vrot.lane.b32.xlu0 %v1582, 16
  %v1744 = vpop.permute.xlu0 %1743
  %1745 = vrot.lane.b32.xlu0 %v1584, 16
  %v1746 = vpop.permute.xlu0 %1745
  %1747 = vrot.lane.b32.xlu0 %v1586, 16
  %v1748 = vpop.permute.xlu0 %1747
  %1749 = vrot.lane.b32.xlu0 %v1588, 16
  %v1750 = vpop.permute.xlu0 %1749
  %1751 = vrot.lane.b32.xlu0 %v1590, 16
  %v1752 = vpop.permute.xlu0 %1751
  %1753 = vrot.lane.b32.xlu0 %v1592, 16
  %v1754 = vpop.permute.xlu0 %1753
  %1755 = vrot.lane.b32.xlu0 %v1594, 16
  %v1756 = vpop.permute.xlu0 %1755
  %1757 = vrot.lane.b32.xlu0 %v1596, 16
  %v1758 = vpop.permute.xlu0 %1757
  %1759 = vrot.lane.b32.xlu0 %v1598, 16
  %v1760 = vpop.permute.xlu0 %1759
  %1761 = vrot.lane.b32.xlu0 %v1600, 16
  %v1762 = vpop.permute.xlu0 %1761
  %1763 = vrot.lane.b32.xlu0 %v1602, 16
  %v1764 = vpop.permute.xlu0 %1763
  %1765 = vrot.lane.b32.xlu0 %v1604, 16
  %v1766 = vpop.permute.xlu0 %1765
  %1767 = vrot.lane.b32.xlu0 %v1606, 16
  %v1768 = vpop.permute.xlu0 %1767
  %1769 = vrot.lane.b32.xlu0 %v1608, 16
  %v1770 = vpop.permute.xlu0 %1769
  %1771 = vrot.lane.b32.xlu0 %v1610, 16
  %v1772 = vpop.permute.xlu0 %1771
  %1773 = vrot.lane.b32.xlu0 %v1612, 16
  %v1774 = vpop.permute.xlu0 %1773
  %1775 = vrot.lane.b32.xlu0 %v1614, 16
  %v1776 = vpop.permute.xlu0 %1775
  %1777 = vrot.lane.b32.xlu0 %v1616, 16
  %v1778 = vpop.permute.xlu0 %1777
  %1779 = vrot.lane.b32.xlu0 %v1615, 16
  %v1780 = vpop.permute.xlu0 %1779
  %vm1864 = vcmask 1043456
  %v1865 = vrot.slane %v196, 4
  %v1866 = vrot.slane %v197, 4
  %v1867 = vsel %vm1864, %v1865, %v1866
  %v1868 = vrot.slane %v198, 4
  %v1869 = vsel %vm1864, %v1866, %v1868
  %v1870 = vrot.slane %v199, 4
  %v1871 = vsel %vm1864, %v1868, %v1870
  %v1872 = vrot.slane %v200, 4
  %v1873 = vsel %vm1864, %v1870, %v1872
  %v1874 = vrot.slane %v201, 4
  %v1875 = vsel %vm1864, %v1872, %v1874
  %v1876 = vrot.slane %v202, 4
  %v1877 = vsel %vm1864, %v1874, %v1876
  %v1878 = vrot.slane %v203, 4
  %v1879 = vsel %vm1864, %v1876, %v1878
  %v1880 = vrot.slane %v204, 4
  %v1881 = vsel %vm1864, %v1878, %v1880
  %v1882 = vrot.slane %v205, 4
  %v1883 = vsel %vm1864, %v1880, %v1882
  %v1884 = vrot.slane %v206, 4
  %v1885 = vsel %vm1864, %v1882, %v1884
  %v1886 = vrot.slane %v207, 4
  %v1887 = vsel %vm1864, %v1884, %v1886
  %v1888 = vrot.slane %v208, 4
  %v1889 = vsel %vm1864, %v1886, %v1888
  %v1890 = vrot.slane %v209, 4
  %v1891 = vsel %vm1864, %v1888, %v1890
  %v1892 = vrot.slane %v210, 4
  %v1893 = vsel %vm1864, %v1890, %v1892
  %v1894 = vrot.slane %v211, 4
  %v1895 = vsel %vm1864, %v1892, %v1894
  %v1896 = vrot.slane %v212, 4
  %v1897 = vsel %vm1864, %v1894, %v1896
  %v1898 = vrot.slane %v213, 4
  %v1899 = vsel %vm1864, %v1896, %v1898
  %v1900 = vrot.slane %v214, 4
  %v1901 = vsel %vm1864, %v1898, %v1900
  %v1902 = vrot.slane %v215, 4
  %v1903 = vsel %vm1864, %v1900, %v1902
  %v1904 = vrot.slane %v216, 4
  %v1905 = vsel %vm1864, %v1902, %v1904
  %v1906 = vrot.slane %v217, 4
  %v1907 = vsel %vm1864, %v1904, %v1906
  %v1908 = vrot.slane %v218, 4
  %v1909 = vsel %vm1864, %v1906, %v1908
  %v1910 = vrot.slane %v219, 4
  %v1911 = vsel %vm1864, %v1908, %v1910
  %v1912 = vrot.slane %v220, 4
  %v1913 = vsel %vm1864, %v1910, %v1912
  %v1914 = vrot.slane %v221, 4
  %v1915 = vsel %vm1864, %v1912, %v1914
  %v1916 = vrot.slane %v222, 4
  %v1917 = vsel %vm1864, %v1914, %v1916
  %v1918 = vrot.slane %v223, 4
  %v1919 = vsel %vm1864, %v1916, %v1918
  %v1920 = vrot.slane %v224, 4
  %v1921 = vsel %vm1864, %v1918, %v1920
  %v1922 = vrot.slane %v225, 4
  %v1923 = vsel %vm1864, %v1920, %v1922
  %v1924 = vrot.slane %v226, 4
  %v1925 = vsel %vm1864, %v1922, %v1924
  %v1926 = vrot.slane %v227, 4
  %v1927 = vsel %vm1864, %v1924, %v1926
  %v1928 = vrot.slane %v228, 4
  %v1929 = vsel %vm1864, %v1926, %v1928
  %v1930 = vrot.slane %v229, 4
  %v1931 = vsel %vm1864, %v1928, %v1930
  %v1932 = vrot.slane %v230, 4
  %v1933 = vsel %vm1864, %v1930, %v1932
  %v1934 = vrot.slane %v231, 4
  %v1935 = vsel %vm1864, %v1932, %v1934
  %v1936 = vrot.slane %v232, 4
  %v1937 = vsel %vm1864, %v1934, %v1936
  %v1938 = vrot.slane %v233, 4
  %v1939 = vsel %vm1864, %v1936, %v1938
  %v1940 = vrot.slane %v234, 4
  %v1941 = vsel %vm1864, %v1938, %v1940
  %v1942 = vrot.slane %v235, 4
  %v1943 = vsel %vm1864, %v1940, %v1942
  %v1944 = vrot.slane %v236, 4
  %v1945 = vsel %vm1864, %v1942, %v1944
  %v1946 = vrot.slane %v237, 4
  %v1947 = vsel %vm1864, %v1944, %v1946
  %v1948 = vrot.slane %v238, 4
  %v1949 = vsel %vm1864, %v1946, %v1948
  %v1950 = vrot.slane %v239, 4
  %v1951 = vsel %vm1864, %v1948, %v1950
  %v1952 = vrot.slane %v240, 4
  %v1953 = vsel %vm1864, %v1950, %v1952
  %v1954 = vrot.slane %v241, 4
  %v1955 = vsel %vm1864, %v1952, %v1954
  %v1956 = vrot.slane %v242, 4
  %v1957 = vsel %vm1864, %v1954, %v1956
  %v1958 = vrot.slane %v243, 4
  %v1959 = vsel %vm1864, %v1956, %v1958
  %v1960 = vrot.slane %v244, 4
  %v1961 = vsel %vm1864, %v1958, %v1960
  %v1962 = vrot.slane %v245, 4
  %v1963 = vsel %vm1864, %v1960, %v1962
  %v1964 = vrot.slane %v246, 4
  %v1965 = vsel %vm1864, %v1962, %v1964
  %v1966 = vrot.slane %v247, 4
  %v1967 = vsel %vm1864, %v1964, %v1966
  %v1968 = vrot.slane %v248, 4
  %v1969 = vsel %vm1864, %v1966, %v1968
  %v1970 = vrot.slane %v249, 4
  %v1971 = vsel %vm1864, %v1968, %v1970
  %v1972 = vrot.slane %v250, 4
  %v1973 = vsel %vm1864, %v1970, %v1972
  %v1974 = vrot.slane %v251, 4
  %v1975 = vsel %vm1864, %v1972, %v1974
  %v1976 = vrot.slane %v252, 4
  %v1977 = vsel %vm1864, %v1974, %v1976
  %v1978 = vrot.slane %v253, 4
  %v1979 = vsel %vm1864, %v1976, %v1978
  %v1980 = vrot.slane %v254, 4
  %v1981 = vsel %vm1864, %v1978, %v1980
  %v1982 = vrot.slane %v255, 4
  %v1983 = vsel %vm1864, %v1980, %v1982
  %v1984 = vrot.slane %v256, 4
  %v1985 = vsel %vm1864, %v1982, %v1984
  %v1986 = vrot.slane %v257, 4
  %v1987 = vsel %vm1864, %v1984, %v1986
  %v1988 = vrot.slane %v258, 4
  %v1989 = vsel %vm1864, %v1986, %v1988
  %v1990 = vrot.slane %v259, 4
  %v1991 = vsel %vm1864, %v1988, %v1990
  %v1992 = vrot.slane %v260, 4
  %v1993 = vsel %vm1864, %v1990, %v1992
  %v1994 = vrot.slane %v261, 4
  %v1995 = vsel %vm1864, %v1992, %v1994
  %v1996 = vrot.slane %v262, 4
  %v1997 = vsel %vm1864, %v1994, %v1996
  %v1998 = vrot.slane %v263, 4
  %v1999 = vsel %vm1864, %v1996, %v1998
  %v2000 = vrot.slane %v264, 4
  %v2001 = vsel %vm1864, %v1998, %v2000
  %v2002 = vrot.slane %v265, 4
  %v2003 = vsel %vm1864, %v2000, %v2002
  %v2004 = vrot.slane %v266, 4
  %v2005 = vsel %vm1864, %v2002, %v2004
  %v2006 = vrot.slane %v267, 4
  %v2007 = vsel %vm1864, %v2004, %v2006
  %v2008 = vrot.slane %v268, 4
  %v2009 = vsel %vm1864, %v2006, %v2008
  %v2010 = vrot.slane %v269, 4
  %v2011 = vsel %vm1864, %v2008, %v2010
  %v2012 = vrot.slane %v270, 4
  %v2013 = vsel %vm1864, %v2010, %v2012
  %v2014 = vrot.slane %v271, 4
  %v2015 = vsel %vm1864, %v2012, %v2014
  %v2016 = vrot.slane %v272, 4
  %v2017 = vsel %vm1864, %v2014, %v2016
  %v2018 = vrot.slane %v273, 4
  %v2019 = vsel %vm1864, %v2016, %v2018
  %v2020 = vrot.slane %v278, 4
  %v2021 = vsel %vm1864, %v2018, %v2020
  %v2022 = vrot.slane %v283, 4
  %v2023 = vsel %vm1864, %v2020, %v2022
  %v2024 = vrot.slane %v284, 4
  %v2025 = vsel %vm1864, %v2022, %v2024
  %v2026 = vrot.slane %v286, 4
  %v2027 = vsel %vm1864, %v2024, %v2026
  %2028 = vrot.lane.b32.xlu0 %v1865, 20
  %v2029 = vpop.permute.xlu0 %2028
  %2030 = vrot.lane.b32.xlu0 %v1867, 20
  %v2031 = vpop.permute.xlu0 %2030
  %2032 = vrot.lane.b32.xlu0 %v1869, 20
  %v2033 = vpop.permute.xlu0 %2032
  %2034 = vrot.lane.b32.xlu0 %v1871, 20
  %v2035 = vpop.permute.xlu0 %2034
  %2036 = vrot.lane.b32.xlu0 %v1873, 20
  %v2037 = vpop.permute.xlu0 %2036
  %2038 = vrot.lane.b32.xlu0 %v1875, 20
  %v2039 = vpop.permute.xlu0 %2038
  %2040 = vrot.lane.b32.xlu0 %v1877, 20
  %v2041 = vpop.permute.xlu0 %2040
  %2042 = vrot.lane.b32.xlu0 %v1879, 20
  %v2043 = vpop.permute.xlu0 %2042
  %2044 = vrot.lane.b32.xlu0 %v1881, 20
  %v2045 = vpop.permute.xlu0 %2044
  %2046 = vrot.lane.b32.xlu0 %v1883, 20
  %v2047 = vpop.permute.xlu0 %2046
  %2048 = vrot.lane.b32.xlu0 %v1885, 20
  %v2049 = vpop.permute.xlu0 %2048
  %2050 = vrot.lane.b32.xlu0 %v1887, 20
  %v2051 = vpop.permute.xlu0 %2050
  %2052 = vrot.lane.b32.xlu0 %v1889, 20
  %v2053 = vpop.permute.xlu0 %2052
  %2054 = vrot.lane.b32.xlu0 %v1891, 20
  %v2055 = vpop.permute.xlu0 %2054
  %2056 = vrot.lane.b32.xlu0 %v1893, 20
  %v2057 = vpop.permute.xlu0 %2056
  %2058 = vrot.lane.b32.xlu0 %v1895, 20
  %v2059 = vpop.permute.xlu0 %2058
  %2060 = vrot.lane.b32.xlu0 %v1897, 20
  %v2061 = vpop.permute.xlu0 %2060
  %2062 = vrot.lane.b32.xlu0 %v1899, 20
  %v2063 = vpop.permute.xlu0 %2062
  %2064 = vrot.lane.b32.xlu0 %v1901, 20
  %v2065 = vpop.permute.xlu0 %2064
  %2066 = vrot.lane.b32.xlu0 %v1903, 20
  %v2067 = vpop.permute.xlu0 %2066
  %2068 = vrot.lane.b32.xlu0 %v1905, 20
  %v2069 = vpop.permute.xlu0 %2068
  %2070 = vrot.lane.b32.xlu0 %v1907, 20
  %v2071 = vpop.permute.xlu0 %2070
  %2072 = vrot.lane.b32.xlu0 %v1909, 20
  %v2073 = vpop.permute.xlu0 %2072
  %2074 = vrot.lane.b32.xlu0 %v1911, 20
  %v2075 = vpop.permute.xlu0 %2074
  %2076 = vrot.lane.b32.xlu0 %v1913, 20
  %v2077 = vpop.permute.xlu0 %2076
  %2078 = vrot.lane.b32.xlu0 %v1915, 20
  %v2079 = vpop.permute.xlu0 %2078
  %2080 = vrot.lane.b32.xlu0 %v1917, 20
  %v2081 = vpop.permute.xlu0 %2080
  %2082 = vrot.lane.b32.xlu0 %v1919, 20
  %v2083 = vpop.permute.xlu0 %2082
  %2084 = vrot.lane.b32.xlu0 %v1921, 20
  %v2085 = vpop.permute.xlu0 %2084
  %2086 = vrot.lane.b32.xlu0 %v1923, 20
  %v2087 = vpop.permute.xlu0 %2086
  %2088 = vrot.lane.b32.xlu0 %v1925, 20
  %v2089 = vpop.permute.xlu0 %2088
  %2090 = vrot.lane.b32.xlu0 %v1927, 20
  %v2091 = vpop.permute.xlu0 %2090
  %2092 = vrot.lane.b32.xlu0 %v1929, 20
  %v2093 = vpop.permute.xlu0 %2092
  %2094 = vrot.lane.b32.xlu0 %v1931, 20
  %v2095 = vpop.permute.xlu0 %2094
  %2096 = vrot.lane.b32.xlu0 %v1933, 20
  %v2097 = vpop.permute.xlu0 %2096
  %2098 = vrot.lane.b32.xlu0 %v1935, 20
  %v2099 = vpop.permute.xlu0 %2098
  %2100 = vrot.lane.b32.xlu0 %v1937, 20
  %v2101 = vpop.permute.xlu0 %2100
  %2102 = vrot.lane.b32.xlu0 %v1939, 20
  %v2103 = vpop.permute.xlu0 %2102
  %2104 = vrot.lane.b32.xlu0 %v1941, 20
  %v2105 = vpop.permute.xlu0 %2104
  %2106 = vrot.lane.b32.xlu0 %v1943, 20
  %v2107 = vpop.permute.xlu0 %2106
  %2108 = vrot.lane.b32.xlu0 %v1945, 20
  %v2109 = vpop.permute.xlu0 %2108
  %2110 = vrot.lane.b32.xlu0 %v1947, 20
  %v2111 = vpop.permute.xlu0 %2110
  %2112 = vrot.lane.b32.xlu0 %v1949, 20
  %v2113 = vpop.permute.xlu0 %2112
  %2114 = vrot.lane.b32.xlu0 %v1951, 20
  %v2115 = vpop.permute.xlu0 %2114
  %2116 = vrot.lane.b32.xlu0 %v1953, 20
  %v2117 = vpop.permute.xlu0 %2116
  %2118 = vrot.lane.b32.xlu0 %v1955, 20
  %v2119 = vpop.permute.xlu0 %2118
  %2120 = vrot.lane.b32.xlu0 %v1957, 20
  %v2121 = vpop.permute.xlu0 %2120
  %2122 = vrot.lane.b32.xlu0 %v1959, 20
  %v2123 = vpop.permute.xlu0 %2122
  %2124 = vrot.lane.b32.xlu0 %v1961, 20
  %v2125 = vpop.permute.xlu0 %2124
  %2126 = vrot.lane.b32.xlu0 %v1963, 20
  %v2127 = vpop.permute.xlu0 %2126
  %2128 = vrot.lane.b32.xlu0 %v1965, 20
  %v2129 = vpop.permute.xlu0 %2128
  %2130 = vrot.lane.b32.xlu0 %v1967, 20
  %v2131 = vpop.permute.xlu0 %2130
  %2132 = vrot.lane.b32.xlu0 %v1969, 20
  %v2133 = vpop.permute.xlu0 %2132
  %2134 = vrot.lane.b32.xlu0 %v1971, 20
  %v2135 = vpop.permute.xlu0 %2134
  %2136 = vrot.lane.b32.xlu0 %v1973, 20
  %v2137 = vpop.permute.xlu0 %2136
  %2138 = vrot.lane.b32.xlu0 %v1975, 20
  %v2139 = vpop.permute.xlu0 %2138
  %2140 = vrot.lane.b32.xlu0 %v1977, 20
  %v2141 = vpop.permute.xlu0 %2140
  %2142 = vrot.lane.b32.xlu0 %v1979, 20
  %v2143 = vpop.permute.xlu0 %2142
  %2144 = vrot.lane.b32.xlu0 %v1981, 20
  %v2145 = vpop.permute.xlu0 %2144
  %2146 = vrot.lane.b32.xlu0 %v1983, 20
  %v2147 = vpop.permute.xlu0 %2146
  %2148 = vrot.lane.b32.xlu0 %v1985, 20
  %v2149 = vpop.permute.xlu0 %2148
  %2150 = vrot.lane.b32.xlu0 %v1987, 20
  %v2151 = vpop.permute.xlu0 %2150
  %2152 = vrot.lane.b32.xlu0 %v1989, 20
  %v2153 = vpop.permute.xlu0 %2152
  %2154 = vrot.lane.b32.xlu0 %v1991, 20
  %v2155 = vpop.permute.xlu0 %2154
  %2156 = vrot.lane.b32.xlu0 %v1993, 20
  %v2157 = vpop.permute.xlu0 %2156
  %2158 = vrot.lane.b32.xlu0 %v1995, 20
  %v2159 = vpop.permute.xlu0 %2158
  %2160 = vrot.lane.b32.xlu0 %v1997, 20
  %v2161 = vpop.permute.xlu0 %2160
  %2162 = vrot.lane.b32.xlu0 %v1999, 20
  %v2163 = vpop.permute.xlu0 %2162
  %2164 = vrot.lane.b32.xlu0 %v2001, 20
  %v2165 = vpop.permute.xlu0 %2164
  %2166 = vrot.lane.b32.xlu0 %v2003, 20
  %v2167 = vpop.permute.xlu0 %2166
  %2168 = vrot.lane.b32.xlu0 %v2005, 20
  %v2169 = vpop.permute.xlu0 %2168
  %2170 = vrot.lane.b32.xlu0 %v2007, 20
  %v2171 = vpop.permute.xlu0 %2170
  %2172 = vrot.lane.b32.xlu0 %v2009, 20
  %v2173 = vpop.permute.xlu0 %2172
  %2174 = vrot.lane.b32.xlu0 %v2011, 20
  %v2175 = vpop.permute.xlu0 %2174
  %2176 = vrot.lane.b32.xlu0 %v2013, 20
  %v2177 = vpop.permute.xlu0 %2176
  %2178 = vrot.lane.b32.xlu0 %v2015, 20
  %v2179 = vpop.permute.xlu0 %2178
  %2180 = vrot.lane.b32.xlu0 %v2017, 20
  %v2181 = vpop.permute.xlu0 %2180
  %2182 = vrot.lane.b32.xlu0 %v2019, 20
  %v2183 = vpop.permute.xlu0 %2182
  %2184 = vrot.lane.b32.xlu0 %v2021, 20
  %v2185 = vpop.permute.xlu0 %2184
  %2186 = vrot.lane.b32.xlu0 %v2023, 20
  %v2187 = vpop.permute.xlu0 %2186
  %2188 = vrot.lane.b32.xlu0 %v2025, 20
  %v2189 = vpop.permute.xlu0 %2188
  %2190 = vrot.lane.b32.xlu0 %v2027, 20
  %v2191 = vpop.permute.xlu0 %2190
  %v2277 = vrot.slane %v290, 4
  %v2278 = vsel %vm1864, %v2024, %v2277
  %v2279 = vrot.slane %v291, 4
  %v2280 = vsel %vm1864, %v2277, %v2279
  %v2281 = vrot.slane %v292, 4
  %v2282 = vsel %vm1864, %v2279, %v2281
  %2283 = vrot.lane.b32.xlu0 %v1868, 24
  %v2284 = vpop.permute.xlu0 %2283
  %2285 = vrot.lane.b32.xlu0 %v1871, 24
  %v2286 = vpop.permute.xlu0 %2285
  %2287 = vrot.lane.b32.xlu0 %v1873, 24
  %v2288 = vpop.permute.xlu0 %2287
  %2289 = vrot.lane.b32.xlu0 %v1875, 24
  %v2290 = vpop.permute.xlu0 %2289
  %2291 = vrot.lane.b32.xlu0 %v1877, 24
  %v2292 = vpop.permute.xlu0 %2291
  %2293 = vrot.lane.b32.xlu0 %v1879, 24
  %v2294 = vpop.permute.xlu0 %2293
  %2295 = vrot.lane.b32.xlu0 %v1881, 24
  %v2296 = vpop.permute.xlu0 %2295
  %2297 = vrot.lane.b32.xlu0 %v1883, 24
  %v2298 = vpop.permute.xlu0 %2297
  %2299 = vrot.lane.b32.xlu0 %v1885, 24
  %v2300 = vpop.permute.xlu0 %2299
  %2301 = vrot.lane.b32.xlu0 %v1887, 24
  %v2302 = vpop.permute.xlu0 %2301
  %2303 = vrot.lane.b32.xlu0 %v1889, 24
  %v2304 = vpop.permute.xlu0 %2303
  %2305 = vrot.lane.b32.xlu0 %v1891, 24
  %v2306 = vpop.permute.xlu0 %2305
  %2307 = vrot.lane.b32.xlu0 %v1893, 24
  %v2308 = vpop.permute.xlu0 %2307
  %2309 = vrot.lane.b32.xlu0 %v1895, 24
  %v2310 = vpop.permute.xlu0 %2309
  %2311 = vrot.lane.b32.xlu0 %v1897, 24
  %v2312 = vpop.permute.xlu0 %2311
  %2313 = vrot.lane.b32.xlu0 %v1899, 24
  %v2314 = vpop.permute.xlu0 %2313
  %2315 = vrot.lane.b32.xlu0 %v1901, 24
  %v2316 = vpop.permute.xlu0 %2315
  %2317 = vrot.lane.b32.xlu0 %v1903, 24
  %v2318 = vpop.permute.xlu0 %2317
  %2319 = vrot.lane.b32.xlu0 %v1905, 24
  %v2320 = vpop.permute.xlu0 %2319
  %2321 = vrot.lane.b32.xlu0 %v1907, 24
  %v2322 = vpop.permute.xlu0 %2321
  %2323 = vrot.lane.b32.xlu0 %v1909, 24
  %v2324 = vpop.permute.xlu0 %2323
  %2325 = vrot.lane.b32.xlu0 %v1911, 24
  %v2326 = vpop.permute.xlu0 %2325
  %2327 = vrot.lane.b32.xlu0 %v1913, 24
  %v2328 = vpop.permute.xlu0 %2327
  %2329 = vrot.lane.b32.xlu0 %v1915, 24
  %v2330 = vpop.permute.xlu0 %2329
  %2331 = vrot.lane.b32.xlu0 %v1917, 24
  %v2332 = vpop.permute.xlu0 %2331
  %2333 = vrot.lane.b32.xlu0 %v1919, 24
  %v2334 = vpop.permute.xlu0 %2333
  %2335 = vrot.lane.b32.xlu0 %v1921, 24
  %v2336 = vpop.permute.xlu0 %2335
  %2337 = vrot.lane.b32.xlu0 %v1923, 24
  %v2338 = vpop.permute.xlu0 %2337
  %2339 = vrot.lane.b32.xlu0 %v1925, 24
  %v2340 = vpop.permute.xlu0 %2339
  %2341 = vrot.lane.b32.xlu0 %v1927, 24
  %v2342 = vpop.permute.xlu0 %2341
  %2343 = vrot.lane.b32.xlu0 %v1929, 24
  %v2344 = vpop.permute.xlu0 %2343
  %2345 = vrot.lane.b32.xlu0 %v1931, 24
  %v2346 = vpop.permute.xlu0 %2345
  %2347 = vrot.lane.b32.xlu0 %v1933, 24
  %v2348 = vpop.permute.xlu0 %2347
  %2349 = vrot.lane.b32.xlu0 %v1935, 24
  %v2350 = vpop.permute.xlu0 %2349
  %2351 = vrot.lane.b32.xlu0 %v1937, 24
  %v2352 = vpop.permute.xlu0 %2351
  %2353 = vrot.lane.b32.xlu0 %v1939, 24
  %v2354 = vpop.permute.xlu0 %2353
  %2355 = vrot.lane.b32.xlu0 %v1941, 24
  %v2356 = vpop.permute.xlu0 %2355
  %2357 = vrot.lane.b32.xlu0 %v1943, 24
  %v2358 = vpop.permute.xlu0 %2357
  %2359 = vrot.lane.b32.xlu0 %v1945, 24
  %v2360 = vpop.permute.xlu0 %2359
  %2361 = vrot.lane.b32.xlu0 %v1947, 24
  %v2362 = vpop.permute.xlu0 %2361
  %2363 = vrot.lane.b32.xlu0 %v1949, 24
  %v2364 = vpop.permute.xlu0 %2363
  %2365 = vrot.lane.b32.xlu0 %v1951, 24
  %v2366 = vpop.permute.xlu0 %2365
  %2367 = vrot.lane.b32.xlu0 %v1953, 24
  %v2368 = vpop.permute.xlu0 %2367
  %2369 = vrot.lane.b32.xlu0 %v1955, 24
  %v2370 = vpop.permute.xlu0 %2369
  %2371 = vrot.lane.b32.xlu0 %v1957, 24
  %v2372 = vpop.permute.xlu0 %2371
  %2373 = vrot.lane.b32.xlu0 %v1959, 24
  %v2374 = vpop.permute.xlu0 %2373
  %2375 = vrot.lane.b32.xlu0 %v1961, 24
  %v2376 = vpop.permute.xlu0 %2375
  %2377 = vrot.lane.b32.xlu0 %v1963, 24
  %v2378 = vpop.permute.xlu0 %2377
  %2379 = vrot.lane.b32.xlu0 %v1965, 24
  %v2380 = vpop.permute.xlu0 %2379
  %2381 = vrot.lane.b32.xlu0 %v1967, 24
  %v2382 = vpop.permute.xlu0 %2381
  %2383 = vrot.lane.b32.xlu0 %v1969, 24
  %v2384 = vpop.permute.xlu0 %2383
  %2385 = vrot.lane.b32.xlu0 %v1971, 24
  %v2386 = vpop.permute.xlu0 %2385
  %2387 = vrot.lane.b32.xlu0 %v1973, 24
  %v2388 = vpop.permute.xlu0 %2387
  %2389 = vrot.lane.b32.xlu0 %v1975, 24
  %v2390 = vpop.permute.xlu0 %2389
  %2391 = vrot.lane.b32.xlu0 %v1977, 24
  %v2392 = vpop.permute.xlu0 %2391
  %2393 = vrot.lane.b32.xlu0 %v1979, 24
  %v2394 = vpop.permute.xlu0 %2393
  %2395 = vrot.lane.b32.xlu0 %v1981, 24
  %v2396 = vpop.permute.xlu0 %2395
  %2397 = vrot.lane.b32.xlu0 %v1983, 24
  %v2398 = vpop.permute.xlu0 %2397
  %2399 = vrot.lane.b32.xlu0 %v1985, 24
  %v2400 = vpop.permute.xlu0 %2399
  %2401 = vrot.lane.b32.xlu0 %v1987, 24
  %v2402 = vpop.permute.xlu0 %2401
  %2403 = vrot.lane.b32.xlu0 %v1989, 24
  %v2404 = vpop.permute.xlu0 %2403
  %2405 = vrot.lane.b32.xlu0 %v1991, 24
  %v2406 = vpop.permute.xlu0 %2405
  %2407 = vrot.lane.b32.xlu0 %v1993, 24
  %v2408 = vpop.permute.xlu0 %2407
  %2409 = vrot.lane.b32.xlu0 %v1995, 24
  %v2410 = vpop.permute.xlu0 %2409
  %2411 = vrot.lane.b32.xlu0 %v1997, 24
  %v2412 = vpop.permute.xlu0 %2411
  %2413 = vrot.lane.b32.xlu0 %v1999, 24
  %v2414 = vpop.permute.xlu0 %2413
  %2415 = vrot.lane.b32.xlu0 %v2001, 24
  %v2416 = vpop.permute.xlu0 %2415
  %2417 = vrot.lane.b32.xlu0 %v2003, 24
  %v2418 = vpop.permute.xlu0 %2417
  %2419 = vrot.lane.b32.xlu0 %v2005, 24
  %v2420 = vpop.permute.xlu0 %2419
  %2421 = vrot.lane.b32.xlu0 %v2007, 24
  %v2422 = vpop.permute.xlu0 %2421
  %2423 = vrot.lane.b32.xlu0 %v2009, 24
  %v2424 = vpop.permute.xlu0 %2423
  %2425 = vrot.lane.b32.xlu0 %v2011, 24
  %v2426 = vpop.permute.xlu0 %2425
  %2427 = vrot.lane.b32.xlu0 %v2013, 24
  %v2428 = vpop.permute.xlu0 %2427
  %2429 = vrot.lane.b32.xlu0 %v2015, 24
  %v2430 = vpop.permute.xlu0 %2429
  %2431 = vrot.lane.b32.xlu0 %v2017, 24
  %v2432 = vpop.permute.xlu0 %2431
  %2433 = vrot.lane.b32.xlu0 %v2019, 24
  %v2434 = vpop.permute.xlu0 %2433
  %2435 = vrot.lane.b32.xlu0 %v2021, 24
  %v2436 = vpop.permute.xlu0 %2435
  %2437 = vrot.lane.b32.xlu0 %v2023, 24
  %v2438 = vpop.permute.xlu0 %2437
  %2439 = vrot.lane.b32.xlu0 %v2025, 24
  %v2440 = vpop.permute.xlu0 %2439
  %2441 = vrot.lane.b32.xlu0 %v2278, 24
  %v2442 = vpop.permute.xlu0 %2441
  %2443 = vrot.lane.b32.xlu0 %v2280, 24
  %v2444 = vpop.permute.xlu0 %2443
  %2445 = vrot.lane.b32.xlu0 %v2282, 24
  %v2446 = vpop.permute.xlu0 %2445
  %vm2530 = vcmask 1042432
  %v2531 = vrot.slane %v294, 5
  %v2532 = vrot.slane %v199, 5
  %v2533 = vsel %vm2530, %v2531, %v2532
  %v2534 = vrot.slane %v200, 5
  %v2535 = vsel %vm2530, %v2532, %v2534
  %v2536 = vrot.slane %v201, 5
  %v2537 = vsel %vm2530, %v2534, %v2536
  %v2538 = vrot.slane %v202, 5
  %v2539 = vsel %vm2530, %v2536, %v2538
  %v2540 = vrot.slane %v203, 5
  %v2541 = vsel %vm2530, %v2538, %v2540
  %v2542 = vrot.slane %v204, 5
  %v2543 = vsel %vm2530, %v2540, %v2542
  %v2544 = vrot.slane %v205, 5
  %v2545 = vsel %vm2530, %v2542, %v2544
  %v2546 = vrot.slane %v206, 5
  %v2547 = vsel %vm2530, %v2544, %v2546
  %v2548 = vrot.slane %v207, 5
  %v2549 = vsel %vm2530, %v2546, %v2548
  %v2550 = vrot.slane %v208, 5
  %v2551 = vsel %vm2530, %v2548, %v2550
  %v2552 = vrot.slane %v209, 5
  %v2553 = vsel %vm2530, %v2550, %v2552
  %v2554 = vrot.slane %v210, 5
  %v2555 = vsel %vm2530, %v2552, %v2554
  %v2556 = vrot.slane %v211, 5
  %v2557 = vsel %vm2530, %v2554, %v2556
  %v2558 = vrot.slane %v212, 5
  %v2559 = vsel %vm2530, %v2556, %v2558
  %v2560 = vrot.slane %v213, 5
  %v2561 = vsel %vm2530, %v2558, %v2560
  %v2562 = vrot.slane %v214, 5
  %v2563 = vsel %vm2530, %v2560, %v2562
  %v2564 = vrot.slane %v215, 5
  %v2565 = vsel %vm2530, %v2562, %v2564
  %v2566 = vrot.slane %v216, 5
  %v2567 = vsel %vm2530, %v2564, %v2566
  %v2568 = vrot.slane %v217, 5
  %v2569 = vsel %vm2530, %v2566, %v2568
  %v2570 = vrot.slane %v218, 5
  %v2571 = vsel %vm2530, %v2568, %v2570
  %v2572 = vrot.slane %v219, 5
  %v2573 = vsel %vm2530, %v2570, %v2572
  %v2574 = vrot.slane %v220, 5
  %v2575 = vsel %vm2530, %v2572, %v2574
  %v2576 = vrot.slane %v221, 5
  %v2577 = vsel %vm2530, %v2574, %v2576
  %v2578 = vrot.slane %v222, 5
  %v2579 = vsel %vm2530, %v2576, %v2578
  %v2580 = vrot.slane %v223, 5
  %v2581 = vsel %vm2530, %v2578, %v2580
  %v2582 = vrot.slane %v224, 5
  %v2583 = vsel %vm2530, %v2580, %v2582
  %v2584 = vrot.slane %v225, 5
  %v2585 = vsel %vm2530, %v2582, %v2584
  %v2586 = vrot.slane %v226, 5
  %v2587 = vsel %vm2530, %v2584, %v2586
  %v2588 = vrot.slane %v227, 5
  %v2589 = vsel %vm2530, %v2586, %v2588
  %v2590 = vrot.slane %v228, 5
  %v2591 = vsel %vm2530, %v2588, %v2590
  %v2592 = vrot.slane %v229, 5
  %v2593 = vsel %vm2530, %v2590, %v2592
  %v2594 = vrot.slane %v230, 5
  %v2595 = vsel %vm2530, %v2592, %v2594
  %v2596 = vrot.slane %v231, 5
  %v2597 = vsel %vm2530, %v2594, %v2596
  %v2598 = vrot.slane %v232, 5
  %v2599 = vsel %vm2530, %v2596, %v2598
  %v2600 = vrot.slane %v233, 5
  %v2601 = vsel %vm2530, %v2598, %v2600
  %v2602 = vrot.slane %v234, 5
  %v2603 = vsel %vm2530, %v2600, %v2602
  %v2604 = vrot.slane %v235, 5
  %v2605 = vsel %vm2530, %v2602, %v2604
  %v2606 = vrot.slane %v236, 5
  %v2607 = vsel %vm2530, %v2604, %v2606
  %v2608 = vrot.slane %v237, 5
  %v2609 = vsel %vm2530, %v2606, %v2608
  %v2610 = vrot.slane %v238, 5
  %v2611 = vsel %vm2530, %v2608, %v2610
  %v2612 = vrot.slane %v239, 5
  %v2613 = vsel %vm2530, %v2610, %v2612
  %v2614 = vrot.slane %v240, 5
  %v2615 = vsel %vm2530, %v2612, %v2614
  %v2616 = vrot.slane %v241, 5
  %v2617 = vsel %vm2530, %v2614, %v2616
  %v2618 = vrot.slane %v242, 5
  %v2619 = vsel %vm2530, %v2616, %v2618
  %v2620 = vrot.slane %v243, 5
  %v2621 = vsel %vm2530, %v2618, %v2620
  %v2622 = vrot.slane %v244, 5
  %v2623 = vsel %vm2530, %v2620, %v2622
  %v2624 = vrot.slane %v245, 5
  %v2625 = vsel %vm2530, %v2622, %v2624
  %v2626 = vrot.slane %v246, 5
  %v2627 = vsel %vm2530, %v2624, %v2626
  %v2628 = vrot.slane %v247, 5
  %v2629 = vsel %vm2530, %v2626, %v2628
  %v2630 = vrot.slane %v248, 5
  %v2631 = vsel %vm2530, %v2628, %v2630
  %v2632 = vrot.slane %v249, 5
  %v2633 = vsel %vm2530, %v2630, %v2632
  %v2634 = vrot.slane %v250, 5
  %v2635 = vsel %vm2530, %v2632, %v2634
  %v2636 = vrot.slane %v251, 5
  %v2637 = vsel %vm2530, %v2634, %v2636
  %v2638 = vrot.slane %v252, 5
  %v2639 = vsel %vm2530, %v2636, %v2638
  %v2640 = vrot.slane %v253, 5
  %v2641 = vsel %vm2530, %v2638, %v2640
  %v2642 = vrot.slane %v254, 5
  %v2643 = vsel %vm2530, %v2640, %v2642
  %v2644 = vrot.slane %v255, 5
  %v2645 = vsel %vm2530, %v2642, %v2644
  %v2646 = vrot.slane %v256, 5
  %v2647 = vsel %vm2530, %v2644, %v2646
  %v2648 = vrot.slane %v257, 5
  %v2649 = vsel %vm2530, %v2646, %v2648
  %v2650 = vrot.slane %v258, 5
  %v2651 = vsel %vm2530, %v2648, %v2650
  %v2652 = vrot.slane %v259, 5
  %v2653 = vsel %vm2530, %v2650, %v2652
  %v2654 = vrot.slane %v260, 5
  %v2655 = vsel %vm2530, %v2652, %v2654
  %v2656 = vrot.slane %v261, 5
  %v2657 = vsel %vm2530, %v2654, %v2656
  %v2658 = vrot.slane %v262, 5
  %v2659 = vsel %vm2530, %v2656, %v2658
  %v2660 = vrot.slane %v263, 5
  %v2661 = vsel %vm2530, %v2658, %v2660
  %v2662 = vrot.slane %v264, 5
  %v2663 = vsel %vm2530, %v2660, %v2662
  %v2664 = vrot.slane %v265, 5
  %v2665 = vsel %vm2530, %v2662, %v2664
  %v2666 = vrot.slane %v266, 5
  %v2667 = vsel %vm2530, %v2664, %v2666
  %v2668 = vrot.slane %v267, 5
  %v2669 = vsel %vm2530, %v2666, %v2668
  %v2670 = vrot.slane %v268, 5
  %v2671 = vsel %vm2530, %v2668, %v2670
  %v2672 = vrot.slane %v269, 5
  %v2673 = vsel %vm2530, %v2670, %v2672
  %v2674 = vrot.slane %v270, 5
  %v2675 = vsel %vm2530, %v2672, %v2674
  %v2676 = vrot.slane %v271, 5
  %v2677 = vsel %vm2530, %v2674, %v2676
  %v2678 = vrot.slane %v272, 5
  %v2679 = vsel %vm2530, %v2676, %v2678
  %v2680 = vrot.slane %v273, 5
  %v2681 = vsel %vm2530, %v2678, %v2680
  %v2682 = vrot.slane %v278, 5
  %v2683 = vsel %vm2530, %v2680, %v2682
  %v2684 = vrot.slane %v283, 5
  %v2685 = vsel %vm2530, %v2682, %v2684
  %v2686 = vrot.slane %v284, 5
  %v2687 = vsel %vm2530, %v2684, %v2686
  %v2688 = vrot.slane %v290, 5
  %v2689 = vsel %vm2530, %v2686, %v2688
  %v2690 = vrot.slane %v291, 5
  %v2691 = vsel %vm2530, %v2688, %v2690
  %v2692 = vrot.slane %v292, 5
  %v2693 = vsel %vm2530, %v2690, %v2692
  %2694 = vrot.lane.b32.xlu0 %v2531, 28
  %v2695 = vpop.permute.xlu0 %2694
  %2696 = vrot.lane.b32.xlu0 %v2533, 28
  %v2697 = vpop.permute.xlu0 %2696
  %2698 = vrot.lane.b32.xlu0 %v2535, 28
  %v2699 = vpop.permute.xlu0 %2698
  %2700 = vrot.lane.b32.xlu0 %v2537, 28
  %v2701 = vpop.permute.xlu0 %2700
  %2702 = vrot.lane.b32.xlu0 %v2539, 28
  %v2703 = vpop.permute.xlu0 %2702
  %2704 = vrot.lane.b32.xlu0 %v2541, 28
  %v2705 = vpop.permute.xlu0 %2704
  %2706 = vrot.lane.b32.xlu0 %v2543, 28
  %v2707 = vpop.permute.xlu0 %2706
  %2708 = vrot.lane.b32.xlu0 %v2545, 28
  %v2709 = vpop.permute.xlu0 %2708
  %2710 = vrot.lane.b32.xlu0 %v2547, 28
  %v2711 = vpop.permute.xlu0 %2710
  %2712 = vrot.lane.b32.xlu0 %v2549, 28
  %v2713 = vpop.permute.xlu0 %2712
  %2714 = vrot.lane.b32.xlu0 %v2551, 28
  %v2715 = vpop.permute.xlu0 %2714
  %2716 = vrot.lane.b32.xlu0 %v2553, 28
  %v2717 = vpop.permute.xlu0 %2716
  %2718 = vrot.lane.b32.xlu0 %v2555, 28
  %v2719 = vpop.permute.xlu0 %2718
  %2720 = vrot.lane.b32.xlu0 %v2557, 28
  %v2721 = vpop.permute.xlu0 %2720
  %2722 = vrot.lane.b32.xlu0 %v2559, 28
  %v2723 = vpop.permute.xlu0 %2722
  %2724 = vrot.lane.b32.xlu0 %v2561, 28
  %v2725 = vpop.permute.xlu0 %2724
  %2726 = vrot.lane.b32.xlu0 %v2563, 28
  %v2727 = vpop.permute.xlu0 %2726
  %2728 = vrot.lane.b32.xlu0 %v2565, 28
  %v2729 = vpop.permute.xlu0 %2728
  %2730 = vrot.lane.b32.xlu0 %v2567, 28
  %v2731 = vpop.permute.xlu0 %2730
  %2732 = vrot.lane.b32.xlu0 %v2569, 28
  %v2733 = vpop.permute.xlu0 %2732
  %2734 = vrot.lane.b32.xlu0 %v2571, 28
  %v2735 = vpop.permute.xlu0 %2734
  %2736 = vrot.lane.b32.xlu0 %v2573, 28
  %v2737 = vpop.permute.xlu0 %2736
  %2738 = vrot.lane.b32.xlu0 %v2575, 28
  %v2739 = vpop.permute.xlu0 %2738
  %2740 = vrot.lane.b32.xlu0 %v2577, 28
  %v2741 = vpop.permute.xlu0 %2740
  %2742 = vrot.lane.b32.xlu0 %v2579, 28
  %v2743 = vpop.permute.xlu0 %2742
  %2744 = vrot.lane.b32.xlu0 %v2581, 28
  %v2745 = vpop.permute.xlu0 %2744
  %2746 = vrot.lane.b32.xlu0 %v2583, 28
  %v2747 = vpop.permute.xlu0 %2746
  %2748 = vrot.lane.b32.xlu0 %v2585, 28
  %v2749 = vpop.permute.xlu0 %2748
  %2750 = vrot.lane.b32.xlu0 %v2587, 28
  %v2751 = vpop.permute.xlu0 %2750
  %2752 = vrot.lane.b32.xlu0 %v2589, 28
  %v2753 = vpop.permute.xlu0 %2752
  %2754 = vrot.lane.b32.xlu0 %v2591, 28
  %v2755 = vpop.permute.xlu0 %2754
  %2756 = vrot.lane.b32.xlu0 %v2593, 28
  %v2757 = vpop.permute.xlu0 %2756
  %2758 = vrot.lane.b32.xlu0 %v2595, 28
  %v2759 = vpop.permute.xlu0 %2758
  %2760 = vrot.lane.b32.xlu0 %v2597, 28
  %v2761 = vpop.permute.xlu0 %2760
  %2762 = vrot.lane.b32.xlu0 %v2599, 28
  %v2763 = vpop.permute.xlu0 %2762
  %2764 = vrot.lane.b32.xlu0 %v2601, 28
  %v2765 = vpop.permute.xlu0 %2764
  %2766 = vrot.lane.b32.xlu0 %v2603, 28
  %v2767 = vpop.permute.xlu0 %2766
  %2768 = vrot.lane.b32.xlu0 %v2605, 28
  %v2769 = vpop.permute.xlu0 %2768
  %2770 = vrot.lane.b32.xlu0 %v2607, 28
  %v2771 = vpop.permute.xlu0 %2770
  %2772 = vrot.lane.b32.xlu0 %v2609, 28
  %v2773 = vpop.permute.xlu0 %2772
  %2774 = vrot.lane.b32.xlu0 %v2611, 28
  %v2775 = vpop.permute.xlu0 %2774
  %2776 = vrot.lane.b32.xlu0 %v2613, 28
  %v2777 = vpop.permute.xlu0 %2776
  %2778 = vrot.lane.b32.xlu0 %v2615, 28
  %v2779 = vpop.permute.xlu0 %2778
  %2780 = vrot.lane.b32.xlu0 %v2617, 28
  %v2781 = vpop.permute.xlu0 %2780
  %2782 = vrot.lane.b32.xlu0 %v2619, 28
  %v2783 = vpop.permute.xlu0 %2782
  %2784 = vrot.lane.b32.xlu0 %v2621, 28
  %v2785 = vpop.permute.xlu0 %2784
  %2786 = vrot.lane.b32.xlu0 %v2623, 28
  %v2787 = vpop.permute.xlu0 %2786
  %2788 = vrot.lane.b32.xlu0 %v2625, 28
  %v2789 = vpop.permute.xlu0 %2788
  %2790 = vrot.lane.b32.xlu0 %v2627, 28
  %v2791 = vpop.permute.xlu0 %2790
  %2792 = vrot.lane.b32.xlu0 %v2629, 28
  %v2793 = vpop.permute.xlu0 %2792
  %2794 = vrot.lane.b32.xlu0 %v2631, 28
  %v2795 = vpop.permute.xlu0 %2794
  %2796 = vrot.lane.b32.xlu0 %v2633, 28
  %v2797 = vpop.permute.xlu0 %2796
  %2798 = vrot.lane.b32.xlu0 %v2635, 28
  %v2799 = vpop.permute.xlu0 %2798
  %2800 = vrot.lane.b32.xlu0 %v2637, 28
  %v2801 = vpop.permute.xlu0 %2800
  %2802 = vrot.lane.b32.xlu0 %v2639, 28
  %v2803 = vpop.permute.xlu0 %2802
  %2804 = vrot.lane.b32.xlu0 %v2641, 28
  %v2805 = vpop.permute.xlu0 %2804
  %2806 = vrot.lane.b32.xlu0 %v2643, 28
  %v2807 = vpop.permute.xlu0 %2806
  %2808 = vrot.lane.b32.xlu0 %v2645, 28
  %v2809 = vpop.permute.xlu0 %2808
  %2810 = vrot.lane.b32.xlu0 %v2647, 28
  %v2811 = vpop.permute.xlu0 %2810
  %2812 = vrot.lane.b32.xlu0 %v2649, 28
  %v2813 = vpop.permute.xlu0 %2812
  %2814 = vrot.lane.b32.xlu0 %v2651, 28
  %v2815 = vpop.permute.xlu0 %2814
  %2816 = vrot.lane.b32.xlu0 %v2653, 28
  %v2817 = vpop.permute.xlu0 %2816
  %2818 = vrot.lane.b32.xlu0 %v2655, 28
  %v2819 = vpop.permute.xlu0 %2818
  %2820 = vrot.lane.b32.xlu0 %v2657, 28
  %v2821 = vpop.permute.xlu0 %2820
  %2822 = vrot.lane.b32.xlu0 %v2659, 28
  %v2823 = vpop.permute.xlu0 %2822
  %2824 = vrot.lane.b32.xlu0 %v2661, 28
  %v2825 = vpop.permute.xlu0 %2824
  %2826 = vrot.lane.b32.xlu0 %v2663, 28
  %v2827 = vpop.permute.xlu0 %2826
  %2828 = vrot.lane.b32.xlu0 %v2665, 28
  %v2829 = vpop.permute.xlu0 %2828
  %2830 = vrot.lane.b32.xlu0 %v2667, 28
  %v2831 = vpop.permute.xlu0 %2830
  %2832 = vrot.lane.b32.xlu0 %v2669, 28
  %v2833 = vpop.permute.xlu0 %2832
  %2834 = vrot.lane.b32.xlu0 %v2671, 28
  %v2835 = vpop.permute.xlu0 %2834
  %2836 = vrot.lane.b32.xlu0 %v2673, 28
  %v2837 = vpop.permute.xlu0 %2836
  %2838 = vrot.lane.b32.xlu0 %v2675, 28
  %v2839 = vpop.permute.xlu0 %2838
  %2840 = vrot.lane.b32.xlu0 %v2677, 28
  %v2841 = vpop.permute.xlu0 %2840
  %2842 = vrot.lane.b32.xlu0 %v2679, 28
  %v2843 = vpop.permute.xlu0 %2842
  %2844 = vrot.lane.b32.xlu0 %v2681, 28
  %v2845 = vpop.permute.xlu0 %2844
  %2846 = vrot.lane.b32.xlu0 %v2683, 28
  %v2847 = vpop.permute.xlu0 %2846
  %2848 = vrot.lane.b32.xlu0 %v2685, 28
  %v2849 = vpop.permute.xlu0 %2848
  %2850 = vrot.lane.b32.xlu0 %v2687, 28
  %v2851 = vpop.permute.xlu0 %2850
  %2852 = vrot.lane.b32.xlu0 %v2689, 28
  %v2853 = vpop.permute.xlu0 %2852
  %2854 = vrot.lane.b32.xlu0 %v2691, 28
  %v2855 = vpop.permute.xlu0 %2854
  %2856 = vrot.lane.b32.xlu0 %v2693, 28
  %v2857 = vpop.permute.xlu0 %2856
  %vm2941 = vcmask 1041408
  %v2942 = vrot.slane %v294, 6
  %v2943 = vrot.slane %v199, 6
  %v2944 = vsel %vm2941, %v2942, %v2943
  %v2945 = vrot.slane %v200, 6
  %v2946 = vsel %vm2941, %v2943, %v2945
  %v2947 = vrot.slane %v201, 6
  %v2948 = vsel %vm2941, %v2945, %v2947
  %v2949 = vrot.slane %v202, 6
  %v2950 = vsel %vm2941, %v2947, %v2949
  %v2951 = vrot.slane %v203, 6
  %v2952 = vsel %vm2941, %v2949, %v2951
  %v2953 = vrot.slane %v204, 6
  %v2954 = vsel %vm2941, %v2951, %v2953
  %v2955 = vrot.slane %v205, 6
  %v2956 = vsel %vm2941, %v2953, %v2955
  %v2957 = vrot.slane %v206, 6
  %v2958 = vsel %vm2941, %v2955, %v2957
  %v2959 = vrot.slane %v207, 6
  %v2960 = vsel %vm2941, %v2957, %v2959
  %v2961 = vrot.slane %v208, 6
  %v2962 = vsel %vm2941, %v2959, %v2961
  %v2963 = vrot.slane %v209, 6
  %v2964 = vsel %vm2941, %v2961, %v2963
  %v2965 = vrot.slane %v210, 6
  %v2966 = vsel %vm2941, %v2963, %v2965
  %v2967 = vrot.slane %v211, 6
  %v2968 = vsel %vm2941, %v2965, %v2967
  %v2969 = vrot.slane %v212, 6
  %v2970 = vsel %vm2941, %v2967, %v2969
  %v2971 = vrot.slane %v213, 6
  %v2972 = vsel %vm2941, %v2969, %v2971
  %v2973 = vrot.slane %v214, 6
  %v2974 = vsel %vm2941, %v2971, %v2973
  %v2975 = vrot.slane %v215, 6
  %v2976 = vsel %vm2941, %v2973, %v2975
  %v2977 = vrot.slane %v216, 6
  %v2978 = vsel %vm2941, %v2975, %v2977
  %v2979 = vrot.slane %v217, 6
  %v2980 = vsel %vm2941, %v2977, %v2979
  %v2981 = vrot.slane %v218, 6
  %v2982 = vsel %vm2941, %v2979, %v2981
  %v2983 = vrot.slane %v219, 6
  %v2984 = vsel %vm2941, %v2981, %v2983
  %v2985 = vrot.slane %v220, 6
  %v2986 = vsel %vm2941, %v2983, %v2985
  %v2987 = vrot.slane %v221, 6
  %v2988 = vsel %vm2941, %v2985, %v2987
  %v2989 = vrot.slane %v222, 6
  %v2990 = vsel %vm2941, %v2987, %v2989
  %v2991 = vrot.slane %v223, 6
  %v2992 = vsel %vm2941, %v2989, %v2991
  %v2993 = vrot.slane %v224, 6
  %v2994 = vsel %vm2941, %v2991, %v2993
  %v2995 = vrot.slane %v225, 6
  %v2996 = vsel %vm2941, %v2993, %v2995
  %v2997 = vrot.slane %v226, 6
  %v2998 = vsel %vm2941, %v2995, %v2997
  %v2999 = vrot.slane %v227, 6
  %v3000 = vsel %vm2941, %v2997, %v2999
  %v3001 = vrot.slane %v228, 6
  %v3002 = vsel %vm2941, %v2999, %v3001
  %v3003 = vrot.slane %v229, 6
  %v3004 = vsel %vm2941, %v3001, %v3003
  %v3005 = vrot.slane %v230, 6
  %v3006 = vsel %vm2941, %v3003, %v3005
  %v3007 = vrot.slane %v231, 6
  %v3008 = vsel %vm2941, %v3005, %v3007
  %v3009 = vrot.slane %v232, 6
  %v3010 = vsel %vm2941, %v3007, %v3009
  %v3011 = vrot.slane %v233, 6
  %v3012 = vsel %vm2941, %v3009, %v3011
  %v3013 = vrot.slane %v234, 6
  %v3014 = vsel %vm2941, %v3011, %v3013
  %v3015 = vrot.slane %v235, 6
  %v3016 = vsel %vm2941, %v3013, %v3015
  %v3017 = vrot.slane %v236, 6
  %v3018 = vsel %vm2941, %v3015, %v3017
  %v3019 = vrot.slane %v237, 6
  %v3020 = vsel %vm2941, %v3017, %v3019
  %v3021 = vrot.slane %v238, 6
  %v3022 = vsel %vm2941, %v3019, %v3021
  %v3023 = vrot.slane %v239, 6
  %v3024 = vsel %vm2941, %v3021, %v3023
  %v3025 = vrot.slane %v240, 6
  %v3026 = vsel %vm2941, %v3023, %v3025
  %v3027 = vrot.slane %v241, 6
  %v3028 = vsel %vm2941, %v3025, %v3027
  %v3029 = vrot.slane %v242, 6
  %v3030 = vsel %vm2941, %v3027, %v3029
  %v3031 = vrot.slane %v243, 6
  %v3032 = vsel %vm2941, %v3029, %v3031
  %v3033 = vrot.slane %v244, 6
  %v3034 = vsel %vm2941, %v3031, %v3033
  %v3035 = vrot.slane %v245, 6
  %v3036 = vsel %vm2941, %v3033, %v3035
  %v3037 = vrot.slane %v246, 6
  %v3038 = vsel %vm2941, %v3035, %v3037
  %v3039 = vrot.slane %v247, 6
  %v3040 = vsel %vm2941, %v3037, %v3039
  %v3041 = vrot.slane %v248, 6
  %v3042 = vsel %vm2941, %v3039, %v3041
  %v3043 = vrot.slane %v249, 6
  %v3044 = vsel %vm2941, %v3041, %v3043
  %v3045 = vrot.slane %v250, 6
  %v3046 = vsel %vm2941, %v3043, %v3045
  %v3047 = vrot.slane %v251, 6
  %v3048 = vsel %vm2941, %v3045, %v3047
  %v3049 = vrot.slane %v252, 6
  %v3050 = vsel %vm2941, %v3047, %v3049
  %v3051 = vrot.slane %v253, 6
  %v3052 = vsel %vm2941, %v3049, %v3051
  %v3053 = vrot.slane %v254, 6
  %v3054 = vsel %vm2941, %v3051, %v3053
  %v3055 = vrot.slane %v255, 6
  %v3056 = vsel %vm2941, %v3053, %v3055
  %v3057 = vrot.slane %v256, 6
  %v3058 = vsel %vm2941, %v3055, %v3057
  %v3059 = vrot.slane %v257, 6
  %v3060 = vsel %vm2941, %v3057, %v3059
  %v3061 = vrot.slane %v258, 6
  %v3062 = vsel %vm2941, %v3059, %v3061
  %v3063 = vrot.slane %v259, 6
  %v3064 = vsel %vm2941, %v3061, %v3063
  %v3065 = vrot.slane %v260, 6
  %v3066 = vsel %vm2941, %v3063, %v3065
  %v3067 = vrot.slane %v261, 6
  %v3068 = vsel %vm2941, %v3065, %v3067
  %v3069 = vrot.slane %v262, 6
  %v3070 = vsel %vm2941, %v3067, %v3069
  %v3071 = vrot.slane %v263, 6
  %v3072 = vsel %vm2941, %v3069, %v3071
  %v3073 = vrot.slane %v264, 6
  %v3074 = vsel %vm2941, %v3071, %v3073
  %v3075 = vrot.slane %v265, 6
  %v3076 = vsel %vm2941, %v3073, %v3075
  %v3077 = vrot.slane %v266, 6
  %v3078 = vsel %vm2941, %v3075, %v3077
  %v3079 = vrot.slane %v267, 6
  %v3080 = vsel %vm2941, %v3077, %v3079
  %v3081 = vrot.slane %v268, 6
  %v3082 = vsel %vm2941, %v3079, %v3081
  %v3083 = vrot.slane %v269, 6
  %v3084 = vsel %vm2941, %v3081, %v3083
  %v3085 = vrot.slane %v270, 6
  %v3086 = vsel %vm2941, %v3083, %v3085
  %v3087 = vrot.slane %v271, 6
  %v3088 = vsel %vm2941, %v3085, %v3087
  %v3089 = vrot.slane %v272, 6
  %v3090 = vsel %vm2941, %v3087, %v3089
  %v3091 = vrot.slane %v273, 6
  %v3092 = vsel %vm2941, %v3089, %v3091
  %v3093 = vrot.slane %v278, 6
  %v3094 = vsel %vm2941, %v3091, %v3093
  %v3095 = vrot.slane %v283, 6
  %v3096 = vsel %vm2941, %v3093, %v3095
  %v3097 = vrot.slane %v284, 6
  %v3098 = vsel %vm2941, %v3095, %v3097
  %v3099 = vrot.slane %v290, 6
  %v3100 = vsel %vm2941, %v3097, %v3099
  %v3101 = vrot.slane %v291, 6
  %v3102 = vsel %vm2941, %v3099, %v3101
  %v3103 = vrot.slane %v296, 6
  %v3104 = vsel %vm2941, %v3101, %v3103
  %3105 = vrot.lane.b32.xlu0 %v2942, 32
  %v3106 = vpop.permute.xlu0 %3105
  %3107 = vrot.lane.b32.xlu0 %v2944, 32
  %v3108 = vpop.permute.xlu0 %3107
  %3109 = vrot.lane.b32.xlu0 %v2946, 32
  %v3110 = vpop.permute.xlu0 %3109
  %3111 = vrot.lane.b32.xlu0 %v2948, 32
  %v3112 = vpop.permute.xlu0 %3111
  %3113 = vrot.lane.b32.xlu0 %v2950, 32
  %v3114 = vpop.permute.xlu0 %3113
  %3115 = vrot.lane.b32.xlu0 %v2952, 32
  %v3116 = vpop.permute.xlu0 %3115
  %3117 = vrot.lane.b32.xlu0 %v2954, 32
  %v3118 = vpop.permute.xlu0 %3117
  %3119 = vrot.lane.b32.xlu0 %v2956, 32
  %v3120 = vpop.permute.xlu0 %3119
  %3121 = vrot.lane.b32.xlu0 %v2958, 32
  %v3122 = vpop.permute.xlu0 %3121
  %3123 = vrot.lane.b32.xlu0 %v2960, 32
  %v3124 = vpop.permute.xlu0 %3123
  %3125 = vrot.lane.b32.xlu0 %v2962, 32
  %v3126 = vpop.permute.xlu0 %3125
  %3127 = vrot.lane.b32.xlu0 %v2964, 32
  %v3128 = vpop.permute.xlu0 %3127
  %3129 = vrot.lane.b32.xlu0 %v2966, 32
  %v3130 = vpop.permute.xlu0 %3129
  %3131 = vrot.lane.b32.xlu0 %v2968, 32
  %v3132 = vpop.permute.xlu0 %3131
  %3133 = vrot.lane.b32.xlu0 %v2970, 32
  %v3134 = vpop.permute.xlu0 %3133
  %3135 = vrot.lane.b32.xlu0 %v2972, 32
  %v3136 = vpop.permute.xlu0 %3135
  %3137 = vrot.lane.b32.xlu0 %v2974, 32
  %v3138 = vpop.permute.xlu0 %3137
  %3139 = vrot.lane.b32.xlu0 %v2976, 32
  %v3140 = vpop.permute.xlu0 %3139
  %3141 = vrot.lane.b32.xlu0 %v2978, 32
  %v3142 = vpop.permute.xlu0 %3141
  %3143 = vrot.lane.b32.xlu0 %v2980, 32
  %v3144 = vpop.permute.xlu0 %3143
  %3145 = vrot.lane.b32.xlu0 %v2982, 32
  %v3146 = vpop.permute.xlu0 %3145
  %3147 = vrot.lane.b32.xlu0 %v2984, 32
  %v3148 = vpop.permute.xlu0 %3147
  %3149 = vrot.lane.b32.xlu0 %v2986, 32
  %v3150 = vpop.permute.xlu0 %3149
  %3151 = vrot.lane.b32.xlu0 %v2988, 32
  %v3152 = vpop.permute.xlu0 %3151
  %3153 = vrot.lane.b32.xlu0 %v2990, 32
  %v3154 = vpop.permute.xlu0 %3153
  %3155 = vrot.lane.b32.xlu0 %v2992, 32
  %v3156 = vpop.permute.xlu0 %3155
  %3157 = vrot.lane.b32.xlu0 %v2994, 32
  %v3158 = vpop.permute.xlu0 %3157
  %3159 = vrot.lane.b32.xlu0 %v2996, 32
  %v3160 = vpop.permute.xlu0 %3159
  %3161 = vrot.lane.b32.xlu0 %v2998, 32
  %v3162 = vpop.permute.xlu0 %3161
  %3163 = vrot.lane.b32.xlu0 %v3000, 32
  %v3164 = vpop.permute.xlu0 %3163
  %3165 = vrot.lane.b32.xlu0 %v3002, 32
  %v3166 = vpop.permute.xlu0 %3165
  %3167 = vrot.lane.b32.xlu0 %v3004, 32
  %v3168 = vpop.permute.xlu0 %3167
  %3169 = vrot.lane.b32.xlu0 %v3006, 32
  %v3170 = vpop.permute.xlu0 %3169
  %3171 = vrot.lane.b32.xlu0 %v3008, 32
  %v3172 = vpop.permute.xlu0 %3171
  %3173 = vrot.lane.b32.xlu0 %v3010, 32
  %v3174 = vpop.permute.xlu0 %3173
  %3175 = vrot.lane.b32.xlu0 %v3012, 32
  %v3176 = vpop.permute.xlu0 %3175
  %3177 = vrot.lane.b32.xlu0 %v3014, 32
  %v3178 = vpop.permute.xlu0 %3177
  %3179 = vrot.lane.b32.xlu0 %v3016, 32
  %v3180 = vpop.permute.xlu0 %3179
  %3181 = vrot.lane.b32.xlu0 %v3018, 32
  %v3182 = vpop.permute.xlu0 %3181
  %3183 = vrot.lane.b32.xlu0 %v3020, 32
  %v3184 = vpop.permute.xlu0 %3183
  %3185 = vrot.lane.b32.xlu0 %v3022, 32
  %v3186 = vpop.permute.xlu0 %3185
  %3187 = vrot.lane.b32.xlu0 %v3024, 32
  %v3188 = vpop.permute.xlu0 %3187
  %3189 = vrot.lane.b32.xlu0 %v3026, 32
  %v3190 = vpop.permute.xlu0 %3189
  %3191 = vrot.lane.b32.xlu0 %v3028, 32
  %v3192 = vpop.permute.xlu0 %3191
  %3193 = vrot.lane.b32.xlu0 %v3030, 32
  %v3194 = vpop.permute.xlu0 %3193
  %3195 = vrot.lane.b32.xlu0 %v3032, 32
  %v3196 = vpop.permute.xlu0 %3195
  %3197 = vrot.lane.b32.xlu0 %v3034, 32
  %v3198 = vpop.permute.xlu0 %3197
  %3199 = vrot.lane.b32.xlu0 %v3036, 32
  %v3200 = vpop.permute.xlu0 %3199
  %3201 = vrot.lane.b32.xlu0 %v3038, 32
  %v3202 = vpop.permute.xlu0 %3201
  %3203 = vrot.lane.b32.xlu0 %v3040, 32
  %v3204 = vpop.permute.xlu0 %3203
  %3205 = vrot.lane.b32.xlu0 %v3042, 32
  %v3206 = vpop.permute.xlu0 %3205
  %3207 = vrot.lane.b32.xlu0 %v3044, 32
  %v3208 = vpop.permute.xlu0 %3207
  %3209 = vrot.lane.b32.xlu0 %v3046, 32
  %v3210 = vpop.permute.xlu0 %3209
  %3211 = vrot.lane.b32.xlu0 %v3048, 32
  %v3212 = vpop.permute.xlu0 %3211
  %3213 = vrot.lane.b32.xlu0 %v3050, 32
  %v3214 = vpop.permute.xlu0 %3213
  %3215 = vrot.lane.b32.xlu0 %v3052, 32
  %v3216 = vpop.permute.xlu0 %3215
  %3217 = vrot.lane.b32.xlu0 %v3054, 32
  %v3218 = vpop.permute.xlu0 %3217
  %3219 = vrot.lane.b32.xlu0 %v3056, 32
  %v3220 = vpop.permute.xlu0 %3219
  %3221 = vrot.lane.b32.xlu0 %v3058, 32
  %v3222 = vpop.permute.xlu0 %3221
  %3223 = vrot.lane.b32.xlu0 %v3060, 32
  %v3224 = vpop.permute.xlu0 %3223
  %3225 = vrot.lane.b32.xlu0 %v3062, 32
  %v3226 = vpop.permute.xlu0 %3225
  %3227 = vrot.lane.b32.xlu0 %v3064, 32
  %v3228 = vpop.permute.xlu0 %3227
  %3229 = vrot.lane.b32.xlu0 %v3066, 32
  %v3230 = vpop.permute.xlu0 %3229
  %3231 = vrot.lane.b32.xlu0 %v3068, 32
  %v3232 = vpop.permute.xlu0 %3231
  %3233 = vrot.lane.b32.xlu0 %v3070, 32
  %v3234 = vpop.permute.xlu0 %3233
  %3235 = vrot.lane.b32.xlu0 %v3072, 32
  %v3236 = vpop.permute.xlu0 %3235
  %3237 = vrot.lane.b32.xlu0 %v3074, 32
  %v3238 = vpop.permute.xlu0 %3237
  %3239 = vrot.lane.b32.xlu0 %v3076, 32
  %v3240 = vpop.permute.xlu0 %3239
  %3241 = vrot.lane.b32.xlu0 %v3078, 32
  %v3242 = vpop.permute.xlu0 %3241
  %3243 = vrot.lane.b32.xlu0 %v3080, 32
  %v3244 = vpop.permute.xlu0 %3243
  %3245 = vrot.lane.b32.xlu0 %v3082, 32
  %v3246 = vpop.permute.xlu0 %3245
  %3247 = vrot.lane.b32.xlu0 %v3084, 32
  %v3248 = vpop.permute.xlu0 %3247
  %3249 = vrot.lane.b32.xlu0 %v3086, 32
  %v3250 = vpop.permute.xlu0 %3249
  %3251 = vrot.lane.b32.xlu0 %v3088, 32
  %v3252 = vpop.permute.xlu0 %3251
  %3253 = vrot.lane.b32.xlu0 %v3090, 32
  %v3254 = vpop.permute.xlu0 %3253
  %3255 = vrot.lane.b32.xlu0 %v3092, 32
  %v3256 = vpop.permute.xlu0 %3255
  %3257 = vrot.lane.b32.xlu0 %v3094, 32
  %v3258 = vpop.permute.xlu0 %3257
  %3259 = vrot.lane.b32.xlu0 %v3096, 32
  %v3260 = vpop.permute.xlu0 %3259
  %3261 = vrot.lane.b32.xlu0 %v3098, 32
  %v3262 = vpop.permute.xlu0 %3261
  %3263 = vrot.lane.b32.xlu0 %v3100, 32
  %v3264 = vpop.permute.xlu0 %3263
  %3265 = vrot.lane.b32.xlu0 %v3102, 32
  %v3266 = vpop.permute.xlu0 %3265
  %3267 = vrot.lane.b32.xlu0 %v3104, 32
  %v3268 = vpop.permute.xlu0 %3267
  %vm3351 = vcmask 31744
  %v3352 = vsel %vm3351, %v193, %v544
  %v3353 = vsel %vm3351, %v194, %v546
  %v3354 = vsel %vm3351, %v195, %v548
  %v3355 = vsel %vm3351, %v196, %v550
  %v3356 = vsel %vm3351, %v197, %v552
  %v3357 = vsel %vm3351, %v198, %v554
  %v3358 = vsel %vm3351, %v199, %v556
  %v3359 = vsel %vm3351, %v200, %v558
  %v3360 = vsel %vm3351, %v201, %v560
  %v3361 = vsel %vm3351, %v202, %v562
  %v3362 = vsel %vm3351, %v203, %v564
  %v3363 = vsel %vm3351, %v204, %v566
  %v3364 = vsel %vm3351, %v205, %v568
  %v3365 = vsel %vm3351, %v206, %v570
  %v3366 = vsel %vm3351, %v207, %v572
  %v3367 = vsel %vm3351, %v208, %v574
  %v3368 = vsel %vm3351, %v209, %v576
  %v3369 = vsel %vm3351, %v210, %v578
  %v3370 = vsel %vm3351, %v211, %v580
  %v3371 = vsel %vm3351, %v212, %v582
  %v3372 = vsel %vm3351, %v213, %v584
  %v3373 = vsel %vm3351, %v214, %v586
  %v3374 = vsel %vm3351, %v215, %v588
  %v3375 = vsel %vm3351, %v216, %v590
  %v3376 = vsel %vm3351, %v217, %v592
  %v3377 = vsel %vm3351, %v218, %v594
  %v3378 = vsel %vm3351, %v219, %v596
  %v3379 = vsel %vm3351, %v220, %v598
  %v3380 = vsel %vm3351, %v221, %v600
  %v3381 = vsel %vm3351, %v222, %v602
  %v3382 = vsel %vm3351, %v223, %v604
  %v3383 = vsel %vm3351, %v224, %v606
  %v3384 = vsel %vm3351, %v225, %v608
  %v3385 = vsel %vm3351, %v226, %v610
  %v3386 = vsel %vm3351, %v227, %v612
  %v3387 = vsel %vm3351, %v228, %v614
  %v3388 = vsel %vm3351, %v229, %v616
  %v3389 = vsel %vm3351, %v230, %v618
  %v3390 = vsel %vm3351, %v231, %v620
  %v3391 = vsel %vm3351, %v232, %v622
  %v3392 = vsel %vm3351, %v233, %v624
  %v3393 = vsel %vm3351, %v234, %v626
  %v3394 = vsel %vm3351, %v235, %v628
  %v3395 = vsel %vm3351, %v236, %v630
  %v3396 = vsel %vm3351, %v237, %v632
  %v3397 = vsel %vm3351, %v238, %v634
  %v3398 = vsel %vm3351, %v239, %v636
  %v3399 = vsel %vm3351, %v240, %v638
  %v3400 = vsel %vm3351, %v241, %v640
  %v3401 = vsel %vm3351, %v242, %v642
  %v3402 = vsel %vm3351, %v243, %v644
  %v3403 = vsel %vm3351, %v244, %v646
  %v3404 = vsel %vm3351, %v245, %v648
  %v3405 = vsel %vm3351, %v246, %v650
  %v3406 = vsel %vm3351, %v247, %v652
  %v3407 = vsel %vm3351, %v248, %v654
  %v3408 = vsel %vm3351, %v249, %v656
  %v3409 = vsel %vm3351, %v250, %v658
  %v3410 = vsel %vm3351, %v251, %v660
  %v3411 = vsel %vm3351, %v252, %v662
  %v3412 = vsel %vm3351, %v253, %v664
  %v3413 = vsel %vm3351, %v254, %v666
  %v3414 = vsel %vm3351, %v255, %v668
  %v3415 = vsel %vm3351, %v256, %v670
  %v3416 = vsel %vm3351, %v257, %v672
  %v3417 = vsel %vm3351, %v258, %v674
  %v3418 = vsel %vm3351, %v259, %v676
  %v3419 = vsel %vm3351, %v260, %v678
  %v3420 = vsel %vm3351, %v261, %v680
  %v3421 = vsel %vm3351, %v262, %v682
  %v3422 = vsel %vm3351, %v263, %v684
  %v3423 = vsel %vm3351, %v264, %v686
  %v3424 = vsel %vm3351, %v265, %v688
  %v3425 = vsel %vm3351, %v266, %v690
  %v3426 = vsel %vm3351, %v267, %v692
  %v3427 = vsel %vm3351, %v268, %v694
  %v3428 = vsel %vm3351, %v269, %v696
  %v3429 = vsel %vm3351, %v270, %v698
  %v3430 = vsel %vm3351, %v271, %v700
  %v3431 = vsel %vm3351, %v272, %v702
  %v3432 = vsel %vm3351, %v273, %v704
  %v3433 = vsel %vm3351, %v274, %v706
  %vm3434 = vcmask 64512
  %v3435 = vsel %vm3434, %v3352, %v955
  %v3436 = vsel %vm3434, %v3353, %v957
  %v3437 = vsel %vm3434, %v3354, %v959
  %v3438 = vsel %vm3434, %v3355, %v961
  %v3439 = vsel %vm3434, %v3356, %v963
  %v3440 = vsel %vm3434, %v3357, %v965
  %v3441 = vsel %vm3434, %v3358, %v967
  %v3442 = vsel %vm3434, %v3359, %v969
  %v3443 = vsel %vm3434, %v3360, %v971
  %v3444 = vsel %vm3434, %v3361, %v973
  %v3445 = vsel %vm3434, %v3362, %v975
  %v3446 = vsel %vm3434, %v3363, %v977
  %v3447 = vsel %vm3434, %v3364, %v979
  %v3448 = vsel %vm3434, %v3365, %v981
  %v3449 = vsel %vm3434, %v3366, %v983
  %v3450 = vsel %vm3434, %v3367, %v985
  %v3451 = vsel %vm3434, %v3368, %v987
  %v3452 = vsel %vm3434, %v3369, %v989
  %v3453 = vsel %vm3434, %v3370, %v991
  %v3454 = vsel %vm3434, %v3371, %v993
  %v3455 = vsel %vm3434, %v3372, %v995
  %v3456 = vsel %vm3434, %v3373, %v997
  %v3457 = vsel %vm3434, %v3374, %v999
  %v3458 = vsel %vm3434, %v3375, %v1001
  %v3459 = vsel %vm3434, %v3376, %v1003
  %v3460 = vsel %vm3434, %v3377, %v1005
  %v3461 = vsel %vm3434, %v3378, %v1007
  %v3462 = vsel %vm3434, %v3379, %v1009
  %v3463 = vsel %vm3434, %v3380, %v1011
  %v3464 = vsel %vm3434, %v3381, %v1013
  %v3465 = vsel %vm3434, %v3382, %v1015
  %v3466 = vsel %vm3434, %v3383, %v1017
  %v3467 = vsel %vm3434, %v3384, %v1019
  %v3468 = vsel %vm3434, %v3385, %v1021
  %v3469 = vsel %vm3434, %v3386, %v1023
  %v3470 = vsel %vm3434, %v3387, %v1025
  %v3471 = vsel %vm3434, %v3388, %v1027
  %v3472 = vsel %vm3434, %v3389, %v1029
  %v3473 = vsel %vm3434, %v3390, %v1031
  %v3474 = vsel %vm3434, %v3391, %v1033
  %v3475 = vsel %vm3434, %v3392, %v1035
  %v3476 = vsel %vm3434, %v3393, %v1037
  %v3477 = vsel %vm3434, %v3394, %v1039
  %v3478 = vsel %vm3434, %v3395, %v1041
  %v3479 = vsel %vm3434, %v3396, %v1043
  %v3480 = vsel %vm3434, %v3397, %v1045
  %v3481 = vsel %vm3434, %v3398, %v1047
  %v3482 = vsel %vm3434, %v3399, %v1049
  %v3483 = vsel %vm3434, %v3400, %v1051
  %v3484 = vsel %vm3434, %v3401, %v1053
  %v3485 = vsel %vm3434, %v3402, %v1055
  %v3486 = vsel %vm3434, %v3403, %v1057
  %v3487 = vsel %vm3434, %v3404, %v1059
  %v3488 = vsel %vm3434, %v3405, %v1061
  %v3489 = vsel %vm3434, %v3406, %v1063
  %v3490 = vsel %vm3434, %v3407, %v1065
  %v3491 = vsel %vm3434, %v3408, %v1067
  %v3492 = vsel %vm3434, %v3409, %v1069
  %v3493 = vsel %vm3434, %v3410, %v1071
  %v3494 = vsel %vm3434, %v3411, %v1073
  %v3495 = vsel %vm3434, %v3412, %v1075
  %v3496 = vsel %vm3434, %v3413, %v1077
  %v3497 = vsel %vm3434, %v3414, %v1079
  %v3498 = vsel %vm3434, %v3415, %v1081
  %v3499 = vsel %vm3434, %v3416, %v1083
  %v3500 = vsel %vm3434, %v3417, %v1085
  %v3501 = vsel %vm3434, %v3418, %v1087
  %v3502 = vsel %vm3434, %v3419, %v1089
  %v3503 = vsel %vm3434, %v3420, %v1091
  %v3504 = vsel %vm3434, %v3421, %v1093
  %v3505 = vsel %vm3434, %v3422, %v1095
  %v3506 = vsel %vm3434, %v3423, %v1097
  %v3507 = vsel %vm3434, %v3424, %v1099
  %v3508 = vsel %vm3434, %v3425, %v1101
  %v3509 = vsel %vm3434, %v3426, %v1103
  %v3510 = vsel %vm3434, %v3427, %v1105
  %v3511 = vsel %vm3434, %v3428, %v1107
  %v3512 = vsel %vm3434, %v3429, %v1109
  %v3513 = vsel %vm3434, %v3430, %v1111
  %v3514 = vsel %vm3434, %v3431, %v1113
  %v3515 = vsel %vm3434, %v3432, %v1115
  %v3516 = vsel %vm3434, %v3433, %v1117
  %vm3517 = vcmask 97280
  %v3518 = vsel %vm3517, %v3435, %v1210
  %v3519 = vsel %vm3517, %v3436, %v1212
  %v3520 = vsel %vm3517, %v3437, %v1214
  %v3521 = vsel %vm3517, %v3438, %v1216
  %v3522 = vsel %vm3517, %v3439, %v1218
  %v3523 = vsel %vm3517, %v3440, %v1220
  %v3524 = vsel %vm3517, %v3441, %v1222
  %v3525 = vsel %vm3517, %v3442, %v1224
  %v3526 = vsel %vm3517, %v3443, %v1226
  %v3527 = vsel %vm3517, %v3444, %v1228
  %v3528 = vsel %vm3517, %v3445, %v1230
  %v3529 = vsel %vm3517, %v3446, %v1232
  %v3530 = vsel %vm3517, %v3447, %v1234
  %v3531 = vsel %vm3517, %v3448, %v1236
  %v3532 = vsel %vm3517, %v3449, %v1238
  %v3533 = vsel %vm3517, %v3450, %v1240
  %v3534 = vsel %vm3517, %v3451, %v1242
  %v3535 = vsel %vm3517, %v3452, %v1244
  %v3536 = vsel %vm3517, %v3453, %v1246
  %v3537 = vsel %vm3517, %v3454, %v1248
  %v3538 = vsel %vm3517, %v3455, %v1250
  %v3539 = vsel %vm3517, %v3456, %v1252
  %v3540 = vsel %vm3517, %v3457, %v1254
  %v3541 = vsel %vm3517, %v3458, %v1256
  %v3542 = vsel %vm3517, %v3459, %v1258
  %v3543 = vsel %vm3517, %v3460, %v1260
  %v3544 = vsel %vm3517, %v3461, %v1262
  %v3545 = vsel %vm3517, %v3462, %v1264
  %v3546 = vsel %vm3517, %v3463, %v1266
  %v3547 = vsel %vm3517, %v3464, %v1268
  %v3548 = vsel %vm3517, %v3465, %v1270
  %v3549 = vsel %vm3517, %v3466, %v1272
  %v3550 = vsel %vm3517, %v3467, %v1274
  %v3551 = vsel %vm3517, %v3468, %v1276
  %v3552 = vsel %vm3517, %v3469, %v1278
  %v3553 = vsel %vm3517, %v3470, %v1280
  %v3554 = vsel %vm3517, %v3471, %v1282
  %v3555 = vsel %vm3517, %v3472, %v1284
  %v3556 = vsel %vm3517, %v3473, %v1286
  %v3557 = vsel %vm3517, %v3474, %v1288
  %v3558 = vsel %vm3517, %v3475, %v1290
  %v3559 = vsel %vm3517, %v3476, %v1292
  %v3560 = vsel %vm3517, %v3477, %v1294
  %v3561 = vsel %vm3517, %v3478, %v1296
  %v3562 = vsel %vm3517, %v3479, %v1298
  %v3563 = vsel %vm3517, %v3480, %v1300
  %v3564 = vsel %vm3517, %v3481, %v1302
  %v3565 = vsel %vm3517, %v3482, %v1304
  %v3566 = vsel %vm3517, %v3483, %v1306
  %v3567 = vsel %vm3517, %v3484, %v1308
  %v3568 = vsel %vm3517, %v3485, %v1310
  %v3569 = vsel %vm3517, %v3486, %v1312
  %v3570 = vsel %vm3517, %v3487, %v1314
  %v3571 = vsel %vm3517, %v3488, %v1316
  %v3572 = vsel %vm3517, %v3489, %v1318
  %v3573 = vsel %vm3517, %v3490, %v1320
  %v3574 = vsel %vm3517, %v3491, %v1322
  %v3575 = vsel %vm3517, %v3492, %v1324
  %v3576 = vsel %vm3517, %v3493, %v1326
  %v3577 = vsel %vm3517, %v3494, %v1328
  %v3578 = vsel %vm3517, %v3495, %v1330
  %v3579 = vsel %vm3517, %v3496, %v1332
  %v3580 = vsel %vm3517, %v3497, %v1334
  %v3581 = vsel %vm3517, %v3498, %v1336
  %v3582 = vsel %vm3517, %v3499, %v1338
  %v3583 = vsel %vm3517, %v3500, %v1340
  %v3584 = vsel %vm3517, %v3501, %v1342
  %v3585 = vsel %vm3517, %v3502, %v1344
  %v3586 = vsel %vm3517, %v3503, %v1346
  %v3587 = vsel %vm3517, %v3504, %v1348
  %v3588 = vsel %vm3517, %v3505, %v1350
  %v3589 = vsel %vm3517, %v3506, %v1352
  %v3590 = vsel %vm3517, %v3507, %v1354
  %v3591 = vsel %vm3517, %v3508, %v1356
  %v3592 = vsel %vm3517, %v3509, %v1358
  %v3593 = vsel %vm3517, %v3510, %v1360
  %v3594 = vsel %vm3517, %v3511, %v1362
  %v3595 = vsel %vm3517, %v3512, %v1364
  %v3596 = vsel %vm3517, %v3513, %v1366
  %v3597 = vsel %vm3517, %v3514, %v1368
  %v3598 = vsel %vm3517, %v3515, %v1370
  %v3599 = vsel %vm3517, %v3516, %v1372
  %vm3600 = vcmask 130048
  %v3601 = vsel %vm3600, %v3518, %v1618
  %v3602 = vsel %vm3600, %v3519, %v1620
  %v3603 = vsel %vm3600, %v3520, %v1622
  %v3604 = vsel %vm3600, %v3521, %v1624
  %v3605 = vsel %vm3600, %v3522, %v1626
  %v3606 = vsel %vm3600, %v3523, %v1628
  %v3607 = vsel %vm3600, %v3524, %v1630
  %v3608 = vsel %vm3600, %v3525, %v1632
  %v3609 = vsel %vm3600, %v3526, %v1634
  %v3610 = vsel %vm3600, %v3527, %v1636
  %v3611 = vsel %vm3600, %v3528, %v1638
  %v3612 = vsel %vm3600, %v3529, %v1640
  %v3613 = vsel %vm3600, %v3530, %v1642
  %v3614 = vsel %vm3600, %v3531, %v1644
  %v3615 = vsel %vm3600, %v3532, %v1646
  %v3616 = vsel %vm3600, %v3533, %v1648
  %v3617 = vsel %vm3600, %v3534, %v1650
  %v3618 = vsel %vm3600, %v3535, %v1652
  %v3619 = vsel %vm3600, %v3536, %v1654
  %v3620 = vsel %vm3600, %v3537, %v1656
  %v3621 = vsel %vm3600, %v3538, %v1658
  %v3622 = vsel %vm3600, %v3539, %v1660
  %v3623 = vsel %vm3600, %v3540, %v1662
  %v3624 = vsel %vm3600, %v3541, %v1664
  %v3625 = vsel %vm3600, %v3542, %v1666
  %v3626 = vsel %vm3600, %v3543, %v1668
  %v3627 = vsel %vm3600, %v3544, %v1670
  %v3628 = vsel %vm3600, %v3545, %v1672
  %v3629 = vsel %vm3600, %v3546, %v1674
  %v3630 = vsel %vm3600, %v3547, %v1676
  %v3631 = vsel %vm3600, %v3548, %v1678
  %v3632 = vsel %vm3600, %v3549, %v1680
  %v3633 = vsel %vm3600, %v3550, %v1682
  %v3634 = vsel %vm3600, %v3551, %v1684
  %v3635 = vsel %vm3600, %v3552, %v1686
  %v3636 = vsel %vm3600, %v3553, %v1688
  %v3637 = vsel %vm3600, %v3554, %v1690
  %v3638 = vsel %vm3600, %v3555, %v1692
  %v3639 = vsel %vm3600, %v3556, %v1694
  %v3640 = vsel %vm3600, %v3557, %v1696
  %v3641 = vsel %vm3600, %v3558, %v1698
  %v3642 = vsel %vm3600, %v3559, %v1700
  %v3643 = vsel %vm3600, %v3560, %v1702
  %v3644 = vsel %vm3600, %v3561, %v1704
  %v3645 = vsel %vm3600, %v3562, %v1706
  %v3646 = vsel %vm3600, %v3563, %v1708
  %v3647 = vsel %vm3600, %v3564, %v1710
  %v3648 = vsel %vm3600, %v3565, %v1712
  %v3649 = vsel %vm3600, %v3566, %v1714
  %v3650 = vsel %vm3600, %v3567, %v1716
  %v3651 = vsel %vm3600, %v3568, %v1718
  %v3652 = vsel %vm3600, %v3569, %v1720
  %v3653 = vsel %vm3600, %v3570, %v1722
  %v3654 = vsel %vm3600, %v3571, %v1724
  %v3655 = vsel %vm3600, %v3572, %v1726
  %v3656 = vsel %vm3600, %v3573, %v1728
  %v3657 = vsel %vm3600, %v3574, %v1730
  %v3658 = vsel %vm3600, %v3575, %v1732
  %v3659 = vsel %vm3600, %v3576, %v1734
  %v3660 = vsel %vm3600, %v3577, %v1736
  %v3661 = vsel %vm3600, %v3578, %v1738
  %v3662 = vsel %vm3600, %v3579, %v1740
  %v3663 = vsel %vm3600, %v3580, %v1742
  %v3664 = vsel %vm3600, %v3581, %v1744
  %v3665 = vsel %vm3600, %v3582, %v1746
  %v3666 = vsel %vm3600, %v3583, %v1748
  %v3667 = vsel %vm3600, %v3584, %v1750
  %v3668 = vsel %vm3600, %v3585, %v1752
  %v3669 = vsel %vm3600, %v3586, %v1754
  %v3670 = vsel %vm3600, %v3587, %v1756
  %v3671 = vsel %vm3600, %v3588, %v1758
  %v3672 = vsel %vm3600, %v3589, %v1760
  %v3673 = vsel %vm3600, %v3590, %v1762
  %v3674 = vsel %vm3600, %v3591, %v1764
  %v3675 = vsel %vm3600, %v3592, %v1766
  %v3676 = vsel %vm3600, %v3593, %v1768
  %v3677 = vsel %vm3600, %v3594, %v1770
  %v3678 = vsel %vm3600, %v3595, %v1772
  %v3679 = vsel %vm3600, %v3596, %v1774
  %v3680 = vsel %vm3600, %v3597, %v1776
  %v3681 = vsel %vm3600, %v3598, %v1778
  %v3682 = vsel %vm3600, %v3599, %v1780
  %vm3683 = vcmask 162816
  %v3684 = vsel %vm3683, %v3601, %v2029
  %v3685 = vsel %vm3683, %v3602, %v2031
  %v3686 = vsel %vm3683, %v3603, %v2033
  %v3687 = vsel %vm3683, %v3604, %v2035
  %v3688 = vsel %vm3683, %v3605, %v2037
  %v3689 = vsel %vm3683, %v3606, %v2039
  %v3690 = vsel %vm3683, %v3607, %v2041
  %v3691 = vsel %vm3683, %v3608, %v2043
  %v3692 = vsel %vm3683, %v3609, %v2045
  %v3693 = vsel %vm3683, %v3610, %v2047
  %v3694 = vsel %vm3683, %v3611, %v2049
  %v3695 = vsel %vm3683, %v3612, %v2051
  %v3696 = vsel %vm3683, %v3613, %v2053
  %v3697 = vsel %vm3683, %v3614, %v2055
  %v3698 = vsel %vm3683, %v3615, %v2057
  %v3699 = vsel %vm3683, %v3616, %v2059
  %v3700 = vsel %vm3683, %v3617, %v2061
  %v3701 = vsel %vm3683, %v3618, %v2063
  %v3702 = vsel %vm3683, %v3619, %v2065
  %v3703 = vsel %vm3683, %v3620, %v2067
  %v3704 = vsel %vm3683, %v3621, %v2069
  %v3705 = vsel %vm3683, %v3622, %v2071
  %v3706 = vsel %vm3683, %v3623, %v2073
  %v3707 = vsel %vm3683, %v3624, %v2075
  %v3708 = vsel %vm3683, %v3625, %v2077
  %v3709 = vsel %vm3683, %v3626, %v2079
  %v3710 = vsel %vm3683, %v3627, %v2081
  %v3711 = vsel %vm3683, %v3628, %v2083
  %v3712 = vsel %vm3683, %v3629, %v2085
  %v3713 = vsel %vm3683, %v3630, %v2087
  %v3714 = vsel %vm3683, %v3631, %v2089
  %v3715 = vsel %vm3683, %v3632, %v2091
  %v3716 = vsel %vm3683, %v3633, %v2093
  %v3717 = vsel %vm3683, %v3634, %v2095
  %v3718 = vsel %vm3683, %v3635, %v2097
  %v3719 = vsel %vm3683, %v3636, %v2099
  %v3720 = vsel %vm3683, %v3637, %v2101
  %v3721 = vsel %vm3683, %v3638, %v2103
  %v3722 = vsel %vm3683, %v3639, %v2105
  %v3723 = vsel %vm3683, %v3640, %v2107
  %v3724 = vsel %vm3683, %v3641, %v2109
  %v3725 = vsel %vm3683, %v3642, %v2111
  %v3726 = vsel %vm3683, %v3643, %v2113
  %v3727 = vsel %vm3683, %v3644, %v2115
  %v3728 = vsel %vm3683, %v3645, %v2117
  %v3729 = vsel %vm3683, %v3646, %v2119
  %v3730 = vsel %vm3683, %v3647, %v2121
  %v3731 = vsel %vm3683, %v3648, %v2123
  %v3732 = vsel %vm3683, %v3649, %v2125
  %v3733 = vsel %vm3683, %v3650, %v2127
  %v3734 = vsel %vm3683, %v3651, %v2129
  %v3735 = vsel %vm3683, %v3652, %v2131
  %v3736 = vsel %vm3683, %v3653, %v2133
  %v3737 = vsel %vm3683, %v3654, %v2135
  %v3738 = vsel %vm3683, %v3655, %v2137
  %v3739 = vsel %vm3683, %v3656, %v2139
  %v3740 = vsel %vm3683, %v3657, %v2141
  %v3741 = vsel %vm3683, %v3658, %v2143
  %v3742 = vsel %vm3683, %v3659, %v2145
  %v3743 = vsel %vm3683, %v3660, %v2147
  %v3744 = vsel %vm3683, %v3661, %v2149
  %v3745 = vsel %vm3683, %v3662, %v2151
  %v3746 = vsel %vm3683, %v3663, %v2153
  %v3747 = vsel %vm3683, %v3664, %v2155
  %v3748 = vsel %vm3683, %v3665, %v2157
  %v3749 = vsel %vm3683, %v3666, %v2159
  %v3750 = vsel %vm3683, %v3667, %v2161
  %v3751 = vsel %vm3683, %v3668, %v2163
  %v3752 = vsel %vm3683, %v3669, %v2165
  %v3753 = vsel %vm3683, %v3670, %v2167
  %v3754 = vsel %vm3683, %v3671, %v2169
  %v3755 = vsel %vm3683, %v3672, %v2171
  %v3756 = vsel %vm3683, %v3673, %v2173
  %v3757 = vsel %vm3683, %v3674, %v2175
  %v3758 = vsel %vm3683, %v3675, %v2177
  %v3759 = vsel %vm3683, %v3676, %v2179
  %v3760 = vsel %vm3683, %v3677, %v2181
  %v3761 = vsel %vm3683, %v3678, %v2183
  %v3762 = vsel %vm3683, %v3679, %v2185
  %v3763 = vsel %vm3683, %v3680, %v2187
  %v3764 = vsel %vm3683, %v3681, %v2189
  %v3765 = vsel %vm3683, %v3682, %v2191
  %vm3766 = vcmask 195584
  %v3767 = vsel %vm3766, %v3684, %v2284
  %v3768 = vsel %vm3766, %v3685, %v2286
  %v3769 = vsel %vm3766, %v3686, %v2288
  %v3770 = vsel %vm3766, %v3687, %v2290
  %v3771 = vsel %vm3766, %v3688, %v2292
  %v3772 = vsel %vm3766, %v3689, %v2294
  %v3773 = vsel %vm3766, %v3690, %v2296
  %v3774 = vsel %vm3766, %v3691, %v2298
  %v3775 = vsel %vm3766, %v3692, %v2300
  %v3776 = vsel %vm3766, %v3693, %v2302
  %v3777 = vsel %vm3766, %v3694, %v2304
  %v3778 = vsel %vm3766, %v3695, %v2306
  %v3779 = vsel %vm3766, %v3696, %v2308
  %v3780 = vsel %vm3766, %v3697, %v2310
  %v3781 = vsel %vm3766, %v3698, %v2312
  %v3782 = vsel %vm3766, %v3699, %v2314
  %v3783 = vsel %vm3766, %v3700, %v2316
  %v3784 = vsel %vm3766, %v3701, %v2318
  %v3785 = vsel %vm3766, %v3702, %v2320
  %v3786 = vsel %vm3766, %v3703, %v2322
  %v3787 = vsel %vm3766, %v3704, %v2324
  %v3788 = vsel %vm3766, %v3705, %v2326
  %v3789 = vsel %vm3766, %v3706, %v2328
  %v3790 = vsel %vm3766, %v3707, %v2330
  %v3791 = vsel %vm3766, %v3708, %v2332
  %v3792 = vsel %vm3766, %v3709, %v2334
  %v3793 = vsel %vm3766, %v3710, %v2336
  %v3794 = vsel %vm3766, %v3711, %v2338
  %v3795 = vsel %vm3766, %v3712, %v2340
  %v3796 = vsel %vm3766, %v3713, %v2342
  %v3797 = vsel %vm3766, %v3714, %v2344
  %v3798 = vsel %vm3766, %v3715, %v2346
  %v3799 = vsel %vm3766, %v3716, %v2348
  %v3800 = vsel %vm3766, %v3717, %v2350
  %v3801 = vsel %vm3766, %v3718, %v2352
  %v3802 = vsel %vm3766, %v3719, %v2354
  %v3803 = vsel %vm3766, %v3720, %v2356
  %v3804 = vsel %vm3766, %v3721, %v2358
  %v3805 = vsel %vm3766, %v3722, %v2360
  %v3806 = vsel %vm3766, %v3723, %v2362
  %v3807 = vsel %vm3766, %v3724, %v2364
  %v3808 = vsel %vm3766, %v3725, %v2366
  %v3809 = vsel %vm3766, %v3726, %v2368
  %v3810 = vsel %vm3766, %v3727, %v2370
  %v3811 = vsel %vm3766, %v3728, %v2372
  %v3812 = vsel %vm3766, %v3729, %v2374
  %v3813 = vsel %vm3766, %v3730, %v2376
  %v3814 = vsel %vm3766, %v3731, %v2378
  %v3815 = vsel %vm3766, %v3732, %v2380
  %v3816 = vsel %vm3766, %v3733, %v2382
  %v3817 = vsel %vm3766, %v3734, %v2384
  %v3818 = vsel %vm3766, %v3735, %v2386
  %v3819 = vsel %vm3766, %v3736, %v2388
  %v3820 = vsel %vm3766, %v3737, %v2390
  %v3821 = vsel %vm3766, %v3738, %v2392
  %v3822 = vsel %vm3766, %v3739, %v2394
  %v3823 = vsel %vm3766, %v3740, %v2396
  %v3824 = vsel %vm3766, %v3741, %v2398
  %v3825 = vsel %vm3766, %v3742, %v2400
  %v3826 = vsel %vm3766, %v3743, %v2402
  %v3827 = vsel %vm3766, %v3744, %v2404
  %v3828 = vsel %vm3766, %v3745, %v2406
  %v3829 = vsel %vm3766, %v3746, %v2408
  %v3830 = vsel %vm3766, %v3747, %v2410
  %v3831 = vsel %vm3766, %v3748, %v2412
  %v3832 = vsel %vm3766, %v3749, %v2414
  %v3833 = vsel %vm3766, %v3750, %v2416
  %v3834 = vsel %vm3766, %v3751, %v2418
  %v3835 = vsel %vm3766, %v3752, %v2420
  %v3836 = vsel %vm3766, %v3753, %v2422
  %v3837 = vsel %vm3766, %v3754, %v2424
  %v3838 = vsel %vm3766, %v3755, %v2426
  %v3839 = vsel %vm3766, %v3756, %v2428
  %v3840 = vsel %vm3766, %v3757, %v2430
  %v3841 = vsel %vm3766, %v3758, %v2432
  %v3842 = vsel %vm3766, %v3759, %v2434
  %v3843 = vsel %vm3766, %v3760, %v2436
  %v3844 = vsel %vm3766, %v3761, %v2438
  %v3845 = vsel %vm3766, %v3762, %v2440
  %v3846 = vsel %vm3766, %v3763, %v2442
  %v3847 = vsel %vm3766, %v3764, %v2444
  %v3848 = vsel %vm3766, %v3765, %v2446
  %vm3849 = vcmask 228352
  %v3850 = vsel %vm3849, %v3767, %v2695
  %v3851 = vsel %vm3849, %v3768, %v2697
  %v3852 = vsel %vm3849, %v3769, %v2699
  %v3853 = vsel %vm3849, %v3770, %v2701
  %v3854 = vsel %vm3849, %v3771, %v2703
  %v3855 = vsel %vm3849, %v3772, %v2705
  %v3856 = vsel %vm3849, %v3773, %v2707
  %v3857 = vsel %vm3849, %v3774, %v2709
  %v3858 = vsel %vm3849, %v3775, %v2711
  %v3859 = vsel %vm3849, %v3776, %v2713
  %v3860 = vsel %vm3849, %v3777, %v2715
  %v3861 = vsel %vm3849, %v3778, %v2717
  %v3862 = vsel %vm3849, %v3779, %v2719
  %v3863 = vsel %vm3849, %v3780, %v2721
  %v3864 = vsel %vm3849, %v3781, %v2723
  %v3865 = vsel %vm3849, %v3782, %v2725
  %v3866 = vsel %vm3849, %v3783, %v2727
  %v3867 = vsel %vm3849, %v3784, %v2729
  %v3868 = vsel %vm3849, %v3785, %v2731
  %v3869 = vsel %vm3849, %v3786, %v2733
  %v3870 = vsel %vm3849, %v3787, %v2735
  %v3871 = vsel %vm3849, %v3788, %v2737
  %v3872 = vsel %vm3849, %v3789, %v2739
  %v3873 = vsel %vm3849, %v3790, %v2741
  %v3874 = vsel %vm3849, %v3791, %v2743
  %v3875 = vsel %vm3849, %v3792, %v2745
  %v3876 = vsel %vm3849, %v3793, %v2747
  %v3877 = vsel %vm3849, %v3794, %v2749
  %v3878 = vsel %vm3849, %v3795, %v2751
  %v3879 = vsel %vm3849, %v3796, %v2753
  %v3880 = vsel %vm3849, %v3797, %v2755
  %v3881 = vsel %vm3849, %v3798, %v2757
  %v3882 = vsel %vm3849, %v3799, %v2759
  %v3883 = vsel %vm3849, %v3800, %v2761
  %v3884 = vsel %vm3849, %v3801, %v2763
  %v3885 = vsel %vm3849, %v3802, %v2765
  %v3886 = vsel %vm3849, %v3803, %v2767
  %v3887 = vsel %vm3849, %v3804, %v2769
  %v3888 = vsel %vm3849, %v3805, %v2771
  %v3889 = vsel %vm3849, %v3806, %v2773
  %v3890 = vsel %vm3849, %v3807, %v2775
  %v3891 = vsel %vm3849, %v3808, %v2777
  %v3892 = vsel %vm3849, %v3809, %v2779
  %v3893 = vsel %vm3849, %v3810, %v2781
  %v3894 = vsel %vm3849, %v3811, %v2783
  %v3895 = vsel %vm3849, %v3812, %v2785
  %v3896 = vsel %vm3849, %v3813, %v2787
  %v3897 = vsel %vm3849, %v3814, %v2789
  %v3898 = vsel %vm3849, %v3815, %v2791
  %v3899 = vsel %vm3849, %v3816, %v2793
  %v3900 = vsel %vm3849, %v3817, %v2795
  %v3901 = vsel %vm3849, %v3818, %v2797
  %v3902 = vsel %vm3849, %v3819, %v2799
  %v3903 = vsel %vm3849, %v3820, %v2801
  %v3904 = vsel %vm3849, %v3821, %v2803
  %v3905 = vsel %vm3849, %v3822, %v2805
  %v3906 = vsel %vm3849, %v3823, %v2807
  %v3907 = vsel %vm3849, %v3824, %v2809
  %v3908 = vsel %vm3849, %v3825, %v2811
  %v3909 = vsel %vm3849, %v3826, %v2813
  %v3910 = vsel %vm3849, %v3827, %v2815
  %v3911 = vsel %vm3849, %v3828, %v2817
  %v3912 = vsel %vm3849, %v3829, %v2819
  %v3913 = vsel %vm3849, %v3830, %v2821
  %v3914 = vsel %vm3849, %v3831, %v2823
  %v3915 = vsel %vm3849, %v3832, %v2825
  %v3916 = vsel %vm3849, %v3833, %v2827
  %v3917 = vsel %vm3849, %v3834, %v2829
  %v3918 = vsel %vm3849, %v3835, %v2831
  %v3919 = vsel %vm3849, %v3836, %v2833
  %v3920 = vsel %vm3849, %v3837, %v2835
  %v3921 = vsel %vm3849, %v3838, %v2837
  %v3922 = vsel %vm3849, %v3839, %v2839
  %v3923 = vsel %vm3849, %v3840, %v2841
  %v3924 = vsel %vm3849, %v3841, %v2843
  %v3925 = vsel %vm3849, %v3842, %v2845
  %v3926 = vsel %vm3849, %v3843, %v2847
  %v3927 = vsel %vm3849, %v3844, %v2849
  %v3928 = vsel %vm3849, %v3845, %v2851
  %v3929 = vsel %vm3849, %v3846, %v2853
  %v3930 = vsel %vm3849, %v3847, %v2855
  %v3931 = vsel %vm3849, %v3848, %v2857
  %vm3932 = vcmask 261120
  %v3933 = vsel %vm3932, %v3850, %v3106
  %v3934 = vsel %vm3932, %v3851, %v3108
  %v3935 = vsel %vm3932, %v3852, %v3110
  %v3936 = vsel %vm3932, %v3853, %v3112
  %v3937 = vsel %vm3932, %v3854, %v3114
  %v3938 = vsel %vm3932, %v3855, %v3116
  %v3939 = vsel %vm3932, %v3856, %v3118
  %v3940 = vsel %vm3932, %v3857, %v3120
  %v3941 = vsel %vm3932, %v3858, %v3122
  %v3942 = vsel %vm3932, %v3859, %v3124
  %v3943 = vsel %vm3932, %v3860, %v3126
  %v3944 = vsel %vm3932, %v3861, %v3128
  %v3945 = vsel %vm3932, %v3862, %v3130
  %v3946 = vsel %vm3932, %v3863, %v3132
  %v3947 = vsel %vm3932, %v3864, %v3134
  %v3948 = vsel %vm3932, %v3865, %v3136
  %v3949 = vsel %vm3932, %v3866, %v3138
  %v3950 = vsel %vm3932, %v3867, %v3140
  %v3951 = vsel %vm3932, %v3868, %v3142
  %v3952 = vsel %vm3932, %v3869, %v3144
  %v3953 = vsel %vm3932, %v3870, %v3146
  %v3954 = vsel %vm3932, %v3871, %v3148
  %v3955 = vsel %vm3932, %v3872, %v3150
  %v3956 = vsel %vm3932, %v3873, %v3152
  %v3957 = vsel %vm3932, %v3874, %v3154
  %v3958 = vsel %vm3932, %v3875, %v3156
  %v3959 = vsel %vm3932, %v3876, %v3158
  %v3960 = vsel %vm3932, %v3877, %v3160
  %v3961 = vsel %vm3932, %v3878, %v3162
  %v3962 = vsel %vm3932, %v3879, %v3164
  %v3963 = vsel %vm3932, %v3880, %v3166
  %v3964 = vsel %vm3932, %v3881, %v3168
  %v3965 = vsel %vm3932, %v3882, %v3170
  %v3966 = vsel %vm3932, %v3883, %v3172
  %v3967 = vsel %vm3932, %v3884, %v3174
  %v3968 = vsel %vm3932, %v3885, %v3176
  %v3969 = vsel %vm3932, %v3886, %v3178
  %v3970 = vsel %vm3932, %v3887, %v3180
  %v3971 = vsel %vm3932, %v3888, %v3182
  %v3972 = vsel %vm3932, %v3889, %v3184
  %v3973 = vsel %vm3932, %v3890, %v3186
  %v3974 = vsel %vm3932, %v3891, %v3188
  %v3975 = vsel %vm3932, %v3892, %v3190
  %v3976 = vsel %vm3932, %v3893, %v3192
  %v3977 = vsel %vm3932, %v3894, %v3194
  %v3978 = vsel %vm3932, %v3895, %v3196
  %v3979 = vsel %vm3932, %v3896, %v3198
  %v3980 = vsel %vm3932, %v3897, %v3200
  %v3981 = vsel %vm3932, %v3898, %v3202
  %v3982 = vsel %vm3932, %v3899, %v3204
  %v3983 = vsel %vm3932, %v3900, %v3206
  %v3984 = vsel %vm3932, %v3901, %v3208
  %v3985 = vsel %vm3932, %v3902, %v3210
  %v3986 = vsel %vm3932, %v3903, %v3212
  %v3987 = vsel %vm3932, %v3904, %v3214
  %v3988 = vsel %vm3932, %v3905, %v3216
  %v3989 = vsel %vm3932, %v3906, %v3218
  %v3990 = vsel %vm3932, %v3907, %v3220
  %v3991 = vsel %vm3932, %v3908, %v3222
  %v3992 = vsel %vm3932, %v3909, %v3224
  %v3993 = vsel %vm3932, %v3910, %v3226
  %v3994 = vsel %vm3932, %v3911, %v3228
  %v3995 = vsel %vm3932, %v3912, %v3230
  %v3996 = vsel %vm3932, %v3913, %v3232
  %v3997 = vsel %vm3932, %v3914, %v3234
  %v3998 = vsel %vm3932, %v3915, %v3236
  %v3999 = vsel %vm3932, %v3916, %v3238
  %v4000 = vsel %vm3932, %v3917, %v3240
  %v4001 = vsel %vm3932, %v3918, %v3242
  %v4002 = vsel %vm3932, %v3919, %v3244
  %v4003 = vsel %vm3932, %v3920, %v3246
  %v4004 = vsel %vm3932, %v3921, %v3248
  %v4005 = vsel %vm3932, %v3922, %v3250
  %v4006 = vsel %vm3932, %v3923, %v3252
  %v4007 = vsel %vm3932, %v3924, %v3254
  %v4008 = vsel %vm3932, %v3925, %v3256
  %v4009 = vsel %vm3932, %v3926, %v3258
  %v4010 = vsel %vm3932, %v3927, %v3260
  %v4011 = vsel %vm3932, %v3928, %v3262
  %v4012 = vsel %vm3932, %v3929, %v3264
  %v4013 = vsel %vm3932, %v3930, %v3266
  %v4014 = vsel %vm3932, %v3931, %v3268
  %v4015 = vpack.c.bf16 %v3934, %v3933
  %v4016 = vpack.c.bf16 %v3936, %v3935
  %v4017 = vpack.c.bf16 %v3938, %v3937
  %v4018 = vpack.c.bf16 %v3940, %v3939
  %v4019 = vpack.c.bf16 %v3942, %v3941
  %v4020 = vpack.c.bf16 %v3944, %v3943
  %v4021 = vpack.c.bf16 %v3946, %v3945
  %v4022 = vpack.c.bf16 %v3948, %v3947
  %v4023 = vpack.c.bf16 %v3950, %v3949
  %v4024 = vpack.c.bf16 %v3952, %v3951
  %v4025 = vpack.c.bf16 %v3954, %v3953
  %v4026 = vpack.c.bf16 %v3956, %v3955
  %v4027 = vpack.c.bf16 %v3958, %v3957
  %v4028 = vpack.c.bf16 %v3960, %v3959
  %v4029 = vpack.c.bf16 %v3962, %v3961
  %v4030 = vpack.c.bf16 %v3964, %v3963
  %v4031 = vpack.c.bf16 %v3966, %v3965
  %v4032 = vpack.c.bf16 %v3968, %v3967
  %v4033 = vpack.c.bf16 %v3970, %v3969
  %v4034 = vpack.c.bf16 %v3972, %v3971
  %v4035 = vpack.c.bf16 %v3974, %v3973
  %v4036 = vpack.c.bf16 %v3976, %v3975
  %v4037 = vpack.c.bf16 %v3978, %v3977
  %v4038 = vpack.c.bf16 %v3980, %v3979
  %v4039 = vpack.c.bf16 %v3982, %v3981
  %v4040 = vpack.c.bf16 %v3984, %v3983
  %v4041 = vpack.c.bf16 %v3986, %v3985
  %v4042 = vpack.c.bf16 %v3988, %v3987
  %v4043 = vpack.c.bf16 %v3990, %v3989
  %v4044 = vpack.c.bf16 %v3992, %v3991
  %v4045 = vpack.c.bf16 %v3994, %v3993
  %v4046 = vpack.c.bf16 %v3996, %v3995
  %v4047 = vpack.c.bf16 %v3998, %v3997
  %v4048 = vpack.c.bf16 %v4000, %v3999
  %v4049 = vpack.c.bf16 %v4002, %v4001
  %v4050 = vpack.c.bf16 %v4004, %v4003
  %v4051 = vpack.c.bf16 %v4006, %v4005
  %v4052 = vpack.c.bf16 %v4008, %v4007
  %v4053 = vpack.c.bf16 %v4010, %v4009
  %v4054 = vpack.c.bf16 %v4012, %v4011
  %v4055 = vpack.c.bf16 %v4014, %v4013
  %v4056 = vld [vmem:[%s2] sm:$0xf]
  %v4057 = vld [vmem:[%s2 + $0x4] sm:$0xf]
  %v4058 = vld [vmem:[%s2 + $0x8] sm:$0xf]
  %v4059 = vld [vmem:[%s2 + $0xc] sm:$0xf]
  %v4060 = vld [vmem:[%s2 + $0x10] sm:$0x3]
  %vm4061 = vsmask.f32 5376
  %v4063 = vshrl.u32 %v4015, 16
  %v4065 = vrot.slane %v4063, 2
  %v4066 = vshll.u32 %v4015, 16
  %v4068 = vrot.slane %v4066, 3
  %v4069 = vor.u32 %v4065, %v4068
  %v4071 = vshrl.u32 %v4016, 16
  %v4073 = vrot.slane %v4071, 2
  %v4074 = vshll.u32 %v4016, 16
  %v4076 = vrot.slane %v4074, 3
  %v4077 = vor.u32 %v4073, %v4076
  %v4078 = vsel %vm4061, %v4069, %v4077
  %v4080 = vshrl.u32 %v4017, 16
  %v4082 = vrot.slane %v4080, 2
  %v4083 = vshll.u32 %v4017, 16
  %v4085 = vrot.slane %v4083, 3
  %v4086 = vor.u32 %v4082, %v4085
  %v4087 = vsel %vm4061, %v4077, %v4086
  %v4089 = vshrl.u32 %v4018, 16
  %v4091 = vrot.slane %v4089, 2
  %v4092 = vshll.u32 %v4018, 16
  %v4094 = vrot.slane %v4092, 3
  %v4095 = vor.u32 %v4091, %v4094
  %v4096 = vsel %vm4061, %v4086, %v4095
  %v4098 = vshrl.u32 %v4019, 16
  %v4100 = vrot.slane %v4098, 2
  %v4101 = vshll.u32 %v4019, 16
  %v4103 = vrot.slane %v4101, 3
  %v4104 = vor.u32 %v4100, %v4103
  %v4105 = vsel %vm4061, %v4095, %v4104
  %v4107 = vshrl.u32 %v4020, 16
  %v4109 = vrot.slane %v4107, 2
  %v4110 = vshll.u32 %v4020, 16
  %v4112 = vrot.slane %v4110, 3
  %v4113 = vor.u32 %v4109, %v4112
  %v4114 = vsel %vm4061, %v4104, %v4113
  %v4116 = vshrl.u32 %v4021, 16
  %v4118 = vrot.slane %v4116, 2
  %v4119 = vshll.u32 %v4021, 16
  %v4121 = vrot.slane %v4119, 3
  %v4122 = vor.u32 %v4118, %v4121
  %v4123 = vsel %vm4061, %v4113, %v4122
  %v4125 = vshrl.u32 %v4022, 16
  %v4127 = vrot.slane %v4125, 2
  %v4128 = vshll.u32 %v4022, 16
  %v4130 = vrot.slane %v4128, 3
  %v4131 = vor.u32 %v4127, %v4130
  %v4132 = vsel %vm4061, %v4122, %v4131
  %v4134 = vshrl.u32 %v4023, 16
  %v4136 = vrot.slane %v4134, 2
  %v4137 = vshll.u32 %v4023, 16
  %v4139 = vrot.slane %v4137, 3
  %v4140 = vor.u32 %v4136, %v4139
  %v4141 = vsel %vm4061, %v4131, %v4140
  %v4143 = vshrl.u32 %v4024, 16
  %v4145 = vrot.slane %v4143, 2
  %v4146 = vshll.u32 %v4024, 16
  %v4148 = vrot.slane %v4146, 3
  %v4149 = vor.u32 %v4145, %v4148
  %v4150 = vsel %vm4061, %v4140, %v4149
  %v4152 = vshrl.u32 %v4025, 16
  %v4154 = vrot.slane %v4152, 2
  %v4155 = vshll.u32 %v4025, 16
  %v4157 = vrot.slane %v4155, 3
  %v4158 = vor.u32 %v4154, %v4157
  %v4159 = vsel %vm4061, %v4149, %v4158
  %v4161 = vshrl.u32 %v4026, 16
  %v4163 = vrot.slane %v4161, 2
  %v4164 = vshll.u32 %v4026, 16
  %v4166 = vrot.slane %v4164, 3
  %v4167 = vor.u32 %v4163, %v4166
  %v4168 = vsel %vm4061, %v4158, %v4167
  %v4170 = vshrl.u32 %v4027, 16
  %v4172 = vrot.slane %v4170, 2
  %v4173 = vshll.u32 %v4027, 16
  %v4175 = vrot.slane %v4173, 3
  %v4176 = vor.u32 %v4172, %v4175
  %v4177 = vsel %vm4061, %v4167, %v4176
  %v4179 = vshrl.u32 %v4028, 16
  %v4181 = vrot.slane %v4179, 2
  %v4182 = vshll.u32 %v4028, 16
  %v4184 = vrot.slane %v4182, 3
  %v4185 = vor.u32 %v4181, %v4184
  %v4186 = vsel %vm4061, %v4176, %v4185
  %v4188 = vshrl.u32 %v4029, 16
  %v4190 = vrot.slane %v4188, 2
  %v4191 = vshll.u32 %v4029, 16
  %v4193 = vrot.slane %v4191, 3
  %v4194 = vor.u32 %v4190, %v4193
  %v4195 = vsel %vm4061, %v4185, %v4194
  %v4197 = vshrl.u32 %v4030, 16
  %v4199 = vrot.slane %v4197, 2
  %v4200 = vshll.u32 %v4030, 16
  %v4202 = vrot.slane %v4200, 3
  %v4203 = vor.u32 %v4199, %v4202
  %v4204 = vsel %vm4061, %v4194, %v4203
  %v4206 = vshrl.u32 %v4031, 16
  %v4208 = vrot.slane %v4206, 2
  %v4209 = vshll.u32 %v4031, 16
  %v4211 = vrot.slane %v4209, 3
  %v4212 = vor.u32 %v4208, %v4211
  %v4213 = vsel %vm4061, %v4203, %v4212
  %v4215 = vshrl.u32 %v4032, 16
  %v4217 = vrot.slane %v4215, 2
  %v4218 = vshll.u32 %v4032, 16
  %v4220 = vrot.slane %v4218, 3
  %v4221 = vor.u32 %v4217, %v4220
  %v4222 = vsel %vm4061, %v4212, %v4221
  %v4224 = vshrl.u32 %v4033, 16
  %v4226 = vrot.slane %v4224, 2
  %v4227 = vshll.u32 %v4033, 16
  %v4229 = vrot.slane %v4227, 3
  %v4230 = vor.u32 %v4226, %v4229
  %v4231 = vsel %vm4061, %v4221, %v4230
  %v4233 = vshrl.u32 %v4034, 16
  %v4235 = vrot.slane %v4233, 2
  %v4236 = vshll.u32 %v4034, 16
  %v4238 = vrot.slane %v4236, 3
  %v4239 = vor.u32 %v4235, %v4238
  %v4240 = vsel %vm4061, %v4230, %v4239
  %v4242 = vshrl.u32 %v4035, 16
  %v4244 = vrot.slane %v4242, 2
  %v4245 = vshll.u32 %v4035, 16
  %v4247 = vrot.slane %v4245, 3
  %v4248 = vor.u32 %v4244, %v4247
  %v4249 = vsel %vm4061, %v4239, %v4248
  %v4251 = vshrl.u32 %v4036, 16
  %v4253 = vrot.slane %v4251, 2
  %v4254 = vshll.u32 %v4036, 16
  %v4256 = vrot.slane %v4254, 3
  %v4257 = vor.u32 %v4253, %v4256
  %v4258 = vsel %vm4061, %v4248, %v4257
  %v4260 = vshrl.u32 %v4037, 16
  %v4262 = vrot.slane %v4260, 2
  %v4263 = vshll.u32 %v4037, 16
  %v4265 = vrot.slane %v4263, 3
  %v4266 = vor.u32 %v4262, %v4265
  %v4267 = vsel %vm4061, %v4257, %v4266
  %v4269 = vshrl.u32 %v4038, 16
  %v4271 = vrot.slane %v4269, 2
  %v4272 = vshll.u32 %v4038, 16
  %v4274 = vrot.slane %v4272, 3
  %v4275 = vor.u32 %v4271, %v4274
  %v4276 = vsel %vm4061, %v4266, %v4275
  %v4278 = vshrl.u32 %v4039, 16
  %v4280 = vrot.slane %v4278, 2
  %v4281 = vshll.u32 %v4039, 16
  %v4283 = vrot.slane %v4281, 3
  %v4284 = vor.u32 %v4280, %v4283
  %v4285 = vsel %vm4061, %v4275, %v4284
  %v4287 = vshrl.u32 %v4040, 16
  %v4289 = vrot.slane %v4287, 2
  %v4290 = vshll.u32 %v4040, 16
  %v4292 = vrot.slane %v4290, 3
  %v4293 = vor.u32 %v4289, %v4292
  %v4294 = vsel %vm4061, %v4284, %v4293
  %v4296 = vshrl.u32 %v4041, 16
  %v4298 = vrot.slane %v4296, 2
  %v4299 = vshll.u32 %v4041, 16
  %v4301 = vrot.slane %v4299, 3
  %v4302 = vor.u32 %v4298, %v4301
  %v4303 = vsel %vm4061, %v4293, %v4302
  %v4305 = vshrl.u32 %v4042, 16
  %v4307 = vrot.slane %v4305, 2
  %v4308 = vshll.u32 %v4042, 16
  %v4310 = vrot.slane %v4308, 3
  %v4311 = vor.u32 %v4307, %v4310
  %v4312 = vsel %vm4061, %v4302, %v4311
  %v4314 = vshrl.u32 %v4043, 16
  %v4316 = vrot.slane %v4314, 2
  %v4317 = vshll.u32 %v4043, 16
  %v4319 = vrot.slane %v4317, 3
  %v4320 = vor.u32 %v4316, %v4319
  %v4321 = vsel %vm4061, %v4311, %v4320
  %v4323 = vshrl.u32 %v4044, 16
  %v4325 = vrot.slane %v4323, 2
  %v4326 = vshll.u32 %v4044, 16
  %v4328 = vrot.slane %v4326, 3
  %v4329 = vor.u32 %v4325, %v4328
  %v4330 = vsel %vm4061, %v4320, %v4329
  %v4332 = vshrl.u32 %v4045, 16
  %v4334 = vrot.slane %v4332, 2
  %v4335 = vshll.u32 %v4045, 16
  %v4337 = vrot.slane %v4335, 3
  %v4338 = vor.u32 %v4334, %v4337
  %v4339 = vsel %vm4061, %v4329, %v4338
  %v4341 = vshrl.u32 %v4046, 16
  %v4343 = vrot.slane %v4341, 2
  %v4344 = vshll.u32 %v4046, 16
  %v4346 = vrot.slane %v4344, 3
  %v4347 = vor.u32 %v4343, %v4346
  %v4348 = vsel %vm4061, %v4338, %v4347
  %v4350 = vshrl.u32 %v4047, 16
  %v4352 = vrot.slane %v4350, 2
  %v4353 = vshll.u32 %v4047, 16
  %v4355 = vrot.slane %v4353, 3
  %v4356 = vor.u32 %v4352, %v4355
  %v4357 = vsel %vm4061, %v4347, %v4356
  %v4359 = vshrl.u32 %v4048, 16
  %v4361 = vrot.slane %v4359, 2
  %v4362 = vshll.u32 %v4048, 16
  %v4364 = vrot.slane %v4362, 3
  %v4365 = vor.u32 %v4361, %v4364
  %v4366 = vsel %vm4061, %v4356, %v4365
  %v4368 = vshrl.u32 %v4049, 16
  %v4370 = vrot.slane %v4368, 2
  %v4371 = vshll.u32 %v4049, 16
  %v4373 = vrot.slane %v4371, 3
  %v4374 = vor.u32 %v4370, %v4373
  %v4375 = vsel %vm4061, %v4365, %v4374
  %v4377 = vshrl.u32 %v4050, 16
  %v4379 = vrot.slane %v4377, 2
  %v4380 = vshll.u32 %v4050, 16
  %v4382 = vrot.slane %v4380, 3
  %v4383 = vor.u32 %v4379, %v4382
  %v4384 = vsel %vm4061, %v4374, %v4383
  %v4386 = vshrl.u32 %v4051, 16
  %v4388 = vrot.slane %v4386, 2
  %v4389 = vshll.u32 %v4051, 16
  %v4391 = vrot.slane %v4389, 3
  %v4392 = vor.u32 %v4388, %v4391
  %v4393 = vsel %vm4061, %v4383, %v4392
  %v4395 = vshrl.u32 %v4052, 16
  %v4397 = vrot.slane %v4395, 2
  %v4398 = vshll.u32 %v4052, 16
  %v4400 = vrot.slane %v4398, 3
  %v4401 = vor.u32 %v4397, %v4400
  %v4402 = vsel %vm4061, %v4392, %v4401
  %v4404 = vshrl.u32 %v4053, 16
  %v4406 = vrot.slane %v4404, 2
  %v4407 = vshll.u32 %v4053, 16
  %v4409 = vrot.slane %v4407, 3
  %v4410 = vor.u32 %v4406, %v4409
  %v4411 = vsel %vm4061, %v4401, %v4410
  %v4413 = vshrl.u32 %v4054, 16
  %v4415 = vrot.slane %v4413, 2
  %v4416 = vshll.u32 %v4054, 16
  %v4418 = vrot.slane %v4416, 3
  %v4419 = vor.u32 %v4415, %v4418
  %v4420 = vsel %vm4061, %v4410, %v4419
  %v4422 = vshrl.u32 %v4055, 16
  %v4424 = vrot.slane %v4422, 2
  %v4425 = vshll.u32 %v4055, 16
  %v4427 = vrot.slane %v4425, 3
  %v4428 = vor.u32 %v4424, %v4427
  %v4429 = vsel %vm4061, %v4419, %v4428
  %v4435 = vunpack.c.l.b16 %v4056
  %v4436 = vunpack.c.l.b16 %v4057
  %v4437 = vunpack.c.l.b16 %v4058
  %v4438 = vunpack.c.l.b16 %v4059
  %v4439 = vunpack.c.l.b16 %v4060
  %v4440 = vpack.c.b16 %v4436, %v4435
  %v4441 = vpack.c.b16 %v4438, %v4437
  %v4442 = vpack.c.b16 %v4439, %v4439
  %vm4445 = vcmask 293888
  %v4447 = vsel %vm4445, %v4078, 0
  %v4450 = vsel %vm4445, %v4087, 0
  %v4453 = vsel %vm4445, %v4096, 0
  %v4456 = vsel %vm4445, %v4105, 0
  %v4459 = vsel %vm4445, %v4114, 0
  %v4462 = vsel %vm4445, %v4123, 0
  %v4465 = vsel %vm4445, %v4132, 0
  %v4468 = vsel %vm4445, %v4141, 0
  %v4471 = vsel %vm4445, %v4150, 0
  %v4474 = vsel %vm4445, %v4159, 0
  %v4477 = vsel %vm4445, %v4168, 0
  %v4480 = vsel %vm4445, %v4177, 0
  %v4483 = vsel %vm4445, %v4186, 0
  %v4486 = vsel %vm4445, %v4195, 0
  %v4489 = vsel %vm4445, %v4204, 0
  %v4492 = vsel %vm4445, %v4213, 0
  %v4495 = vsel %vm4445, %v4222, 0
  %v4498 = vsel %vm4445, %v4231, 0
  %v4501 = vsel %vm4445, %v4240, 0
  %v4504 = vsel %vm4445, %v4249, 0
  %v4507 = vsel %vm4445, %v4258, 0
  %v4510 = vsel %vm4445, %v4267, 0
  %v4513 = vsel %vm4445, %v4276, 0
  %v4516 = vsel %vm4445, %v4285, 0
  %v4519 = vsel %vm4445, %v4294, 0
  %v4522 = vsel %vm4445, %v4303, 0
  %v4525 = vsel %vm4445, %v4312, 0
  %v4528 = vsel %vm4445, %v4321, 0
  %v4531 = vsel %vm4445, %v4330, 0
  %v4534 = vsel %vm4445, %v4339, 0
  %v4537 = vsel %vm4445, %v4348, 0
  %v4540 = vsel %vm4445, %v4357, 0
  %v4543 = vsel %vm4445, %v4366, 0
  %v4546 = vsel %vm4445, %v4375, 0
  %v4549 = vsel %vm4445, %v4384, 0
  %v4552 = vsel %vm4445, %v4393, 0
  %v4555 = vsel %vm4445, %v4402, 0
  %v4558 = vsel %vm4445, %v4411, 0
  %v4561 = vsel %vm4445, %v4420, 0
  %v4564 = vsel %vm4445, %v4429, 0
  %v4567 = vsel %vm4445, %v4428, 0
  %v4570 = vsel %vm2941, %v4442, 0
  %4572 = vmatprep.subr.bf16.mxu0 0
  %4573 = vmatpush1.bf16.msra.mxu0 %v4440
  %4574 = vmatprep.subr.bf16.mxu0 0
  %4575 = vmatpush1.bf16.msra.mxu0 %v4441
  %4576 = vmatprep.subr.bf16.mxu0 0
  %4577 = vmatpush1.bf16.msra.mxu0 %v4570
  %4578 = vmatprep.subr.bf16.mxu0 0
  %4579 = vmatpush1.bf16.msra.mxu0 0
  %4580 = vmatprep.subr.bf16.mxu0 0
  %4581 = vmatpush1.bf16.msra.mxu0 0
  %4582 = vmatprep.subr.bf16.mxu0 0
  %4583 = vmatpush1.bf16.msra.mxu0 0
  %4584 = vmatprep.subr.bf16.mxu0 0
  %4585 = vmatpush1.bf16.msra.mxu0 0
  %4586 = vmatprep.subr.bf16.mxu0 0
  %4587 = vmatpush1.bf16.msra.mxu0 0
  %4588 = vmatprep.subr.bf16.mxu0 0
  %4589 = vmatpush1.bf16.msra.mxu0 0
  %4590 = vmatprep.subr.bf16.mxu0 0
  %4591 = vmatpush1.bf16.msra.mxu0 0
  %4592 = vmatprep.subr.bf16.mxu0 0
  %4593 = vmatpush1.bf16.msra.mxu0 0
  %4594 = vmatprep.subr.bf16.mxu0 0
  %4595 = vmatpush1.bf16.msra.mxu0 0
  %4596 = vmatprep.subr.bf16.mxu0 0
  %4597 = vmatpush1.bf16.msra.mxu0 0
  %4598 = vmatprep.subr.bf16.mxu0 0
  %4599 = vmatpush1.bf16.msra.mxu0 0
  %4600 = vmatprep.subr.bf16.mxu0 0
  %4601 = vmatpush1.bf16.msra.mxu0 0
  %4602 = vmatprep.subr.bf16.mxu0 0
  %4603 = vmatpush1.bf16.msra.mxu0 0
  %4604 = vmatprep.mubr.bf16.mxu0 0
  %4605 = vmatmul.mubr.bf16.gmra.mrb[0].mxu0 %v4447
  %v4606 = vpop.f32.mrb[0].mxu0
  %v4607 = vadd.f32 0.0, %v4606
  %v4608 = vpop.f32.mrb[0].mxu0
  %v4609 = vpop.f32.mrb[0].mxu0
  %v4610 = vadd.f32 0.0, %v4609
  %v4611 = vpop.f32.mrb[0].mxu0
  %4612 = vmatprep.mubr.bf16.mxu0 0
  %4613 = vmatmul.mubr.bf16.gmra.mrb[0].mxu0 %v4450
  %v4614 = vpop.f32.mrb[0].mxu0
  %v4615 = vadd.f32 0.0, %v4614
  %v4616 = vpop.f32.mrb[0].mxu0
  %v4617 = vpop.f32.mrb[0].mxu0
  %v4618 = vadd.f32 0.0, %v4617
  %v4619 = vpop.f32.mrb[0].mxu0
  %4620 = vmatprep.mubr.bf16.mxu0 0
  %4621 = vmatmul.mubr.bf16.gmra.mrb[0].mxu0 %v4453
  %v4622 = vpop.f32.mrb[0].mxu0
  %v4623 = vadd.f32 0.0, %v4622
  %v4624 = vpop.f32.mrb[0].mxu0
  %v4625 = vpop.f32.mrb[0].mxu0
  %v4626 = vadd.f32 0.0, %v4625
  %v4627 = vpop.f32.mrb[0].mxu0
  %4628 = vmatprep.mubr.bf16.mxu0 0
  %4629 = vmatmul.mubr.bf16.gmra.mrb[0].mxu0 %v4456
  %v4630 = vpop.f32.mrb[0].mxu0
  %v4631 = vadd.f32 0.0, %v4630
  %v4632 = vpop.f32.mrb[0].mxu0
  %v4633 = vpop.f32.mrb[0].mxu0
  %v4634 = vadd.f32 0.0, %v4633
  %v4635 = vpop.f32.mrb[0].mxu0
  %4636 = vmatprep.mubr.bf16.mxu0 0
  %4637 = vmatmul.mubr.bf16.gmra.mrb[0].mxu0 %v4459
  %v4638 = vpop.f32.mrb[0].mxu0
  %v4639 = vadd.f32 0.0, %v4638
  %v4640 = vpop.f32.mrb[0].mxu0
  %v4641 = vpop.f32.mrb[0].mxu0
  %v4642 = vadd.f32 0.0, %v4641
  %v4643 = vpop.f32.mrb[0].mxu0
  %4644 = vmatprep.mubr.bf16.mxu0 0
  %4645 = vmatmul.mubr.bf16.gmra.mrb[0].mxu0 %v4462
  %v4646 = vpop.f32.mrb[0].mxu0
  %v4647 = vadd.f32 0.0, %v4646
  %v4648 = vpop.f32.mrb[0].mxu0
  %v4649 = vpop.f32.mrb[0].mxu0
  %v4650 = vadd.f32 0.0, %v4649
  %v4651 = vpop.f32.mrb[0].mxu0
  %4652 = vmatprep.mubr.bf16.mxu0 0
  %4653 = vmatmul.mubr.bf16.gmra.mrb[0].mxu0 %v4465
  %v4654 = vpop.f32.mrb[0].mxu0
  %v4655 = vadd.f32 0.0, %v4654
  %v4656 = vpop.f32.mrb[0].mxu0
  %v4657 = vpop.f32.mrb[0].mxu0
  %v4658 = vadd.f32 0.0, %v4657
  %v4659 = vpop.f32.mrb[0].mxu0
  %4660 = vmatprep.mubr.bf16.mxu0 0
  %4661 = vmatmul.mubr.bf16.gmra.mrb[0].mxu0 %v4468
  %v4662 = vpop.f32.mrb[0].mxu0
  %v4663 = vadd.f32 0.0, %v4662
  %v4664 = vpop.f32.mrb[0].mxu0
  %v4665 = vpop.f32.mrb[0].mxu0
  %v4666 = vadd.f32 0.0, %v4665
  %v4667 = vpop.f32.mrb[0].mxu0
  %4668 = vmatprep.mubr.bf16.mxu0 0
  %4669 = vmatmul.mubr.bf16.gmra.mrb[0].mxu0 %v4471
  %v4670 = vpop.f32.mrb[0].mxu0
  %v4671 = vadd.f32 0.0, %v4670
  %v4672 = vpop.f32.mrb[0].mxu0
  %v4673 = vpop.f32.mrb[0].mxu0
  %v4674 = vadd.f32 0.0, %v4673
  %v4675 = vpop.f32.mrb[0].mxu0
  %4676 = vmatprep.mubr.bf16.mxu0 0
  %4677 = vmatmul.mubr.bf16.gmra.mrb[0].mxu0 %v4474
  %v4678 = vpop.f32.mrb[0].mxu0
  %v4679 = vadd.f32 0.0, %v4678
  %v4680 = vpop.f32.mrb[0].mxu0
  %v4681 = vpop.f32.mrb[0].mxu0
  %v4682 = vadd.f32 0.0, %v4681
  %v4683 = vpop.f32.mrb[0].mxu0
  %4684 = vmatprep.mubr.bf16.mxu0 0
  %4685 = vmatmul.mubr.bf16.gmra.mrb[0].mxu0 %v4477
  %v4686 = vpop.f32.mrb[0].mxu0
  %v4687 = vadd.f32 0.0, %v4686
  %v4688 = vpop.f32.mrb[0].mxu0
  %v4689 = vpop.f32.mrb[0].mxu0
  %v4690 = vadd.f32 0.0, %v4689
  %v4691 = vpop.f32.mrb[0].mxu0
  %4692 = vmatprep.mubr.bf16.mxu0 0
  %4693 = vmatmul.mubr.bf16.gmra.mrb[0].mxu0 %v4480
  %v4694 = vpop.f32.mrb[0].mxu0
  %v4695 = vadd.f32 0.0, %v4694
  %v4696 = vpop.f32.mrb[0].mxu0
  %v4697 = vpop.f32.mrb[0].mxu0
  %v4698 = vadd.f32 0.0, %v4697
  %v4699 = vpop.f32.mrb[0].mxu0
  %4700 = vmatprep.mubr.bf16.mxu0 0
  %4701 = vmatmul.mubr.bf16.gmra.mrb[0].mxu0 %v4483
  %v4702 = vpop.f32.mrb[0].mxu0
  %v4703 = vadd.f32 0.0, %v4702
  %v4704 = vpop.f32.mrb[0].mxu0
  %v4705 = vpop.f32.mrb[0].mxu0
  %v4706 = vadd.f32 0.0, %v4705
  %v4707 = vpop.f32.mrb[0].mxu0
  %4708 = vmatprep.mubr.bf16.mxu0 0
  %4709 = vmatmul.mubr.bf16.gmra.mrb[0].mxu0 %v4486
  %v4710 = vpop.f32.mrb[0].mxu0
  %v4711 = vadd.f32 0.0, %v4710
  %v4712 = vpop.f32.mrb[0].mxu0
  %v4713 = vpop.f32.mrb[0].mxu0
  %v4714 = vadd.f32 0.0, %v4713
  %v4715 = vpop.f32.mrb[0].mxu0
  %4716 = vmatprep.mubr.bf16.mxu0 0
  %4717 = vmatmul.mubr.bf16.gmra.mrb[0].mxu0 %v4489
  %v4718 = vpop.f32.mrb[0].mxu0
  %v4719 = vadd.f32 0.0, %v4718
  %v4720 = vpop.f32.mrb[0].mxu0
  %v4721 = vpop.f32.mrb[0].mxu0
  %v4722 = vadd.f32 0.0, %v4721
  %v4723 = vpop.f32.mrb[0].mxu0
  %4724 = vmatprep.mubr.bf16.mxu0 0
  %4725 = vmatmul.mubr.bf16.gmra.mrb[0].mxu0 %v4492
  %v4726 = vpop.f32.mrb[0].mxu0
  %v4727 = vadd.f32 0.0, %v4726
  %v4728 = vpop.f32.mrb[0].mxu0
  %v4729 = vpop.f32.mrb[0].mxu0
  %v4730 = vadd.f32 0.0, %v4729
  %v4731 = vpop.f32.mrb[0].mxu0
  %4732 = vmatprep.mubr.bf16.mxu0 0
  %4733 = vmatmul.mubr.bf16.gmra.mrb[0].mxu0 %v4495
  %v4734 = vpop.f32.mrb[0].mxu0
  %v4735 = vadd.f32 0.0, %v4734
  %v4736 = vpop.f32.mrb[0].mxu0
  %v4737 = vpop.f32.mrb[0].mxu0
  %v4738 = vadd.f32 0.0, %v4737
  %v4739 = vpop.f32.mrb[0].mxu0
  %4740 = vmatprep.mubr.bf16.mxu0 0
  %4741 = vmatmul.mubr.bf16.gmra.mrb[0].mxu0 %v4498
  %v4742 = vpop.f32.mrb[0].mxu0
  %v4743 = vadd.f32 0.0, %v4742
  %v4744 = vpop.f32.mrb[0].mxu0
  %v4745 = vpop.f32.mrb[0].mxu0
  %v4746 = vadd.f32 0.0, %v4745
  %v4747 = vpop.f32.mrb[0].mxu0
  %4748 = vmatprep.mubr.bf16.mxu0 0
  %4749 = vmatmul.mubr.bf16.gmra.mrb[0].mxu0 %v4501
  %v4750 = vpop.f32.mrb[0].mxu0
  %v4751 = vadd.f32 0.0, %v4750
  %v4752 = vpop.f32.mrb[0].mxu0
  %v4753 = vpop.f32.mrb[0].mxu0
  %v4754 = vadd.f32 0.0, %v4753
  %v4755 = vpop.f32.mrb[0].mxu0
  %4756 = vmatprep.mubr.bf16.mxu0 0
  %4757 = vmatmul.mubr.bf16.gmra.mrb[0].mxu0 %v4504
  %v4758 = vpop.f32.mrb[0].mxu0
  %v4759 = vadd.f32 0.0, %v4758
  %v4760 = vpop.f32.mrb[0].mxu0
  %v4761 = vpop.f32.mrb[0].mxu0
  %v4762 = vadd.f32 0.0, %v4761
  %v4763 = vpop.f32.mrb[0].mxu0
  %4764 = vmatprep.mubr.bf16.mxu0 0
  %4765 = vmatmul.mubr.bf16.gmra.mrb[0].mxu0 %v4507
  %v4766 = vpop.f32.mrb[0].mxu0
  %v4767 = vadd.f32 0.0, %v4766
  %v4768 = vpop.f32.mrb[0].mxu0
  %v4769 = vpop.f32.mrb[0].mxu0
  %v4770 = vadd.f32 0.0, %v4769
  %v4771 = vpop.f32.mrb[0].mxu0
  %4772 = vmatprep.mubr.bf16.mxu0 0
  %4773 = vmatmul.mubr.bf16.gmra.mrb[0].mxu0 %v4510
  %v4774 = vpop.f32.mrb[0].mxu0
  %v4775 = vadd.f32 0.0, %v4774
  %v4776 = vpop.f32.mrb[0].mxu0
  %v4777 = vpop.f32.mrb[0].mxu0
  %v4778 = vadd.f32 0.0, %v4777
  %v4779 = vpop.f32.mrb[0].mxu0
  %4780 = vmatprep.mubr.bf16.mxu0 0
  %4781 = vmatmul.mubr.bf16.gmra.mrb[0].mxu0 %v4513
  %v4782 = vpop.f32.mrb[0].mxu0
  %v4783 = vadd.f32 0.0, %v4782
  %v4784 = vpop.f32.mrb[0].mxu0
  %v4785 = vpop.f32.mrb[0].mxu0
  %v4786 = vadd.f32 0.0, %v4785
  %v4787 = vpop.f32.mrb[0].mxu0
  %4788 = vmatprep.mubr.bf16.mxu0 0
  %4789 = vmatmul.mubr.bf16.gmra.mrb[0].mxu0 %v4516
  %v4790 = vpop.f32.mrb[0].mxu0
  %v4791 = vadd.f32 0.0, %v4790
  %v4792 = vpop.f32.mrb[0].mxu0
  %v4793 = vpop.f32.mrb[0].mxu0
  %v4794 = vadd.f32 0.0, %v4793
  %v4795 = vpop.f32.mrb[0].mxu0
  %4796 = vmatprep.mubr.bf16.mxu0 0
  %4797 = vmatmul.mubr.bf16.gmra.mrb[0].mxu0 %v4519
  %v4798 = vpop.f32.mrb[0].mxu0
  %v4799 = vadd.f32 0.0, %v4798
  %v4800 = vpop.f32.mrb[0].mxu0
  %v4801 = vpop.f32.mrb[0].mxu0
  %v4802 = vadd.f32 0.0, %v4801
  %v4803 = vpop.f32.mrb[0].mxu0
  %4804 = vmatprep.mubr.bf16.mxu0 0
  %4805 = vmatmul.mubr.bf16.gmra.mrb[0].mxu0 %v4522
  %v4806 = vpop.f32.mrb[0].mxu0
  %v4807 = vadd.f32 0.0, %v4806
  %v4808 = vpop.f32.mrb[0].mxu0
  %v4809 = vpop.f32.mrb[0].mxu0
  %v4810 = vadd.f32 0.0, %v4809
  %v4811 = vpop.f32.mrb[0].mxu0
  %4812 = vmatprep.mubr.bf16.mxu0 0
  %4813 = vmatmul.mubr.bf16.gmra.mrb[0].mxu0 %v4525
  %v4814 = vpop.f32.mrb[0].mxu0
  %v4815 = vadd.f32 0.0, %v4814
  %v4816 = vpop.f32.mrb[0].mxu0
  %v4817 = vpop.f32.mrb[0].mxu0
  %v4818 = vadd.f32 0.0, %v4817
  %v4819 = vpop.f32.mrb[0].mxu0
  %4820 = vmatprep.mubr.bf16.mxu0 0
  %4821 = vmatmul.mubr.bf16.gmra.mrb[0].mxu0 %v4528
  %v4822 = vpop.f32.mrb[0].mxu0
  %v4823 = vadd.f32 0.0, %v4822
  %v4824 = vpop.f32.mrb[0].mxu0
  %v4825 = vpop.f32.mrb[0].mxu0
  %v4826 = vadd.f32 0.0, %v4825
  %v4827 = vpop.f32.mrb[0].mxu0
  %4828 = vmatprep.mubr.bf16.mxu0 0
  %4829 = vmatmul.mubr.bf16.gmra.mrb[0].mxu0 %v4531
  %v4830 = vpop.f32.mrb[0].mxu0
  %v4831 = vadd.f32 0.0, %v4830
  %v4832 = vpop.f32.mrb[0].mxu0
  %v4833 = vpop.f32.mrb[0].mxu0
  %v4834 = vadd.f32 0.0, %v4833
  %v4835 = vpop.f32.mrb[0].mxu0
  %4836 = vmatprep.mubr.bf16.mxu0 0
  %4837 = vmatmul.mubr.bf16.gmra.mrb[0].mxu0 %v4534
  %v4838 = vpop.f32.mrb[0].mxu0
  %v4839 = vadd.f32 0.0, %v4838
  %v4840 = vpop.f32.mrb[0].mxu0
  %v4841 = vpop.f32.mrb[0].mxu0
  %v4842 = vadd.f32 0.0, %v4841
  %v4843 = vpop.f32.mrb[0].mxu0
  %4844 = vmatprep.mubr.bf16.mxu0 0
  %4845 = vmatmul.mubr.bf16.gmra.mrb[0].mxu0 %v4537
  %v4846 = vpop.f32.mrb[0].mxu0
  %v4847 = vadd.f32 0.0, %v4846
  %v4848 = vpop.f32.mrb[0].mxu0
  %v4849 = vpop.f32.mrb[0].mxu0
  %v4850 = vadd.f32 0.0, %v4849
  %v4851 = vpop.f32.mrb[0].mxu0
  %4852 = vmatprep.mubr.bf16.mxu0 0
  %4853 = vmatmul.mubr.bf16.gmra.mrb[0].mxu0 %v4540
  %v4854 = vpop.f32.mrb[0].mxu0
  %v4855 = vadd.f32 0.0, %v4854
  %v4856 = vpop.f32.mrb[0].mxu0
  %v4857 = vpop.f32.mrb[0].mxu0
  %v4858 = vadd.f32 0.0, %v4857
  %v4859 = vpop.f32.mrb[0].mxu0
  %4860 = vmatprep.mubr.bf16.mxu0 0
  %4861 = vmatmul.mubr.bf16.gmra.mrb[0].mxu0 %v4543
  %v4862 = vpop.f32.mrb[0].mxu0
  %v4863 = vadd.f32 0.0, %v4862
  %v4864 = vpop.f32.mrb[0].mxu0
  %v4865 = vpop.f32.mrb[0].mxu0
  %v4866 = vadd.f32 0.0, %v4865
  %v4867 = vpop.f32.mrb[0].mxu0
  %4868 = vmatprep.mubr.bf16.mxu0 0
  %4869 = vmatmul.mubr.bf16.gmra.mrb[0].mxu0 %v4546
  %v4870 = vpop.f32.mrb[0].mxu0
  %v4871 = vadd.f32 0.0, %v4870
  %v4872 = vpop.f32.mrb[0].mxu0
  %v4873 = vpop.f32.mrb[0].mxu0
  %v4874 = vadd.f32 0.0, %v4873
  %v4875 = vpop.f32.mrb[0].mxu0
  %4876 = vmatprep.mubr.bf16.mxu0 0
  %4877 = vmatmul.mubr.bf16.gmra.mrb[0].mxu0 %v4549
  %v4878 = vpop.f32.mrb[0].mxu0
  %v4879 = vadd.f32 0.0, %v4878
  %v4880 = vpop.f32.mrb[0].mxu0
  %v4881 = vpop.f32.mrb[0].mxu0
  %v4882 = vadd.f32 0.0, %v4881
  %v4883 = vpop.f32.mrb[0].mxu0
  %4884 = vmatprep.mubr.bf16.mxu0 0
  %4885 = vmatmul.mubr.bf16.gmra.mrb[0].mxu0 %v4552
  %v4886 = vpop.f32.mrb[0].mxu0
  %v4887 = vadd.f32 0.0, %v4886
  %v4888 = vpop.f32.mrb[0].mxu0
  %v4889 = vpop.f32.mrb[0].mxu0
  %v4890 = vadd.f32 0.0, %v4889
  %v4891 = vpop.f32.mrb[0].mxu0
  %4892 = vmatprep.mubr.bf16.mxu0 0
  %4893 = vmatmul.mubr.bf16.gmra.mrb[0].mxu0 %v4555
  %v4894 = vpop.f32.mrb[0].mxu0
  %v4895 = vadd.f32 0.0, %v4894
  %v4896 = vpop.f32.mrb[0].mxu0
  %v4897 = vpop.f32.mrb[0].mxu0
  %v4898 = vadd.f32 0.0, %v4897
  %v4899 = vpop.f32.mrb[0].mxu0
  %4900 = vmatprep.mubr.bf16.mxu0 0
  %4901 = vmatmul.mubr.bf16.gmra.mrb[0].mxu0 %v4558
  %v4902 = vpop.f32.mrb[0].mxu0
  %v4903 = vadd.f32 0.0, %v4902
  %v4904 = vpop.f32.mrb[0].mxu0
  %v4905 = vpop.f32.mrb[0].mxu0
  %v4906 = vadd.f32 0.0, %v4905
  %v4907 = vpop.f32.mrb[0].mxu0
  %4908 = vmatprep.mubr.bf16.mxu0 0
  %4909 = vmatmul.mubr.bf16.gmra.mrb[0].mxu0 %v4561
  %v4910 = vpop.f32.mrb[0].mxu0
  %v4911 = vadd.f32 0.0, %v4910
  %v4912 = vpop.f32.mrb[0].mxu0
  %v4913 = vpop.f32.mrb[0].mxu0
  %v4914 = vadd.f32 0.0, %v4913
  %v4915 = vpop.f32.mrb[0].mxu0
  %4916 = vmatprep.mubr.bf16.mxu0 0
  %4917 = vmatmul.mubr.bf16.gmra.mrb[0].mxu0 %v4564
  %v4918 = vpop.f32.mrb[0].mxu0
  %v4919 = vadd.f32 0.0, %v4918
  %v4920 = vpop.f32.mrb[0].mxu0
  %v4921 = vpop.f32.mrb[0].mxu0
  %v4922 = vadd.f32 0.0, %v4921
  %v4923 = vpop.f32.mrb[0].mxu0
  %4924 = vmatprep.mubr.bf16.mxu0 0
  %4925 = vmatmul.mubr.bf16.gmra.mrb[0].mxu0 %v4567
  %v4926 = vpop.f32.mrb[0].mxu0
  %v4927 = vadd.f32 0.0, %v4926
  %v4928 = vpop.f32.mrb[0].mxu0
  %v4929 = vpop.f32.mrb[0].mxu0
  %v4930 = vpop.f32.mrb[0].mxu0
  %4931 = vdwg.mxu0
  %4933 = vset.pattern.permute.xlu0 0
  %4934 = vperm.xlu0 %4933, %v30
  %v4935 = vpop.permute.xlu0 %4934
  %4938 = vset.pattern.permute.xlu0 0
  %4939 = vperm.xlu0 %4938, %v31
  %v4940 = vpop.permute.xlu0 %4939
  %4943 = vset.pattern.permute.xlu0 0
  %4944 = vperm.xlu0 %4943, %v32
  %v4945 = vpop.permute.xlu0 %4944
  %4948 = vset.pattern.permute.xlu0 0
  %4949 = vperm.xlu0 %4948, %v33
  %v4950 = vpop.permute.xlu0 %4949
  %4953 = vset.pattern.permute.xlu0 0
  %4954 = vperm.xlu0 %4953, %v34
  %v4955 = vpop.permute.xlu0 %4954
  %4958 = vset.pattern.permute.xlu0 0
  %4959 = vperm.xlu0 %4958, %v35
  %v4960 = vpop.permute.xlu0 %4959
  %4963 = vset.pattern.permute.xlu0 0
  %4964 = vperm.xlu0 %4963, %v36
  %v4965 = vpop.permute.xlu0 %4964
  %4968 = vset.pattern.permute.xlu0 0
  %4969 = vperm.xlu0 %4968, %v37
  %v4970 = vpop.permute.xlu0 %4969
  %4973 = vset.pattern.permute.xlu0 0
  %4974 = vperm.xlu0 %4973, %v38
  %v4975 = vpop.permute.xlu0 %4974
  %4978 = vset.pattern.permute.xlu0 0
  %4979 = vperm.xlu0 %4978, %v39
  %v4980 = vpop.permute.xlu0 %4979
  %4983 = vset.pattern.permute.xlu0 0
  %4984 = vperm.xlu0 %4983, %v40
  %v4985 = vpop.permute.xlu0 %4984
  %4988 = vset.pattern.permute.xlu0 0
  %4989 = vperm.xlu0 %4988, %v41
  %v4990 = vpop.permute.xlu0 %4989
  %4993 = vset.pattern.permute.xlu0 0
  %4994 = vperm.xlu0 %4993, %v42
  %v4995 = vpop.permute.xlu0 %4994
  %4998 = vset.pattern.permute.xlu0 0
  %4999 = vperm.xlu0 %4998, %v43
  %v5000 = vpop.permute.xlu0 %4999
  %5003 = vset.pattern.permute.xlu0 0
  %5004 = vperm.xlu0 %5003, %v44
  %v5005 = vpop.permute.xlu0 %5004
  %5008 = vset.pattern.permute.xlu0 0
  %5009 = vperm.xlu0 %5008, %v45
  %v5010 = vpop.permute.xlu0 %5009
  %5013 = vset.pattern.permute.xlu0 0
  %5014 = vperm.xlu0 %5013, %v46
  %v5015 = vpop.permute.xlu0 %5014
  %5018 = vset.pattern.permute.xlu0 0
  %5019 = vperm.xlu0 %5018, %v47
  %v5020 = vpop.permute.xlu0 %5019
  %5023 = vset.pattern.permute.xlu0 0
  %5024 = vperm.xlu0 %5023, %v48
  %v5025 = vpop.permute.xlu0 %5024
  %5028 = vset.pattern.permute.xlu0 0
  %5029 = vperm.xlu0 %5028, %v49
  %v5030 = vpop.permute.xlu0 %5029
  %5033 = vset.pattern.permute.xlu0 0
  %5034 = vperm.xlu0 %5033, %v50
  %v5035 = vpop.permute.xlu0 %5034
  %5038 = vset.pattern.permute.xlu0 0
  %5039 = vperm.xlu0 %5038, %v51
  %v5040 = vpop.permute.xlu0 %5039
  %5043 = vset.pattern.permute.xlu0 0
  %5044 = vperm.xlu0 %5043, %v52
  %v5045 = vpop.permute.xlu0 %5044
  %5048 = vset.pattern.permute.xlu0 0
  %5049 = vperm.xlu0 %5048, %v53
  %v5050 = vpop.permute.xlu0 %5049
  %5053 = vset.pattern.permute.xlu0 0
  %5054 = vperm.xlu0 %5053, %v54
  %v5055 = vpop.permute.xlu0 %5054
  %5058 = vset.pattern.permute.xlu0 0
  %5059 = vperm.xlu0 %5058, %v55
  %v5060 = vpop.permute.xlu0 %5059
  %5063 = vset.pattern.permute.xlu0 0
  %5064 = vperm.xlu0 %5063, %v56
  %v5065 = vpop.permute.xlu0 %5064
  %5068 = vset.pattern.permute.xlu0 0
  %5069 = vperm.xlu0 %5068, %v57
  %v5070 = vpop.permute.xlu0 %5069
  %5073 = vset.pattern.permute.xlu0 0
  %5074 = vperm.xlu0 %5073, %v58
  %v5075 = vpop.permute.xlu0 %5074
  %5078 = vset.pattern.permute.xlu0 0
  %5079 = vperm.xlu0 %5078, %v59
  %v5080 = vpop.permute.xlu0 %5079
  %5083 = vset.pattern.permute.xlu0 0
  %5084 = vperm.xlu0 %5083, %v60
  %v5085 = vpop.permute.xlu0 %5084
  %5088 = vset.pattern.permute.xlu0 0
  %5089 = vperm.xlu0 %5088, %v61
  %v5090 = vpop.permute.xlu0 %5089
  %5093 = vset.pattern.permute.xlu0 0
  %5094 = vperm.xlu0 %5093, %v62
  %v5095 = vpop.permute.xlu0 %5094
  %5098 = vset.pattern.permute.xlu0 0
  %5099 = vperm.xlu0 %5098, %v63
  %v5100 = vpop.permute.xlu0 %5099
  %5103 = vset.pattern.permute.xlu0 0
  %5104 = vperm.xlu0 %5103, %v64
  %v5105 = vpop.permute.xlu0 %5104
  %5108 = vset.pattern.permute.xlu0 0
  %5109 = vperm.xlu0 %5108, %v65
  %v5110 = vpop.permute.xlu0 %5109
  %5113 = vset.pattern.permute.xlu0 0
  %5114 = vperm.xlu0 %5113, %v66
  %v5115 = vpop.permute.xlu0 %5114
  %5118 = vset.pattern.permute.xlu0 0
  %5119 = vperm.xlu0 %5118, %v67
  %v5120 = vpop.permute.xlu0 %5119
  %5123 = vset.pattern.permute.xlu0 0
  %5124 = vperm.xlu0 %5123, %v68
  %v5125 = vpop.permute.xlu0 %5124
  %5128 = vset.pattern.permute.xlu0 0
  %5129 = vperm.xlu0 %5128, %v69
  %v5130 = vpop.permute.xlu0 %5129
  %5133 = vset.pattern.permute.xlu0 0
  %5134 = vperm.xlu0 %5133, %v70
  %v5135 = vpop.permute.xlu0 %5134
  %5138 = vset.pattern.permute.xlu0 0
  %5139 = vperm.xlu0 %5138, %v71
  %v5140 = vpop.permute.xlu0 %5139
  %5143 = vset.pattern.permute.xlu0 0
  %5144 = vperm.xlu0 %5143, %v72
  %v5145 = vpop.permute.xlu0 %5144
  %5148 = vset.pattern.permute.xlu0 0
  %5149 = vperm.xlu0 %5148, %v73
  %v5150 = vpop.permute.xlu0 %5149
  %5153 = vset.pattern.permute.xlu0 0
  %5154 = vperm.xlu0 %5153, %v74
  %v5155 = vpop.permute.xlu0 %5154
  %5158 = vset.pattern.permute.xlu0 0
  %5159 = vperm.xlu0 %5158, %v75
  %v5160 = vpop.permute.xlu0 %5159
  %5163 = vset.pattern.permute.xlu0 0
  %5164 = vperm.xlu0 %5163, %v76
  %v5165 = vpop.permute.xlu0 %5164
  %5168 = vset.pattern.permute.xlu0 0
  %5169 = vperm.xlu0 %5168, %v77
  %v5170 = vpop.permute.xlu0 %5169
  %5173 = vset.pattern.permute.xlu0 0
  %5174 = vperm.xlu0 %5173, %v78
  %v5175 = vpop.permute.xlu0 %5174
  %5178 = vset.pattern.permute.xlu0 0
  %5179 = vperm.xlu0 %5178, %v79
  %v5180 = vpop.permute.xlu0 %5179
  %5183 = vset.pattern.permute.xlu0 0
  %5184 = vperm.xlu0 %5183, %v80
  %v5185 = vpop.permute.xlu0 %5184
  %5188 = vset.pattern.permute.xlu0 0
  %5189 = vperm.xlu0 %5188, %v81
  %v5190 = vpop.permute.xlu0 %5189
  %5193 = vset.pattern.permute.xlu0 0
  %5194 = vperm.xlu0 %5193, %v82
  %v5195 = vpop.permute.xlu0 %5194
  %5198 = vset.pattern.permute.xlu0 0
  %5199 = vperm.xlu0 %5198, %v83
  %v5200 = vpop.permute.xlu0 %5199
  %5203 = vset.pattern.permute.xlu0 0
  %5204 = vperm.xlu0 %5203, %v84
  %v5205 = vpop.permute.xlu0 %5204
  %5208 = vset.pattern.permute.xlu0 0
  %5209 = vperm.xlu0 %5208, %v85
  %v5210 = vpop.permute.xlu0 %5209
  %5213 = vset.pattern.permute.xlu0 0
  %5214 = vperm.xlu0 %5213, %v86
  %v5215 = vpop.permute.xlu0 %5214
  %5218 = vset.pattern.permute.xlu0 0
  %5219 = vperm.xlu0 %5218, %v87
  %v5220 = vpop.permute.xlu0 %5219
  %5223 = vset.pattern.permute.xlu0 0
  %5224 = vperm.xlu0 %5223, %v88
  %v5225 = vpop.permute.xlu0 %5224
  %5228 = vset.pattern.permute.xlu0 0
  %5229 = vperm.xlu0 %5228, %v89
  %v5230 = vpop.permute.xlu0 %5229
  %5233 = vset.pattern.permute.xlu0 0
  %5234 = vperm.xlu0 %5233, %v90
  %v5235 = vpop.permute.xlu0 %5234
  %5238 = vset.pattern.permute.xlu0 0
  %5239 = vperm.xlu0 %5238, %v91
  %v5240 = vpop.permute.xlu0 %5239
  %5243 = vset.pattern.permute.xlu0 0
  %5244 = vperm.xlu0 %5243, %v92
  %v5245 = vpop.permute.xlu0 %5244
  %5248 = vset.pattern.permute.xlu0 0
  %5249 = vperm.xlu0 %5248, %v93
  %v5250 = vpop.permute.xlu0 %5249
  %5253 = vset.pattern.permute.xlu0 0
  %5254 = vperm.xlu0 %5253, %v94
  %v5255 = vpop.permute.xlu0 %5254
  %5258 = vset.pattern.permute.xlu0 0
  %5259 = vperm.xlu0 %5258, %v95
  %v5260 = vpop.permute.xlu0 %5259
  %5263 = vset.pattern.permute.xlu0 0
  %5264 = vperm.xlu0 %5263, %v96
  %v5265 = vpop.permute.xlu0 %5264
  %5268 = vset.pattern.permute.xlu0 0
  %5269 = vperm.xlu0 %5268, %v97
  %v5270 = vpop.permute.xlu0 %5269
  %5273 = vset.pattern.permute.xlu0 0
  %5274 = vperm.xlu0 %5273, %v98
  %v5275 = vpop.permute.xlu0 %5274
  %5278 = vset.pattern.permute.xlu0 0
  %5279 = vperm.xlu0 %5278, %v99
  %v5280 = vpop.permute.xlu0 %5279
  %5283 = vset.pattern.permute.xlu0 0
  %5284 = vperm.xlu0 %5283, %v100
  %v5285 = vpop.permute.xlu0 %5284
  %5288 = vset.pattern.permute.xlu0 0
  %5289 = vperm.xlu0 %5288, %v101
  %v5290 = vpop.permute.xlu0 %5289
  %5293 = vset.pattern.permute.xlu0 0
  %5294 = vperm.xlu0 %5293, %v102
  %v5295 = vpop.permute.xlu0 %5294
  %5298 = vset.pattern.permute.xlu0 0
  %5299 = vperm.xlu0 %5298, %v103
  %v5300 = vpop.permute.xlu0 %5299
  %5303 = vset.pattern.permute.xlu0 0
  %5304 = vperm.xlu0 %5303, %v104
  %v5305 = vpop.permute.xlu0 %5304
  %5308 = vset.pattern.permute.xlu0 0
  %5309 = vperm.xlu0 %5308, %v105
  %v5310 = vpop.permute.xlu0 %5309
  %5313 = vset.pattern.permute.xlu0 0
  %5314 = vperm.xlu0 %5313, %v106
  %v5315 = vpop.permute.xlu0 %5314
  %5318 = vset.pattern.permute.xlu0 0
  %5319 = vperm.xlu0 %5318, %v107
  %v5320 = vpop.permute.xlu0 %5319
  %5323 = vset.pattern.permute.xlu0 0
  %5324 = vperm.xlu0 %5323, %v108
  %v5325 = vpop.permute.xlu0 %5324
  %5328 = vset.pattern.permute.xlu0 0
  %5329 = vperm.xlu0 %5328, %v109
  %v5330 = vpop.permute.xlu0 %5329
  %5333 = vset.pattern.permute.xlu0 0
  %5334 = vperm.xlu0 %5333, %v110
  %v5335 = vpop.permute.xlu0 %5334
  %v5337 = vmul.f32 %v4607, %v4935
  %v5338 = vmul.f32 %v4610, %v4940
  %v5339 = vmul.f32 %v4615, %v4945
  %v5340 = vmul.f32 %v4618, %v4950
  %v5341 = vmul.f32 %v4623, %v4955
  %v5342 = vmul.f32 %v4626, %v4960
  %v5343 = vmul.f32 %v4631, %v4965
  %v5344 = vmul.f32 %v4634, %v4970
  %v5345 = vmul.f32 %v4639, %v4975
  %v5346 = vmul.f32 %v4642, %v4980
  %v5347 = vmul.f32 %v4647, %v4985
  %v5348 = vmul.f32 %v4650, %v4990
  %v5349 = vmul.f32 %v4655, %v4995
  %v5350 = vmul.f32 %v4658, %v5000
  %v5351 = vmul.f32 %v4663, %v5005
  %v5352 = vmul.f32 %v4666, %v5010
  %v5353 = vmul.f32 %v4671, %v5015
  %v5354 = vmul.f32 %v4674, %v5020
  %v5355 = vmul.f32 %v4679, %v5025
  %v5356 = vmul.f32 %v4682, %v5030
  %v5357 = vmul.f32 %v4687, %v5035
  %v5358 = vmul.f32 %v4690, %v5040
  %v5359 = vmul.f32 %v4695, %v5045
  %v5360 = vmul.f32 %v4698, %v5050
  %v5361 = vmul.f32 %v4703, %v5055
  %v5362 = vmul.f32 %v4706, %v5060
  %v5363 = vmul.f32 %v4711, %v5065
  %v5364 = vmul.f32 %v4714, %v5070
  %v5365 = vmul.f32 %v4719, %v5075
  %v5366 = vmul.f32 %v4722, %v5080
  %v5367 = vmul.f32 %v4727, %v5085
  %v5368 = vmul.f32 %v4730, %v5090
  %v5369 = vmul.f32 %v4735, %v5095
  %v5370 = vmul.f32 %v4738, %v5100
  %v5371 = vmul.f32 %v4743, %v5105
  %v5372 = vmul.f32 %v4746, %v5110
  %v5373 = vmul.f32 %v4751, %v5115
  %v5374 = vmul.f32 %v4754, %v5120
  %v5375 = vmul.f32 %v4759, %v5125
  %v5376 = vmul.f32 %v4762, %v5130
  %v5377 = vmul.f32 %v4767, %v5135
  %v5378 = vmul.f32 %v4770, %v5140
  %v5379 = vmul.f32 %v4775, %v5145
  %v5380 = vmul.f32 %v4778, %v5150
  %v5381 = vmul.f32 %v4783, %v5155
  %v5382 = vmul.f32 %v4786, %v5160
  %v5383 = vmul.f32 %v4791, %v5165
  %v5384 = vmul.f32 %v4794, %v5170
  %v5385 = vmul.f32 %v4799, %v5175
  %v5386 = vmul.f32 %v4802, %v5180
  %v5387 = vmul.f32 %v4807, %v5185
  %v5388 = vmul.f32 %v4810, %v5190
  %v5389 = vmul.f32 %v4815, %v5195
  %v5390 = vmul.f32 %v4818, %v5200
  %v5391 = vmul.f32 %v4823, %v5205
  %v5392 = vmul.f32 %v4826, %v5210
  %v5393 = vmul.f32 %v4831, %v5215
  %v5394 = vmul.f32 %v4834, %v5220
  %v5395 = vmul.f32 %v4839, %v5225
  %v5396 = vmul.f32 %v4842, %v5230
  %v5397 = vmul.f32 %v4847, %v5235
  %v5398 = vmul.f32 %v4850, %v5240
  %v5399 = vmul.f32 %v4855, %v5245
  %v5400 = vmul.f32 %v4858, %v5250
  %v5401 = vmul.f32 %v4863, %v5255
  %v5402 = vmul.f32 %v4866, %v5260
  %v5403 = vmul.f32 %v4871, %v5265
  %v5404 = vmul.f32 %v4874, %v5270
  %v5405 = vmul.f32 %v4879, %v5275
  %v5406 = vmul.f32 %v4882, %v5280
  %v5407 = vmul.f32 %v4887, %v5285
  %v5408 = vmul.f32 %v4890, %v5290
  %v5409 = vmul.f32 %v4895, %v5295
  %v5410 = vmul.f32 %v4898, %v5300
  %v5411 = vmul.f32 %v4903, %v5305
  %v5412 = vmul.f32 %v4906, %v5310
  %v5413 = vmul.f32 %v4911, %v5315
  %v5414 = vmul.f32 %v4914, %v5320
  %v5415 = vmul.f32 %v4919, %v5325
  %v5416 = vmul.f32 %v4922, %v5330
  %v5417 = vmul.f32 %v4927, %v5335
  %v5418 = vsel %vm3434, %v5337, 0.0
  %v5419 = vsel %vm3434, %v5338, 0.0
  %v5420 = vadd.f32 %v5418, %v5419
  %v5421 = vsel %vm3434, %v5339, 0.0
  %v5422 = vadd.f32 %v5420, %v5421
  %v5423 = vsel %vm3434, %v5340, 0.0
  %v5424 = vadd.f32 %v5422, %v5423
  %v5425 = vsel %vm3434, %v5341, 0.0
  %v5426 = vadd.f32 %v5424, %v5425
  %v5427 = vsel %vm3434, %v5342, 0.0
  %v5428 = vadd.f32 %v5426, %v5427
  %v5429 = vsel %vm3434, %v5343, 0.0
  %v5430 = vadd.f32 %v5428, %v5429
  %v5431 = vsel %vm3434, %v5344, 0.0
  %v5432 = vadd.f32 %v5430, %v5431
  %v5433 = vsel %vm3434, %v5345, 0.0
  %v5434 = vadd.f32 %v5432, %v5433
  %v5435 = vsel %vm3434, %v5346, 0.0
  %v5436 = vadd.f32 %v5434, %v5435
  %v5437 = vsel %vm3434, %v5347, 0.0
  %v5438 = vadd.f32 %v5436, %v5437
  %v5439 = vsel %vm3434, %v5348, 0.0
  %v5440 = vadd.f32 %v5438, %v5439
  %v5441 = vsel %vm3434, %v5349, 0.0
  %v5442 = vadd.f32 %v5440, %v5441
  %v5443 = vsel %vm3434, %v5350, 0.0
  %v5444 = vadd.f32 %v5442, %v5443
  %v5445 = vsel %vm3434, %v5351, 0.0
  %v5446 = vadd.f32 %v5444, %v5445
  %v5447 = vsel %vm3434, %v5352, 0.0
  %v5448 = vadd.f32 %v5446, %v5447
  %v5449 = vsel %vm3434, %v5353, 0.0
  %v5450 = vadd.f32 %v5448, %v5449
  %v5451 = vsel %vm3434, %v5354, 0.0
  %v5452 = vadd.f32 %v5450, %v5451
  %v5453 = vsel %vm3434, %v5355, 0.0
  %v5454 = vadd.f32 %v5452, %v5453
  %v5455 = vsel %vm3434, %v5356, 0.0
  %v5456 = vadd.f32 %v5454, %v5455
  %v5457 = vsel %vm3434, %v5357, 0.0
  %v5458 = vadd.f32 %v5456, %v5457
  %v5459 = vsel %vm3434, %v5358, 0.0
  %v5460 = vadd.f32 %v5458, %v5459
  %v5461 = vsel %vm3434, %v5359, 0.0
  %v5462 = vadd.f32 %v5460, %v5461
  %v5463 = vsel %vm3434, %v5360, 0.0
  %v5464 = vadd.f32 %v5462, %v5463
  %v5465 = vsel %vm3434, %v5361, 0.0
  %v5466 = vadd.f32 %v5464, %v5465
  %v5467 = vsel %vm3434, %v5362, 0.0
  %v5468 = vadd.f32 %v5466, %v5467
  %v5469 = vsel %vm3434, %v5363, 0.0
  %v5470 = vadd.f32 %v5468, %v5469
  %v5471 = vsel %vm3434, %v5364, 0.0
  %v5472 = vadd.f32 %v5470, %v5471
  %v5473 = vsel %vm3434, %v5365, 0.0
  %v5474 = vadd.f32 %v5472, %v5473
  %v5475 = vsel %vm3434, %v5366, 0.0
  %v5476 = vadd.f32 %v5474, %v5475
  %v5477 = vsel %vm3434, %v5367, 0.0
  %v5478 = vadd.f32 %v5476, %v5477
  %v5479 = vsel %vm3434, %v5368, 0.0
  %v5480 = vadd.f32 %v5478, %v5479
  %v5481 = vsel %vm3434, %v5369, 0.0
  %v5482 = vadd.f32 %v5480, %v5481
  %v5483 = vsel %vm3434, %v5370, 0.0
  %v5484 = vadd.f32 %v5482, %v5483
  %v5485 = vsel %vm3434, %v5371, 0.0
  %v5486 = vadd.f32 %v5484, %v5485
  %v5487 = vsel %vm3434, %v5372, 0.0
  %v5488 = vadd.f32 %v5486, %v5487
  %v5489 = vsel %vm3434, %v5373, 0.0
  %v5490 = vadd.f32 %v5488, %v5489
  %v5491 = vsel %vm3434, %v5374, 0.0
  %v5492 = vadd.f32 %v5490, %v5491
  %v5493 = vsel %vm3434, %v5375, 0.0
  %v5494 = vadd.f32 %v5492, %v5493
  %v5495 = vsel %vm3434, %v5376, 0.0
  %v5496 = vadd.f32 %v5494, %v5495
  %v5497 = vsel %vm3434, %v5377, 0.0
  %v5498 = vadd.f32 %v5496, %v5497
  %v5499 = vsel %vm3434, %v5378, 0.0
  %v5500 = vadd.f32 %v5498, %v5499
  %v5501 = vsel %vm3434, %v5379, 0.0
  %v5502 = vadd.f32 %v5500, %v5501
  %v5503 = vsel %vm3434, %v5380, 0.0
  %v5504 = vadd.f32 %v5502, %v5503
  %v5505 = vsel %vm3434, %v5381, 0.0
  %v5506 = vadd.f32 %v5504, %v5505
  %v5507 = vsel %vm3434, %v5382, 0.0
  %v5508 = vadd.f32 %v5506, %v5507
  %v5509 = vsel %vm3434, %v5383, 0.0
  %v5510 = vadd.f32 %v5508, %v5509
  %v5511 = vsel %vm3434, %v5384, 0.0
  %v5512 = vadd.f32 %v5510, %v5511
  %v5513 = vsel %vm3434, %v5385, 0.0
  %v5514 = vadd.f32 %v5512, %v5513
  %v5515 = vsel %vm3434, %v5386, 0.0
  %v5516 = vadd.f32 %v5514, %v5515
  %v5517 = vsel %vm3434, %v5387, 0.0
  %v5518 = vadd.f32 %v5516, %v5517
  %v5519 = vsel %vm3434, %v5388, 0.0
  %v5520 = vadd.f32 %v5518, %v5519
  %v5521 = vsel %vm3434, %v5389, 0.0
  %v5522 = vadd.f32 %v5520, %v5521
  %v5523 = vsel %vm3434, %v5390, 0.0
  %v5524 = vadd.f32 %v5522, %v5523
  %v5525 = vsel %vm3434, %v5391, 0.0
  %v5526 = vadd.f32 %v5524, %v5525
  %v5527 = vsel %vm3434, %v5392, 0.0
  %v5528 = vadd.f32 %v5526, %v5527
  %v5529 = vsel %vm3434, %v5393, 0.0
  %v5530 = vadd.f32 %v5528, %v5529
  %v5531 = vsel %vm3434, %v5394, 0.0
  %v5532 = vadd.f32 %v5530, %v5531
  %v5533 = vsel %vm3434, %v5395, 0.0
  %v5534 = vadd.f32 %v5532, %v5533
  %v5535 = vsel %vm3434, %v5396, 0.0
  %v5536 = vadd.f32 %v5534, %v5535
  %v5537 = vsel %vm3434, %v5397, 0.0
  %v5538 = vadd.f32 %v5536, %v5537
  %v5539 = vsel %vm3434, %v5398, 0.0
  %v5540 = vadd.f32 %v5538, %v5539
  %v5541 = vsel %vm3434, %v5399, 0.0
  %v5542 = vadd.f32 %v5540, %v5541
  %v5543 = vsel %vm3434, %v5400, 0.0
  %v5544 = vadd.f32 %v5542, %v5543
  %v5545 = vsel %vm3434, %v5401, 0.0
  %v5546 = vadd.f32 %v5544, %v5545
  %v5547 = vsel %vm3434, %v5402, 0.0
  %v5548 = vadd.f32 %v5546, %v5547
  %v5549 = vsel %vm3434, %v5403, 0.0
  %v5550 = vadd.f32 %v5548, %v5549
  %v5551 = vsel %vm3434, %v5404, 0.0
  %v5552 = vadd.f32 %v5550, %v5551
  %v5553 = vsel %vm3434, %v5405, 0.0
  %v5554 = vadd.f32 %v5552, %v5553
  %v5555 = vsel %vm3434, %v5406, 0.0
  %v5556 = vadd.f32 %v5554, %v5555
  %v5557 = vsel %vm3434, %v5407, 0.0
  %v5558 = vadd.f32 %v5556, %v5557
  %v5559 = vsel %vm3434, %v5408, 0.0
  %v5560 = vadd.f32 %v5558, %v5559
  %v5561 = vsel %vm3434, %v5409, 0.0
  %v5562 = vadd.f32 %v5560, %v5561
  %v5563 = vsel %vm3434, %v5410, 0.0
  %v5564 = vadd.f32 %v5562, %v5563
  %v5565 = vsel %vm3434, %v5411, 0.0
  %v5566 = vadd.f32 %v5564, %v5565
  %v5567 = vsel %vm3434, %v5412, 0.0
  %v5568 = vadd.f32 %v5566, %v5567
  %v5569 = vsel %vm3434, %v5413, 0.0
  %v5570 = vadd.f32 %v5568, %v5569
  %v5571 = vsel %vm3434, %v5414, 0.0
  %v5572 = vadd.f32 %v5570, %v5571
  %v5573 = vsel %vm3434, %v5415, 0.0
  %v5574 = vadd.f32 %v5572, %v5573
  %v5575 = vsel %vm3434, %v5416, 0.0
  %v5576 = vadd.f32 %v5574, %v5575
  %v5577 = vsel %vm3434, %v5417, 0.0
  %v5578 = vadd.f32 %v5576, %v5577
  %v5579 = vrot.slane %v5578, 4
  %v5580 = vadd.f32 %v5578, %v5579
  %v5581 = vrot.slane %v5580, 2
  %v5582 = vadd.f32 %v5580, %v5581
  %v5583 = vrot.slane %v5582, 1
  %v5584 = vadd.f32 %v5582, %v5583
  %v5585 = vmul.f32 %v5337, %v4607
  %v5586 = vmul.f32 %v5338, %v4610
  %v5587 = vmul.f32 %v5339, %v4615
  %v5588 = vmul.f32 %v5340, %v4618
  %v5589 = vmul.f32 %v5341, %v4623
  %v5590 = vmul.f32 %v5342, %v4626
  %v5591 = vmul.f32 %v5343, %v4631
  %v5592 = vmul.f32 %v5344, %v4634
  %v5593 = vmul.f32 %v5345, %v4639
  %v5594 = vmul.f32 %v5346, %v4642
  %v5595 = vmul.f32 %v5347, %v4647
  %v5596 = vmul.f32 %v5348, %v4650
  %v5597 = vmul.f32 %v5349, %v4655
  %v5598 = vmul.f32 %v5350, %v4658
  %v5599 = vmul.f32 %v5351, %v4663
  %v5600 = vmul.f32 %v5352, %v4666
  %v5601 = vmul.f32 %v5353, %v4671
  %v5602 = vmul.f32 %v5354, %v4674
  %v5603 = vmul.f32 %v5355, %v4679
  %v5604 = vmul.f32 %v5356, %v4682
  %v5605 = vmul.f32 %v5357, %v4687
  %v5606 = vmul.f32 %v5358, %v4690
  %v5607 = vmul.f32 %v5359, %v4695
  %v5608 = vmul.f32 %v5360, %v4698
  %v5609 = vmul.f32 %v5361, %v4703
  %v5610 = vmul.f32 %v5362, %v4706
  %v5611 = vmul.f32 %v5363, %v4711
  %v5612 = vmul.f32 %v5364, %v4714
  %v5613 = vmul.f32 %v5365, %v4719
  %v5614 = vmul.f32 %v5366, %v4722
  %v5615 = vmul.f32 %v5367, %v4727
  %v5616 = vmul.f32 %v5368, %v4730
  %v5617 = vmul.f32 %v5369, %v4735
  %v5618 = vmul.f32 %v5370, %v4738
  %v5619 = vmul.f32 %v5371, %v4743
  %v5620 = vmul.f32 %v5372, %v4746
  %v5621 = vmul.f32 %v5373, %v4751
  %v5622 = vmul.f32 %v5374, %v4754
  %v5623 = vmul.f32 %v5375, %v4759
  %v5624 = vmul.f32 %v5376, %v4762
  %v5625 = vmul.f32 %v5377, %v4767
  %v5626 = vmul.f32 %v5378, %v4770
  %v5627 = vmul.f32 %v5379, %v4775
  %v5628 = vmul.f32 %v5380, %v4778
  %v5629 = vmul.f32 %v5381, %v4783
  %v5630 = vmul.f32 %v5382, %v4786
  %v5631 = vmul.f32 %v5383, %v4791
  %v5632 = vmul.f32 %v5384, %v4794
  %v5633 = vmul.f32 %v5385, %v4799
  %v5634 = vmul.f32 %v5386, %v4802
  %v5635 = vmul.f32 %v5387, %v4807
  %v5636 = vmul.f32 %v5388, %v4810
  %v5637 = vmul.f32 %v5389, %v4815
  %v5638 = vmul.f32 %v5390, %v4818
  %v5639 = vmul.f32 %v5391, %v4823
  %v5640 = vmul.f32 %v5392, %v4826
  %v5641 = vmul.f32 %v5393, %v4831
  %v5642 = vmul.f32 %v5394, %v4834
  %v5643 = vmul.f32 %v5395, %v4839
  %v5644 = vmul.f32 %v5396, %v4842
  %v5645 = vmul.f32 %v5397, %v4847
  %v5646 = vmul.f32 %v5398, %v4850
  %v5647 = vmul.f32 %v5399, %v4855
  %v5648 = vmul.f32 %v5400, %v4858
  %v5649 = vmul.f32 %v5401, %v4863
  %v5650 = vmul.f32 %v5402, %v4866
  %v5651 = vmul.f32 %v5403, %v4871
  %v5652 = vmul.f32 %v5404, %v4874
  %v5653 = vmul.f32 %v5405, %v4879
  %v5654 = vmul.f32 %v5406, %v4882
  %v5655 = vmul.f32 %v5407, %v4887
  %v5656 = vmul.f32 %v5408, %v4890
  %v5657 = vmul.f32 %v5409, %v4895
  %v5658 = vmul.f32 %v5410, %v4898
  %v5659 = vmul.f32 %v5411, %v4903
  %v5660 = vmul.f32 %v5412, %v4906
  %v5661 = vmul.f32 %v5413, %v4911
  %v5662 = vmul.f32 %v5414, %v4914
  %v5663 = vmul.f32 %v5415, %v4919
  %v5664 = vmul.f32 %v5416, %v4922
  %v5665 = vmul.f32 %v5417, %v4927
  %v5666 = vsel %vm3434, %v5585, 0.0
  %v5667 = vsel %vm3434, %v5586, 0.0
  %v5668 = vadd.f32 %v5666, %v5667
  %v5669 = vsel %vm3434, %v5587, 0.0
  %v5670 = vadd.f32 %v5668, %v5669
  %v5671 = vsel %vm3434, %v5588, 0.0
  %v5672 = vadd.f32 %v5670, %v5671
  %v5673 = vsel %vm3434, %v5589, 0.0
  %v5674 = vadd.f32 %v5672, %v5673
  %v5675 = vsel %vm3434, %v5590, 0.0
  %v5676 = vadd.f32 %v5674, %v5675
  %v5677 = vsel %vm3434, %v5591, 0.0
  %v5678 = vadd.f32 %v5676, %v5677
  %v5679 = vsel %vm3434, %v5592, 0.0
  %v5680 = vadd.f32 %v5678, %v5679
  %v5681 = vsel %vm3434, %v5593, 0.0
  %v5682 = vadd.f32 %v5680, %v5681
  %v5683 = vsel %vm3434, %v5594, 0.0
  %v5684 = vadd.f32 %v5682, %v5683
  %v5685 = vsel %vm3434, %v5595, 0.0
  %v5686 = vadd.f32 %v5684, %v5685
  %v5687 = vsel %vm3434, %v5596, 0.0
  %v5688 = vadd.f32 %v5686, %v5687
  %v5689 = vsel %vm3434, %v5597, 0.0
  %v5690 = vadd.f32 %v5688, %v5689
  %v5691 = vsel %vm3434, %v5598, 0.0
  %v5692 = vadd.f32 %v5690, %v5691
  %v5693 = vsel %vm3434, %v5599, 0.0
  %v5694 = vadd.f32 %v5692, %v5693
  %v5695 = vsel %vm3434, %v5600, 0.0
  %v5696 = vadd.f32 %v5694, %v5695
  %v5697 = vsel %vm3434, %v5601, 0.0
  %v5698 = vadd.f32 %v5696, %v5697
  %v5699 = vsel %vm3434, %v5602, 0.0
  %v5700 = vadd.f32 %v5698, %v5699
  %v5701 = vsel %vm3434, %v5603, 0.0
  %v5702 = vadd.f32 %v5700, %v5701
  %v5703 = vsel %vm3434, %v5604, 0.0
  %v5704 = vadd.f32 %v5702, %v5703
  %v5705 = vsel %vm3434, %v5605, 0.0
  %v5706 = vadd.f32 %v5704, %v5705
  %v5707 = vsel %vm3434, %v5606, 0.0
  %v5708 = vadd.f32 %v5706, %v5707
  %v5709 = vsel %vm3434, %v5607, 0.0
  %v5710 = vadd.f32 %v5708, %v5709
  %v5711 = vsel %vm3434, %v5608, 0.0
  %v5712 = vadd.f32 %v5710, %v5711
  %v5713 = vsel %vm3434, %v5609, 0.0
  %v5714 = vadd.f32 %v5712, %v5713
  %v5715 = vsel %vm3434, %v5610, 0.0
  %v5716 = vadd.f32 %v5714, %v5715
  %v5717 = vsel %vm3434, %v5611, 0.0
  %v5718 = vadd.f32 %v5716, %v5717
  %v5719 = vsel %vm3434, %v5612, 0.0
  %v5720 = vadd.f32 %v5718, %v5719
  %v5721 = vsel %vm3434, %v5613, 0.0
  %v5722 = vadd.f32 %v5720, %v5721
  %v5723 = vsel %vm3434, %v5614, 0.0
  %v5724 = vadd.f32 %v5722, %v5723
  %v5725 = vsel %vm3434, %v5615, 0.0
  %v5726 = vadd.f32 %v5724, %v5725
  %v5727 = vsel %vm3434, %v5616, 0.0
  %v5728 = vadd.f32 %v5726, %v5727
  %v5729 = vsel %vm3434, %v5617, 0.0
  %v5730 = vadd.f32 %v5728, %v5729
  %v5731 = vsel %vm3434, %v5618, 0.0
  %v5732 = vadd.f32 %v5730, %v5731
  %v5733 = vsel %vm3434, %v5619, 0.0
  %v5734 = vadd.f32 %v5732, %v5733
  %v5735 = vsel %vm3434, %v5620, 0.0
  %v5736 = vadd.f32 %v5734, %v5735
  %v5737 = vsel %vm3434, %v5621, 0.0
  %v5738 = vadd.f32 %v5736, %v5737
  %v5739 = vsel %vm3434, %v5622, 0.0
  %v5740 = vadd.f32 %v5738, %v5739
  %v5741 = vsel %vm3434, %v5623, 0.0
  %v5742 = vadd.f32 %v5740, %v5741
  %v5743 = vsel %vm3434, %v5624, 0.0
  %v5744 = vadd.f32 %v5742, %v5743
  %v5745 = vsel %vm3434, %v5625, 0.0
  %v5746 = vadd.f32 %v5744, %v5745
  %v5747 = vsel %vm3434, %v5626, 0.0
  %v5748 = vadd.f32 %v5746, %v5747
  %v5749 = vsel %vm3434, %v5627, 0.0
  %v5750 = vadd.f32 %v5748, %v5749
  %v5751 = vsel %vm3434, %v5628, 0.0
  %v5752 = vadd.f32 %v5750, %v5751
  %v5753 = vsel %vm3434, %v5629, 0.0
  %v5754 = vadd.f32 %v5752, %v5753
  %v5755 = vsel %vm3434, %v5630, 0.0
  %v5756 = vadd.f32 %v5754, %v5755
  %v5757 = vsel %vm3434, %v5631, 0.0
  %v5758 = vadd.f32 %v5756, %v5757
  %v5759 = vsel %vm3434, %v5632, 0.0
  %v5760 = vadd.f32 %v5758, %v5759
  %v5761 = vsel %vm3434, %v5633, 0.0
  %v5762 = vadd.f32 %v5760, %v5761
  %v5763 = vsel %vm3434, %v5634, 0.0
  %v5764 = vadd.f32 %v5762, %v5763
  %v5765 = vsel %vm3434, %v5635, 0.0
  %v5766 = vadd.f32 %v5764, %v5765
  %v5767 = vsel %vm3434, %v5636, 0.0
  %v5768 = vadd.f32 %v5766, %v5767
  %v5769 = vsel %vm3434, %v5637, 0.0
  %v5770 = vadd.f32 %v5768, %v5769
  %v5771 = vsel %vm3434, %v5638, 0.0
  %v5772 = vadd.f32 %v5770, %v5771
  %v5773 = vsel %vm3434, %v5639, 0.0
  %v5774 = vadd.f32 %v5772, %v5773
  %v5775 = vsel %vm3434, %v5640, 0.0
  %v5776 = vadd.f32 %v5774, %v5775
  %v5777 = vsel %vm3434, %v5641, 0.0
  %v5778 = vadd.f32 %v5776, %v5777
  %v5779 = vsel %vm3434, %v5642, 0.0
  %v5780 = vadd.f32 %v5778, %v5779
  %v5781 = vsel %vm3434, %v5643, 0.0
  %v5782 = vadd.f32 %v5780, %v5781
  %v5783 = vsel %vm3434, %v5644, 0.0
  %v5784 = vadd.f32 %v5782, %v5783
  %v5785 = vsel %vm3434, %v5645, 0.0
  %v5786 = vadd.f32 %v5784, %v5785
  %v5787 = vsel %vm3434, %v5646, 0.0
  %v5788 = vadd.f32 %v5786, %v5787
  %v5789 = vsel %vm3434, %v5647, 0.0
  %v5790 = vadd.f32 %v5788, %v5789
  %v5791 = vsel %vm3434, %v5648, 0.0
  %v5792 = vadd.f32 %v5790, %v5791
  %v5793 = vsel %vm3434, %v5649, 0.0
  %v5794 = vadd.f32 %v5792, %v5793
  %v5795 = vsel %vm3434, %v5650, 0.0
  %v5796 = vadd.f32 %v5794, %v5795
  %v5797 = vsel %vm3434, %v5651, 0.0
  %v5798 = vadd.f32 %v5796, %v5797
  %v5799 = vsel %vm3434, %v5652, 0.0
  %v5800 = vadd.f32 %v5798, %v5799
  %v5801 = vsel %vm3434, %v5653, 0.0
  %v5802 = vadd.f32 %v5800, %v5801
  %v5803 = vsel %vm3434, %v5654, 0.0
  %v5804 = vadd.f32 %v5802, %v5803
  %v5805 = vsel %vm3434, %v5655, 0.0
  %v5806 = vadd.f32 %v5804, %v5805
  %v5807 = vsel %vm3434, %v5656, 0.0
  %v5808 = vadd.f32 %v5806, %v5807
  %v5809 = vsel %vm3434, %v5657, 0.0
  %v5810 = vadd.f32 %v5808, %v5809
  %v5811 = vsel %vm3434, %v5658, 0.0
  %v5812 = vadd.f32 %v5810, %v5811
  %v5813 = vsel %vm3434, %v5659, 0.0
  %v5814 = vadd.f32 %v5812, %v5813
  %v5815 = vsel %vm3434, %v5660, 0.0
  %v5816 = vadd.f32 %v5814, %v5815
  %v5817 = vsel %vm3434, %v5661, 0.0
  %v5818 = vadd.f32 %v5816, %v5817
  %v5819 = vsel %vm3434, %v5662, 0.0
  %v5820 = vadd.f32 %v5818, %v5819
  %v5821 = vsel %vm3434, %v5663, 0.0
  %v5822 = vadd.f32 %v5820, %v5821
  %v5823 = vsel %vm3434, %v5664, 0.0
  %v5824 = vadd.f32 %v5822, %v5823
  %v5825 = vsel %vm3434, %v5665, 0.0
  %v5826 = vadd.f32 %v5824, %v5825
  %v5827 = vrot.slane %v5826, 4
  %v5828 = vadd.f32 %v5826, %v5827
  %v5829 = vrot.slane %v5828, 2
  %v5830 = vadd.f32 %v5828, %v5829
  %v5831 = vrot.slane %v5830, 1
  %v5832 = vadd.f32 %v5830, %v5831
  %v5833 = vmul.f32 %v5584, 0.001953125
  %v5834 = vmul.f32 %v5832, 0.001953125
  %v5835 = vmul.f32 %v5833, %v5833
  %v5836 = vsub.f32 %v5834, %v5835
  %v5837 = vmax.f32 %v5836, 0.0
  %v5838 = vld [vmem:[%s3] sm:$0x1]
  %v5839 = vadd.f32 %v5837, 1e-05
  %v5840 = vrsqrt.pop %v5839
  %v5841 = vmul.f32 %v5838, %v5840
  %v5842 = vld [vmem:[%s4] sm:$0x1]
  %v5843 = vmul.f32 %v5833, %v5841
  %v5844 = vsub.f32 %v5842, %v5843
  %v5846 = vlaneseq
  %v5847 = vshrl.u32 %v5846, 7
  %v5848 = vsub.s32 0, %v5847
  %v5849 = vrot.slane %v5841, %v5848
  %v5851 = vmul.f32 %v4607, %v5849
  %v5852 = vmul.f32 %v4610, %v5849
  %v5853 = vmul.f32 %v4615, %v5849
  %v5854 = vmul.f32 %v4618, %v5849
  %v5855 = vmul.f32 %v4623, %v5849
  %v5856 = vmul.f32 %v4626, %v5849
  %v5857 = vmul.f32 %v4631, %v5849
  %v5858 = vmul.f32 %v4634, %v5849
  %v5859 = vmul.f32 %v4639, %v5849
  %v5860 = vmul.f32 %v4642, %v5849
  %v5861 = vmul.f32 %v4647, %v5849
  %v5862 = vmul.f32 %v4650, %v5849
  %v5863 = vmul.f32 %v4655, %v5849
  %v5864 = vmul.f32 %v4658, %v5849
  %v5865 = vmul.f32 %v4663, %v5849
  %v5866 = vmul.f32 %v4666, %v5849
  %v5867 = vmul.f32 %v4671, %v5849
  %v5868 = vmul.f32 %v4674, %v5849
  %v5869 = vmul.f32 %v4679, %v5849
  %v5870 = vmul.f32 %v4682, %v5849
  %v5871 = vmul.f32 %v4687, %v5849
  %v5872 = vmul.f32 %v4690, %v5849
  %v5873 = vmul.f32 %v4695, %v5849
  %v5874 = vmul.f32 %v4698, %v5849
  %v5875 = vmul.f32 %v4703, %v5849
  %v5876 = vmul.f32 %v4706, %v5849
  %v5877 = vmul.f32 %v4711, %v5849
  %v5878 = vmul.f32 %v4714, %v5849
  %v5879 = vmul.f32 %v4719, %v5849
  %v5880 = vmul.f32 %v4722, %v5849
  %v5881 = vmul.f32 %v4727, %v5849
  %v5882 = vmul.f32 %v4730, %v5849
  %v5883 = vmul.f32 %v4735, %v5849
  %v5884 = vmul.f32 %v4738, %v5849
  %v5885 = vmul.f32 %v4743, %v5849
  %v5886 = vmul.f32 %v4746, %v5849
  %v5887 = vmul.f32 %v4751, %v5849
  %v5888 = vmul.f32 %v4754, %v5849
  %v5889 = vmul.f32 %v4759, %v5849
  %v5890 = vmul.f32 %v4762, %v5849
  %v5891 = vmul.f32 %v4767, %v5849
  %v5892 = vmul.f32 %v4770, %v5849
  %v5893 = vmul.f32 %v4775, %v5849
  %v5894 = vmul.f32 %v4778, %v5849
  %v5895 = vmul.f32 %v4783, %v5849
  %v5896 = vmul.f32 %v4786, %v5849
  %v5897 = vmul.f32 %v4791, %v5849
  %v5898 = vmul.f32 %v4794, %v5849
  %v5899 = vmul.f32 %v4799, %v5849
  %v5900 = vmul.f32 %v4802, %v5849
  %v5901 = vmul.f32 %v4807, %v5849
  %v5902 = vmul.f32 %v4810, %v5849
  %v5903 = vmul.f32 %v4815, %v5849
  %v5904 = vmul.f32 %v4818, %v5849
  %v5905 = vmul.f32 %v4823, %v5849
  %v5906 = vmul.f32 %v4826, %v5849
  %v5907 = vmul.f32 %v4831, %v5849
  %v5908 = vmul.f32 %v4834, %v5849
  %v5909 = vmul.f32 %v4839, %v5849
  %v5910 = vmul.f32 %v4842, %v5849
  %v5911 = vmul.f32 %v4847, %v5849
  %v5912 = vmul.f32 %v4850, %v5849
  %v5913 = vmul.f32 %v4855, %v5849
  %v5914 = vmul.f32 %v4858, %v5849
  %v5915 = vmul.f32 %v4863, %v5849
  %v5916 = vmul.f32 %v4866, %v5849
  %v5917 = vmul.f32 %v4871, %v5849
  %v5918 = vmul.f32 %v4874, %v5849
  %v5919 = vmul.f32 %v4879, %v5849
  %v5920 = vmul.f32 %v4882, %v5849
  %v5921 = vmul.f32 %v4887, %v5849
  %v5922 = vmul.f32 %v4890, %v5849
  %v5923 = vmul.f32 %v4895, %v5849
  %v5924 = vmul.f32 %v4898, %v5849
  %v5925 = vmul.f32 %v4903, %v5849
  %v5926 = vmul.f32 %v4906, %v5849
  %v5927 = vmul.f32 %v4911, %v5849
  %v5928 = vmul.f32 %v4914, %v5849
  %v5929 = vmul.f32 %v4919, %v5849
  %v5930 = vmul.f32 %v4922, %v5849
  %v5931 = vmul.f32 %v4927, %v5849
  %v5933 = vlaneseq
  %v5934 = vshrl.u32 %v5933, 7
  %v5935 = vsub.s32 0, %v5934
  %v5936 = vrot.slane %v5844, %v5935
  %v5938 = vadd.f32 %v5851, %v5936
  %v5939 = vadd.f32 %v5852, %v5936
  %v5940 = vadd.f32 %v5853, %v5936
  %v5941 = vadd.f32 %v5854, %v5936
  %v5942 = vadd.f32 %v5855, %v5936
  %v5943 = vadd.f32 %v5856, %v5936
  %v5944 = vadd.f32 %v5857, %v5936
  %v5945 = vadd.f32 %v5858, %v5936
  %v5946 = vadd.f32 %v5859, %v5936
  %v5947 = vadd.f32 %v5860, %v5936
  %v5948 = vadd.f32 %v5861, %v5936
  %v5949 = vadd.f32 %v5862, %v5936
  %v5950 = vadd.f32 %v5863, %v5936
  %v5951 = vadd.f32 %v5864, %v5936
  %v5952 = vadd.f32 %v5865, %v5936
  %v5953 = vadd.f32 %v5866, %v5936
  %v5954 = vadd.f32 %v5867, %v5936
  %v5955 = vadd.f32 %v5868, %v5936
  %v5956 = vadd.f32 %v5869, %v5936
  %v5957 = vadd.f32 %v5870, %v5936
  %v5958 = vadd.f32 %v5871, %v5936
  %v5959 = vadd.f32 %v5872, %v5936
  %v5960 = vadd.f32 %v5873, %v5936
  %v5961 = vadd.f32 %v5874, %v5936
  %v5962 = vadd.f32 %v5875, %v5936
  %v5963 = vadd.f32 %v5876, %v5936
  %v5964 = vadd.f32 %v5877, %v5936
  %v5965 = vadd.f32 %v5878, %v5936
  %v5966 = vadd.f32 %v5879, %v5936
  %v5967 = vadd.f32 %v5880, %v5936
  %v5968 = vadd.f32 %v5881, %v5936
  %v5969 = vadd.f32 %v5882, %v5936
  %v5970 = vadd.f32 %v5883, %v5936
  %v5971 = vadd.f32 %v5884, %v5936
  %v5972 = vadd.f32 %v5885, %v5936
  %v5973 = vadd.f32 %v5886, %v5936
  %v5974 = vadd.f32 %v5887, %v5936
  %v5975 = vadd.f32 %v5888, %v5936
  %v5976 = vadd.f32 %v5889, %v5936
  %v5977 = vadd.f32 %v5890, %v5936
  %v5978 = vadd.f32 %v5891, %v5936
  %v5979 = vadd.f32 %v5892, %v5936
  %v5980 = vadd.f32 %v5893, %v5936
  %v5981 = vadd.f32 %v5894, %v5936
  %v5982 = vadd.f32 %v5895, %v5936
  %v5983 = vadd.f32 %v5896, %v5936
  %v5984 = vadd.f32 %v5897, %v5936
  %v5985 = vadd.f32 %v5898, %v5936
  %v5986 = vadd.f32 %v5899, %v5936
  %v5987 = vadd.f32 %v5900, %v5936
  %v5988 = vadd.f32 %v5901, %v5936
  %v5989 = vadd.f32 %v5902, %v5936
  %v5990 = vadd.f32 %v5903, %v5936
  %v5991 = vadd.f32 %v5904, %v5936
  %v5992 = vadd.f32 %v5905, %v5936
  %v5993 = vadd.f32 %v5906, %v5936
  %v5994 = vadd.f32 %v5907, %v5936
  %v5995 = vadd.f32 %v5908, %v5936
  %v5996 = vadd.f32 %v5909, %v5936
  %v5997 = vadd.f32 %v5910, %v5936
  %v5998 = vadd.f32 %v5911, %v5936
  %v5999 = vadd.f32 %v5912, %v5936
  %v6000 = vadd.f32 %v5913, %v5936
  %v6001 = vadd.f32 %v5914, %v5936
  %v6002 = vadd.f32 %v5915, %v5936
  %v6003 = vadd.f32 %v5916, %v5936
  %v6004 = vadd.f32 %v5917, %v5936
  %v6005 = vadd.f32 %v5918, %v5936
  %v6006 = vadd.f32 %v5919, %v5936
  %v6007 = vadd.f32 %v5920, %v5936
  %v6008 = vadd.f32 %v5921, %v5936
  %v6009 = vadd.f32 %v5922, %v5936
  %v6010 = vadd.f32 %v5923, %v5936
  %v6011 = vadd.f32 %v5924, %v5936
  %v6012 = vadd.f32 %v5925, %v5936
  %v6013 = vadd.f32 %v5926, %v5936
  %v6014 = vadd.f32 %v5927, %v5936
  %v6015 = vadd.f32 %v5928, %v5936
  %v6016 = vadd.f32 %v5929, %v5936
  %v6017 = vadd.f32 %v5930, %v5936
  %v6018 = vadd.f32 %v5931, %v5936
  %v6019 = vmax.f32 %v5938, 0.0
  %v6020 = vmax.f32 %v5939, 0.0
  %v6021 = vmax.f32 %v5940, 0.0
  %v6022 = vmax.f32 %v5941, 0.0
  %v6023 = vmax.f32 %v5942, 0.0
  %v6024 = vmax.f32 %v5943, 0.0
  %v6025 = vmax.f32 %v5944, 0.0
  %v6026 = vmax.f32 %v5945, 0.0
  %v6027 = vmax.f32 %v5946, 0.0
  %v6028 = vmax.f32 %v5947, 0.0
  %v6029 = vmax.f32 %v5948, 0.0
  %v6030 = vmax.f32 %v5949, 0.0
  %v6031 = vmax.f32 %v5950, 0.0
  %v6032 = vmax.f32 %v5951, 0.0
  %v6033 = vmax.f32 %v5952, 0.0
  %v6034 = vmax.f32 %v5953, 0.0
  %v6035 = vmax.f32 %v5954, 0.0
  %v6036 = vmax.f32 %v5955, 0.0
  %v6037 = vmax.f32 %v5956, 0.0
  %v6038 = vmax.f32 %v5957, 0.0
  %v6039 = vmax.f32 %v5958, 0.0
  %v6040 = vmax.f32 %v5959, 0.0
  %v6041 = vmax.f32 %v5960, 0.0
  %v6042 = vmax.f32 %v5961, 0.0
  %v6043 = vmax.f32 %v5962, 0.0
  %v6044 = vmax.f32 %v5963, 0.0
  %v6045 = vmax.f32 %v5964, 0.0
  %v6046 = vmax.f32 %v5965, 0.0
  %v6047 = vmax.f32 %v5966, 0.0
  %v6048 = vmax.f32 %v5967, 0.0
  %v6049 = vmax.f32 %v5968, 0.0
  %v6050 = vmax.f32 %v5969, 0.0
  %v6051 = vmax.f32 %v5970, 0.0
  %v6052 = vmax.f32 %v5971, 0.0
  %v6053 = vmax.f32 %v5972, 0.0
  %v6054 = vmax.f32 %v5973, 0.0
  %v6055 = vmax.f32 %v5974, 0.0
  %v6056 = vmax.f32 %v5975, 0.0
  %v6057 = vmax.f32 %v5976, 0.0
  %v6058 = vmax.f32 %v5977, 0.0
  %v6059 = vmax.f32 %v5978, 0.0
  %v6060 = vmax.f32 %v5979, 0.0
  %v6061 = vmax.f32 %v5980, 0.0
  %v6062 = vmax.f32 %v5981, 0.0
  %v6063 = vmax.f32 %v5982, 0.0
  %v6064 = vmax.f32 %v5983, 0.0
  %v6065 = vmax.f32 %v5984, 0.0
  %v6066 = vmax.f32 %v5985, 0.0
  %v6067 = vmax.f32 %v5986, 0.0
  %v6068 = vmax.f32 %v5987, 0.0
  %v6069 = vmax.f32 %v5988, 0.0
  %v6070 = vmax.f32 %v5989, 0.0
  %v6071 = vmax.f32 %v5990, 0.0
  %v6072 = vmax.f32 %v5991, 0.0
  %v6073 = vmax.f32 %v5992, 0.0
  %v6074 = vmax.f32 %v5993, 0.0
  %v6075 = vmax.f32 %v5994, 0.0
  %v6076 = vmax.f32 %v5995, 0.0
  %v6077 = vmax.f32 %v5996, 0.0
  %v6078 = vmax.f32 %v5997, 0.0
  %v6079 = vmax.f32 %v5998, 0.0
  %v6080 = vmax.f32 %v5999, 0.0
  %v6081 = vmax.f32 %v6000, 0.0
  %v6082 = vmax.f32 %v6001, 0.0
  %v6083 = vmax.f32 %v6002, 0.0
  %v6084 = vmax.f32 %v6003, 0.0
  %v6085 = vmax.f32 %v6004, 0.0
  %v6086 = vmax.f32 %v6005, 0.0
  %v6087 = vmax.f32 %v6006, 0.0
  %v6088 = vmax.f32 %v6007, 0.0
  %v6089 = vmax.f32 %v6008, 0.0
  %v6090 = vmax.f32 %v6009, 0.0
  %v6091 = vmax.f32 %v6010, 0.0
  %v6092 = vmax.f32 %v6011, 0.0
  %v6093 = vmax.f32 %v6012, 0.0
  %v6094 = vmax.f32 %v6013, 0.0
  %v6095 = vmax.f32 %v6014, 0.0
  %v6096 = vmax.f32 %v6015, 0.0
  %v6097 = vmax.f32 %v6016, 0.0
  %v6098 = vmax.f32 %v6017, 0.0
  %v6099 = vmax.f32 %v6018, 0.0
  %v6100 = vmul.f32 %v6019, %v4935
  %v6101 = vmul.f32 %v6020, %v4940
  %v6102 = vmul.f32 %v6021, %v4945
  %v6103 = vmul.f32 %v6022, %v4950
  %v6104 = vmul.f32 %v6023, %v4955
  %v6105 = vmul.f32 %v6024, %v4960
  %v6106 = vmul.f32 %v6025, %v4965
  %v6107 = vmul.f32 %v6026, %v4970
  %v6108 = vmul.f32 %v6027, %v4975
  %v6109 = vmul.f32 %v6028, %v4980
  %v6110 = vmul.f32 %v6029, %v4985
  %v6111 = vmul.f32 %v6030, %v4990
  %v6112 = vmul.f32 %v6031, %v4995
  %v6113 = vmul.f32 %v6032, %v5000
  %v6114 = vmul.f32 %v6033, %v5005
  %v6115 = vmul.f32 %v6034, %v5010
  %v6116 = vmul.f32 %v6035, %v5015
  %v6117 = vmul.f32 %v6036, %v5020
  %v6118 = vmul.f32 %v6037, %v5025
  %v6119 = vmul.f32 %v6038, %v5030
  %v6120 = vmul.f32 %v6039, %v5035
  %v6121 = vmul.f32 %v6040, %v5040
  %v6122 = vmul.f32 %v6041, %v5045
  %v6123 = vmul.f32 %v6042, %v5050
  %v6124 = vmul.f32 %v6043, %v5055
  %v6125 = vmul.f32 %v6044, %v5060
  %v6126 = vmul.f32 %v6045, %v5065
  %v6127 = vmul.f32 %v6046, %v5070
  %v6128 = vmul.f32 %v6047, %v5075
  %v6129 = vmul.f32 %v6048, %v5080
  %v6130 = vmul.f32 %v6049, %v5085
  %v6131 = vmul.f32 %v6050, %v5090
  %v6132 = vmul.f32 %v6051, %v5095
  %v6133 = vmul.f32 %v6052, %v5100
  %v6134 = vmul.f32 %v6053, %v5105
  %v6135 = vmul.f32 %v6054, %v5110
  %v6136 = vmul.f32 %v6055, %v5115
  %v6137 = vmul.f32 %v6056, %v5120
  %v6138 = vmul.f32 %v6057, %v5125
  %v6139 = vmul.f32 %v6058, %v5130
  %v6140 = vmul.f32 %v6059, %v5135
  %v6141 = vmul.f32 %v6060, %v5140
  %v6142 = vmul.f32 %v6061, %v5145
  %v6143 = vmul.f32 %v6062, %v5150
  %v6144 = vmul.f32 %v6063, %v5155
  %v6145 = vmul.f32 %v6064, %v5160
  %v6146 = vmul.f32 %v6065, %v5165
  %v6147 = vmul.f32 %v6066, %v5170
  %v6148 = vmul.f32 %v6067, %v5175
  %v6149 = vmul.f32 %v6068, %v5180
  %v6150 = vmul.f32 %v6069, %v5185
  %v6151 = vmul.f32 %v6070, %v5190
  %v6152 = vmul.f32 %v6071, %v5195
  %v6153 = vmul.f32 %v6072, %v5200
  %v6154 = vmul.f32 %v6073, %v5205
  %v6155 = vmul.f32 %v6074, %v5210
  %v6156 = vmul.f32 %v6075, %v5215
  %v6157 = vmul.f32 %v6076, %v5220
  %v6158 = vmul.f32 %v6077, %v5225
  %v6159 = vmul.f32 %v6078, %v5230
  %v6160 = vmul.f32 %v6079, %v5235
  %v6161 = vmul.f32 %v6080, %v5240
  %v6162 = vmul.f32 %v6081, %v5245
  %v6163 = vmul.f32 %v6082, %v5250
  %v6164 = vmul.f32 %v6083, %v5255
  %v6165 = vmul.f32 %v6084, %v5260
  %v6166 = vmul.f32 %v6085, %v5265
  %v6167 = vmul.f32 %v6086, %v5270
  %v6168 = vmul.f32 %v6087, %v5275
  %v6169 = vmul.f32 %v6088, %v5280
  %v6170 = vmul.f32 %v6089, %v5285
  %v6171 = vmul.f32 %v6090, %v5290
  %v6172 = vmul.f32 %v6091, %v5295
  %v6173 = vmul.f32 %v6092, %v5300
  %v6174 = vmul.f32 %v6093, %v5305
  %v6175 = vmul.f32 %v6094, %v5310
  %v6176 = vmul.f32 %v6095, %v5315
  %v6177 = vmul.f32 %v6096, %v5320
  %v6178 = vmul.f32 %v6097, %v5325
  %v6179 = vmul.f32 %v6098, %v5330
  %v6180 = vmul.f32 %v6099, %v5335
  %vm6181 = vcmask 60416
  %6182 = vst.msk [vmem:[#allocation2] sm:$0xf] %vm6181, 0
  %6183 = vst.msk [vmem:[#allocation2 + $0x4] sm:$0xf] %vm6181, 0
  %6184 = vst.msk [vmem:[#allocation2 + $0x8] sm:$0xf] %vm6181, 0
  %6185 = vst.msk [vmem:[#allocation2 + $0x150] sm:$0xf] %vm6181, 0
  %6186 = vst.msk [vmem:[#allocation2 + $0x154] sm:$0xf] %vm6181, 0
  %6187 = vst.msk [vmem:[#allocation2 + $0x158] sm:$0xf] %vm6181, 0
  %v6188 = vpack.c.bf16 %v6101, %v6100
  %v6189 = vpack.c.bf16 %v6103, %v6102
  %v6190 = vpack.c.bf16 %v6105, %v6104
  %v6191 = vpack.c.bf16 %v6107, %v6106
  %v6192 = vpack.c.bf16 %v6109, %v6108
  %v6193 = vpack.c.bf16 %v6111, %v6110
  %v6194 = vpack.c.bf16 %v6113, %v6112
  %v6195 = vpack.c.bf16 %v6115, %v6114
  %v6196 = vpack.c.bf16 %v6117, %v6116
  %v6197 = vpack.c.bf16 %v6119, %v6118
  %v6198 = vpack.c.bf16 %v6121, %v6120
  %v6199 = vpack.c.bf16 %v6123, %v6122
  %v6200 = vpack.c.bf16 %v6125, %v6124
  %v6201 = vpack.c.bf16 %v6127, %v6126
  %v6202 = vpack.c.bf16 %v6129, %v6128
  %v6203 = vpack.c.bf16 %v6131, %v6130
  %v6204 = vpack.c.bf16 %v6133, %v6132
  %v6205 = vpack.c.bf16 %v6135, %v6134
  %v6206 = vpack.c.bf16 %v6137, %v6136
  %v6207 = vpack.c.bf16 %v6139, %v6138
  %v6208 = vpack.c.bf16 %v6141, %v6140
  %v6209 = vpack.c.bf16 %v6143, %v6142
  %v6210 = vpack.c.bf16 %v6145, %v6144
  %v6211 = vpack.c.bf16 %v6147, %v6146
  %v6212 = vpack.c.bf16 %v6149, %v6148
  %v6213 = vpack.c.bf16 %v6151, %v6150
  %v6214 = vpack.c.bf16 %v6153, %v6152
  %v6215 = vpack.c.bf16 %v6155, %v6154
  %v6216 = vpack.c.bf16 %v6157, %v6156
  %v6217 = vpack.c.bf16 %v6159, %v6158
  %v6218 = vpack.c.bf16 %v6161, %v6160
  %v6219 = vpack.c.bf16 %v6163, %v6162
  %v6220 = vpack.c.bf16 %v6165, %v6164
  %v6221 = vpack.c.bf16 %v6167, %v6166
  %v6222 = vpack.c.bf16 %v6169, %v6168
  %v6223 = vpack.c.bf16 %v6171, %v6170
  %v6224 = vpack.c.bf16 %v6173, %v6172
  %v6225 = vpack.c.bf16 %v6175, %v6174
  %v6226 = vpack.c.bf16 %v6177, %v6176
  %v6227 = vpack.c.bf16 %v6179, %v6178
  %v6228 = vpack.c.bf16 %v6180, %v6180
  %v6270 = vunpack.c.l.b16 %v6188
  %v6271 = vunpack.c.h.b16 %v6188
  %v6272 = vunpack.c.l.b16 %v6189
  %v6273 = vunpack.c.h.b16 %v6189
  %v6274 = vunpack.c.l.b16 %v6190
  %v6275 = vunpack.c.h.b16 %v6190
  %v6276 = vunpack.c.l.b16 %v6191
  %v6277 = vunpack.c.h.b16 %v6191
  %v6278 = vunpack.c.l.b16 %v6192
  %v6279 = vunpack.c.h.b16 %v6192
  %v6280 = vunpack.c.l.b16 %v6193
  %v6281 = vunpack.c.h.b16 %v6193
  %v6282 = vunpack.c.l.b16 %v6194
  %v6283 = vunpack.c.h.b16 %v6194
  %v6284 = vunpack.c.l.b16 %v6195
  %v6285 = vunpack.c.h.b16 %v6195
  %v6286 = vunpack.c.l.b16 %v6196
  %v6287 = vunpack.c.h.b16 %v6196
  %v6288 = vunpack.c.l.b16 %v6197
  %v6289 = vunpack.c.h.b16 %v6197
  %v6290 = vunpack.c.l.b16 %v6198
  %v6291 = vunpack.c.h.b16 %v6198
  %v6292 = vunpack.c.l.b16 %v6199
  %v6293 = vunpack.c.h.b16 %v6199
  %v6294 = vunpack.c.l.b16 %v6200
  %v6295 = vunpack.c.h.b16 %v6200
  %v6296 = vunpack.c.l.b16 %v6201
  %v6297 = vunpack.c.h.b16 %v6201
  %v6298 = vunpack.c.l.b16 %v6202
  %v6299 = vunpack.c.h.b16 %v6202
  %v6300 = vunpack.c.l.b16 %v6203
  %v6301 = vunpack.c.h.b16 %v6203
  %v6302 = vunpack.c.l.b16 %v6204
  %v6303 = vunpack.c.h.b16 %v6204
  %v6304 = vunpack.c.l.b16 %v6205
  %v6305 = vunpack.c.h.b16 %v6205
  %v6306 = vunpack.c.l.b16 %v6206
  %v6307 = vunpack.c.h.b16 %v6206
  %v6308 = vunpack.c.l.b16 %v6207
  %v6309 = vunpack.c.h.b16 %v6207
  %v6310 = vunpack.c.l.b16 %v6208
  %v6311 = vunpack.c.h.b16 %v6208
  %v6312 = vunpack.c.l.b16 %v6209
  %v6313 = vunpack.c.h.b16 %v6209
  %v6314 = vunpack.c.l.b16 %v6210
  %v6315 = vunpack.c.h.b16 %v6210
  %v6316 = vunpack.c.l.b16 %v6211
  %v6317 = vunpack.c.h.b16 %v6211
  %v6318 = vunpack.c.l.b16 %v6212
  %v6319 = vunpack.c.h.b16 %v6212
  %v6320 = vunpack.c.l.b16 %v6213
  %v6321 = vunpack.c.h.b16 %v6213
  %v6322 = vunpack.c.l.b16 %v6214
  %v6323 = vunpack.c.h.b16 %v6214
  %v6324 = vunpack.c.l.b16 %v6215
  %v6325 = vunpack.c.h.b16 %v6215
  %v6326 = vunpack.c.l.b16 %v6216
  %v6327 = vunpack.c.h.b16 %v6216
  %v6328 = vunpack.c.l.b16 %v6217
  %v6329 = vunpack.c.h.b16 %v6217
  %v6330 = vunpack.c.l.b16 %v6218
  %v6331 = vunpack.c.h.b16 %v6218
  %v6332 = vunpack.c.l.b16 %v6219
  %v6333 = vunpack.c.h.b16 %v6219
  %v6334 = vunpack.c.l.b16 %v6220
  %v6335 = vunpack.c.h.b16 %v6220
  %v6336 = vunpack.c.l.b16 %v6221
  %v6337 = vunpack.c.h.b16 %v6221
  %v6338 = vunpack.c.l.b16 %v6222
  %v6339 = vunpack.c.h.b16 %v6222
  %v6340 = vunpack.c.l.b16 %v6223
  %v6341 = vunpack.c.h.b16 %v6223
  %v6342 = vunpack.c.l.b16 %v6224
  %v6343 = vunpack.c.h.b16 %v6224
  %v6344 = vunpack.c.l.b16 %v6225
  %v6345 = vunpack.c.h.b16 %v6225
  %v6346 = vunpack.c.l.b16 %v6226
  %v6347 = vunpack.c.h.b16 %v6226
  %v6348 = vunpack.c.l.b16 %v6227
  %v6349 = vunpack.c.h.b16 %v6227
  %v6350 = vunpack.c.l.b16 %v6228
  %v6351 = vpack.c.b16 %v6270, %v6270
  %v6352 = vpack.c.b16 %v6271, %v6271
  %v6353 = vpack.c.b16 %v6272, %v6272
  %v6354 = vpack.c.b16 %v6273, %v6273
  %v6355 = vpack.c.b16 %v6274, %v6274
  %v6356 = vpack.c.b16 %v6275, %v6275
  %v6357 = vpack.c.b16 %v6276, %v6276
  %v6358 = vpack.c.b16 %v6277, %v6277
  %v6359 = vpack.c.b16 %v6278, %v6278
  %v6360 = vpack.c.b16 %v6279, %v6279
  %v6361 = vpack.c.b16 %v6280, %v6280
  %v6362 = vpack.c.b16 %v6281, %v6281
  %v6363 = vpack.c.b16 %v6282, %v6282
  %v6364 = vpack.c.b16 %v6283, %v6283
  %v6365 = vpack.c.b16 %v6284, %v6284
  %v6366 = vpack.c.b16 %v6285, %v6285
  %v6367 = vpack.c.b16 %v6286, %v6286
  %v6368 = vpack.c.b16 %v6287, %v6287
  %v6369 = vpack.c.b16 %v6288, %v6288
  %v6370 = vpack.c.b16 %v6289, %v6289
  %v6371 = vpack.c.b16 %v6290, %v6290
  %v6372 = vpack.c.b16 %v6291, %v6291
  %v6373 = vpack.c.b16 %v6292, %v6292
  %v6374 = vpack.c.b16 %v6293, %v6293
  %v6375 = vpack.c.b16 %v6294, %v6294
  %v6376 = vpack.c.b16 %v6295, %v6295
  %v6377 = vpack.c.b16 %v6296, %v6296
  %v6378 = vpack.c.b16 %v6297, %v6297
  %v6379 = vpack.c.b16 %v6298, %v6298
  %v6380 = vpack.c.b16 %v6299, %v6299
  %v6381 = vpack.c.b16 %v6300, %v6300
  %v6382 = vpack.c.b16 %v6301, %v6301
  %v6383 = vpack.c.b16 %v6302, %v6302
  %v6384 = vpack.c.b16 %v6303, %v6303
  %v6385 = vpack.c.b16 %v6304, %v6304
  %v6386 = vpack.c.b16 %v6305, %v6305
  %v6387 = vpack.c.b16 %v6306, %v6306
  %v6388 = vpack.c.b16 %v6307, %v6307
  %v6389 = vpack.c.b16 %v6308, %v6308
  %v6390 = vpack.c.b16 %v6309, %v6309
  %v6391 = vpack.c.b16 %v6310, %v6310
  %v6392 = vpack.c.b16 %v6311, %v6311
  %v6393 = vpack.c.b16 %v6312, %v6312
  %v6394 = vpack.c.b16 %v6313, %v6313
  %v6395 = vpack.c.b16 %v6314, %v6314
  %v6396 = vpack.c.b16 %v6315, %v6315
  %v6397 = vpack.c.b16 %v6316, %v6316
  %v6398 = vpack.c.b16 %v6317, %v6317
  %v6399 = vpack.c.b16 %v6318, %v6318
  %v6400 = vpack.c.b16 %v6319, %v6319
  %v6401 = vpack.c.b16 %v6320, %v6320
  %v6402 = vpack.c.b16 %v6321, %v6321
  %v6403 = vpack.c.b16 %v6322, %v6322
  %v6404 = vpack.c.b16 %v6323, %v6323
  %v6405 = vpack.c.b16 %v6324, %v6324
  %v6406 = vpack.c.b16 %v6325, %v6325
  %v6407 = vpack.c.b16 %v6326, %v6326
  %v6408 = vpack.c.b16 %v6327, %v6327
  %v6409 = vpack.c.b16 %v6328, %v6328
  %v6410 = vpack.c.b16 %v6329, %v6329
  %v6411 = vpack.c.b16 %v6330, %v6330
  %v6412 = vpack.c.b16 %v6331, %v6331
  %v6413 = vpack.c.b16 %v6332, %v6332
  %v6414 = vpack.c.b16 %v6333, %v6333
  %v6415 = vpack.c.b16 %v6334, %v6334
  %v6416 = vpack.c.b16 %v6335, %v6335
  %v6417 = vpack.c.b16 %v6336, %v6336
  %v6418 = vpack.c.b16 %v6337, %v6337
  %v6419 = vpack.c.b16 %v6338, %v6338
  %v6420 = vpack.c.b16 %v6339, %v6339
  %v6421 = vpack.c.b16 %v6340, %v6340
  %v6422 = vpack.c.b16 %v6341, %v6341
  %v6423 = vpack.c.b16 %v6342, %v6342
  %v6424 = vpack.c.b16 %v6343, %v6343
  %v6425 = vpack.c.b16 %v6344, %v6344
  %v6426 = vpack.c.b16 %v6345, %v6345
  %v6427 = vpack.c.b16 %v6346, %v6346
  %v6428 = vpack.c.b16 %v6347, %v6347
  %v6429 = vpack.c.b16 %v6348, %v6348
  %v6430 = vpack.c.b16 %v6349, %v6349
  %v6431 = vpack.c.b16 %v6350, %v6350
  %6513 = vst.msk [vmem:[#allocation2 + $0xc] sm:$0xf] %vm6181, %v6351
  %6514 = vst.msk [vmem:[#allocation2 + $0x10] sm:$0xf] %vm6181, %v6352
  %6515 = vst.msk [vmem:[#allocation2 + $0x14] sm:$0xf] %vm6181, %v6353
  %6516 = vst.msk [vmem:[#allocation2 + $0x18] sm:$0xf] %vm6181, %v6354
  %6517 = vst.msk [vmem:[#allocation2 + $0x1c] sm:$0xf] %vm6181, %v6355
  %6518 = vst.msk [vmem:[#allocation2 + $0x20] sm:$0xf] %vm6181, %v6356
  %6519 = vst.msk [vmem:[#allocation2 + $0x24] sm:$0xf] %vm6181, %v6357
  %6520 = vst.msk [vmem:[#allocation2 + $0x28] sm:$0xf] %vm6181, %v6358
  %6521 = vst.msk [vmem:[#allocation2 + $0x2c] sm:$0xf] %vm6181, %v6359
  %6522 = vst.msk [vmem:[#allocation2 + $0x30] sm:$0xf] %vm6181, %v6360
  %6523 = vst.msk [vmem:[#allocation2 + $0x34] sm:$0xf] %vm6181, %v6361
  %6524 = vst.msk [vmem:[#allocation2 + $0x38] sm:$0xf] %vm6181, %v6362
  %6525 = vst.msk [vmem:[#allocation2 + $0x3c] sm:$0xf] %vm6181, %v6363
  %6526 = vst.msk [vmem:[#allocation2 + $0x40] sm:$0xf] %vm6181, %v6364
  %6527 = vst.msk [vmem:[#allocation2 + $0x44] sm:$0xf] %vm6181, %v6365
  %6528 = vst.msk [vmem:[#allocation2 + $0x48] sm:$0xf] %vm6181, %v6366
  %6529 = vst.msk [vmem:[#allocation2 + $0x4c] sm:$0xf] %vm6181, %v6367
  %6530 = vst.msk [vmem:[#allocation2 + $0x50] sm:$0xf] %vm6181, %v6368
  %6531 = vst.msk [vmem:[#allocation2 + $0x54] sm:$0xf] %vm6181, %v6369
  %6532 = vst.msk [vmem:[#allocation2 + $0x58] sm:$0xf] %vm6181, %v6370
  %6533 = vst.msk [vmem:[#allocation2 + $0x5c] sm:$0xf] %vm6181, %v6371
  %6534 = vst.msk [vmem:[#allocation2 + $0x60] sm:$0xf] %vm6181, %v6372
  %6535 = vst.msk [vmem:[#allocation2 + $0x64] sm:$0xf] %vm6181, %v6373
  %6536 = vst.msk [vmem:[#allocation2 + $0x68] sm:$0xf] %vm6181, %v6374
  %6537 = vst.msk [vmem:[#allocation2 + $0x6c] sm:$0xf] %vm6181, %v6375
  %6538 = vst.msk [vmem:[#allocation2 + $0x70] sm:$0xf] %vm6181, %v6376
  %6539 = vst.msk [vmem:[#allocation2 + $0x74] sm:$0xf] %vm6181, %v6377
  %6540 = vst.msk [vmem:[#allocation2 + $0x78] sm:$0xf] %vm6181, %v6378
  %6541 = vst.msk [vmem:[#allocation2 + $0x7c] sm:$0xf] %vm6181, %v6379
  %6542 = vst.msk [vmem:[#allocation2 + $0x80] sm:$0xf] %vm6181, %v6380
  %6543 = vst.msk [vmem:[#allocation2 + $0x84] sm:$0xf] %vm6181, %v6381
  %6544 = vst.msk [vmem:[#allocation2 + $0x88] sm:$0xf] %vm6181, %v6382
  %6545 = vst.msk [vmem:[#allocation2 + $0x8c] sm:$0xf] %vm6181, %v6383
  %6546 = vst.msk [vmem:[#allocation2 + $0x90] sm:$0xf] %vm6181, %v6384
  %6547 = vst.msk [vmem:[#allocation2 + $0x94] sm:$0xf] %vm6181, %v6385
  %6548 = vst.msk [vmem:[#allocation2 + $0x98] sm:$0xf] %vm6181, %v6386
  %6549 = vst.msk [vmem:[#allocation2 + $0x9c] sm:$0xf] %vm6181, %v6387
  %6550 = vst.msk [vmem:[#allocation2 + $0xa0] sm:$0xf] %vm6181, %v6388
  %6551 = vst.msk [vmem:[#allocation2 + $0xa4] sm:$0xf] %vm6181, %v6389
  %6552 = vst.msk [vmem:[#allocation2 + $0xa8] sm:$0xf] %vm6181, %v6390
  %6553 = vst.msk [vmem:[#allocation2 + $0xac] sm:$0xf] %vm6181, %v6391
  %6554 = vst.msk [vmem:[#allocation2 + $0xb0] sm:$0xf] %vm6181, %v6392
  %6555 = vst.msk [vmem:[#allocation2 + $0xb4] sm:$0xf] %vm6181, %v6393
  %6556 = vst.msk [vmem:[#allocation2 + $0xb8] sm:$0xf] %vm6181, %v6394
  %6557 = vst.msk [vmem:[#allocation2 + $0xbc] sm:$0xf] %vm6181, %v6395
  %6558 = vst.msk [vmem:[#allocation2 + $0xc0] sm:$0xf] %vm6181, %v6396
  %6559 = vst.msk [vmem:[#allocation2 + $0xc4] sm:$0xf] %vm6181, %v6397
  %6560 = vst.msk [vmem:[#allocation2 + $0xc8] sm:$0xf] %vm6181, %v6398
  %6561 = vst.msk [vmem:[#allocation2 + $0xcc] sm:$0xf] %vm6181, %v6399
  %6562 = vst.msk [vmem:[#allocation2 + $0xd0] sm:$0xf] %vm6181, %v6400
  %6563 = vst.msk [vmem:[#allocation2 + $0xd4] sm:$0xf] %vm6181, %v6401
  %6564 = vst.msk [vmem:[#allocation2 + $0xd8] sm:$0xf] %vm6181, %v6402
  %6565 = vst.msk [vmem:[#allocation2 + $0xdc] sm:$0xf] %vm6181, %v6403
  %6566 = vst.msk [vmem:[#allocation2 + $0xe0] sm:$0xf] %vm6181, %v6404
  %6567 = vst.msk [vmem:[#allocation2 + $0xe4] sm:$0xf] %vm6181, %v6405
  %6568 = vst.msk [vmem:[#allocation2 + $0xe8] sm:$0xf] %vm6181, %v6406
  %6569 = vst.msk [vmem:[#allocation2 + $0xec] sm:$0xf] %vm6181, %v6407
  %6570 = vst.msk [vmem:[#allocation2 + $0xf0] sm:$0xf] %vm6181, %v6408
  %6571 = vst.msk [vmem:[#allocation2 + $0xf4] sm:$0xf] %vm6181, %v6409
  %6572 = vst.msk [vmem:[#allocation2 + $0xf8] sm:$0xf] %vm6181, %v6410
  %6573 = vst.msk [vmem:[#allocation2 + $0xfc] sm:$0xf] %vm6181, %v6411
  %6574 = vst.msk [vmem:[#allocation2 + $0x100] sm:$0xf] %vm6181, %v6412
  %6575 = vst.msk [vmem:[#allocation2 + $0x104] sm:$0xf] %vm6181, %v6413
  %6576 = vst.msk [vmem:[#allocation2 + $0x108] sm:$0xf] %vm6181, %v6414
  %6577 = vst.msk [vmem:[#allocation2 + $0x10c] sm:$0xf] %vm6181, %v6415
  %6578 = vst.msk [vmem:[#allocation2 + $0x110] sm:$0xf] %vm6181, %v6416
  %6579 = vst.msk [vmem:[#allocation2 + $0x114] sm:$0xf] %vm6181, %v6417
  %6580 = vst.msk [vmem:[#allocation2 + $0x118] sm:$0xf] %vm6181, %v6418
  %6581 = vst.msk [vmem:[#allocation2 + $0x11c] sm:$0xf] %vm6181, %v6419
  %6582 = vst.msk [vmem:[#allocation2 + $0x120] sm:$0xf] %vm6181, %v6420
  %6583 = vst.msk [vmem:[#allocation2 + $0x124] sm:$0xf] %vm6181, %v6421
  %6584 = vst.msk [vmem:[#allocation2 + $0x128] sm:$0xf] %vm6181, %v6422
  %6585 = vst.msk [vmem:[#allocation2 + $0x12c] sm:$0xf] %vm6181, %v6423
  %6586 = vst.msk [vmem:[#allocation2 + $0x130] sm:$0xf] %vm6181, %v6424
  %6587 = vst.msk [vmem:[#allocation2 + $0x134] sm:$0xf] %vm6181, %v6425
  %6588 = vst.msk [vmem:[#allocation2 + $0x138] sm:$0xf] %vm6181, %v6426
  %6589 = vst.msk [vmem:[#allocation2 + $0x13c] sm:$0xf] %vm6181, %v6427
  %6590 = vst.msk [vmem:[#allocation2 + $0x140] sm:$0xf] %vm6181, %v6428
  %6591 = vst.msk [vmem:[#allocation2 + $0x144] sm:$0xf] %vm6181, %v6429
  %6592 = vst.msk [vmem:[#allocation2 + $0x148] sm:$0xf] %vm6181, %v6430
  %6593 = vst.msk [vmem:[#allocation2 + $0x14c] sm:$0xf] %vm6181, %v6431
  %v6594 = vld [vmem:[#allocation2] sm:$0xc]
  %v6595 = vld [vmem:[#allocation2 + $0x4] sm:$0xf]
  %v6596 = vld [vmem:[#allocation2 + $0x8] sm:$0xf]
  %v6597 = vld [vmem:[#allocation2 + $0xc] sm:$0xf]
  %v6598 = vld [vmem:[#allocation2 + $0x10] sm:$0xf]
  %v6599 = vld [vmem:[#allocation2 + $0x14] sm:$0xf]
  %v6600 = vld [vmem:[#allocation2 + $0x18] sm:$0xf]
  %v6601 = vld [vmem:[#allocation2 + $0x1c] sm:$0xf]
  %v6602 = vld [vmem:[#allocation2 + $0x20] sm:$0xf]
  %v6603 = vld [vmem:[#allocation2 + $0x24] sm:$0xf]
  %v6604 = vld [vmem:[#allocation2 + $0x28] sm:$0xf]
  %v6605 = vld [vmem:[#allocation2 + $0x2c] sm:$0xf]
  %v6606 = vld [vmem:[#allocation2 + $0x30] sm:$0xf]
  %v6607 = vld [vmem:[#allocation2 + $0x34] sm:$0xf]
  %v6608 = vld [vmem:[#allocation2 + $0x38] sm:$0xf]
  %v6609 = vld [vmem:[#allocation2 + $0x3c] sm:$0xf]
  %v6610 = vld [vmem:[#allocation2 + $0x40] sm:$0xf]
  %v6611 = vld [vmem:[#allocation2 + $0x44] sm:$0xf]
  %v6612 = vld [vmem:[#allocation2 + $0x48] sm:$0xf]
  %v6613 = vld [vmem:[#allocation2 + $0x4c] sm:$0xf]
  %v6614 = vld [vmem:[#allocation2 + $0x50] sm:$0xf]
  %v6615 = vld [vmem:[#allocation2 + $0x54] sm:$0xf]
  %v6616 = vld [vmem:[#allocation2 + $0x58] sm:$0xf]
  %v6617 = vld [vmem:[#allocation2 + $0x5c] sm:$0xf]
  %v6618 = vld [vmem:[#allocation2 + $0x60] sm:$0xf]
  %v6619 = vld [vmem:[#allocation2 + $0x64] sm:$0xf]
  %v6620 = vld [vmem:[#allocation2 + $0x68] sm:$0xf]
  %v6621 = vld [vmem:[#allocation2 + $0x6c] sm:$0xf]
  %v6622 = vld [vmem:[#allocation2 + $0x70] sm:$0xf]
  %v6623 = vld [vmem:[#allocation2 + $0x74] sm:$0xf]
  %v6624 = vld [vmem:[#allocation2 + $0x78] sm:$0xf]
  %v6625 = vld [vmem:[#allocation2 + $0x7c] sm:$0xf]
  %v6626 = vld [vmem:[#allocation2 + $0x80] sm:$0xf]
  %v6627 = vld [vmem:[#allocation2 + $0x84] sm:$0xf]
  %v6628 = vld [vmem:[#allocation2 + $0x88] sm:$0xf]
  %v6629 = vld [vmem:[#allocation2 + $0x8c] sm:$0xf]
  %v6630 = vld [vmem:[#allocation2 + $0x90] sm:$0xf]
  %v6631 = vld [vmem:[#allocation2 + $0x94] sm:$0xf]
  %v6632 = vld [vmem:[#allocation2 + $0x98] sm:$0xf]
  %v6633 = vld [vmem:[#allocation2 + $0x9c] sm:$0xf]
  %v6634 = vld [vmem:[#allocation2 + $0xa0] sm:$0xf]
  %v6635 = vld [vmem:[#allocation2 + $0xa4] sm:$0xf]
  %v6636 = vld [vmem:[#allocation2 + $0xa8] sm:$0xf]
  %v6637 = vld [vmem:[#allocation2 + $0xac] sm:$0xf]
  %v6638 = vld [vmem:[#allocation2 + $0xb0] sm:$0xf]
  %v6639 = vld [vmem:[#allocation2 + $0xb4] sm:$0xf]
  %v6640 = vld [vmem:[#allocation2 + $0xb8] sm:$0xf]
  %v6641 = vld [vmem:[#allocation2 + $0xbc] sm:$0xf]
  %v6642 = vld [vmem:[#allocation2 + $0xc0] sm:$0xf]
  %v6643 = vld [vmem:[#allocation2 + $0xc4] sm:$0xf]
  %v6644 = vld [vmem:[#allocation2 + $0xc8] sm:$0xf]
  %v6645 = vld [vmem:[#allocation2 + $0xcc] sm:$0xf]
  %v6646 = vld [vmem:[#allocation2 + $0xd0] sm:$0xf]
  %v6647 = vld [vmem:[#allocation2 + $0xd4] sm:$0xf]
  %v6648 = vld [vmem:[#allocation2 + $0xd8] sm:$0xf]
  %v6649 = vld [vmem:[#allocation2 + $0xdc] sm:$0xf]
  %v6650 = vld [vmem:[#allocation2 + $0xe0] sm:$0xf]
  %v6651 = vld [vmem:[#allocation2 + $0xe4] sm:$0xf]
  %v6652 = vld [vmem:[#allocation2 + $0xe8] sm:$0xf]
  %v6653 = vld [vmem:[#allocation2 + $0xec] sm:$0xf]
  %v6654 = vld [vmem:[#allocation2 + $0xf0] sm:$0xf]
  %v6655 = vld [vmem:[#allocation2 + $0xf4] sm:$0xf]
  %v6656 = vld [vmem:[#allocation2 + $0xf8] sm:$0xf]
  %v6657 = vld [vmem:[#allocation2 + $0xfc] sm:$0xf]
  %v6658 = vld [vmem:[#allocation2 + $0x100] sm:$0xf]
  %v6659 = vld [vmem:[#allocation2 + $0x104] sm:$0xf]
  %v6660 = vld [vmem:[#allocation2 + $0x108] sm:$0xf]
  %v6661 = vld [vmem:[#allocation2 + $0x10c] sm:$0xf]
  %v6662 = vld [vmem:[#allocation2 + $0x110] sm:$0xf]
  %v6663 = vld [vmem:[#allocation2 + $0x114] sm:$0xf]
  %v6664 = vld [vmem:[#allocation2 + $0x118] sm:$0xf]
  %v6665 = vld [vmem:[#allocation2 + $0x11c] sm:$0xf]
  %v6666 = vld [vmem:[#allocation2 + $0x120] sm:$0xf]
  %v6667 = vld [vmem:[#allocation2 + $0x124] sm:$0xf]
  %v6668 = vld [vmem:[#allocation2 + $0x128] sm:$0xf]
  %v6669 = vld [vmem:[#allocation2 + $0x12c] sm:$0xf]
  %v6670 = vld [vmem:[#allocation2 + $0x130] sm:$0xf]
  %v6671 = vld [vmem:[#allocation2 + $0x134] sm:$0xf]
  %v6672 = vld [vmem:[#allocation2 + $0x138] sm:$0xf]
  %v6673 = vld [vmem:[#allocation2 + $0x13c] sm:$0xf]
  %v6674 = vld [vmem:[#allocation2 + $0x140] sm:$0xf]
  %v6675 = vld [vmem:[#allocation2 + $0x144] sm:$0x7]
  %v6676 = vunpack.c.l.bf16 %v6594
  %v6677 = vunpack.c.l.bf16 %v6595
  %v6678 = vunpack.c.l.bf16 %v6596
  %v6679 = vunpack.c.l.bf16 %v6597
  %v6680 = vunpack.c.l.bf16 %v6598
  %v6681 = vunpack.c.l.bf16 %v6599
  %v6682 = vunpack.c.l.bf16 %v6600
  %v6683 = vunpack.c.l.bf16 %v6601
  %v6684 = vunpack.c.l.bf16 %v6602
  %v6685 = vunpack.c.l.bf16 %v6603
  %v6686 = vunpack.c.l.bf16 %v6604
  %v6687 = vunpack.c.l.bf16 %v6605
  %v6688 = vunpack.c.l.bf16 %v6606
  %v6689 = vunpack.c.l.bf16 %v6607
  %v6690 = vunpack.c.l.bf16 %v6608
  %v6691 = vunpack.c.l.bf16 %v6609
  %v6692 = vunpack.c.l.bf16 %v6610
  %v6693 = vunpack.c.l.bf16 %v6611
  %v6694 = vunpack.c.l.bf16 %v6612
  %v6695 = vunpack.c.l.bf16 %v6613
  %v6696 = vunpack.c.l.bf16 %v6614
  %v6697 = vunpack.c.l.bf16 %v6615
  %v6698 = vunpack.c.l.bf16 %v6616
  %v6699 = vunpack.c.l.bf16 %v6617
  %v6700 = vunpack.c.l.bf16 %v6618
  %v6701 = vunpack.c.l.bf16 %v6619
  %v6702 = vunpack.c.l.bf16 %v6620
  %v6703 = vunpack.c.l.bf16 %v6621
  %v6704 = vunpack.c.l.bf16 %v6622
  %v6705 = vunpack.c.l.bf16 %v6623
  %v6706 = vunpack.c.l.bf16 %v6624
  %v6707 = vunpack.c.l.bf16 %v6625
  %v6708 = vunpack.c.l.bf16 %v6626
  %v6709 = vunpack.c.l.bf16 %v6627
  %v6710 = vunpack.c.l.bf16 %v6628
  %v6711 = vunpack.c.l.bf16 %v6629
  %v6712 = vunpack.c.l.bf16 %v6630
  %v6713 = vunpack.c.l.bf16 %v6631
  %v6714 = vunpack.c.l.bf16 %v6632
  %v6715 = vunpack.c.l.bf16 %v6633
  %v6716 = vunpack.c.l.bf16 %v6634
  %v6717 = vunpack.c.l.bf16 %v6635
  %v6718 = vunpack.c.l.bf16 %v6636
  %v6719 = vunpack.c.l.bf16 %v6637
  %v6720 = vunpack.c.l.bf16 %v6638
  %v6721 = vunpack.c.l.bf16 %v6639
  %v6722 = vunpack.c.l.bf16 %v6640
  %v6723 = vunpack.c.l.bf16 %v6641
  %v6724 = vunpack.c.l.bf16 %v6642
  %v6725 = vunpack.c.l.bf16 %v6643
  %v6726 = vunpack.c.l.bf16 %v6644
  %v6727 = vunpack.c.l.bf16 %v6645
  %v6728 = vunpack.c.l.bf16 %v6646
  %v6729 = vunpack.c.l.bf16 %v6647
  %v6730 = vunpack.c.l.bf16 %v6648
  %v6731 = vunpack.c.l.bf16 %v6649
  %v6732 = vunpack.c.l.bf16 %v6650
  %v6733 = vunpack.c.l.bf16 %v6651
  %v6734 = vunpack.c.l.bf16 %v6652
  %v6735 = vunpack.c.l.bf16 %v6653
  %v6736 = vunpack.c.l.bf16 %v6654
  %v6737 = vunpack.c.l.bf16 %v6655
  %v6738 = vunpack.c.l.bf16 %v6656
  %v6739 = vunpack.c.l.bf16 %v6657
  %v6740 = vunpack.c.l.bf16 %v6658
  %v6741 = vunpack.c.l.bf16 %v6659
  %v6742 = vunpack.c.l.bf16 %v6660
  %v6743 = vunpack.c.l.bf16 %v6661
  %v6744 = vunpack.c.l.bf16 %v6662
  %v6745 = vunpack.c.l.bf16 %v6663
  %v6746 = vunpack.c.l.bf16 %v6664
  %v6747 = vunpack.c.l.bf16 %v6665
  %v6748 = vunpack.c.l.bf16 %v6666
  %v6749 = vunpack.c.l.bf16 %v6667
  %v6750 = vunpack.c.l.bf16 %v6668
  %v6751 = vunpack.c.l.bf16 %v6669
  %v6752 = vunpack.c.l.bf16 %v6670
  %v6753 = vunpack.c.l.bf16 %v6671
  %v6754 = vunpack.c.l.bf16 %v6672
  %v6755 = vunpack.c.l.bf16 %v6673
  %v6756 = vunpack.c.l.bf16 %v6674
  %v6757 = vunpack.c.l.bf16 %v6675
  %v6758 = vld [vmem:[#allocation2] sm:$0x8]
  %v6759 = vunpack.c.l.bf16 %v6758
  %v6760 = vld [vmem:[#allocation2 + $0x144] sm:$0xf]
  %v6761 = vunpack.c.l.bf16 %v6760
  %v6762 = vld [vmem:[#allocation2 + $0x8] sm:$0x8]
  %v6763 = vld [vmem:[#allocation2 + $0x148] sm:$0xf]
  %v6764 = vld [vmem:[#allocation2 + $0x14c] sm:$0xf]
  %v6765 = vunpack.c.l.bf16 %v6762
  %v6766 = vunpack.c.l.bf16 %v6763
  %v6767 = vunpack.c.l.bf16 %v6764
  %v6768 = vld [vmem:[#allocation2 + $0x150] sm:$0x1]
  %v6769 = vunpack.c.l.bf16 %v6768
  %v6770 = vld [vmem:[#allocation2 + $0x150] sm:$0xf]
  %v6771 = vld [vmem:[#allocation2 + $0x154] sm:$0xf]
  %v6772 = vld [vmem:[#allocation2 + $0x158] sm:$0x1]
  %v6773 = vunpack.c.l.bf16 %v6770
  %v6774 = vunpack.c.l.bf16 %v6771
  %v6775 = vunpack.c.l.bf16 %v6772
  %v6776 = vld [vmem:[#allocation2 + $0x14] sm:$0xe]
  %v6777 = vunpack.c.l.bf16 %v6776
  %v6778 = vld [vmem:[#allocation2 + $0x158] sm:$0x3]
  %v6779 = vunpack.c.l.bf16 %v6778
  %v6862 = vrot.slane %v6759, 1
  %v6863 = vrot.slane %v6677, 1
  %v6864 = vsel %vm379, %v6862, %v6863
  %v6865 = vrot.slane %v6678, 1
  %v6866 = vsel %vm379, %v6863, %v6865
  %v6867 = vrot.slane %v6679, 1
  %v6868 = vsel %vm379, %v6865, %v6867
  %v6869 = vrot.slane %v6680, 1
  %v6870 = vsel %vm379, %v6867, %v6869
  %v6871 = vrot.slane %v6681, 1
  %v6872 = vsel %vm379, %v6869, %v6871
  %v6873 = vrot.slane %v6682, 1
  %v6874 = vsel %vm379, %v6871, %v6873
  %v6875 = vrot.slane %v6683, 1
  %v6876 = vsel %vm379, %v6873, %v6875
  %v6877 = vrot.slane %v6684, 1
  %v6878 = vsel %vm379, %v6875, %v6877
  %v6879 = vrot.slane %v6685, 1
  %v6880 = vsel %vm379, %v6877, %v6879
  %v6881 = vrot.slane %v6686, 1
  %v6882 = vsel %vm379, %v6879, %v6881
  %v6883 = vrot.slane %v6687, 1
  %v6884 = vsel %vm379, %v6881, %v6883
  %v6885 = vrot.slane %v6688, 1
  %v6886 = vsel %vm379, %v6883, %v6885
  %v6887 = vrot.slane %v6689, 1
  %v6888 = vsel %vm379, %v6885, %v6887
  %v6889 = vrot.slane %v6690, 1
  %v6890 = vsel %vm379, %v6887, %v6889
  %v6891 = vrot.slane %v6691, 1
  %v6892 = vsel %vm379, %v6889, %v6891
  %v6893 = vrot.slane %v6692, 1
  %v6894 = vsel %vm379, %v6891, %v6893
  %v6895 = vrot.slane %v6693, 1
  %v6896 = vsel %vm379, %v6893, %v6895
  %v6897 = vrot.slane %v6694, 1
  %v6898 = vsel %vm379, %v6895, %v6897
  %v6899 = vrot.slane %v6695, 1
  %v6900 = vsel %vm379, %v6897, %v6899
  %v6901 = vrot.slane %v6696, 1
  %v6902 = vsel %vm379, %v6899, %v6901
  %v6903 = vrot.slane %v6697, 1
  %v6904 = vsel %vm379, %v6901, %v6903
  %v6905 = vrot.slane %v6698, 1
  %v6906 = vsel %vm379, %v6903, %v6905
  %v6907 = vrot.slane %v6699, 1
  %v6908 = vsel %vm379, %v6905, %v6907
  %v6909 = vrot.slane %v6700, 1
  %v6910 = vsel %vm379, %v6907, %v6909
  %v6911 = vrot.slane %v6701, 1
  %v6912 = vsel %vm379, %v6909, %v6911
  %v6913 = vrot.slane %v6702, 1
  %v6914 = vsel %vm379, %v6911, %v6913
  %v6915 = vrot.slane %v6703, 1
  %v6916 = vsel %vm379, %v6913, %v6915
  %v6917 = vrot.slane %v6704, 1
  %v6918 = vsel %vm379, %v6915, %v6917
  %v6919 = vrot.slane %v6705, 1
  %v6920 = vsel %vm379, %v6917, %v6919
  %v6921 = vrot.slane %v6706, 1
  %v6922 = vsel %vm379, %v6919, %v6921
  %v6923 = vrot.slane %v6707, 1
  %v6924 = vsel %vm379, %v6921, %v6923
  %v6925 = vrot.slane %v6708, 1
  %v6926 = vsel %vm379, %v6923, %v6925
  %v6927 = vrot.slane %v6709, 1
  %v6928 = vsel %vm379, %v6925, %v6927
  %v6929 = vrot.slane %v6710, 1
  %v6930 = vsel %vm379, %v6927, %v6929
  %v6931 = vrot.slane %v6711, 1
  %v6932 = vsel %vm379, %v6929, %v6931
  %v6933 = vrot.slane %v6712, 1
  %v6934 = vsel %vm379, %v6931, %v6933
  %v6935 = vrot.slane %v6713, 1
  %v6936 = vsel %vm379, %v6933, %v6935
  %v6937 = vrot.slane %v6714, 1
  %v6938 = vsel %vm379, %v6935, %v6937
  %v6939 = vrot.slane %v6715, 1
  %v6940 = vsel %vm379, %v6937, %v6939
  %v6941 = vrot.slane %v6716, 1
  %v6942 = vsel %vm379, %v6939, %v6941
  %v6943 = vrot.slane %v6717, 1
  %v6944 = vsel %vm379, %v6941, %v6943
  %v6945 = vrot.slane %v6718, 1
  %v6946 = vsel %vm379, %v6943, %v6945
  %v6947 = vrot.slane %v6719, 1
  %v6948 = vsel %vm379, %v6945, %v6947
  %v6949 = vrot.slane %v6720, 1
  %v6950 = vsel %vm379, %v6947, %v6949
  %v6951 = vrot.slane %v6721, 1
  %v6952 = vsel %vm379, %v6949, %v6951
  %v6953 = vrot.slane %v6722, 1
  %v6954 = vsel %vm379, %v6951, %v6953
  %v6955 = vrot.slane %v6723, 1
  %v6956 = vsel %vm379, %v6953, %v6955
  %v6957 = vrot.slane %v6724, 1
  %v6958 = vsel %vm379, %v6955, %v6957
  %v6959 = vrot.slane %v6725, 1
  %v6960 = vsel %vm379, %v6957, %v6959
  %v6961 = vrot.slane %v6726, 1
  %v6962 = vsel %vm379, %v6959, %v6961
  %v6963 = vrot.slane %v6727, 1
  %v6964 = vsel %vm379, %v6961, %v6963
  %v6965 = vrot.slane %v6728, 1
  %v6966 = vsel %vm379, %v6963, %v6965
  %v6967 = vrot.slane %v6729, 1
  %v6968 = vsel %vm379, %v6965, %v6967
  %v6969 = vrot.slane %v6730, 1
  %v6970 = vsel %vm379, %v6967, %v6969
  %v6971 = vrot.slane %v6731, 1
  %v6972 = vsel %vm379, %v6969, %v6971
  %v6973 = vrot.slane %v6732, 1
  %v6974 = vsel %vm379, %v6971, %v6973
  %v6975 = vrot.slane %v6733, 1
  %v6976 = vsel %vm379, %v6973, %v6975
  %v6977 = vrot.slane %v6734, 1
  %v6978 = vsel %vm379, %v6975, %v6977
  %v6979 = vrot.slane %v6735, 1
  %v6980 = vsel %vm379, %v6977, %v6979
  %v6981 = vrot.slane %v6736, 1
  %v6982 = vsel %vm379, %v6979, %v6981
  %v6983 = vrot.slane %v6737, 1
  %v6984 = vsel %vm379, %v6981, %v6983
  %v6985 = vrot.slane %v6738, 1
  %v6986 = vsel %vm379, %v6983, %v6985
  %v6987 = vrot.slane %v6739, 1
  %v6988 = vsel %vm379, %v6985, %v6987
  %v6989 = vrot.slane %v6740, 1
  %v6990 = vsel %vm379, %v6987, %v6989
  %v6991 = vrot.slane %v6741, 1
  %v6992 = vsel %vm379, %v6989, %v6991
  %v6993 = vrot.slane %v6742, 1
  %v6994 = vsel %vm379, %v6991, %v6993
  %v6995 = vrot.slane %v6743, 1
  %v6996 = vsel %vm379, %v6993, %v6995
  %v6997 = vrot.slane %v6744, 1
  %v6998 = vsel %vm379, %v6995, %v6997
  %v6999 = vrot.slane %v6745, 1
  %v7000 = vsel %vm379, %v6997, %v6999
  %v7001 = vrot.slane %v6746, 1
  %v7002 = vsel %vm379, %v6999, %v7001
  %v7003 = vrot.slane %v6747, 1
  %v7004 = vsel %vm379, %v7001, %v7003
  %v7005 = vrot.slane %v6748, 1
  %v7006 = vsel %vm379, %v7003, %v7005
  %v7007 = vrot.slane %v6749, 1
  %v7008 = vsel %vm379, %v7005, %v7007
  %v7009 = vrot.slane %v6750, 1
  %v7010 = vsel %vm379, %v7007, %v7009
  %v7011 = vrot.slane %v6751, 1
  %v7012 = vsel %vm379, %v7009, %v7011
  %v7013 = vrot.slane %v6752, 1
  %v7014 = vsel %vm379, %v7011, %v7013
  %v7015 = vrot.slane %v6753, 1
  %v7016 = vsel %vm379, %v7013, %v7015
  %v7017 = vrot.slane %v6754, 1
  %v7018 = vsel %vm379, %v7015, %v7017
  %v7019 = vrot.slane %v6755, 1
  %v7020 = vsel %vm379, %v7017, %v7019
  %v7021 = vrot.slane %v6756, 1
  %v7022 = vsel %vm379, %v7019, %v7021
  %v7023 = vrot.slane %v6757, 1
  %v7024 = vsel %vm379, %v7021, %v7023
  %7025 = vrot.lane.b32.xlu0 %v6864, 8
  %v7026 = vpop.permute.xlu0 %7025
  %7027 = vrot.lane.b32.xlu0 %v6866, 8
  %v7028 = vpop.permute.xlu0 %7027
  %7029 = vrot.lane.b32.xlu0 %v6868, 8
  %v7030 = vpop.permute.xlu0 %7029
  %7031 = vrot.lane.b32.xlu0 %v6870, 8
  %v7032 = vpop.permute.xlu0 %7031
  %7033 = vrot.lane.b32.xlu0 %v6872, 8
  %v7034 = vpop.permute.xlu0 %7033
  %7035 = vrot.lane.b32.xlu0 %v6874, 8
  %v7036 = vpop.permute.xlu0 %7035
  %7037 = vrot.lane.b32.xlu0 %v6876, 8
  %v7038 = vpop.permute.xlu0 %7037
  %7039 = vrot.lane.b32.xlu0 %v6878, 8
  %v7040 = vpop.permute.xlu0 %7039
  %7041 = vrot.lane.b32.xlu0 %v6880, 8
  %v7042 = vpop.permute.xlu0 %7041
  %7043 = vrot.lane.b32.xlu0 %v6882, 8
  %v7044 = vpop.permute.xlu0 %7043
  %7045 = vrot.lane.b32.xlu0 %v6884, 8
  %v7046 = vpop.permute.xlu0 %7045
  %7047 = vrot.lane.b32.xlu0 %v6886, 8
  %v7048 = vpop.permute.xlu0 %7047
  %7049 = vrot.lane.b32.xlu0 %v6888, 8
  %v7050 = vpop.permute.xlu0 %7049
  %7051 = vrot.lane.b32.xlu0 %v6890, 8
  %v7052 = vpop.permute.xlu0 %7051
  %7053 = vrot.lane.b32.xlu0 %v6892, 8
  %v7054 = vpop.permute.xlu0 %7053
  %7055 = vrot.lane.b32.xlu0 %v6894, 8
  %v7056 = vpop.permute.xlu0 %7055
  %7057 = vrot.lane.b32.xlu0 %v6896, 8
  %v7058 = vpop.permute.xlu0 %7057
  %7059 = vrot.lane.b32.xlu0 %v6898, 8
  %v7060 = vpop.permute.xlu0 %7059
  %7061 = vrot.lane.b32.xlu0 %v6900, 8
  %v7062 = vpop.permute.xlu0 %7061
  %7063 = vrot.lane.b32.xlu0 %v6902, 8
  %v7064 = vpop.permute.xlu0 %7063
  %7065 = vrot.lane.b32.xlu0 %v6904, 8
  %v7066 = vpop.permute.xlu0 %7065
  %7067 = vrot.lane.b32.xlu0 %v6906, 8
  %v7068 = vpop.permute.xlu0 %7067
  %7069 = vrot.lane.b32.xlu0 %v6908, 8
  %v7070 = vpop.permute.xlu0 %7069
  %7071 = vrot.lane.b32.xlu0 %v6910, 8
  %v7072 = vpop.permute.xlu0 %7071
  %7073 = vrot.lane.b32.xlu0 %v6912, 8
  %v7074 = vpop.permute.xlu0 %7073
  %7075 = vrot.lane.b32.xlu0 %v6914, 8
  %v7076 = vpop.permute.xlu0 %7075
  %7077 = vrot.lane.b32.xlu0 %v6916, 8
  %v7078 = vpop.permute.xlu0 %7077
  %7079 = vrot.lane.b32.xlu0 %v6918, 8
  %v7080 = vpop.permute.xlu0 %7079
  %7081 = vrot.lane.b32.xlu0 %v6920, 8
  %v7082 = vpop.permute.xlu0 %7081
  %7083 = vrot.lane.b32.xlu0 %v6922, 8
  %v7084 = vpop.permute.xlu0 %7083
  %7085 = vrot.lane.b32.xlu0 %v6924, 8
  %v7086 = vpop.permute.xlu0 %7085
  %7087 = vrot.lane.b32.xlu0 %v6926, 8
  %v7088 = vpop.permute.xlu0 %7087
  %7089 = vrot.lane.b32.xlu0 %v6928, 8
  %v7090 = vpop.permute.xlu0 %7089
  %7091 = vrot.lane.b32.xlu0 %v6930, 8
  %v7092 = vpop.permute.xlu0 %7091
  %7093 = vrot.lane.b32.xlu0 %v6932, 8
  %v7094 = vpop.permute.xlu0 %7093
  %7095 = vrot.lane.b32.xlu0 %v6934, 8
  %v7096 = vpop.permute.xlu0 %7095
  %7097 = vrot.lane.b32.xlu0 %v6936, 8
  %v7098 = vpop.permute.xlu0 %7097
  %7099 = vrot.lane.b32.xlu0 %v6938, 8
  %v7100 = vpop.permute.xlu0 %7099
  %7101 = vrot.lane.b32.xlu0 %v6940, 8
  %v7102 = vpop.permute.xlu0 %7101
  %7103 = vrot.lane.b32.xlu0 %v6942, 8
  %v7104 = vpop.permute.xlu0 %7103
  %7105 = vrot.lane.b32.xlu0 %v6944, 8
  %v7106 = vpop.permute.xlu0 %7105
  %7107 = vrot.lane.b32.xlu0 %v6946, 8
  %v7108 = vpop.permute.xlu0 %7107
  %7109 = vrot.lane.b32.xlu0 %v6948, 8
  %v7110 = vpop.permute.xlu0 %7109
  %7111 = vrot.lane.b32.xlu0 %v6950, 8
  %v7112 = vpop.permute.xlu0 %7111
  %7113 = vrot.lane.b32.xlu0 %v6952, 8
  %v7114 = vpop.permute.xlu0 %7113
  %7115 = vrot.lane.b32.xlu0 %v6954, 8
  %v7116 = vpop.permute.xlu0 %7115
  %7117 = vrot.lane.b32.xlu0 %v6956, 8
  %v7118 = vpop.permute.xlu0 %7117
  %7119 = vrot.lane.b32.xlu0 %v6958, 8
  %v7120 = vpop.permute.xlu0 %7119
  %7121 = vrot.lane.b32.xlu0 %v6960, 8
  %v7122 = vpop.permute.xlu0 %7121
  %7123 = vrot.lane.b32.xlu0 %v6962, 8
  %v7124 = vpop.permute.xlu0 %7123
  %7125 = vrot.lane.b32.xlu0 %v6964, 8
  %v7126 = vpop.permute.xlu0 %7125
  %7127 = vrot.lane.b32.xlu0 %v6966, 8
  %v7128 = vpop.permute.xlu0 %7127
  %7129 = vrot.lane.b32.xlu0 %v6968, 8
  %v7130 = vpop.permute.xlu0 %7129
  %7131 = vrot.lane.b32.xlu0 %v6970, 8
  %v7132 = vpop.permute.xlu0 %7131
  %7133 = vrot.lane.b32.xlu0 %v6972, 8
  %v7134 = vpop.permute.xlu0 %7133
  %7135 = vrot.lane.b32.xlu0 %v6974, 8
  %v7136 = vpop.permute.xlu0 %7135
  %7137 = vrot.lane.b32.xlu0 %v6976, 8
  %v7138 = vpop.permute.xlu0 %7137
  %7139 = vrot.lane.b32.xlu0 %v6978, 8
  %v7140 = vpop.permute.xlu0 %7139
  %7141 = vrot.lane.b32.xlu0 %v6980, 8
  %v7142 = vpop.permute.xlu0 %7141
  %7143 = vrot.lane.b32.xlu0 %v6982, 8
  %v7144 = vpop.permute.xlu0 %7143
  %7145 = vrot.lane.b32.xlu0 %v6984, 8
  %v7146 = vpop.permute.xlu0 %7145
  %7147 = vrot.lane.b32.xlu0 %v6986, 8
  %v7148 = vpop.permute.xlu0 %7147
  %7149 = vrot.lane.b32.xlu0 %v6988, 8
  %v7150 = vpop.permute.xlu0 %7149
  %7151 = vrot.lane.b32.xlu0 %v6990, 8
  %v7152 = vpop.permute.xlu0 %7151
  %7153 = vrot.lane.b32.xlu0 %v6992, 8
  %v7154 = vpop.permute.xlu0 %7153
  %7155 = vrot.lane.b32.xlu0 %v6994, 8
  %v7156 = vpop.permute.xlu0 %7155
  %7157 = vrot.lane.b32.xlu0 %v6996, 8
  %v7158 = vpop.permute.xlu0 %7157
  %7159 = vrot.lane.b32.xlu0 %v6998, 8
  %v7160 = vpop.permute.xlu0 %7159
  %7161 = vrot.lane.b32.xlu0 %v7000, 8
  %v7162 = vpop.permute.xlu0 %7161
  %7163 = vrot.lane.b32.xlu0 %v7002, 8
  %v7164 = vpop.permute.xlu0 %7163
  %7165 = vrot.lane.b32.xlu0 %v7004, 8
  %v7166 = vpop.permute.xlu0 %7165
  %7167 = vrot.lane.b32.xlu0 %v7006, 8
  %v7168 = vpop.permute.xlu0 %7167
  %7169 = vrot.lane.b32.xlu0 %v7008, 8
  %v7170 = vpop.permute.xlu0 %7169
  %7171 = vrot.lane.b32.xlu0 %v7010, 8
  %v7172 = vpop.permute.xlu0 %7171
  %7173 = vrot.lane.b32.xlu0 %v7012, 8
  %v7174 = vpop.permute.xlu0 %7173
  %7175 = vrot.lane.b32.xlu0 %v7014, 8
  %v7176 = vpop.permute.xlu0 %7175
  %7177 = vrot.lane.b32.xlu0 %v7016, 8
  %v7178 = vpop.permute.xlu0 %7177
  %7179 = vrot.lane.b32.xlu0 %v7018, 8
  %v7180 = vpop.permute.xlu0 %7179
  %7181 = vrot.lane.b32.xlu0 %v7020, 8
  %v7182 = vpop.permute.xlu0 %7181
  %7183 = vrot.lane.b32.xlu0 %v7022, 8
  %v7184 = vpop.permute.xlu0 %7183
  %7185 = vrot.lane.b32.xlu0 %v7024, 8
  %v7186 = vpop.permute.xlu0 %7185
  %7187 = vrot.lane.b32.xlu0 %v7023, 8
  %v7188 = vpop.permute.xlu0 %7187
  %v7272 = vrot.slane %v6759, 2
  %v7273 = vrot.slane %v6677, 2
  %v7274 = vsel %vm790, %v7272, %v7273
  %v7275 = vrot.slane %v6678, 2
  %v7276 = vsel %vm790, %v7273, %v7275
  %v7277 = vrot.slane %v6679, 2
  %v7278 = vsel %vm790, %v7275, %v7277
  %v7279 = vrot.slane %v6680, 2
  %v7280 = vsel %vm790, %v7277, %v7279
  %v7281 = vrot.slane %v6681, 2
  %v7282 = vsel %vm790, %v7279, %v7281
  %v7283 = vrot.slane %v6682, 2
  %v7284 = vsel %vm790, %v7281, %v7283
  %v7285 = vrot.slane %v6683, 2
  %v7286 = vsel %vm790, %v7283, %v7285
  %v7287 = vrot.slane %v6684, 2
  %v7288 = vsel %vm790, %v7285, %v7287
  %v7289 = vrot.slane %v6685, 2
  %v7290 = vsel %vm790, %v7287, %v7289
  %v7291 = vrot.slane %v6686, 2
  %v7292 = vsel %vm790, %v7289, %v7291
  %v7293 = vrot.slane %v6687, 2
  %v7294 = vsel %vm790, %v7291, %v7293
  %v7295 = vrot.slane %v6688, 2
  %v7296 = vsel %vm790, %v7293, %v7295
  %v7297 = vrot.slane %v6689, 2
  %v7298 = vsel %vm790, %v7295, %v7297
  %v7299 = vrot.slane %v6690, 2
  %v7300 = vsel %vm790, %v7297, %v7299
  %v7301 = vrot.slane %v6691, 2
  %v7302 = vsel %vm790, %v7299, %v7301
  %v7303 = vrot.slane %v6692, 2
  %v7304 = vsel %vm790, %v7301, %v7303
  %v7305 = vrot.slane %v6693, 2
  %v7306 = vsel %vm790, %v7303, %v7305
  %v7307 = vrot.slane %v6694, 2
  %v7308 = vsel %vm790, %v7305, %v7307
  %v7309 = vrot.slane %v6695, 2
  %v7310 = vsel %vm790, %v7307, %v7309
  %v7311 = vrot.slane %v6696, 2
  %v7312 = vsel %vm790, %v7309, %v7311
  %v7313 = vrot.slane %v6697, 2
  %v7314 = vsel %vm790, %v7311, %v7313
  %v7315 = vrot.slane %v6698, 2
  %v7316 = vsel %vm790, %v7313, %v7315
  %v7317 = vrot.slane %v6699, 2
  %v7318 = vsel %vm790, %v7315, %v7317
  %v7319 = vrot.slane %v6700, 2
  %v7320 = vsel %vm790, %v7317, %v7319
  %v7321 = vrot.slane %v6701, 2
  %v7322 = vsel %vm790, %v7319, %v7321
  %v7323 = vrot.slane %v6702, 2
  %v7324 = vsel %vm790, %v7321, %v7323
  %v7325 = vrot.slane %v6703, 2
  %v7326 = vsel %vm790, %v7323, %v7325
  %v7327 = vrot.slane %v6704, 2
  %v7328 = vsel %vm790, %v7325, %v7327
  %v7329 = vrot.slane %v6705, 2
  %v7330 = vsel %vm790, %v7327, %v7329
  %v7331 = vrot.slane %v6706, 2
  %v7332 = vsel %vm790, %v7329, %v7331
  %v7333 = vrot.slane %v6707, 2
  %v7334 = vsel %vm790, %v7331, %v7333
  %v7335 = vrot.slane %v6708, 2
  %v7336 = vsel %vm790, %v7333, %v7335
  %v7337 = vrot.slane %v6709, 2
  %v7338 = vsel %vm790, %v7335, %v7337
  %v7339 = vrot.slane %v6710, 2
  %v7340 = vsel %vm790, %v7337, %v7339
  %v7341 = vrot.slane %v6711, 2
  %v7342 = vsel %vm790, %v7339, %v7341
  %v7343 = vrot.slane %v6712, 2
  %v7344 = vsel %vm790, %v7341, %v7343
  %v7345 = vrot.slane %v6713, 2
  %v7346 = vsel %vm790, %v7343, %v7345
  %v7347 = vrot.slane %v6714, 2
  %v7348 = vsel %vm790, %v7345, %v7347
  %v7349 = vrot.slane %v6715, 2
  %v7350 = vsel %vm790, %v7347, %v7349
  %v7351 = vrot.slane %v6716, 2
  %v7352 = vsel %vm790, %v7349, %v7351
  %v7353 = vrot.slane %v6717, 2
  %v7354 = vsel %vm790, %v7351, %v7353
  %v7355 = vrot.slane %v6718, 2
  %v7356 = vsel %vm790, %v7353, %v7355
  %v7357 = vrot.slane %v6719, 2
  %v7358 = vsel %vm790, %v7355, %v7357
  %v7359 = vrot.slane %v6720, 2
  %v7360 = vsel %vm790, %v7357, %v7359
  %v7361 = vrot.slane %v6721, 2
  %v7362 = vsel %vm790, %v7359, %v7361
  %v7363 = vrot.slane %v6722, 2
  %v7364 = vsel %vm790, %v7361, %v7363
  %v7365 = vrot.slane %v6723, 2
  %v7366 = vsel %vm790, %v7363, %v7365
  %v7367 = vrot.slane %v6724, 2
  %v7368 = vsel %vm790, %v7365, %v7367
  %v7369 = vrot.slane %v6725, 2
  %v7370 = vsel %vm790, %v7367, %v7369
  %v7371 = vrot.slane %v6726, 2
  %v7372 = vsel %vm790, %v7369, %v7371
  %v7373 = vrot.slane %v6727, 2
  %v7374 = vsel %vm790, %v7371, %v7373
  %v7375 = vrot.slane %v6728, 2
  %v7376 = vsel %vm790, %v7373, %v7375
  %v7377 = vrot.slane %v6729, 2
  %v7378 = vsel %vm790, %v7375, %v7377
  %v7379 = vrot.slane %v6730, 2
  %v7380 = vsel %vm790, %v7377, %v7379
  %v7381 = vrot.slane %v6731, 2
  %v7382 = vsel %vm790, %v7379, %v7381
  %v7383 = vrot.slane %v6732, 2
  %v7384 = vsel %vm790, %v7381, %v7383
  %v7385 = vrot.slane %v6733, 2
  %v7386 = vsel %vm790, %v7383, %v7385
  %v7387 = vrot.slane %v6734, 2
  %v7388 = vsel %vm790, %v7385, %v7387
  %v7389 = vrot.slane %v6735, 2
  %v7390 = vsel %vm790, %v7387, %v7389
  %v7391 = vrot.slane %v6736, 2
  %v7392 = vsel %vm790, %v7389, %v7391
  %v7393 = vrot.slane %v6737, 2
  %v7394 = vsel %vm790, %v7391, %v7393
  %v7395 = vrot.slane %v6738, 2
  %v7396 = vsel %vm790, %v7393, %v7395
  %v7397 = vrot.slane %v6739, 2
  %v7398 = vsel %vm790, %v7395, %v7397
  %v7399 = vrot.slane %v6740, 2
  %v7400 = vsel %vm790, %v7397, %v7399
  %v7401 = vrot.slane %v6741, 2
  %v7402 = vsel %vm790, %v7399, %v7401
  %v7403 = vrot.slane %v6742, 2
  %v7404 = vsel %vm790, %v7401, %v7403
  %v7405 = vrot.slane %v6743, 2
  %v7406 = vsel %vm790, %v7403, %v7405
  %v7407 = vrot.slane %v6744, 2
  %v7408 = vsel %vm790, %v7405, %v7407
  %v7409 = vrot.slane %v6745, 2
  %v7410 = vsel %vm790, %v7407, %v7409
  %v7411 = vrot.slane %v6746, 2
  %v7412 = vsel %vm790, %v7409, %v7411
  %v7413 = vrot.slane %v6747, 2
  %v7414 = vsel %vm790, %v7411, %v7413
  %v7415 = vrot.slane %v6748, 2
  %v7416 = vsel %vm790, %v7413, %v7415
  %v7417 = vrot.slane %v6749, 2
  %v7418 = vsel %vm790, %v7415, %v7417
  %v7419 = vrot.slane %v6750, 2
  %v7420 = vsel %vm790, %v7417, %v7419
  %v7421 = vrot.slane %v6751, 2
  %v7422 = vsel %vm790, %v7419, %v7421
  %v7423 = vrot.slane %v6752, 2
  %v7424 = vsel %vm790, %v7421, %v7423
  %v7425 = vrot.slane %v6753, 2
  %v7426 = vsel %vm790, %v7423, %v7425
  %v7427 = vrot.slane %v6754, 2
  %v7428 = vsel %vm790, %v7425, %v7427
  %v7429 = vrot.slane %v6755, 2
  %v7430 = vsel %vm790, %v7427, %v7429
  %v7431 = vrot.slane %v6756, 2
  %v7432 = vsel %vm790, %v7429, %v7431
  %v7433 = vrot.slane %v6761, 2
  %v7434 = vsel %vm790, %v7431, %v7433
  %7435 = vrot.lane.b32.xlu0 %v7274, 16
  %v7436 = vpop.permute.xlu0 %7435
  %7437 = vrot.lane.b32.xlu0 %v7276, 16
  %v7438 = vpop.permute.xlu0 %7437
  %7439 = vrot.lane.b32.xlu0 %v7278, 16
  %v7440 = vpop.permute.xlu0 %7439
  %7441 = vrot.lane.b32.xlu0 %v7280, 16
  %v7442 = vpop.permute.xlu0 %7441
  %7443 = vrot.lane.b32.xlu0 %v7282, 16
  %v7444 = vpop.permute.xlu0 %7443
  %7445 = vrot.lane.b32.xlu0 %v7284, 16
  %v7446 = vpop.permute.xlu0 %7445
  %7447 = vrot.lane.b32.xlu0 %v7286, 16
  %v7448 = vpop.permute.xlu0 %7447
  %7449 = vrot.lane.b32.xlu0 %v7288, 16
  %v7450 = vpop.permute.xlu0 %7449
  %7451 = vrot.lane.b32.xlu0 %v7290, 16
  %v7452 = vpop.permute.xlu0 %7451
  %7453 = vrot.lane.b32.xlu0 %v7292, 16
  %v7454 = vpop.permute.xlu0 %7453
  %7455 = vrot.lane.b32.xlu0 %v7294, 16
  %v7456 = vpop.permute.xlu0 %7455
  %7457 = vrot.lane.b32.xlu0 %v7296, 16
  %v7458 = vpop.permute.xlu0 %7457
  %7459 = vrot.lane.b32.xlu0 %v7298, 16
  %v7460 = vpop.permute.xlu0 %7459
  %7461 = vrot.lane.b32.xlu0 %v7300, 16
  %v7462 = vpop.permute.xlu0 %7461
  %7463 = vrot.lane.b32.xlu0 %v7302, 16
  %v7464 = vpop.permute.xlu0 %7463
  %7465 = vrot.lane.b32.xlu0 %v7304, 16
  %v7466 = vpop.permute.xlu0 %7465
  %7467 = vrot.lane.b32.xlu0 %v7306, 16
  %v7468 = vpop.permute.xlu0 %7467
  %7469 = vrot.lane.b32.xlu0 %v7308, 16
  %v7470 = vpop.permute.xlu0 %7469
  %7471 = vrot.lane.b32.xlu0 %v7310, 16
  %v7472 = vpop.permute.xlu0 %7471
  %7473 = vrot.lane.b32.xlu0 %v7312, 16
  %v7474 = vpop.permute.xlu0 %7473
  %7475 = vrot.lane.b32.xlu0 %v7314, 16
  %v7476 = vpop.permute.xlu0 %7475
  %7477 = vrot.lane.b32.xlu0 %v7316, 16
  %v7478 = vpop.permute.xlu0 %7477
  %7479 = vrot.lane.b32.xlu0 %v7318, 16
  %v7480 = vpop.permute.xlu0 %7479
  %7481 = vrot.lane.b32.xlu0 %v7320, 16
  %v7482 = vpop.permute.xlu0 %7481
  %7483 = vrot.lane.b32.xlu0 %v7322, 16
  %v7484 = vpop.permute.xlu0 %7483
  %7485 = vrot.lane.b32.xlu0 %v7324, 16
  %v7486 = vpop.permute.xlu0 %7485
  %7487 = vrot.lane.b32.xlu0 %v7326, 16
  %v7488 = vpop.permute.xlu0 %7487
  %7489 = vrot.lane.b32.xlu0 %v7328, 16
  %v7490 = vpop.permute.xlu0 %7489
  %7491 = vrot.lane.b32.xlu0 %v7330, 16
  %v7492 = vpop.permute.xlu0 %7491
  %7493 = vrot.lane.b32.xlu0 %v7332, 16
  %v7494 = vpop.permute.xlu0 %7493
  %7495 = vrot.lane.b32.xlu0 %v7334, 16
  %v7496 = vpop.permute.xlu0 %7495
  %7497 = vrot.lane.b32.xlu0 %v7336, 16
  %v7498 = vpop.permute.xlu0 %7497
  %7499 = vrot.lane.b32.xlu0 %v7338, 16
  %v7500 = vpop.permute.xlu0 %7499
  %7501 = vrot.lane.b32.xlu0 %v7340, 16
  %v7502 = vpop.permute.xlu0 %7501
  %7503 = vrot.lane.b32.xlu0 %v7342, 16
  %v7504 = vpop.permute.xlu0 %7503
  %7505 = vrot.lane.b32.xlu0 %v7344, 16
  %v7506 = vpop.permute.xlu0 %7505
  %7507 = vrot.lane.b32.xlu0 %v7346, 16
  %v7508 = vpop.permute.xlu0 %7507
  %7509 = vrot.lane.b32.xlu0 %v7348, 16
  %v7510 = vpop.permute.xlu0 %7509
  %7511 = vrot.lane.b32.xlu0 %v7350, 16
  %v7512 = vpop.permute.xlu0 %7511
  %7513 = vrot.lane.b32.xlu0 %v7352, 16
  %v7514 = vpop.permute.xlu0 %7513
  %7515 = vrot.lane.b32.xlu0 %v7354, 16
  %v7516 = vpop.permute.xlu0 %7515
  %7517 = vrot.lane.b32.xlu0 %v7356, 16
  %v7518 = vpop.permute.xlu0 %7517
  %7519 = vrot.lane.b32.xlu0 %v7358, 16
  %v7520 = vpop.permute.xlu0 %7519
  %7521 = vrot.lane.b32.xlu0 %v7360, 16
  %v7522 = vpop.permute.xlu0 %7521
  %7523 = vrot.lane.b32.xlu0 %v7362, 16
  %v7524 = vpop.permute.xlu0 %7523
  %7525 = vrot.lane.b32.xlu0 %v7364, 16
  %v7526 = vpop.permute.xlu0 %7525
  %7527 = vrot.lane.b32.xlu0 %v7366, 16
  %v7528 = vpop.permute.xlu0 %7527
  %7529 = vrot.lane.b32.xlu0 %v7368, 16
  %v7530 = vpop.permute.xlu0 %7529
  %7531 = vrot.lane.b32.xlu0 %v7370, 16
  %v7532 = vpop.permute.xlu0 %7531
  %7533 = vrot.lane.b32.xlu0 %v7372, 16
  %v7534 = vpop.permute.xlu0 %7533
  %7535 = vrot.lane.b32.xlu0 %v7374, 16
  %v7536 = vpop.permute.xlu0 %7535
  %7537 = vrot.lane.b32.xlu0 %v7376, 16
  %v7538 = vpop.permute.xlu0 %7537
  %7539 = vrot.lane.b32.xlu0 %v7378, 16
  %v7540 = vpop.permute.xlu0 %7539
  %7541 = vrot.lane.b32.xlu0 %v7380, 16
  %v7542 = vpop.permute.xlu0 %7541
  %7543 = vrot.lane.b32.xlu0 %v7382, 16
  %v7544 = vpop.permute.xlu0 %7543
  %7545 = vrot.lane.b32.xlu0 %v7384, 16
  %v7546 = vpop.permute.xlu0 %7545
  %7547 = vrot.lane.b32.xlu0 %v7386, 16
  %v7548 = vpop.permute.xlu0 %7547
  %7549 = vrot.lane.b32.xlu0 %v7388, 16
  %v7550 = vpop.permute.xlu0 %7549
  %7551 = vrot.lane.b32.xlu0 %v7390, 16
  %v7552 = vpop.permute.xlu0 %7551
  %7553 = vrot.lane.b32.xlu0 %v7392, 16
  %v7554 = vpop.permute.xlu0 %7553
  %7555 = vrot.lane.b32.xlu0 %v7394, 16
  %v7556 = vpop.permute.xlu0 %7555
  %7557 = vrot.lane.b32.xlu0 %v7396, 16
  %v7558 = vpop.permute.xlu0 %7557
  %7559 = vrot.lane.b32.xlu0 %v7398, 16
  %v7560 = vpop.permute.xlu0 %7559
  %7561 = vrot.lane.b32.xlu0 %v7400, 16
  %v7562 = vpop.permute.xlu0 %7561
  %7563 = vrot.lane.b32.xlu0 %v7402, 16
  %v7564 = vpop.permute.xlu0 %7563
  %7565 = vrot.lane.b32.xlu0 %v7404, 16
  %v7566 = vpop.permute.xlu0 %7565
  %7567 = vrot.lane.b32.xlu0 %v7406, 16
  %v7568 = vpop.permute.xlu0 %7567
  %7569 = vrot.lane.b32.xlu0 %v7408, 16
  %v7570 = vpop.permute.xlu0 %7569
  %7571 = vrot.lane.b32.xlu0 %v7410, 16
  %v7572 = vpop.permute.xlu0 %7571
  %7573 = vrot.lane.b32.xlu0 %v7412, 16
  %v7574 = vpop.permute.xlu0 %7573
  %7575 = vrot.lane.b32.xlu0 %v7414, 16
  %v7576 = vpop.permute.xlu0 %7575
  %7577 = vrot.lane.b32.xlu0 %v7416, 16
  %v7578 = vpop.permute.xlu0 %7577
  %7579 = vrot.lane.b32.xlu0 %v7418, 16
  %v7580 = vpop.permute.xlu0 %7579
  %7581 = vrot.lane.b32.xlu0 %v7420, 16
  %v7582 = vpop.permute.xlu0 %7581
  %7583 = vrot.lane.b32.xlu0 %v7422, 16
  %v7584 = vpop.permute.xlu0 %7583
  %7585 = vrot.lane.b32.xlu0 %v7424, 16
  %v7586 = vpop.permute.xlu0 %7585
  %7587 = vrot.lane.b32.xlu0 %v7426, 16
  %v7588 = vpop.permute.xlu0 %7587
  %7589 = vrot.lane.b32.xlu0 %v7428, 16
  %v7590 = vpop.permute.xlu0 %7589
  %7591 = vrot.lane.b32.xlu0 %v7430, 16
  %v7592 = vpop.permute.xlu0 %7591
  %7593 = vrot.lane.b32.xlu0 %v7432, 16
  %v7594 = vpop.permute.xlu0 %7593
  %7595 = vrot.lane.b32.xlu0 %v7434, 16
  %v7596 = vpop.permute.xlu0 %7595
  %7597 = vrot.lane.b32.xlu0 %v7433, 16
  %v7598 = vpop.permute.xlu0 %7597
  %v7684 = vrot.slane %v6765, 2
  %v7685 = vsel %vm790, %v7684, %v7277
  %v7686 = vrot.slane %v6766, 2
  %v7687 = vsel %vm790, %v7433, %v7686
  %v7688 = vrot.slane %v6767, 2
  %v7689 = vsel %vm790, %v7686, %v7688
  %7690 = vrot.lane.b32.xlu0 %v7685, 24
  %v7691 = vpop.permute.xlu0 %7690
  %7692 = vrot.lane.b32.xlu0 %v7280, 24
  %v7693 = vpop.permute.xlu0 %7692
  %7694 = vrot.lane.b32.xlu0 %v7282, 24
  %v7695 = vpop.permute.xlu0 %7694
  %7696 = vrot.lane.b32.xlu0 %v7284, 24
  %v7697 = vpop.permute.xlu0 %7696
  %7698 = vrot.lane.b32.xlu0 %v7286, 24
  %v7699 = vpop.permute.xlu0 %7698
  %7700 = vrot.lane.b32.xlu0 %v7288, 24
  %v7701 = vpop.permute.xlu0 %7700
  %7702 = vrot.lane.b32.xlu0 %v7290, 24
  %v7703 = vpop.permute.xlu0 %7702
  %7704 = vrot.lane.b32.xlu0 %v7292, 24
  %v7705 = vpop.permute.xlu0 %7704
  %7706 = vrot.lane.b32.xlu0 %v7294, 24
  %v7707 = vpop.permute.xlu0 %7706
  %7708 = vrot.lane.b32.xlu0 %v7296, 24
  %v7709 = vpop.permute.xlu0 %7708
  %7710 = vrot.lane.b32.xlu0 %v7298, 24
  %v7711 = vpop.permute.xlu0 %7710
  %7712 = vrot.lane.b32.xlu0 %v7300, 24
  %v7713 = vpop.permute.xlu0 %7712
  %7714 = vrot.lane.b32.xlu0 %v7302, 24
  %v7715 = vpop.permute.xlu0 %7714
  %7716 = vrot.lane.b32.xlu0 %v7304, 24
  %v7717 = vpop.permute.xlu0 %7716
  %7718 = vrot.lane.b32.xlu0 %v7306, 24
  %v7719 = vpop.permute.xlu0 %7718
  %7720 = vrot.lane.b32.xlu0 %v7308, 24
  %v7721 = vpop.permute.xlu0 %7720
  %7722 = vrot.lane.b32.xlu0 %v7310, 24
  %v7723 = vpop.permute.xlu0 %7722
  %7724 = vrot.lane.b32.xlu0 %v7312, 24
  %v7725 = vpop.permute.xlu0 %7724
  %7726 = vrot.lane.b32.xlu0 %v7314, 24
  %v7727 = vpop.permute.xlu0 %7726
  %7728 = vrot.lane.b32.xlu0 %v7316, 24
  %v7729 = vpop.permute.xlu0 %7728
  %7730 = vrot.lane.b32.xlu0 %v7318, 24
  %v7731 = vpop.permute.xlu0 %7730
  %7732 = vrot.lane.b32.xlu0 %v7320, 24
  %v7733 = vpop.permute.xlu0 %7732
  %7734 = vrot.lane.b32.xlu0 %v7322, 24
  %v7735 = vpop.permute.xlu0 %7734
  %7736 = vrot.lane.b32.xlu0 %v7324, 24
  %v7737 = vpop.permute.xlu0 %7736
  %7738 = vrot.lane.b32.xlu0 %v7326, 24
  %v7739 = vpop.permute.xlu0 %7738
  %7740 = vrot.lane.b32.xlu0 %v7328, 24
  %v7741 = vpop.permute.xlu0 %7740
  %7742 = vrot.lane.b32.xlu0 %v7330, 24
  %v7743 = vpop.permute.xlu0 %7742
  %7744 = vrot.lane.b32.xlu0 %v7332, 24
  %v7745 = vpop.permute.xlu0 %7744
  %7746 = vrot.lane.b32.xlu0 %v7334, 24
  %v7747 = vpop.permute.xlu0 %7746
  %7748 = vrot.lane.b32.xlu0 %v7336, 24
  %v7749 = vpop.permute.xlu0 %7748
  %7750 = vrot.lane.b32.xlu0 %v7338, 24
  %v7751 = vpop.permute.xlu0 %7750
  %7752 = vrot.lane.b32.xlu0 %v7340, 24
  %v7753 = vpop.permute.xlu0 %7752
  %7754 = vrot.lane.b32.xlu0 %v7342, 24
  %v7755 = vpop.permute.xlu0 %7754
  %7756 = vrot.lane.b32.xlu0 %v7344, 24
  %v7757 = vpop.permute.xlu0 %7756
  %7758 = vrot.lane.b32.xlu0 %v7346, 24
  %v7759 = vpop.permute.xlu0 %7758
  %7760 = vrot.lane.b32.xlu0 %v7348, 24
  %v7761 = vpop.permute.xlu0 %7760
  %7762 = vrot.lane.b32.xlu0 %v7350, 24
  %v7763 = vpop.permute.xlu0 %7762
  %7764 = vrot.lane.b32.xlu0 %v7352, 24
  %v7765 = vpop.permute.xlu0 %7764
  %7766 = vrot.lane.b32.xlu0 %v7354, 24
  %v7767 = vpop.permute.xlu0 %7766
  %7768 = vrot.lane.b32.xlu0 %v7356, 24
  %v7769 = vpop.permute.xlu0 %7768
  %7770 = vrot.lane.b32.xlu0 %v7358, 24
  %v7771 = vpop.permute.xlu0 %7770
  %7772 = vrot.lane.b32.xlu0 %v7360, 24
  %v7773 = vpop.permute.xlu0 %7772
  %7774 = vrot.lane.b32.xlu0 %v7362, 24
  %v7775 = vpop.permute.xlu0 %7774
  %7776 = vrot.lane.b32.xlu0 %v7364, 24
  %v7777 = vpop.permute.xlu0 %7776
  %7778 = vrot.lane.b32.xlu0 %v7366, 24
  %v7779 = vpop.permute.xlu0 %7778
  %7780 = vrot.lane.b32.xlu0 %v7368, 24
  %v7781 = vpop.permute.xlu0 %7780
  %7782 = vrot.lane.b32.xlu0 %v7370, 24
  %v7783 = vpop.permute.xlu0 %7782
  %7784 = vrot.lane.b32.xlu0 %v7372, 24
  %v7785 = vpop.permute.xlu0 %7784
  %7786 = vrot.lane.b32.xlu0 %v7374, 24
  %v7787 = vpop.permute.xlu0 %7786
  %7788 = vrot.lane.b32.xlu0 %v7376, 24
  %v7789 = vpop.permute.xlu0 %7788
  %7790 = vrot.lane.b32.xlu0 %v7378, 24
  %v7791 = vpop.permute.xlu0 %7790
  %7792 = vrot.lane.b32.xlu0 %v7380, 24
  %v7793 = vpop.permute.xlu0 %7792
  %7794 = vrot.lane.b32.xlu0 %v7382, 24
  %v7795 = vpop.permute.xlu0 %7794
  %7796 = vrot.lane.b32.xlu0 %v7384, 24
  %v7797 = vpop.permute.xlu0 %7796
  %7798 = vrot.lane.b32.xlu0 %v7386, 24
  %v7799 = vpop.permute.xlu0 %7798
  %7800 = vrot.lane.b32.xlu0 %v7388, 24
  %v7801 = vpop.permute.xlu0 %7800
  %7802 = vrot.lane.b32.xlu0 %v7390, 24
  %v7803 = vpop.permute.xlu0 %7802
  %7804 = vrot.lane.b32.xlu0 %v7392, 24
  %v7805 = vpop.permute.xlu0 %7804
  %7806 = vrot.lane.b32.xlu0 %v7394, 24
  %v7807 = vpop.permute.xlu0 %7806
  %7808 = vrot.lane.b32.xlu0 %v7396, 24
  %v7809 = vpop.permute.xlu0 %7808
  %7810 = vrot.lane.b32.xlu0 %v7398, 24
  %v7811 = vpop.permute.xlu0 %7810
  %7812 = vrot.lane.b32.xlu0 %v7400, 24
  %v7813 = vpop.permute.xlu0 %7812
  %7814 = vrot.lane.b32.xlu0 %v7402, 24
  %v7815 = vpop.permute.xlu0 %7814
  %7816 = vrot.lane.b32.xlu0 %v7404, 24
  %v7817 = vpop.permute.xlu0 %7816
  %7818 = vrot.lane.b32.xlu0 %v7406, 24
  %v7819 = vpop.permute.xlu0 %7818
  %7820 = vrot.lane.b32.xlu0 %v7408, 24
  %v7821 = vpop.permute.xlu0 %7820
  %7822 = vrot.lane.b32.xlu0 %v7410, 24
  %v7823 = vpop.permute.xlu0 %7822
  %7824 = vrot.lane.b32.xlu0 %v7412, 24
  %v7825 = vpop.permute.xlu0 %7824
  %7826 = vrot.lane.b32.xlu0 %v7414, 24
  %v7827 = vpop.permute.xlu0 %7826
  %7828 = vrot.lane.b32.xlu0 %v7416, 24
  %v7829 = vpop.permute.xlu0 %7828
  %7830 = vrot.lane.b32.xlu0 %v7418, 24
  %v7831 = vpop.permute.xlu0 %7830
  %7832 = vrot.lane.b32.xlu0 %v7420, 24
  %v7833 = vpop.permute.xlu0 %7832
  %7834 = vrot.lane.b32.xlu0 %v7422, 24
  %v7835 = vpop.permute.xlu0 %7834
  %7836 = vrot.lane.b32.xlu0 %v7424, 24
  %v7837 = vpop.permute.xlu0 %7836
  %7838 = vrot.lane.b32.xlu0 %v7426, 24
  %v7839 = vpop.permute.xlu0 %7838
  %7840 = vrot.lane.b32.xlu0 %v7428, 24
  %v7841 = vpop.permute.xlu0 %7840
  %7842 = vrot.lane.b32.xlu0 %v7430, 24
  %v7843 = vpop.permute.xlu0 %7842
  %7844 = vrot.lane.b32.xlu0 %v7432, 24
  %v7845 = vpop.permute.xlu0 %7844
  %7846 = vrot.lane.b32.xlu0 %v7434, 24
  %v7847 = vpop.permute.xlu0 %7846
  %7848 = vrot.lane.b32.xlu0 %v7687, 24
  %v7849 = vpop.permute.xlu0 %7848
  %7850 = vrot.lane.b32.xlu0 %v7689, 24
  %v7851 = vpop.permute.xlu0 %7850
  %7852 = vrot.lane.b32.xlu0 %v7688, 24
  %v7853 = vpop.permute.xlu0 %7852
  %v7936 = vrot.slane %v6679, 3
  %v7937 = vrot.slane %v6680, 3
  %v7938 = vsel %vm1455, %v7936, %v7937
  %v7939 = vrot.slane %v6681, 3
  %v7940 = vsel %vm1455, %v7937, %v7939
  %v7941 = vrot.slane %v6682, 3
  %v7942 = vsel %vm1455, %v7939, %v7941
  %v7943 = vrot.slane %v6683, 3
  %v7944 = vsel %vm1455, %v7941, %v7943
  %v7945 = vrot.slane %v6684, 3
  %v7946 = vsel %vm1455, %v7943, %v7945
  %v7947 = vrot.slane %v6685, 3
  %v7948 = vsel %vm1455, %v7945, %v7947
  %v7949 = vrot.slane %v6686, 3
  %v7950 = vsel %vm1455, %v7947, %v7949
  %v7951 = vrot.slane %v6687, 3
  %v7952 = vsel %vm1455, %v7949, %v7951
  %v7953 = vrot.slane %v6688, 3
  %v7954 = vsel %vm1455, %v7951, %v7953
  %v7955 = vrot.slane %v6689, 3
  %v7956 = vsel %vm1455, %v7953, %v7955
  %v7957 = vrot.slane %v6690, 3
  %v7958 = vsel %vm1455, %v7955, %v7957
  %v7959 = vrot.slane %v6691, 3
  %v7960 = vsel %vm1455, %v7957, %v7959
  %v7961 = vrot.slane %v6692, 3
  %v7962 = vsel %vm1455, %v7959, %v7961
  %v7963 = vrot.slane %v6693, 3
  %v7964 = vsel %vm1455, %v7961, %v7963
  %v7965 = vrot.slane %v6694, 3
  %v7966 = vsel %vm1455, %v7963, %v7965
  %v7967 = vrot.slane %v6695, 3
  %v7968 = vsel %vm1455, %v7965, %v7967
  %v7969 = vrot.slane %v6696, 3
  %v7970 = vsel %vm1455, %v7967, %v7969
  %v7971 = vrot.slane %v6697, 3
  %v7972 = vsel %vm1455, %v7969, %v7971
  %v7973 = vrot.slane %v6698, 3
  %v7974 = vsel %vm1455, %v7971, %v7973
  %v7975 = vrot.slane %v6699, 3
  %v7976 = vsel %vm1455, %v7973, %v7975
  %v7977 = vrot.slane %v6700, 3
  %v7978 = vsel %vm1455, %v7975, %v7977
  %v7979 = vrot.slane %v6701, 3
  %v7980 = vsel %vm1455, %v7977, %v7979
  %v7981 = vrot.slane %v6702, 3
  %v7982 = vsel %vm1455, %v7979, %v7981
  %v7983 = vrot.slane %v6703, 3
  %v7984 = vsel %vm1455, %v7981, %v7983
  %v7985 = vrot.slane %v6704, 3
  %v7986 = vsel %vm1455, %v7983, %v7985
  %v7987 = vrot.slane %v6705, 3
  %v7988 = vsel %vm1455, %v7985, %v7987
  %v7989 = vrot.slane %v6706, 3
  %v7990 = vsel %vm1455, %v7987, %v7989
  %v7991 = vrot.slane %v6707, 3
  %v7992 = vsel %vm1455, %v7989, %v7991
  %v7993 = vrot.slane %v6708, 3
  %v7994 = vsel %vm1455, %v7991, %v7993
  %v7995 = vrot.slane %v6709, 3
  %v7996 = vsel %vm1455, %v7993, %v7995
  %v7997 = vrot.slane %v6710, 3
  %v7998 = vsel %vm1455, %v7995, %v7997
  %v7999 = vrot.slane %v6711, 3
  %v8000 = vsel %vm1455, %v7997, %v7999
  %v8001 = vrot.slane %v6712, 3
  %v8002 = vsel %vm1455, %v7999, %v8001
  %v8003 = vrot.slane %v6713, 3
  %v8004 = vsel %vm1455, %v8001, %v8003
  %v8005 = vrot.slane %v6714, 3
  %v8006 = vsel %vm1455, %v8003, %v8005
  %v8007 = vrot.slane %v6715, 3
  %v8008 = vsel %vm1455, %v8005, %v8007
  %v8009 = vrot.slane %v6716, 3
  %v8010 = vsel %vm1455, %v8007, %v8009
  %v8011 = vrot.slane %v6717, 3
  %v8012 = vsel %vm1455, %v8009, %v8011
  %v8013 = vrot.slane %v6718, 3
  %v8014 = vsel %vm1455, %v8011, %v8013
  %v8015 = vrot.slane %v6719, 3
  %v8016 = vsel %vm1455, %v8013, %v8015
  %v8017 = vrot.slane %v6720, 3
  %v8018 = vsel %vm1455, %v8015, %v8017
  %v8019 = vrot.slane %v6721, 3
  %v8020 = vsel %vm1455, %v8017, %v8019
  %v8021 = vrot.slane %v6722, 3
  %v8022 = vsel %vm1455, %v8019, %v8021
  %v8023 = vrot.slane %v6723, 3
  %v8024 = vsel %vm1455, %v8021, %v8023
  %v8025 = vrot.slane %v6724, 3
  %v8026 = vsel %vm1455, %v8023, %v8025
  %v8027 = vrot.slane %v6725, 3
  %v8028 = vsel %vm1455, %v8025, %v8027
  %v8029 = vrot.slane %v6726, 3
  %v8030 = vsel %vm1455, %v8027, %v8029
  %v8031 = vrot.slane %v6727, 3
  %v8032 = vsel %vm1455, %v8029, %v8031
  %v8033 = vrot.slane %v6728, 3
  %v8034 = vsel %vm1455, %v8031, %v8033
  %v8035 = vrot.slane %v6729, 3
  %v8036 = vsel %vm1455, %v8033, %v8035
  %v8037 = vrot.slane %v6730, 3
  %v8038 = vsel %vm1455, %v8035, %v8037
  %v8039 = vrot.slane %v6731, 3
  %v8040 = vsel %vm1455, %v8037, %v8039
  %v8041 = vrot.slane %v6732, 3
  %v8042 = vsel %vm1455, %v8039, %v8041
  %v8043 = vrot.slane %v6733, 3
  %v8044 = vsel %vm1455, %v8041, %v8043
  %v8045 = vrot.slane %v6734, 3
  %v8046 = vsel %vm1455, %v8043, %v8045
  %v8047 = vrot.slane %v6735, 3
  %v8048 = vsel %vm1455, %v8045, %v8047
  %v8049 = vrot.slane %v6736, 3
  %v8050 = vsel %vm1455, %v8047, %v8049
  %v8051 = vrot.slane %v6737, 3
  %v8052 = vsel %vm1455, %v8049, %v8051
  %v8053 = vrot.slane %v6738, 3
  %v8054 = vsel %vm1455, %v8051, %v8053
  %v8055 = vrot.slane %v6739, 3
  %v8056 = vsel %vm1455, %v8053, %v8055
  %v8057 = vrot.slane %v6740, 3
  %v8058 = vsel %vm1455, %v8055, %v8057
  %v8059 = vrot.slane %v6741, 3
  %v8060 = vsel %vm1455, %v8057, %v8059
  %v8061 = vrot.slane %v6742, 3
  %v8062 = vsel %vm1455, %v8059, %v8061
  %v8063 = vrot.slane %v6743, 3
  %v8064 = vsel %vm1455, %v8061, %v8063
  %v8065 = vrot.slane %v6744, 3
  %v8066 = vsel %vm1455, %v8063, %v8065
  %v8067 = vrot.slane %v6745, 3
  %v8068 = vsel %vm1455, %v8065, %v8067
  %v8069 = vrot.slane %v6746, 3
  %v8070 = vsel %vm1455, %v8067, %v8069
  %v8071 = vrot.slane %v6747, 3
  %v8072 = vsel %vm1455, %v8069, %v8071
  %v8073 = vrot.slane %v6748, 3
  %v8074 = vsel %vm1455, %v8071, %v8073
  %v8075 = vrot.slane %v6749, 3
  %v8076 = vsel %vm1455, %v8073, %v8075
  %v8077 = vrot.slane %v6750, 3
  %v8078 = vsel %vm1455, %v8075, %v8077
  %v8079 = vrot.slane %v6751, 3
  %v8080 = vsel %vm1455, %v8077, %v8079
  %v8081 = vrot.slane %v6752, 3
  %v8082 = vsel %vm1455, %v8079, %v8081
  %v8083 = vrot.slane %v6753, 3
  %v8084 = vsel %vm1455, %v8081, %v8083
  %v8085 = vrot.slane %v6754, 3
  %v8086 = vsel %vm1455, %v8083, %v8085
  %v8087 = vrot.slane %v6755, 3
  %v8088 = vsel %vm1455, %v8085, %v8087
  %v8089 = vrot.slane %v6756, 3
  %v8090 = vsel %vm1455, %v8087, %v8089
  %v8091 = vrot.slane %v6761, 3
  %v8092 = vsel %vm1455, %v8089, %v8091
  %v8093 = vrot.slane %v6766, 3
  %v8094 = vsel %vm1455, %v8091, %v8093
  %v8095 = vrot.slane %v6767, 3
  %v8096 = vsel %vm1455, %v8093, %v8095
  %8097 = vrot.lane.b32.xlu0 %v7936, 32
  %v8098 = vpop.permute.xlu0 %8097
  %8099 = vrot.lane.b32.xlu0 %v7938, 32
  %v8100 = vpop.permute.xlu0 %8099
  %8101 = vrot.lane.b32.xlu0 %v7940, 32
  %v8102 = vpop.permute.xlu0 %8101
  %8103 = vrot.lane.b32.xlu0 %v7942, 32
  %v8104 = vpop.permute.xlu0 %8103
  %8105 = vrot.lane.b32.xlu0 %v7944, 32
  %v8106 = vpop.permute.xlu0 %8105
  %8107 = vrot.lane.b32.xlu0 %v7946, 32
  %v8108 = vpop.permute.xlu0 %8107
  %8109 = vrot.lane.b32.xlu0 %v7948, 32
  %v8110 = vpop.permute.xlu0 %8109
  %8111 = vrot.lane.b32.xlu0 %v7950, 32
  %v8112 = vpop.permute.xlu0 %8111
  %8113 = vrot.lane.b32.xlu0 %v7952, 32
  %v8114 = vpop.permute.xlu0 %8113
  %8115 = vrot.lane.b32.xlu0 %v7954, 32
  %v8116 = vpop.permute.xlu0 %8115
  %8117 = vrot.lane.b32.xlu0 %v7956, 32
  %v8118 = vpop.permute.xlu0 %8117
  %8119 = vrot.lane.b32.xlu0 %v7958, 32
  %v8120 = vpop.permute.xlu0 %8119
  %8121 = vrot.lane.b32.xlu0 %v7960, 32
  %v8122 = vpop.permute.xlu0 %8121
  %8123 = vrot.lane.b32.xlu0 %v7962, 32
  %v8124 = vpop.permute.xlu0 %8123
  %8125 = vrot.lane.b32.xlu0 %v7964, 32
  %v8126 = vpop.permute.xlu0 %8125
  %8127 = vrot.lane.b32.xlu0 %v7966, 32
  %v8128 = vpop.permute.xlu0 %8127
  %8129 = vrot.lane.b32.xlu0 %v7968, 32
  %v8130 = vpop.permute.xlu0 %8129
  %8131 = vrot.lane.b32.xlu0 %v7970, 32
  %v8132 = vpop.permute.xlu0 %8131
  %8133 = vrot.lane.b32.xlu0 %v7972, 32
  %v8134 = vpop.permute.xlu0 %8133
  %8135 = vrot.lane.b32.xlu0 %v7974, 32
  %v8136 = vpop.permute.xlu0 %8135
  %8137 = vrot.lane.b32.xlu0 %v7976, 32
  %v8138 = vpop.permute.xlu0 %8137
  %8139 = vrot.lane.b32.xlu0 %v7978, 32
  %v8140 = vpop.permute.xlu0 %8139
  %8141 = vrot.lane.b32.xlu0 %v7980, 32
  %v8142 = vpop.permute.xlu0 %8141
  %8143 = vrot.lane.b32.xlu0 %v7982, 32
  %v8144 = vpop.permute.xlu0 %8143
  %8145 = vrot.lane.b32.xlu0 %v7984, 32
  %v8146 = vpop.permute.xlu0 %8145
  %8147 = vrot.lane.b32.xlu0 %v7986, 32
  %v8148 = vpop.permute.xlu0 %8147
  %8149 = vrot.lane.b32.xlu0 %v7988, 32
  %v8150 = vpop.permute.xlu0 %8149
  %8151 = vrot.lane.b32.xlu0 %v7990, 32
  %v8152 = vpop.permute.xlu0 %8151
  %8153 = vrot.lane.b32.xlu0 %v7992, 32
  %v8154 = vpop.permute.xlu0 %8153
  %8155 = vrot.lane.b32.xlu0 %v7994, 32
  %v8156 = vpop.permute.xlu0 %8155
  %8157 = vrot.lane.b32.xlu0 %v7996, 32
  %v8158 = vpop.permute.xlu0 %8157
  %8159 = vrot.lane.b32.xlu0 %v7998, 32
  %v8160 = vpop.permute.xlu0 %8159
  %8161 = vrot.lane.b32.xlu0 %v8000, 32
  %v8162 = vpop.permute.xlu0 %8161
  %8163 = vrot.lane.b32.xlu0 %v8002, 32
  %v8164 = vpop.permute.xlu0 %8163
  %8165 = vrot.lane.b32.xlu0 %v8004, 32
  %v8166 = vpop.permute.xlu0 %8165
  %8167 = vrot.lane.b32.xlu0 %v8006, 32
  %v8168 = vpop.permute.xlu0 %8167
  %8169 = vrot.lane.b32.xlu0 %v8008, 32
  %v8170 = vpop.permute.xlu0 %8169
  %8171 = vrot.lane.b32.xlu0 %v8010, 32
  %v8172 = vpop.permute.xlu0 %8171
  %8173 = vrot.lane.b32.xlu0 %v8012, 32
  %v8174 = vpop.permute.xlu0 %8173
  %8175 = vrot.lane.b32.xlu0 %v8014, 32
  %v8176 = vpop.permute.xlu0 %8175
  %8177 = vrot.lane.b32.xlu0 %v8016, 32
  %v8178 = vpop.permute.xlu0 %8177
  %8179 = vrot.lane.b32.xlu0 %v8018, 32
  %v8180 = vpop.permute.xlu0 %8179
  %8181 = vrot.lane.b32.xlu0 %v8020, 32
  %v8182 = vpop.permute.xlu0 %8181
  %8183 = vrot.lane.b32.xlu0 %v8022, 32
  %v8184 = vpop.permute.xlu0 %8183
  %8185 = vrot.lane.b32.xlu0 %v8024, 32
  %v8186 = vpop.permute.xlu0 %8185
  %8187 = vrot.lane.b32.xlu0 %v8026, 32
  %v8188 = vpop.permute.xlu0 %8187
  %8189 = vrot.lane.b32.xlu0 %v8028, 32
  %v8190 = vpop.permute.xlu0 %8189
  %8191 = vrot.lane.b32.xlu0 %v8030, 32
  %v8192 = vpop.permute.xlu0 %8191
  %8193 = vrot.lane.b32.xlu0 %v8032, 32
  %v8194 = vpop.permute.xlu0 %8193
  %8195 = vrot.lane.b32.xlu0 %v8034, 32
  %v8196 = vpop.permute.xlu0 %8195
  %8197 = vrot.lane.b32.xlu0 %v8036, 32
  %v8198 = vpop.permute.xlu0 %8197
  %8199 = vrot.lane.b32.xlu0 %v8038, 32
  %v8200 = vpop.permute.xlu0 %8199
  %8201 = vrot.lane.b32.xlu0 %v8040, 32
  %v8202 = vpop.permute.xlu0 %8201
  %8203 = vrot.lane.b32.xlu0 %v8042, 32
  %v8204 = vpop.permute.xlu0 %8203
  %8205 = vrot.lane.b32.xlu0 %v8044, 32
  %v8206 = vpop.permute.xlu0 %8205
  %8207 = vrot.lane.b32.xlu0 %v8046, 32
  %v8208 = vpop.permute.xlu0 %8207
  %8209 = vrot.lane.b32.xlu0 %v8048, 32
  %v8210 = vpop.permute.xlu0 %8209
  %8211 = vrot.lane.b32.xlu0 %v8050, 32
  %v8212 = vpop.permute.xlu0 %8211
  %8213 = vrot.lane.b32.xlu0 %v8052, 32
  %v8214 = vpop.permute.xlu0 %8213
  %8215 = vrot.lane.b32.xlu0 %v8054, 32
  %v8216 = vpop.permute.xlu0 %8215
  %8217 = vrot.lane.b32.xlu0 %v8056, 32
  %v8218 = vpop.permute.xlu0 %8217
  %8219 = vrot.lane.b32.xlu0 %v8058, 32
  %v8220 = vpop.permute.xlu0 %8219
  %8221 = vrot.lane.b32.xlu0 %v8060, 32
  %v8222 = vpop.permute.xlu0 %8221
  %8223 = vrot.lane.b32.xlu0 %v8062, 32
  %v8224 = vpop.permute.xlu0 %8223
  %8225 = vrot.lane.b32.xlu0 %v8064, 32
  %v8226 = vpop.permute.xlu0 %8225
  %8227 = vrot.lane.b32.xlu0 %v8066, 32
  %v8228 = vpop.permute.xlu0 %8227
  %8229 = vrot.lane.b32.xlu0 %v8068, 32
  %v8230 = vpop.permute.xlu0 %8229
  %8231 = vrot.lane.b32.xlu0 %v8070, 32
  %v8232 = vpop.permute.xlu0 %8231
  %8233 = vrot.lane.b32.xlu0 %v8072, 32
  %v8234 = vpop.permute.xlu0 %8233
  %8235 = vrot.lane.b32.xlu0 %v8074, 32
  %v8236 = vpop.permute.xlu0 %8235
  %8237 = vrot.lane.b32.xlu0 %v8076, 32
  %v8238 = vpop.permute.xlu0 %8237
  %8239 = vrot.lane.b32.xlu0 %v8078, 32
  %v8240 = vpop.permute.xlu0 %8239
  %8241 = vrot.lane.b32.xlu0 %v8080, 32
  %v8242 = vpop.permute.xlu0 %8241
  %8243 = vrot.lane.b32.xlu0 %v8082, 32
  %v8244 = vpop.permute.xlu0 %8243
  %8245 = vrot.lane.b32.xlu0 %v8084, 32
  %v8246 = vpop.permute.xlu0 %8245
  %8247 = vrot.lane.b32.xlu0 %v8086, 32
  %v8248 = vpop.permute.xlu0 %8247
  %8249 = vrot.lane.b32.xlu0 %v8088, 32
  %v8250 = vpop.permute.xlu0 %8249
  %8251 = vrot.lane.b32.xlu0 %v8090, 32
  %v8252 = vpop.permute.xlu0 %8251
  %8253 = vrot.lane.b32.xlu0 %v8092, 32
  %v8254 = vpop.permute.xlu0 %8253
  %8255 = vrot.lane.b32.xlu0 %v8094, 32
  %v8256 = vpop.permute.xlu0 %8255
  %8257 = vrot.lane.b32.xlu0 %v8096, 32
  %v8258 = vpop.permute.xlu0 %8257
  %8259 = vrot.lane.b32.xlu0 %v8095, 32
  %v8260 = vpop.permute.xlu0 %8259
  %v8344 = vrot.slane %v6679, 4
  %v8345 = vrot.slane %v6680, 4
  %v8346 = vsel %vm1864, %v8344, %v8345
  %v8347 = vrot.slane %v6681, 4
  %v8348 = vsel %vm1864, %v8345, %v8347
  %v8349 = vrot.slane %v6682, 4
  %v8350 = vsel %vm1864, %v8347, %v8349
  %v8351 = vrot.slane %v6683, 4
  %v8352 = vsel %vm1864, %v8349, %v8351
  %v8353 = vrot.slane %v6684, 4
  %v8354 = vsel %vm1864, %v8351, %v8353
  %v8355 = vrot.slane %v6685, 4
  %v8356 = vsel %vm1864, %v8353, %v8355
  %v8357 = vrot.slane %v6686, 4
  %v8358 = vsel %vm1864, %v8355, %v8357
  %v8359 = vrot.slane %v6687, 4
  %v8360 = vsel %vm1864, %v8357, %v8359
  %v8361 = vrot.slane %v6688, 4
  %v8362 = vsel %vm1864, %v8359, %v8361
  %v8363 = vrot.slane %v6689, 4
  %v8364 = vsel %vm1864, %v8361, %v8363
  %v8365 = vrot.slane %v6690, 4
  %v8366 = vsel %vm1864, %v8363, %v8365
  %v8367 = vrot.slane %v6691, 4
  %v8368 = vsel %vm1864, %v8365, %v8367
  %v8369 = vrot.slane %v6692, 4
  %v8370 = vsel %vm1864, %v8367, %v8369
  %v8371 = vrot.slane %v6693, 4
  %v8372 = vsel %vm1864, %v8369, %v8371
  %v8373 = vrot.slane %v6694, 4
  %v8374 = vsel %vm1864, %v8371, %v8373
  %v8375 = vrot.slane %v6695, 4
  %v8376 = vsel %vm1864, %v8373, %v8375
  %v8377 = vrot.slane %v6696, 4
  %v8378 = vsel %vm1864, %v8375, %v8377
  %v8379 = vrot.slane %v6697, 4
  %v8380 = vsel %vm1864, %v8377, %v8379
  %v8381 = vrot.slane %v6698, 4
  %v8382 = vsel %vm1864, %v8379, %v8381
  %v8383 = vrot.slane %v6699, 4
  %v8384 = vsel %vm1864, %v8381, %v8383
  %v8385 = vrot.slane %v6700, 4
  %v8386 = vsel %vm1864, %v8383, %v8385
  %v8387 = vrot.slane %v6701, 4
  %v8388 = vsel %vm1864, %v8385, %v8387
  %v8389 = vrot.slane %v6702, 4
  %v8390 = vsel %vm1864, %v8387, %v8389
  %v8391 = vrot.slane %v6703, 4
  %v8392 = vsel %vm1864, %v8389, %v8391
  %v8393 = vrot.slane %v6704, 4
  %v8394 = vsel %vm1864, %v8391, %v8393
  %v8395 = vrot.slane %v6705, 4
  %v8396 = vsel %vm1864, %v8393, %v8395
  %v8397 = vrot.slane %v6706, 4
  %v8398 = vsel %vm1864, %v8395, %v8397
  %v8399 = vrot.slane %v6707, 4
  %v8400 = vsel %vm1864, %v8397, %v8399
  %v8401 = vrot.slane %v6708, 4
  %v8402 = vsel %vm1864, %v8399, %v8401
  %v8403 = vrot.slane %v6709, 4
  %v8404 = vsel %vm1864, %v8401, %v8403
  %v8405 = vrot.slane %v6710, 4
  %v8406 = vsel %vm1864, %v8403, %v8405
  %v8407 = vrot.slane %v6711, 4
  %v8408 = vsel %vm1864, %v8405, %v8407
  %v8409 = vrot.slane %v6712, 4
  %v8410 = vsel %vm1864, %v8407, %v8409
  %v8411 = vrot.slane %v6713, 4
  %v8412 = vsel %vm1864, %v8409, %v8411
  %v8413 = vrot.slane %v6714, 4
  %v8414 = vsel %vm1864, %v8411, %v8413
  %v8415 = vrot.slane %v6715, 4
  %v8416 = vsel %vm1864, %v8413, %v8415
  %v8417 = vrot.slane %v6716, 4
  %v8418 = vsel %vm1864, %v8415, %v8417
  %v8419 = vrot.slane %v6717, 4
  %v8420 = vsel %vm1864, %v8417, %v8419
  %v8421 = vrot.slane %v6718, 4
  %v8422 = vsel %vm1864, %v8419, %v8421
  %v8423 = vrot.slane %v6719, 4
  %v8424 = vsel %vm1864, %v8421, %v8423
  %v8425 = vrot.slane %v6720, 4
  %v8426 = vsel %vm1864, %v8423, %v8425
  %v8427 = vrot.slane %v6721, 4
  %v8428 = vsel %vm1864, %v8425, %v8427
  %v8429 = vrot.slane %v6722, 4
  %v8430 = vsel %vm1864, %v8427, %v8429
  %v8431 = vrot.slane %v6723, 4
  %v8432 = vsel %vm1864, %v8429, %v8431
  %v8433 = vrot.slane %v6724, 4
  %v8434 = vsel %vm1864, %v8431, %v8433
  %v8435 = vrot.slane %v6725, 4
  %v8436 = vsel %vm1864, %v8433, %v8435
  %v8437 = vrot.slane %v6726, 4
  %v8438 = vsel %vm1864, %v8435, %v8437
  %v8439 = vrot.slane %v6727, 4
  %v8440 = vsel %vm1864, %v8437, %v8439
  %v8441 = vrot.slane %v6728, 4
  %v8442 = vsel %vm1864, %v8439, %v8441
  %v8443 = vrot.slane %v6729, 4
  %v8444 = vsel %vm1864, %v8441, %v8443
  %v8445 = vrot.slane %v6730, 4
  %v8446 = vsel %vm1864, %v8443, %v8445
  %v8447 = vrot.slane %v6731, 4
  %v8448 = vsel %vm1864, %v8445, %v8447
  %v8449 = vrot.slane %v6732, 4
  %v8450 = vsel %vm1864, %v8447, %v8449
  %v8451 = vrot.slane %v6733, 4
  %v8452 = vsel %vm1864, %v8449, %v8451
  %v8453 = vrot.slane %v6734, 4
  %v8454 = vsel %vm1864, %v8451, %v8453
  %v8455 = vrot.slane %v6735, 4
  %v8456 = vsel %vm1864, %v8453, %v8455
  %v8457 = vrot.slane %v6736, 4
  %v8458 = vsel %vm1864, %v8455, %v8457
  %v8459 = vrot.slane %v6737, 4
  %v8460 = vsel %vm1864, %v8457, %v8459
  %v8461 = vrot.slane %v6738, 4
  %v8462 = vsel %vm1864, %v8459, %v8461
  %v8463 = vrot.slane %v6739, 4
  %v8464 = vsel %vm1864, %v8461, %v8463
  %v8465 = vrot.slane %v6740, 4
  %v8466 = vsel %vm1864, %v8463, %v8465
  %v8467 = vrot.slane %v6741, 4
  %v8468 = vsel %vm1864, %v8465, %v8467
  %v8469 = vrot.slane %v6742, 4
  %v8470 = vsel %vm1864, %v8467, %v8469
  %v8471 = vrot.slane %v6743, 4
  %v8472 = vsel %vm1864, %v8469, %v8471
  %v8473 = vrot.slane %v6744, 4
  %v8474 = vsel %vm1864, %v8471, %v8473
  %v8475 = vrot.slane %v6745, 4
  %v8476 = vsel %vm1864, %v8473, %v8475
  %v8477 = vrot.slane %v6746, 4
  %v8478 = vsel %vm1864, %v8475, %v8477
  %v8479 = vrot.slane %v6747, 4
  %v8480 = vsel %vm1864, %v8477, %v8479
  %v8481 = vrot.slane %v6748, 4
  %v8482 = vsel %vm1864, %v8479, %v8481
  %v8483 = vrot.slane %v6749, 4
  %v8484 = vsel %vm1864, %v8481, %v8483
  %v8485 = vrot.slane %v6750, 4
  %v8486 = vsel %vm1864, %v8483, %v8485
  %v8487 = vrot.slane %v6751, 4
  %v8488 = vsel %vm1864, %v8485, %v8487
  %v8489 = vrot.slane %v6752, 4
  %v8490 = vsel %vm1864, %v8487, %v8489
  %v8491 = vrot.slane %v6753, 4
  %v8492 = vsel %vm1864, %v8489, %v8491
  %v8493 = vrot.slane %v6754, 4
  %v8494 = vsel %vm1864, %v8491, %v8493
  %v8495 = vrot.slane %v6755, 4
  %v8496 = vsel %vm1864, %v8493, %v8495
  %v8497 = vrot.slane %v6756, 4
  %v8498 = vsel %vm1864, %v8495, %v8497
  %v8499 = vrot.slane %v6761, 4
  %v8500 = vsel %vm1864, %v8497, %v8499
  %v8501 = vrot.slane %v6766, 4
  %v8502 = vsel %vm1864, %v8499, %v8501
  %v8503 = vrot.slane %v6767, 4
  %v8504 = vsel %vm1864, %v8501, %v8503
  %v8505 = vrot.slane %v6769, 4
  %v8506 = vsel %vm1864, %v8503, %v8505
  %8507 = vrot.lane.b32.xlu0 %v8344, 40
  %v8508 = vpop.permute.xlu0 %8507
  %8509 = vrot.lane.b32.xlu0 %v8346, 40
  %v8510 = vpop.permute.xlu0 %8509
  %8511 = vrot.lane.b32.xlu0 %v8348, 40
  %v8512 = vpop.permute.xlu0 %8511
  %8513 = vrot.lane.b32.xlu0 %v8350, 40
  %v8514 = vpop.permute.xlu0 %8513
  %8515 = vrot.lane.b32.xlu0 %v8352, 40
  %v8516 = vpop.permute.xlu0 %8515
  %8517 = vrot.lane.b32.xlu0 %v8354, 40
  %v8518 = vpop.permute.xlu0 %8517
  %8519 = vrot.lane.b32.xlu0 %v8356, 40
  %v8520 = vpop.permute.xlu0 %8519
  %8521 = vrot.lane.b32.xlu0 %v8358, 40
  %v8522 = vpop.permute.xlu0 %8521
  %8523 = vrot.lane.b32.xlu0 %v8360, 40
  %v8524 = vpop.permute.xlu0 %8523
  %8525 = vrot.lane.b32.xlu0 %v8362, 40
  %v8526 = vpop.permute.xlu0 %8525
  %8527 = vrot.lane.b32.xlu0 %v8364, 40
  %v8528 = vpop.permute.xlu0 %8527
  %8529 = vrot.lane.b32.xlu0 %v8366, 40
  %v8530 = vpop.permute.xlu0 %8529
  %8531 = vrot.lane.b32.xlu0 %v8368, 40
  %v8532 = vpop.permute.xlu0 %8531
  %8533 = vrot.lane.b32.xlu0 %v8370, 40
  %v8534 = vpop.permute.xlu0 %8533
  %8535 = vrot.lane.b32.xlu0 %v8372, 40
  %v8536 = vpop.permute.xlu0 %8535
  %8537 = vrot.lane.b32.xlu0 %v8374, 40
  %v8538 = vpop.permute.xlu0 %8537
  %8539 = vrot.lane.b32.xlu0 %v8376, 40
  %v8540 = vpop.permute.xlu0 %8539
  %8541 = vrot.lane.b32.xlu0 %v8378, 40
  %v8542 = vpop.permute.xlu0 %8541
  %8543 = vrot.lane.b32.xlu0 %v8380, 40
  %v8544 = vpop.permute.xlu0 %8543
  %8545 = vrot.lane.b32.xlu0 %v8382, 40
  %v8546 = vpop.permute.xlu0 %8545
  %8547 = vrot.lane.b32.xlu0 %v8384, 40
  %v8548 = vpop.permute.xlu0 %8547
  %8549 = vrot.lane.b32.xlu0 %v8386, 40
  %v8550 = vpop.permute.xlu0 %8549
  %8551 = vrot.lane.b32.xlu0 %v8388, 40
  %v8552 = vpop.permute.xlu0 %8551
  %8553 = vrot.lane.b32.xlu0 %v8390, 40
  %v8554 = vpop.permute.xlu0 %8553
  %8555 = vrot.lane.b32.xlu0 %v8392, 40
  %v8556 = vpop.permute.xlu0 %8555
  %8557 = vrot.lane.b32.xlu0 %v8394, 40
  %v8558 = vpop.permute.xlu0 %8557
  %8559 = vrot.lane.b32.xlu0 %v8396, 40
  %v8560 = vpop.permute.xlu0 %8559
  %8561 = vrot.lane.b32.xlu0 %v8398, 40
  %v8562 = vpop.permute.xlu0 %8561
  %8563 = vrot.lane.b32.xlu0 %v8400, 40
  %v8564 = vpop.permute.xlu0 %8563
  %8565 = vrot.lane.b32.xlu0 %v8402, 40
  %v8566 = vpop.permute.xlu0 %8565
  %8567 = vrot.lane.b32.xlu0 %v8404, 40
  %v8568 = vpop.permute.xlu0 %8567
  %8569 = vrot.lane.b32.xlu0 %v8406, 40
  %v8570 = vpop.permute.xlu0 %8569
  %8571 = vrot.lane.b32.xlu0 %v8408, 40
  %v8572 = vpop.permute.xlu0 %8571
  %8573 = vrot.lane.b32.xlu0 %v8410, 40
  %v8574 = vpop.permute.xlu0 %8573
  %8575 = vrot.lane.b32.xlu0 %v8412, 40
  %v8576 = vpop.permute.xlu0 %8575
  %8577 = vrot.lane.b32.xlu0 %v8414, 40
  %v8578 = vpop.permute.xlu0 %8577
  %8579 = vrot.lane.b32.xlu0 %v8416, 40
  %v8580 = vpop.permute.xlu0 %8579
  %8581 = vrot.lane.b32.xlu0 %v8418, 40
  %v8582 = vpop.permute.xlu0 %8581
  %8583 = vrot.lane.b32.xlu0 %v8420, 40
  %v8584 = vpop.permute.xlu0 %8583
  %8585 = vrot.lane.b32.xlu0 %v8422, 40
  %v8586 = vpop.permute.xlu0 %8585
  %8587 = vrot.lane.b32.xlu0 %v8424, 40
  %v8588 = vpop.permute.xlu0 %8587
  %8589 = vrot.lane.b32.xlu0 %v8426, 40
  %v8590 = vpop.permute.xlu0 %8589
  %8591 = vrot.lane.b32.xlu0 %v8428, 40
  %v8592 = vpop.permute.xlu0 %8591
  %8593 = vrot.lane.b32.xlu0 %v8430, 40
  %v8594 = vpop.permute.xlu0 %8593
  %8595 = vrot.lane.b32.xlu0 %v8432, 40
  %v8596 = vpop.permute.xlu0 %8595
  %8597 = vrot.lane.b32.xlu0 %v8434, 40
  %v8598 = vpop.permute.xlu0 %8597
  %8599 = vrot.lane.b32.xlu0 %v8436, 40
  %v8600 = vpop.permute.xlu0 %8599
  %8601 = vrot.lane.b32.xlu0 %v8438, 40
  %v8602 = vpop.permute.xlu0 %8601
  %8603 = vrot.lane.b32.xlu0 %v8440, 40
  %v8604 = vpop.permute.xlu0 %8603
  %8605 = vrot.lane.b32.xlu0 %v8442, 40
  %v8606 = vpop.permute.xlu0 %8605
  %8607 = vrot.lane.b32.xlu0 %v8444, 40
  %v8608 = vpop.permute.xlu0 %8607
  %8609 = vrot.lane.b32.xlu0 %v8446, 40
  %v8610 = vpop.permute.xlu0 %8609
  %8611 = vrot.lane.b32.xlu0 %v8448, 40
  %v8612 = vpop.permute.xlu0 %8611
  %8613 = vrot.lane.b32.xlu0 %v8450, 40
  %v8614 = vpop.permute.xlu0 %8613
  %8615 = vrot.lane.b32.xlu0 %v8452, 40
  %v8616 = vpop.permute.xlu0 %8615
  %8617 = vrot.lane.b32.xlu0 %v8454, 40
  %v8618 = vpop.permute.xlu0 %8617
  %8619 = vrot.lane.b32.xlu0 %v8456, 40
  %v8620 = vpop.permute.xlu0 %8619
  %8621 = vrot.lane.b32.xlu0 %v8458, 40
  %v8622 = vpop.permute.xlu0 %8621
  %8623 = vrot.lane.b32.xlu0 %v8460, 40
  %v8624 = vpop.permute.xlu0 %8623
  %8625 = vrot.lane.b32.xlu0 %v8462, 40
  %v8626 = vpop.permute.xlu0 %8625
  %8627 = vrot.lane.b32.xlu0 %v8464, 40
  %v8628 = vpop.permute.xlu0 %8627
  %8629 = vrot.lane.b32.xlu0 %v8466, 40
  %v8630 = vpop.permute.xlu0 %8629
  %8631 = vrot.lane.b32.xlu0 %v8468, 40
  %v8632 = vpop.permute.xlu0 %8631
  %8633 = vrot.lane.b32.xlu0 %v8470, 40
  %v8634 = vpop.permute.xlu0 %8633
  %8635 = vrot.lane.b32.xlu0 %v8472, 40
  %v8636 = vpop.permute.xlu0 %8635
  %8637 = vrot.lane.b32.xlu0 %v8474, 40
  %v8638 = vpop.permute.xlu0 %8637
  %8639 = vrot.lane.b32.xlu0 %v8476, 40
  %v8640 = vpop.permute.xlu0 %8639
  %8641 = vrot.lane.b32.xlu0 %v8478, 40
  %v8642 = vpop.permute.xlu0 %8641
  %8643 = vrot.lane.b32.xlu0 %v8480, 40
  %v8644 = vpop.permute.xlu0 %8643
  %8645 = vrot.lane.b32.xlu0 %v8482, 40
  %v8646 = vpop.permute.xlu0 %8645
  %8647 = vrot.lane.b32.xlu0 %v8484, 40
  %v8648 = vpop.permute.xlu0 %8647
  %8649 = vrot.lane.b32.xlu0 %v8486, 40
  %v8650 = vpop.permute.xlu0 %8649
  %8651 = vrot.lane.b32.xlu0 %v8488, 40
  %v8652 = vpop.permute.xlu0 %8651
  %8653 = vrot.lane.b32.xlu0 %v8490, 40
  %v8654 = vpop.permute.xlu0 %8653
  %8655 = vrot.lane.b32.xlu0 %v8492, 40
  %v8656 = vpop.permute.xlu0 %8655
  %8657 = vrot.lane.b32.xlu0 %v8494, 40
  %v8658 = vpop.permute.xlu0 %8657
  %8659 = vrot.lane.b32.xlu0 %v8496, 40
  %v8660 = vpop.permute.xlu0 %8659
  %8661 = vrot.lane.b32.xlu0 %v8498, 40
  %v8662 = vpop.permute.xlu0 %8661
  %8663 = vrot.lane.b32.xlu0 %v8500, 40
  %v8664 = vpop.permute.xlu0 %8663
  %8665 = vrot.lane.b32.xlu0 %v8502, 40
  %v8666 = vpop.permute.xlu0 %8665
  %8667 = vrot.lane.b32.xlu0 %v8504, 40
  %v8668 = vpop.permute.xlu0 %8667
  %8669 = vrot.lane.b32.xlu0 %v8506, 40
  %v8670 = vpop.permute.xlu0 %8669
  %v8756 = vrot.slane %v6773, 4
  %v8757 = vsel %vm1864, %v8503, %v8756
  %v8758 = vrot.slane %v6774, 4
  %v8759 = vsel %vm1864, %v8756, %v8758
  %v8760 = vrot.slane %v6775, 4
  %v8761 = vsel %vm1864, %v8758, %v8760
  %8762 = vrot.lane.b32.xlu0 %v8347, 48
  %v8763 = vpop.permute.xlu0 %8762
  %8764 = vrot.lane.b32.xlu0 %v8350, 48
  %v8765 = vpop.permute.xlu0 %8764
  %8766 = vrot.lane.b32.xlu0 %v8352, 48
  %v8767 = vpop.permute.xlu0 %8766
  %8768 = vrot.lane.b32.xlu0 %v8354, 48
  %v8769 = vpop.permute.xlu0 %8768
  %8770 = vrot.lane.b32.xlu0 %v8356, 48
  %v8771 = vpop.permute.xlu0 %8770
  %8772 = vrot.lane.b32.xlu0 %v8358, 48
  %v8773 = vpop.permute.xlu0 %8772
  %8774 = vrot.lane.b32.xlu0 %v8360, 48
  %v8775 = vpop.permute.xlu0 %8774
  %8776 = vrot.lane.b32.xlu0 %v8362, 48
  %v8777 = vpop.permute.xlu0 %8776
  %8778 = vrot.lane.b32.xlu0 %v8364, 48
  %v8779 = vpop.permute.xlu0 %8778
  %8780 = vrot.lane.b32.xlu0 %v8366, 48
  %v8781 = vpop.permute.xlu0 %8780
  %8782 = vrot.lane.b32.xlu0 %v8368, 48
  %v8783 = vpop.permute.xlu0 %8782
  %8784 = vrot.lane.b32.xlu0 %v8370, 48
  %v8785 = vpop.permute.xlu0 %8784
  %8786 = vrot.lane.b32.xlu0 %v8372, 48
  %v8787 = vpop.permute.xlu0 %8786
  %8788 = vrot.lane.b32.xlu0 %v8374, 48
  %v8789 = vpop.permute.xlu0 %8788
  %8790 = vrot.lane.b32.xlu0 %v8376, 48
  %v8791 = vpop.permute.xlu0 %8790
  %8792 = vrot.lane.b32.xlu0 %v8378, 48
  %v8793 = vpop.permute.xlu0 %8792
  %8794 = vrot.lane.b32.xlu0 %v8380, 48
  %v8795 = vpop.permute.xlu0 %8794
  %8796 = vrot.lane.b32.xlu0 %v8382, 48
  %v8797 = vpop.permute.xlu0 %8796
  %8798 = vrot.lane.b32.xlu0 %v8384, 48
  %v8799 = vpop.permute.xlu0 %8798
  %8800 = vrot.lane.b32.xlu0 %v8386, 48
  %v8801 = vpop.permute.xlu0 %8800
  %8802 = vrot.lane.b32.xlu0 %v8388, 48
  %v8803 = vpop.permute.xlu0 %8802
  %8804 = vrot.lane.b32.xlu0 %v8390, 48
  %v8805 = vpop.permute.xlu0 %8804
  %8806 = vrot.lane.b32.xlu0 %v8392, 48
  %v8807 = vpop.permute.xlu0 %8806
  %8808 = vrot.lane.b32.xlu0 %v8394, 48
  %v8809 = vpop.permute.xlu0 %8808
  %8810 = vrot.lane.b32.xlu0 %v8396, 48
  %v8811 = vpop.permute.xlu0 %8810
  %8812 = vrot.lane.b32.xlu0 %v8398, 48
  %v8813 = vpop.permute.xlu0 %8812
  %8814 = vrot.lane.b32.xlu0 %v8400, 48
  %v8815 = vpop.permute.xlu0 %8814
  %8816 = vrot.lane.b32.xlu0 %v8402, 48
  %v8817 = vpop.permute.xlu0 %8816
  %8818 = vrot.lane.b32.xlu0 %v8404, 48
  %v8819 = vpop.permute.xlu0 %8818
  %8820 = vrot.lane.b32.xlu0 %v8406, 48
  %v8821 = vpop.permute.xlu0 %8820
  %8822 = vrot.lane.b32.xlu0 %v8408, 48
  %v8823 = vpop.permute.xlu0 %8822
  %8824 = vrot.lane.b32.xlu0 %v8410, 48
  %v8825 = vpop.permute.xlu0 %8824
  %8826 = vrot.lane.b32.xlu0 %v8412, 48
  %v8827 = vpop.permute.xlu0 %8826
  %8828 = vrot.lane.b32.xlu0 %v8414, 48
  %v8829 = vpop.permute.xlu0 %8828
  %8830 = vrot.lane.b32.xlu0 %v8416, 48
  %v8831 = vpop.permute.xlu0 %8830
  %8832 = vrot.lane.b32.xlu0 %v8418, 48
  %v8833 = vpop.permute.xlu0 %8832
  %8834 = vrot.lane.b32.xlu0 %v8420, 48
  %v8835 = vpop.permute.xlu0 %8834
  %8836 = vrot.lane.b32.xlu0 %v8422, 48
  %v8837 = vpop.permute.xlu0 %8836
  %8838 = vrot.lane.b32.xlu0 %v8424, 48
  %v8839 = vpop.permute.xlu0 %8838
  %8840 = vrot.lane.b32.xlu0 %v8426, 48
  %v8841 = vpop.permute.xlu0 %8840
  %8842 = vrot.lane.b32.xlu0 %v8428, 48
  %v8843 = vpop.permute.xlu0 %8842
  %8844 = vrot.lane.b32.xlu0 %v8430, 48
  %v8845 = vpop.permute.xlu0 %8844
  %8846 = vrot.lane.b32.xlu0 %v8432, 48
  %v8847 = vpop.permute.xlu0 %8846
  %8848 = vrot.lane.b32.xlu0 %v8434, 48
  %v8849 = vpop.permute.xlu0 %8848
  %8850 = vrot.lane.b32.xlu0 %v8436, 48
  %v8851 = vpop.permute.xlu0 %8850
  %8852 = vrot.lane.b32.xlu0 %v8438, 48
  %v8853 = vpop.permute.xlu0 %8852
  %8854 = vrot.lane.b32.xlu0 %v8440, 48
  %v8855 = vpop.permute.xlu0 %8854
  %8856 = vrot.lane.b32.xlu0 %v8442, 48
  %v8857 = vpop.permute.xlu0 %8856
  %8858 = vrot.lane.b32.xlu0 %v8444, 48
  %v8859 = vpop.permute.xlu0 %8858
  %8860 = vrot.lane.b32.xlu0 %v8446, 48
  %v8861 = vpop.permute.xlu0 %8860
  %8862 = vrot.lane.b32.xlu0 %v8448, 48
  %v8863 = vpop.permute.xlu0 %8862
  %8864 = vrot.lane.b32.xlu0 %v8450, 48
  %v8865 = vpop.permute.xlu0 %8864
  %8866 = vrot.lane.b32.xlu0 %v8452, 48
  %v8867 = vpop.permute.xlu0 %8866
  %8868 = vrot.lane.b32.xlu0 %v8454, 48
  %v8869 = vpop.permute.xlu0 %8868
  %8870 = vrot.lane.b32.xlu0 %v8456, 48
  %v8871 = vpop.permute.xlu0 %8870
  %8872 = vrot.lane.b32.xlu0 %v8458, 48
  %v8873 = vpop.permute.xlu0 %8872
  %8874 = vrot.lane.b32.xlu0 %v8460, 48
  %v8875 = vpop.permute.xlu0 %8874
  %8876 = vrot.lane.b32.xlu0 %v8462, 48
  %v8877 = vpop.permute.xlu0 %8876
  %8878 = vrot.lane.b32.xlu0 %v8464, 48
  %v8879 = vpop.permute.xlu0 %8878
  %8880 = vrot.lane.b32.xlu0 %v8466, 48
  %v8881 = vpop.permute.xlu0 %8880
  %8882 = vrot.lane.b32.xlu0 %v8468, 48
  %v8883 = vpop.permute.xlu0 %8882
  %8884 = vrot.lane.b32.xlu0 %v8470, 48
  %v8885 = vpop.permute.xlu0 %8884
  %8886 = vrot.lane.b32.xlu0 %v8472, 48
  %v8887 = vpop.permute.xlu0 %8886
  %8888 = vrot.lane.b32.xlu0 %v8474, 48
  %v8889 = vpop.permute.xlu0 %8888
  %8890 = vrot.lane.b32.xlu0 %v8476, 48
  %v8891 = vpop.permute.xlu0 %8890
  %8892 = vrot.lane.b32.xlu0 %v8478, 48
  %v8893 = vpop.permute.xlu0 %8892
  %8894 = vrot.lane.b32.xlu0 %v8480, 48
  %v8895 = vpop.permute.xlu0 %8894
  %8896 = vrot.lane.b32.xlu0 %v8482, 48
  %v8897 = vpop.permute.xlu0 %8896
  %8898 = vrot.lane.b32.xlu0 %v8484, 48
  %v8899 = vpop.permute.xlu0 %8898
  %8900 = vrot.lane.b32.xlu0 %v8486, 48
  %v8901 = vpop.permute.xlu0 %8900
  %8902 = vrot.lane.b32.xlu0 %v8488, 48
  %v8903 = vpop.permute.xlu0 %8902
  %8904 = vrot.lane.b32.xlu0 %v8490, 48
  %v8905 = vpop.permute.xlu0 %8904
  %8906 = vrot.lane.b32.xlu0 %v8492, 48
  %v8907 = vpop.permute.xlu0 %8906
  %8908 = vrot.lane.b32.xlu0 %v8494, 48
  %v8909 = vpop.permute.xlu0 %8908
  %8910 = vrot.lane.b32.xlu0 %v8496, 48
  %v8911 = vpop.permute.xlu0 %8910
  %8912 = vrot.lane.b32.xlu0 %v8498, 48
  %v8913 = vpop.permute.xlu0 %8912
  %8914 = vrot.lane.b32.xlu0 %v8500, 48
  %v8915 = vpop.permute.xlu0 %8914
  %8916 = vrot.lane.b32.xlu0 %v8502, 48
  %v8917 = vpop.permute.xlu0 %8916
  %8918 = vrot.lane.b32.xlu0 %v8504, 48
  %v8919 = vpop.permute.xlu0 %8918
  %8920 = vrot.lane.b32.xlu0 %v8757, 48
  %v8921 = vpop.permute.xlu0 %8920
  %8922 = vrot.lane.b32.xlu0 %v8759, 48
  %v8923 = vpop.permute.xlu0 %8922
  %8924 = vrot.lane.b32.xlu0 %v8761, 48
  %v8925 = vpop.permute.xlu0 %8924
  %v9009 = vrot.slane %v6777, 5
  %v9010 = vrot.slane %v6682, 5
  %v9011 = vsel %vm2530, %v9009, %v9010
  %v9012 = vrot.slane %v6683, 5
  %v9013 = vsel %vm2530, %v9010, %v9012
  %v9014 = vrot.slane %v6684, 5
  %v9015 = vsel %vm2530, %v9012, %v9014
  %v9016 = vrot.slane %v6685, 5
  %v9017 = vsel %vm2530, %v9014, %v9016
  %v9018 = vrot.slane %v6686, 5
  %v9019 = vsel %vm2530, %v9016, %v9018
  %v9020 = vrot.slane %v6687, 5
  %v9021 = vsel %vm2530, %v9018, %v9020
  %v9022 = vrot.slane %v6688, 5
  %v9023 = vsel %vm2530, %v9020, %v9022
  %v9024 = vrot.slane %v6689, 5
  %v9025 = vsel %vm2530, %v9022, %v9024
  %v9026 = vrot.slane %v6690, 5
  %v9027 = vsel %vm2530, %v9024, %v9026
  %v9028 = vrot.slane %v6691, 5
  %v9029 = vsel %vm2530, %v9026, %v9028
  %v9030 = vrot.slane %v6692, 5
  %v9031 = vsel %vm2530, %v9028, %v9030
  %v9032 = vrot.slane %v6693, 5
  %v9033 = vsel %vm2530, %v9030, %v9032
  %v9034 = vrot.slane %v6694, 5
  %v9035 = vsel %vm2530, %v9032, %v9034
  %v9036 = vrot.slane %v6695, 5
  %v9037 = vsel %vm2530, %v9034, %v9036
  %v9038 = vrot.slane %v6696, 5
  %v9039 = vsel %vm2530, %v9036, %v9038
  %v9040 = vrot.slane %v6697, 5
  %v9041 = vsel %vm2530, %v9038, %v9040
  %v9042 = vrot.slane %v6698, 5
  %v9043 = vsel %vm2530, %v9040, %v9042
  %v9044 = vrot.slane %v6699, 5
  %v9045 = vsel %vm2530, %v9042, %v9044
  %v9046 = vrot.slane %v6700, 5
  %v9047 = vsel %vm2530, %v9044, %v9046
  %v9048 = vrot.slane %v6701, 5
  %v9049 = vsel %vm2530, %v9046, %v9048
  %v9050 = vrot.slane %v6702, 5
  %v9051 = vsel %vm2530, %v9048, %v9050
  %v9052 = vrot.slane %v6703, 5
  %v9053 = vsel %vm2530, %v9050, %v9052
  %v9054 = vrot.slane %v6704, 5
  %v9055 = vsel %vm2530, %v9052, %v9054
  %v9056 = vrot.slane %v6705, 5
  %v9057 = vsel %vm2530, %v9054, %v9056
  %v9058 = vrot.slane %v6706, 5
  %v9059 = vsel %vm2530, %v9056, %v9058
  %v9060 = vrot.slane %v6707, 5
  %v9061 = vsel %vm2530, %v9058, %v9060
  %v9062 = vrot.slane %v6708, 5
  %v9063 = vsel %vm2530, %v9060, %v9062
  %v9064 = vrot.slane %v6709, 5
  %v9065 = vsel %vm2530, %v9062, %v9064
  %v9066 = vrot.slane %v6710, 5
  %v9067 = vsel %vm2530, %v9064, %v9066
  %v9068 = vrot.slane %v6711, 5
  %v9069 = vsel %vm2530, %v9066, %v9068
  %v9070 = vrot.slane %v6712, 5
  %v9071 = vsel %vm2530, %v9068, %v9070
  %v9072 = vrot.slane %v6713, 5
  %v9073 = vsel %vm2530, %v9070, %v9072
  %v9074 = vrot.slane %v6714, 5
  %v9075 = vsel %vm2530, %v9072, %v9074
  %v9076 = vrot.slane %v6715, 5
  %v9077 = vsel %vm2530, %v9074, %v9076
  %v9078 = vrot.slane %v6716, 5
  %v9079 = vsel %vm2530, %v9076, %v9078
  %v9080 = vrot.slane %v6717, 5
  %v9081 = vsel %vm2530, %v9078, %v9080
  %v9082 = vrot.slane %v6718, 5
  %v9083 = vsel %vm2530, %v9080, %v9082
  %v9084 = vrot.slane %v6719, 5
  %v9085 = vsel %vm2530, %v9082, %v9084
  %v9086 = vrot.slane %v6720, 5
  %v9087 = vsel %vm2530, %v9084, %v9086
  %v9088 = vrot.slane %v6721, 5
  %v9089 = vsel %vm2530, %v9086, %v9088
  %v9090 = vrot.slane %v6722, 5
  %v9091 = vsel %vm2530, %v9088, %v9090
  %v9092 = vrot.slane %v6723, 5
  %v9093 = vsel %vm2530, %v9090, %v9092
  %v9094 = vrot.slane %v6724, 5
  %v9095 = vsel %vm2530, %v9092, %v9094
  %v9096 = vrot.slane %v6725, 5
  %v9097 = vsel %vm2530, %v9094, %v9096
  %v9098 = vrot.slane %v6726, 5
  %v9099 = vsel %vm2530, %v9096, %v9098
  %v9100 = vrot.slane %v6727, 5
  %v9101 = vsel %vm2530, %v9098, %v9100
  %v9102 = vrot.slane %v6728, 5
  %v9103 = vsel %vm2530, %v9100, %v9102
  %v9104 = vrot.slane %v6729, 5
  %v9105 = vsel %vm2530, %v9102, %v9104
  %v9106 = vrot.slane %v6730, 5
  %v9107 = vsel %vm2530, %v9104, %v9106
  %v9108 = vrot.slane %v6731, 5
  %v9109 = vsel %vm2530, %v9106, %v9108
  %v9110 = vrot.slane %v6732, 5
  %v9111 = vsel %vm2530, %v9108, %v9110
  %v9112 = vrot.slane %v6733, 5
  %v9113 = vsel %vm2530, %v9110, %v9112
  %v9114 = vrot.slane %v6734, 5
  %v9115 = vsel %vm2530, %v9112, %v9114
  %v9116 = vrot.slane %v6735, 5
  %v9117 = vsel %vm2530, %v9114, %v9116
  %v9118 = vrot.slane %v6736, 5
  %v9119 = vsel %vm2530, %v9116, %v9118
  %v9120 = vrot.slane %v6737, 5
  %v9121 = vsel %vm2530, %v9118, %v9120
  %v9122 = vrot.slane %v6738, 5
  %v9123 = vsel %vm2530, %v9120, %v9122
  %v9124 = vrot.slane %v6739, 5
  %v9125 = vsel %vm2530, %v9122, %v9124
  %v9126 = vrot.slane %v6740, 5
  %v9127 = vsel %vm2530, %v9124, %v9126
  %v9128 = vrot.slane %v6741, 5
  %v9129 = vsel %vm2530, %v9126, %v9128
  %v9130 = vrot.slane %v6742, 5
  %v9131 = vsel %vm2530, %v9128, %v9130
  %v9132 = vrot.slane %v6743, 5
  %v9133 = vsel %vm2530, %v9130, %v9132
  %v9134 = vrot.slane %v6744, 5
  %v9135 = vsel %vm2530, %v9132, %v9134
  %v9136 = vrot.slane %v6745, 5
  %v9137 = vsel %vm2530, %v9134, %v9136
  %v9138 = vrot.slane %v6746, 5
  %v9139 = vsel %vm2530, %v9136, %v9138
  %v9140 = vrot.slane %v6747, 5
  %v9141 = vsel %vm2530, %v9138, %v9140
  %v9142 = vrot.slane %v6748, 5
  %v9143 = vsel %vm2530, %v9140, %v9142
  %v9144 = vrot.slane %v6749, 5
  %v9145 = vsel %vm2530, %v9142, %v9144
  %v9146 = vrot.slane %v6750, 5
  %v9147 = vsel %vm2530, %v9144, %v9146
  %v9148 = vrot.slane %v6751, 5
  %v9149 = vsel %vm2530, %v9146, %v9148
  %v9150 = vrot.slane %v6752, 5
  %v9151 = vsel %vm2530, %v9148, %v9150
  %v9152 = vrot.slane %v6753, 5
  %v9153 = vsel %vm2530, %v9150, %v9152
  %v9154 = vrot.slane %v6754, 5
  %v9155 = vsel %vm2530, %v9152, %v9154
  %v9156 = vrot.slane %v6755, 5
  %v9157 = vsel %vm2530, %v9154, %v9156
  %v9158 = vrot.slane %v6756, 5
  %v9159 = vsel %vm2530, %v9156, %v9158
  %v9160 = vrot.slane %v6761, 5
  %v9161 = vsel %vm2530, %v9158, %v9160
  %v9162 = vrot.slane %v6766, 5
  %v9163 = vsel %vm2530, %v9160, %v9162
  %v9164 = vrot.slane %v6767, 5
  %v9165 = vsel %vm2530, %v9162, %v9164
  %v9166 = vrot.slane %v6773, 5
  %v9167 = vsel %vm2530, %v9164, %v9166
  %v9168 = vrot.slane %v6774, 5
  %v9169 = vsel %vm2530, %v9166, %v9168
  %v9170 = vrot.slane %v6775, 5
  %v9171 = vsel %vm2530, %v9168, %v9170
  %9172 = vrot.lane.b32.xlu0 %v9009, 56
  %v9173 = vpop.permute.xlu0 %9172
  %9174 = vrot.lane.b32.xlu0 %v9011, 56
  %v9175 = vpop.permute.xlu0 %9174
  %9176 = vrot.lane.b32.xlu0 %v9013, 56
  %v9177 = vpop.permute.xlu0 %9176
  %9178 = vrot.lane.b32.xlu0 %v9015, 56
  %v9179 = vpop.permute.xlu0 %9178
  %9180 = vrot.lane.b32.xlu0 %v9017, 56
  %v9181 = vpop.permute.xlu0 %9180
  %9182 = vrot.lane.b32.xlu0 %v9019, 56
  %v9183 = vpop.permute.xlu0 %9182
  %9184 = vrot.lane.b32.xlu0 %v9021, 56
  %v9185 = vpop.permute.xlu0 %9184
  %9186 = vrot.lane.b32.xlu0 %v9023, 56
  %v9187 = vpop.permute.xlu0 %9186
  %9188 = vrot.lane.b32.xlu0 %v9025, 56
  %v9189 = vpop.permute.xlu0 %9188
  %9190 = vrot.lane.b32.xlu0 %v9027, 56
  %v9191 = vpop.permute.xlu0 %9190
  %9192 = vrot.lane.b32.xlu0 %v9029, 56
  %v9193 = vpop.permute.xlu0 %9192
  %9194 = vrot.lane.b32.xlu0 %v9031, 56
  %v9195 = vpop.permute.xlu0 %9194
  %9196 = vrot.lane.b32.xlu0 %v9033, 56
  %v9197 = vpop.permute.xlu0 %9196
  %9198 = vrot.lane.b32.xlu0 %v9035, 56
  %v9199 = vpop.permute.xlu0 %9198
  %9200 = vrot.lane.b32.xlu0 %v9037, 56
  %v9201 = vpop.permute.xlu0 %9200
  %9202 = vrot.lane.b32.xlu0 %v9039, 56
  %v9203 = vpop.permute.xlu0 %9202
  %9204 = vrot.lane.b32.xlu0 %v9041, 56
  %v9205 = vpop.permute.xlu0 %9204
  %9206 = vrot.lane.b32.xlu0 %v9043, 56
  %v9207 = vpop.permute.xlu0 %9206
  %9208 = vrot.lane.b32.xlu0 %v9045, 56
  %v9209 = vpop.permute.xlu0 %9208
  %9210 = vrot.lane.b32.xlu0 %v9047, 56
  %v9211 = vpop.permute.xlu0 %9210
  %9212 = vrot.lane.b32.xlu0 %v9049, 56
  %v9213 = vpop.permute.xlu0 %9212
  %9214 = vrot.lane.b32.xlu0 %v9051, 56
  %v9215 = vpop.permute.xlu0 %9214
  %9216 = vrot.lane.b32.xlu0 %v9053, 56
  %v9217 = vpop.permute.xlu0 %9216
  %9218 = vrot.lane.b32.xlu0 %v9055, 56
  %v9219 = vpop.permute.xlu0 %9218
  %9220 = vrot.lane.b32.xlu0 %v9057, 56
  %v9221 = vpop.permute.xlu0 %9220
  %9222 = vrot.lane.b32.xlu0 %v9059, 56
  %v9223 = vpop.permute.xlu0 %9222
  %9224 = vrot.lane.b32.xlu0 %v9061, 56
  %v9225 = vpop.permute.xlu0 %9224
  %9226 = vrot.lane.b32.xlu0 %v9063, 56
  %v9227 = vpop.permute.xlu0 %9226
  %9228 = vrot.lane.b32.xlu0 %v9065, 56
  %v9229 = vpop.permute.xlu0 %9228
  %9230 = vrot.lane.b32.xlu0 %v9067, 56
  %v9231 = vpop.permute.xlu0 %9230
  %9232 = vrot.lane.b32.xlu0 %v9069, 56
  %v9233 = vpop.permute.xlu0 %9232
  %9234 = vrot.lane.b32.xlu0 %v9071, 56
  %v9235 = vpop.permute.xlu0 %9234
  %9236 = vrot.lane.b32.xlu0 %v9073, 56
  %v9237 = vpop.permute.xlu0 %9236
  %9238 = vrot.lane.b32.xlu0 %v9075, 56
  %v9239 = vpop.permute.xlu0 %9238
  %9240 = vrot.lane.b32.xlu0 %v9077, 56
  %v9241 = vpop.permute.xlu0 %9240
  %9242 = vrot.lane.b32.xlu0 %v9079, 56
  %v9243 = vpop.permute.xlu0 %9242
  %9244 = vrot.lane.b32.xlu0 %v9081, 56
  %v9245 = vpop.permute.xlu0 %9244
  %9246 = vrot.lane.b32.xlu0 %v9083, 56
  %v9247 = vpop.permute.xlu0 %9246
  %9248 = vrot.lane.b32.xlu0 %v9085, 56
  %v9249 = vpop.permute.xlu0 %9248
  %9250 = vrot.lane.b32.xlu0 %v9087, 56
  %v9251 = vpop.permute.xlu0 %9250
  %9252 = vrot.lane.b32.xlu0 %v9089, 56
  %v9253 = vpop.permute.xlu0 %9252
  %9254 = vrot.lane.b32.xlu0 %v9091, 56
  %v9255 = vpop.permute.xlu0 %9254
  %9256 = vrot.lane.b32.xlu0 %v9093, 56
  %v9257 = vpop.permute.xlu0 %9256
  %9258 = vrot.lane.b32.xlu0 %v9095, 56
  %v9259 = vpop.permute.xlu0 %9258
  %9260 = vrot.lane.b32.xlu0 %v9097, 56
  %v9261 = vpop.permute.xlu0 %9260
  %9262 = vrot.lane.b32.xlu0 %v9099, 56
  %v9263 = vpop.permute.xlu0 %9262
  %9264 = vrot.lane.b32.xlu0 %v9101, 56
  %v9265 = vpop.permute.xlu0 %9264
  %9266 = vrot.lane.b32.xlu0 %v9103, 56
  %v9267 = vpop.permute.xlu0 %9266
  %9268 = vrot.lane.b32.xlu0 %v9105, 56
  %v9269 = vpop.permute.xlu0 %9268
  %9270 = vrot.lane.b32.xlu0 %v9107, 56
  %v9271 = vpop.permute.xlu0 %9270
  %9272 = vrot.lane.b32.xlu0 %v9109, 56
  %v9273 = vpop.permute.xlu0 %9272
  %9274 = vrot.lane.b32.xlu0 %v9111, 56
  %v9275 = vpop.permute.xlu0 %9274
  %9276 = vrot.lane.b32.xlu0 %v9113, 56
  %v9277 = vpop.permute.xlu0 %9276
  %9278 = vrot.lane.b32.xlu0 %v9115, 56
  %v9279 = vpop.permute.xlu0 %9278
  %9280 = vrot.lane.b32.xlu0 %v9117, 56
  %v9281 = vpop.permute.xlu0 %9280
  %9282 = vrot.lane.b32.xlu0 %v9119, 56
  %v9283 = vpop.permute.xlu0 %9282
  %9284 = vrot.lane.b32.xlu0 %v9121, 56
  %v9285 = vpop.permute.xlu0 %9284
  %9286 = vrot.lane.b32.xlu0 %v9123, 56
  %v9287 = vpop.permute.xlu0 %9286
  %9288 = vrot.lane.b32.xlu0 %v9125, 56
  %v9289 = vpop.permute.xlu0 %9288
  %9290 = vrot.lane.b32.xlu0 %v9127, 56
  %v9291 = vpop.permute.xlu0 %9290
  %9292 = vrot.lane.b32.xlu0 %v9129, 56
  %v9293 = vpop.permute.xlu0 %9292
  %9294 = vrot.lane.b32.xlu0 %v9131, 56
  %v9295 = vpop.permute.xlu0 %9294
  %9296 = vrot.lane.b32.xlu0 %v9133, 56
  %v9297 = vpop.permute.xlu0 %9296
  %9298 = vrot.lane.b32.xlu0 %v9135, 56
  %v9299 = vpop.permute.xlu0 %9298
  %9300 = vrot.lane.b32.xlu0 %v9137, 56
  %v9301 = vpop.permute.xlu0 %9300
  %9302 = vrot.lane.b32.xlu0 %v9139, 56
  %v9303 = vpop.permute.xlu0 %9302
  %9304 = vrot.lane.b32.xlu0 %v9141, 56
  %v9305 = vpop.permute.xlu0 %9304
  %9306 = vrot.lane.b32.xlu0 %v9143, 56
  %v9307 = vpop.permute.xlu0 %9306
  %9308 = vrot.lane.b32.xlu0 %v9145, 56
  %v9309 = vpop.permute.xlu0 %9308
  %9310 = vrot.lane.b32.xlu0 %v9147, 56
  %v9311 = vpop.permute.xlu0 %9310
  %9312 = vrot.lane.b32.xlu0 %v9149, 56
  %v9313 = vpop.permute.xlu0 %9312
  %9314 = vrot.lane.b32.xlu0 %v9151, 56
  %v9315 = vpop.permute.xlu0 %9314
  %9316 = vrot.lane.b32.xlu0 %v9153, 56
  %v9317 = vpop.permute.xlu0 %9316
  %9318 = vrot.lane.b32.xlu0 %v9155, 56
  %v9319 = vpop.permute.xlu0 %9318
  %9320 = vrot.lane.b32.xlu0 %v9157, 56
  %v9321 = vpop.permute.xlu0 %9320
  %9322 = vrot.lane.b32.xlu0 %v9159, 56
  %v9323 = vpop.permute.xlu0 %9322
  %9324 = vrot.lane.b32.xlu0 %v9161, 56
  %v9325 = vpop.permute.xlu0 %9324
  %9326 = vrot.lane.b32.xlu0 %v9163, 56
  %v9327 = vpop.permute.xlu0 %9326
  %9328 = vrot.lane.b32.xlu0 %v9165, 56
  %v9329 = vpop.permute.xlu0 %9328
  %9330 = vrot.lane.b32.xlu0 %v9167, 56
  %v9331 = vpop.permute.xlu0 %9330
  %9332 = vrot.lane.b32.xlu0 %v9169, 56
  %v9333 = vpop.permute.xlu0 %9332
  %9334 = vrot.lane.b32.xlu0 %v9171, 56
  %v9335 = vpop.permute.xlu0 %9334
  %v9419 = vrot.slane %v6777, 6
  %v9420 = vrot.slane %v6682, 6
  %v9421 = vsel %vm2941, %v9419, %v9420
  %v9422 = vrot.slane %v6683, 6
  %v9423 = vsel %vm2941, %v9420, %v9422
  %v9424 = vrot.slane %v6684, 6
  %v9425 = vsel %vm2941, %v9422, %v9424
  %v9426 = vrot.slane %v6685, 6
  %v9427 = vsel %vm2941, %v9424, %v9426
  %v9428 = vrot.slane %v6686, 6
  %v9429 = vsel %vm2941, %v9426, %v9428
  %v9430 = vrot.slane %v6687, 6
  %v9431 = vsel %vm2941, %v9428, %v9430
  %v9432 = vrot.slane %v6688, 6
  %v9433 = vsel %vm2941, %v9430, %v9432
  %v9434 = vrot.slane %v6689, 6
  %v9435 = vsel %vm2941, %v9432, %v9434
  %v9436 = vrot.slane %v6690, 6
  %v9437 = vsel %vm2941, %v9434, %v9436
  %v9438 = vrot.slane %v6691, 6
  %v9439 = vsel %vm2941, %v9436, %v9438
  %v9440 = vrot.slane %v6692, 6
  %v9441 = vsel %vm2941, %v9438, %v9440
  %v9442 = vrot.slane %v6693, 6
  %v9443 = vsel %vm2941, %v9440, %v9442
  %v9444 = vrot.slane %v6694, 6
  %v9445 = vsel %vm2941, %v9442, %v9444
  %v9446 = vrot.slane %v6695, 6
  %v9447 = vsel %vm2941, %v9444, %v9446
  %v9448 = vrot.slane %v6696, 6
  %v9449 = vsel %vm2941, %v9446, %v9448
  %v9450 = vrot.slane %v6697, 6
  %v9451 = vsel %vm2941, %v9448, %v9450
  %v9452 = vrot.slane %v6698, 6
  %v9453 = vsel %vm2941, %v9450, %v9452
  %v9454 = vrot.slane %v6699, 6
  %v9455 = vsel %vm2941, %v9452, %v9454
  %v9456 = vrot.slane %v6700, 6
  %v9457 = vsel %vm2941, %v9454, %v9456
  %v9458 = vrot.slane %v6701, 6
  %v9459 = vsel %vm2941, %v9456, %v9458
  %v9460 = vrot.slane %v6702, 6
  %v9461 = vsel %vm2941, %v9458, %v9460
  %v9462 = vrot.slane %v6703, 6
  %v9463 = vsel %vm2941, %v9460, %v9462
  %v9464 = vrot.slane %v6704, 6
  %v9465 = vsel %vm2941, %v9462, %v9464
  %v9466 = vrot.slane %v6705, 6
  %v9467 = vsel %vm2941, %v9464, %v9466
  %v9468 = vrot.slane %v6706, 6
  %v9469 = vsel %vm2941, %v9466, %v9468
  %v9470 = vrot.slane %v6707, 6
  %v9471 = vsel %vm2941, %v9468, %v9470
  %v9472 = vrot.slane %v6708, 6
  %v9473 = vsel %vm2941, %v9470, %v9472
  %v9474 = vrot.slane %v6709, 6
  %v9475 = vsel %vm2941, %v9472, %v9474
  %v9476 = vrot.slane %v6710, 6
  %v9477 = vsel %vm2941, %v9474, %v9476
  %v9478 = vrot.slane %v6711, 6
  %v9479 = vsel %vm2941, %v9476, %v9478
  %v9480 = vrot.slane %v6712, 6
  %v9481 = vsel %vm2941, %v9478, %v9480
  %v9482 = vrot.slane %v6713, 6
  %v9483 = vsel %vm2941, %v9480, %v9482
  %v9484 = vrot.slane %v6714, 6
  %v9485 = vsel %vm2941, %v9482, %v9484
  %v9486 = vrot.slane %v6715, 6
  %v9487 = vsel %vm2941, %v9484, %v9486
  %v9488 = vrot.slane %v6716, 6
  %v9489 = vsel %vm2941, %v9486, %v9488
  %v9490 = vrot.slane %v6717, 6
  %v9491 = vsel %vm2941, %v9488, %v9490
  %v9492 = vrot.slane %v6718, 6
  %v9493 = vsel %vm2941, %v9490, %v9492
  %v9494 = vrot.slane %v6719, 6
  %v9495 = vsel %vm2941, %v9492, %v9494
  %v9496 = vrot.slane %v6720, 6
  %v9497 = vsel %vm2941, %v9494, %v9496
  %v9498 = vrot.slane %v6721, 6
  %v9499 = vsel %vm2941, %v9496, %v9498
  %v9500 = vrot.slane %v6722, 6
  %v9501 = vsel %vm2941, %v9498, %v9500
  %v9502 = vrot.slane %v6723, 6
  %v9503 = vsel %vm2941, %v9500, %v9502
  %v9504 = vrot.slane %v6724, 6
  %v9505 = vsel %vm2941, %v9502, %v9504
  %v9506 = vrot.slane %v6725, 6
  %v9507 = vsel %vm2941, %v9504, %v9506
  %v9508 = vrot.slane %v6726, 6
  %v9509 = vsel %vm2941, %v9506, %v9508
  %v9510 = vrot.slane %v6727, 6
  %v9511 = vsel %vm2941, %v9508, %v9510
  %v9512 = vrot.slane %v6728, 6
  %v9513 = vsel %vm2941, %v9510, %v9512
  %v9514 = vrot.slane %v6729, 6
  %v9515 = vsel %vm2941, %v9512, %v9514
  %v9516 = vrot.slane %v6730, 6
  %v9517 = vsel %vm2941, %v9514, %v9516
  %v9518 = vrot.slane %v6731, 6
  %v9519 = vsel %vm2941, %v9516, %v9518
  %v9520 = vrot.slane %v6732, 6
  %v9521 = vsel %vm2941, %v9518, %v9520
  %v9522 = vrot.slane %v6733, 6
  %v9523 = vsel %vm2941, %v9520, %v9522
  %v9524 = vrot.slane %v6734, 6
  %v9525 = vsel %vm2941, %v9522, %v9524
  %v9526 = vrot.slane %v6735, 6
  %v9527 = vsel %vm2941, %v9524, %v9526
  %v9528 = vrot.slane %v6736, 6
  %v9529 = vsel %vm2941, %v9526, %v9528
  %v9530 = vrot.slane %v6737, 6
  %v9531 = vsel %vm2941, %v9528, %v9530
  %v9532 = vrot.slane %v6738, 6
  %v9533 = vsel %vm2941, %v9530, %v9532
  %v9534 = vrot.slane %v6739, 6
  %v9535 = vsel %vm2941, %v9532, %v9534
  %v9536 = vrot.slane %v6740, 6
  %v9537 = vsel %vm2941, %v9534, %v9536
  %v9538 = vrot.slane %v6741, 6
  %v9539 = vsel %vm2941, %v9536, %v9538
  %v9540 = vrot.slane %v6742, 6
  %v9541 = vsel %vm2941, %v9538, %v9540
  %v9542 = vrot.slane %v6743, 6
  %v9543 = vsel %vm2941, %v9540, %v9542
  %v9544 = vrot.slane %v6744, 6
  %v9545 = vsel %vm2941, %v9542, %v9544
  %v9546 = vrot.slane %v6745, 6
  %v9547 = vsel %vm2941, %v9544, %v9546
  %v9548 = vrot.slane %v6746, 6
  %v9549 = vsel %vm2941, %v9546, %v9548
  %v9550 = vrot.slane %v6747, 6
  %v9551 = vsel %vm2941, %v9548, %v9550
  %v9552 = vrot.slane %v6748, 6
  %v9553 = vsel %vm2941, %v9550, %v9552
  %v9554 = vrot.slane %v6749, 6
  %v9555 = vsel %vm2941, %v9552, %v9554
  %v9556 = vrot.slane %v6750, 6
  %v9557 = vsel %vm2941, %v9554, %v9556
  %v9558 = vrot.slane %v6751, 6
  %v9559 = vsel %vm2941, %v9556, %v9558
  %v9560 = vrot.slane %v6752, 6
  %v9561 = vsel %vm2941, %v9558, %v9560
  %v9562 = vrot.slane %v6753, 6
  %v9563 = vsel %vm2941, %v9560, %v9562
  %v9564 = vrot.slane %v6754, 6
  %v9565 = vsel %vm2941, %v9562, %v9564
  %v9566 = vrot.slane %v6755, 6
  %v9567 = vsel %vm2941, %v9564, %v9566
  %v9568 = vrot.slane %v6756, 6
  %v9569 = vsel %vm2941, %v9566, %v9568
  %v9570 = vrot.slane %v6761, 6
  %v9571 = vsel %vm2941, %v9568, %v9570
  %v9572 = vrot.slane %v6766, 6
  %v9573 = vsel %vm2941, %v9570, %v9572
  %v9574 = vrot.slane %v6767, 6
  %v9575 = vsel %vm2941, %v9572, %v9574
  %v9576 = vrot.slane %v6773, 6
  %v9577 = vsel %vm2941, %v9574, %v9576
  %v9578 = vrot.slane %v6774, 6
  %v9579 = vsel %vm2941, %v9576, %v9578
  %v9580 = vrot.slane %v6779, 6
  %v9581 = vsel %vm2941, %v9578, %v9580
  %9582 = vrot.lane.b32.xlu0 %v9419, 64
  %v9583 = vpop.permute.xlu0 %9582
  %9584 = vrot.lane.b32.xlu0 %v9421, 64
  %v9585 = vpop.permute.xlu0 %9584
  %9586 = vrot.lane.b32.xlu0 %v9423, 64
  %v9587 = vpop.permute.xlu0 %9586
  %9588 = vrot.lane.b32.xlu0 %v9425, 64
  %v9589 = vpop.permute.xlu0 %9588
  %9590 = vrot.lane.b32.xlu0 %v9427, 64
  %v9591 = vpop.permute.xlu0 %9590
  %9592 = vrot.lane.b32.xlu0 %v9429, 64
  %v9593 = vpop.permute.xlu0 %9592
  %9594 = vrot.lane.b32.xlu0 %v9431, 64
  %v9595 = vpop.permute.xlu0 %9594
  %9596 = vrot.lane.b32.xlu0 %v9433, 64
  %v9597 = vpop.permute.xlu0 %9596
  %9598 = vrot.lane.b32.xlu0 %v9435, 64
  %v9599 = vpop.permute.xlu0 %9598
  %9600 = vrot.lane.b32.xlu0 %v9437, 64
  %v9601 = vpop.permute.xlu0 %9600
  %9602 = vrot.lane.b32.xlu0 %v9439, 64
  %v9603 = vpop.permute.xlu0 %9602
  %9604 = vrot.lane.b32.xlu0 %v9441, 64
  %v9605 = vpop.permute.xlu0 %9604
  %9606 = vrot.lane.b32.xlu0 %v9443, 64
  %v9607 = vpop.permute.xlu0 %9606
  %9608 = vrot.lane.b32.xlu0 %v9445, 64
  %v9609 = vpop.permute.xlu0 %9608
  %9610 = vrot.lane.b32.xlu0 %v9447, 64
  %v9611 = vpop.permute.xlu0 %9610
  %9612 = vrot.lane.b32.xlu0 %v9449, 64
  %v9613 = vpop.permute.xlu0 %9612
  %9614 = vrot.lane.b32.xlu0 %v9451, 64
  %v9615 = vpop.permute.xlu0 %9614
  %9616 = vrot.lane.b32.xlu0 %v9453, 64
  %v9617 = vpop.permute.xlu0 %9616
  %9618 = vrot.lane.b32.xlu0 %v9455, 64
  %v9619 = vpop.permute.xlu0 %9618
  %9620 = vrot.lane.b32.xlu0 %v9457, 64
  %v9621 = vpop.permute.xlu0 %9620
  %9622 = vrot.lane.b32.xlu0 %v9459, 64
  %v9623 = vpop.permute.xlu0 %9622
  %9624 = vrot.lane.b32.xlu0 %v9461, 64
  %v9625 = vpop.permute.xlu0 %9624
  %9626 = vrot.lane.b32.xlu0 %v9463, 64
  %v9627 = vpop.permute.xlu0 %9626
  %9628 = vrot.lane.b32.xlu0 %v9465, 64
  %v9629 = vpop.permute.xlu0 %9628
  %9630 = vrot.lane.b32.xlu0 %v9467, 64
  %v9631 = vpop.permute.xlu0 %9630
  %9632 = vrot.lane.b32.xlu0 %v9469, 64
  %v9633 = vpop.permute.xlu0 %9632
  %9634 = vrot.lane.b32.xlu0 %v9471, 64
  %v9635 = vpop.permute.xlu0 %9634
  %9636 = vrot.lane.b32.xlu0 %v9473, 64
  %v9637 = vpop.permute.xlu0 %9636
  %9638 = vrot.lane.b32.xlu0 %v9475, 64
  %v9639 = vpop.permute.xlu0 %9638
  %9640 = vrot.lane.b32.xlu0 %v9477, 64
  %v9641 = vpop.permute.xlu0 %9640
  %9642 = vrot.lane.b32.xlu0 %v9479, 64
  %v9643 = vpop.permute.xlu0 %9642
  %9644 = vrot.lane.b32.xlu0 %v9481, 64
  %v9645 = vpop.permute.xlu0 %9644
  %9646 = vrot.lane.b32.xlu0 %v9483, 64
  %v9647 = vpop.permute.xlu0 %9646
  %9648 = vrot.lane.b32.xlu0 %v9485, 64
  %v9649 = vpop.permute.xlu0 %9648
  %9650 = vrot.lane.b32.xlu0 %v9487, 64
  %v9651 = vpop.permute.xlu0 %9650
  %9652 = vrot.lane.b32.xlu0 %v9489, 64
  %v9653 = vpop.permute.xlu0 %9652
  %9654 = vrot.lane.b32.xlu0 %v9491, 64
  %v9655 = vpop.permute.xlu0 %9654
  %9656 = vrot.lane.b32.xlu0 %v9493, 64
  %v9657 = vpop.permute.xlu0 %9656
  %9658 = vrot.lane.b32.xlu0 %v9495, 64
  %v9659 = vpop.permute.xlu0 %9658
  %9660 = vrot.lane.b32.xlu0 %v9497, 64
  %v9661 = vpop.permute.xlu0 %9660
  %9662 = vrot.lane.b32.xlu0 %v9499, 64
  %v9663 = vpop.permute.xlu0 %9662
  %9664 = vrot.lane.b32.xlu0 %v9501, 64
  %v9665 = vpop.permute.xlu0 %9664
  %9666 = vrot.lane.b32.xlu0 %v9503, 64
  %v9667 = vpop.permute.xlu0 %9666
  %9668 = vrot.lane.b32.xlu0 %v9505, 64
  %v9669 = vpop.permute.xlu0 %9668
  %9670 = vrot.lane.b32.xlu0 %v9507, 64
  %v9671 = vpop.permute.xlu0 %9670
  %9672 = vrot.lane.b32.xlu0 %v9509, 64
  %v9673 = vpop.permute.xlu0 %9672
  %9674 = vrot.lane.b32.xlu0 %v9511, 64
  %v9675 = vpop.permute.xlu0 %9674
  %9676 = vrot.lane.b32.xlu0 %v9513, 64
  %v9677 = vpop.permute.xlu0 %9676
  %9678 = vrot.lane.b32.xlu0 %v9515, 64
  %v9679 = vpop.permute.xlu0 %9678
  %9680 = vrot.lane.b32.xlu0 %v9517, 64
  %v9681 = vpop.permute.xlu0 %9680
  %9682 = vrot.lane.b32.xlu0 %v9519, 64
  %v9683 = vpop.permute.xlu0 %9682
  %9684 = vrot.lane.b32.xlu0 %v9521, 64
  %v9685 = vpop.permute.xlu0 %9684
  %9686 = vrot.lane.b32.xlu0 %v9523, 64
  %v9687 = vpop.permute.xlu0 %9686
  %9688 = vrot.lane.b32.xlu0 %v9525, 64
  %v9689 = vpop.permute.xlu0 %9688
  %9690 = vrot.lane.b32.xlu0 %v9527, 64
  %v9691 = vpop.permute.xlu0 %9690
  %9692 = vrot.lane.b32.xlu0 %v9529, 64
  %v9693 = vpop.permute.xlu0 %9692
  %9694 = vrot.lane.b32.xlu0 %v9531, 64
  %v9695 = vpop.permute.xlu0 %9694
  %9696 = vrot.lane.b32.xlu0 %v9533, 64
  %v9697 = vpop.permute.xlu0 %9696
  %9698 = vrot.lane.b32.xlu0 %v9535, 64
  %v9699 = vpop.permute.xlu0 %9698
  %9700 = vrot.lane.b32.xlu0 %v9537, 64
  %v9701 = vpop.permute.xlu0 %9700
  %9702 = vrot.lane.b32.xlu0 %v9539, 64
  %v9703 = vpop.permute.xlu0 %9702
  %9704 = vrot.lane.b32.xlu0 %v9541, 64
  %v9705 = vpop.permute.xlu0 %9704
  %9706 = vrot.lane.b32.xlu0 %v9543, 64
  %v9707 = vpop.permute.xlu0 %9706
  %9708 = vrot.lane.b32.xlu0 %v9545, 64
  %v9709 = vpop.permute.xlu0 %9708
  %9710 = vrot.lane.b32.xlu0 %v9547, 64
  %v9711 = vpop.permute.xlu0 %9710
  %9712 = vrot.lane.b32.xlu0 %v9549, 64
  %v9713 = vpop.permute.xlu0 %9712
  %9714 = vrot.lane.b32.xlu0 %v9551, 64
  %v9715 = vpop.permute.xlu0 %9714
  %9716 = vrot.lane.b32.xlu0 %v9553, 64
  %v9717 = vpop.permute.xlu0 %9716
  %9718 = vrot.lane.b32.xlu0 %v9555, 64
  %v9719 = vpop.permute.xlu0 %9718
  %9720 = vrot.lane.b32.xlu0 %v9557, 64
  %v9721 = vpop.permute.xlu0 %9720
  %9722 = vrot.lane.b32.xlu0 %v9559, 64
  %v9723 = vpop.permute.xlu0 %9722
  %9724 = vrot.lane.b32.xlu0 %v9561, 64
  %v9725 = vpop.permute.xlu0 %9724
  %9726 = vrot.lane.b32.xlu0 %v9563, 64
  %v9727 = vpop.permute.xlu0 %9726
  %9728 = vrot.lane.b32.xlu0 %v9565, 64
  %v9729 = vpop.permute.xlu0 %9728
  %9730 = vrot.lane.b32.xlu0 %v9567, 64
  %v9731 = vpop.permute.xlu0 %9730
  %9732 = vrot.lane.b32.xlu0 %v9569, 64
  %v9733 = vpop.permute.xlu0 %9732
  %9734 = vrot.lane.b32.xlu0 %v9571, 64
  %v9735 = vpop.permute.xlu0 %9734
  %9736 = vrot.lane.b32.xlu0 %v9573, 64
  %v9737 = vpop.permute.xlu0 %9736
  %9738 = vrot.lane.b32.xlu0 %v9575, 64
  %v9739 = vpop.permute.xlu0 %9738
  %9740 = vrot.lane.b32.xlu0 %v9577, 64
  %v9741 = vpop.permute.xlu0 %9740
  %9742 = vrot.lane.b32.xlu0 %v9579, 64
  %v9743 = vpop.permute.xlu0 %9742
  %9744 = vrot.lane.b32.xlu0 %v9581, 64
  %v9745 = vpop.permute.xlu0 %9744
  %v9828 = vsel %vm3434, %v6676, %v7026
  %v9829 = vsel %vm3434, %v6677, %v7028
  %v9830 = vsel %vm3434, %v6678, %v7030
  %v9831 = vsel %vm3434, %v6679, %v7032
  %v9832 = vsel %vm3434, %v6680, %v7034
  %v9833 = vsel %vm3434, %v6681, %v7036
  %v9834 = vsel %vm3434, %v6682, %v7038
  %v9835 = vsel %vm3434, %v6683, %v7040
  %v9836 = vsel %vm3434, %v6684, %v7042
  %v9837 = vsel %vm3434, %v6685, %v7044
  %v9838 = vsel %vm3434, %v6686, %v7046
  %v9839 = vsel %vm3434, %v6687, %v7048
  %v9840 = vsel %vm3434, %v6688, %v7050
  %v9841 = vsel %vm3434, %v6689, %v7052
  %v9842 = vsel %vm3434, %v6690, %v7054
  %v9843 = vsel %vm3434, %v6691, %v7056
  %v9844 = vsel %vm3434, %v6692, %v7058
  %v9845 = vsel %vm3434, %v6693, %v7060
  %v9846 = vsel %vm3434, %v6694, %v7062
  %v9847 = vsel %vm3434, %v6695, %v7064
  %v9848 = vsel %vm3434, %v6696, %v7066
  %v9849 = vsel %vm3434, %v6697, %v7068
  %v9850 = vsel %vm3434, %v6698, %v7070
  %v9851 = vsel %vm3434, %v6699, %v7072
  %v9852 = vsel %vm3434, %v6700, %v7074
  %v9853 = vsel %vm3434, %v6701, %v7076
  %v9854 = vsel %vm3434, %v6702, %v7078
  %v9855 = vsel %vm3434, %v6703, %v7080
  %v9856 = vsel %vm3434, %v6704, %v7082
  %v9857 = vsel %vm3434, %v6705, %v7084
  %v9858 = vsel %vm3434, %v6706, %v7086
  %v9859 = vsel %vm3434, %v6707, %v7088
  %v9860 = vsel %vm3434, %v6708, %v7090
  %v9861 = vsel %vm3434, %v6709, %v7092
  %v9862 = vsel %vm3434, %v6710, %v7094
  %v9863 = vsel %vm3434, %v6711, %v7096
  %v9864 = vsel %vm3434, %v6712, %v7098
  %v9865 = vsel %vm3434, %v6713, %v7100
  %v9866 = vsel %vm3434, %v6714, %v7102
  %v9867 = vsel %vm3434, %v6715, %v7104
  %v9868 = vsel %vm3434, %v6716, %v7106
  %v9869 = vsel %vm3434, %v6717, %v7108
  %v9870 = vsel %vm3434, %v6718, %v7110
  %v9871 = vsel %vm3434, %v6719, %v7112
  %v9872 = vsel %vm3434, %v6720, %v7114
  %v9873 = vsel %vm3434, %v6721, %v7116
  %v9874 = vsel %vm3434, %v6722, %v7118
  %v9875 = vsel %vm3434, %v6723, %v7120
  %v9876 = vsel %vm3434, %v6724, %v7122
  %v9877 = vsel %vm3434, %v6725, %v7124
  %v9878 = vsel %vm3434, %v6726, %v7126
  %v9879 = vsel %vm3434, %v6727, %v7128
  %v9880 = vsel %vm3434, %v6728, %v7130
  %v9881 = vsel %vm3434, %v6729, %v7132
  %v9882 = vsel %vm3434, %v6730, %v7134
  %v9883 = vsel %vm3434, %v6731, %v7136
  %v9884 = vsel %vm3434, %v6732, %v7138
  %v9885 = vsel %vm3434, %v6733, %v7140
  %v9886 = vsel %vm3434, %v6734, %v7142
  %v9887 = vsel %vm3434, %v6735, %v7144
  %v9888 = vsel %vm3434, %v6736, %v7146
  %v9889 = vsel %vm3434, %v6737, %v7148
  %v9890 = vsel %vm3434, %v6738, %v7150
  %v9891 = vsel %vm3434, %v6739, %v7152
  %v9892 = vsel %vm3434, %v6740, %v7154
  %v9893 = vsel %vm3434, %v6741, %v7156
  %v9894 = vsel %vm3434, %v6742, %v7158
  %v9895 = vsel %vm3434, %v6743, %v7160
  %v9896 = vsel %vm3434, %v6744, %v7162
  %v9897 = vsel %vm3434, %v6745, %v7164
  %v9898 = vsel %vm3434, %v6746, %v7166
  %v9899 = vsel %vm3434, %v6747, %v7168
  %v9900 = vsel %vm3434, %v6748, %v7170
  %v9901 = vsel %vm3434, %v6749, %v7172
  %v9902 = vsel %vm3434, %v6750, %v7174
  %v9903 = vsel %vm3434, %v6751, %v7176
  %v9904 = vsel %vm3434, %v6752, %v7178
  %v9905 = vsel %vm3434, %v6753, %v7180
  %v9906 = vsel %vm3434, %v6754, %v7182
  %v9907 = vsel %vm3434, %v6755, %v7184
  %v9908 = vsel %vm3434, %v6756, %v7186
  %v9909 = vsel %vm3434, %v6757, %v7188
  %v9910 = vsel %vm3600, %v9828, %v7436
  %v9911 = vsel %vm3600, %v9829, %v7438
  %v9912 = vsel %vm3600, %v9830, %v7440
  %v9913 = vsel %vm3600, %v9831, %v7442
  %v9914 = vsel %vm3600, %v9832, %v7444
  %v9915 = vsel %vm3600, %v9833, %v7446
  %v9916 = vsel %vm3600, %v9834, %v7448
  %v9917 = vsel %vm3600, %v9835, %v7450
  %v9918 = vsel %vm3600, %v9836, %v7452
  %v9919 = vsel %vm3600, %v9837, %v7454
  %v9920 = vsel %vm3600, %v9838, %v7456
  %v9921 = vsel %vm3600, %v9839, %v7458
  %v9922 = vsel %vm3600, %v9840, %v7460
  %v9923 = vsel %vm3600, %v9841, %v7462
  %v9924 = vsel %vm3600, %v9842, %v7464
  %v9925 = vsel %vm3600, %v9843, %v7466
  %v9926 = vsel %vm3600, %v9844, %v7468
  %v9927 = vsel %vm3600, %v9845, %v7470
  %v9928 = vsel %vm3600, %v9846, %v7472
  %v9929 = vsel %vm3600, %v9847, %v7474
  %v9930 = vsel %vm3600, %v9848, %v7476
  %v9931 = vsel %vm3600, %v9849, %v7478
  %v9932 = vsel %vm3600, %v9850, %v7480
  %v9933 = vsel %vm3600, %v9851, %v7482
  %v9934 = vsel %vm3600, %v9852, %v7484
  %v9935 = vsel %vm3600, %v9853, %v7486
  %v9936 = vsel %vm3600, %v9854, %v7488
  %v9937 = vsel %vm3600, %v9855, %v7490
  %v9938 = vsel %vm3600, %v9856, %v7492
  %v9939 = vsel %vm3600, %v9857, %v7494
  %v9940 = vsel %vm3600, %v9858, %v7496
  %v9941 = vsel %vm3600, %v9859, %v7498
  %v9942 = vsel %vm3600, %v9860, %v7500
  %v9943 = vsel %vm3600, %v9861, %v7502
  %v9944 = vsel %vm3600, %v9862, %v7504
  %v9945 = vsel %vm3600, %v9863, %v7506
  %v9946 = vsel %vm3600, %v9864, %v7508
  %v9947 = vsel %vm3600, %v9865, %v7510
  %v9948 = vsel %vm3600, %v9866, %v7512
  %v9949 = vsel %vm3600, %v9867, %v7514
  %v9950 = vsel %vm3600, %v9868, %v7516
  %v9951 = vsel %vm3600, %v9869, %v7518
  %v9952 = vsel %vm3600, %v9870, %v7520
  %v9953 = vsel %vm3600, %v9871, %v7522
  %v9954 = vsel %vm3600, %v9872, %v7524
  %v9955 = vsel %vm3600, %v9873, %v7526
  %v9956 = vsel %vm3600, %v9874, %v7528
  %v9957 = vsel %vm3600, %v9875, %v7530
  %v9958 = vsel %vm3600, %v9876, %v7532
  %v9959 = vsel %vm3600, %v9877, %v7534
  %v9960 = vsel %vm3600, %v9878, %v7536
  %v9961 = vsel %vm3600, %v9879, %v7538
  %v9962 = vsel %vm3600, %v9880, %v7540
  %v9963 = vsel %vm3600, %v9881, %v7542
  %v9964 = vsel %vm3600, %v9882, %v7544
  %v9965 = vsel %vm3600, %v9883, %v7546
  %v9966 = vsel %vm3600, %v9884, %v7548
  %v9967 = vsel %vm3600, %v9885, %v7550
  %v9968 = vsel %vm3600, %v9886, %v7552
  %v9969 = vsel %vm3600, %v9887, %v7554
  %v9970 = vsel %vm3600, %v9888, %v7556
  %v9971 = vsel %vm3600, %v9889, %v7558
  %v9972 = vsel %vm3600, %v9890, %v7560
  %v9973 = vsel %vm3600, %v9891, %v7562
  %v9974 = vsel %vm3600, %v9892, %v7564
  %v9975 = vsel %vm3600, %v9893, %v7566
  %v9976 = vsel %vm3600, %v9894, %v7568
  %v9977 = vsel %vm3600, %v9895, %v7570
  %v9978 = vsel %vm3600, %v9896, %v7572
  %v9979 = vsel %vm3600, %v9897, %v7574
  %v9980 = vsel %vm3600, %v9898, %v7576
  %v9981 = vsel %vm3600, %v9899, %v7578
  %v9982 = vsel %vm3600, %v9900, %v7580
  %v9983 = vsel %vm3600, %v9901, %v7582
  %v9984 = vsel %vm3600, %v9902, %v7584
  %v9985 = vsel %vm3600, %v9903, %v7586
  %v9986 = vsel %vm3600, %v9904, %v7588
  %v9987 = vsel %vm3600, %v9905, %v7590
  %v9988 = vsel %vm3600, %v9906, %v7592
  %v9989 = vsel %vm3600, %v9907, %v7594
  %v9990 = vsel %vm3600, %v9908, %v7596
  %v9991 = vsel %vm3600, %v9909, %v7598
  %v9992 = vsel %vm3766, %v9910, %v7691
  %v9993 = vsel %vm3766, %v9911, %v7693
  %v9994 = vsel %vm3766, %v9912, %v7695
  %v9995 = vsel %vm3766, %v9913, %v7697
  %v9996 = vsel %vm3766, %v9914, %v7699
  %v9997 = vsel %vm3766, %v9915, %v7701
  %v9998 = vsel %vm3766, %v9916, %v7703
  %v9999 = vsel %vm3766, %v9917, %v7705
  %v10000 = vsel %vm3766, %v9918, %v7707
  %v10001 = vsel %vm3766, %v9919, %v7709
  %v10002 = vsel %vm3766, %v9920, %v7711
  %v10003 = vsel %vm3766, %v9921, %v7713
  %v10004 = vsel %vm3766, %v9922, %v7715
  %v10005 = vsel %vm3766, %v9923, %v7717
  %v10006 = vsel %vm3766, %v9924, %v7719
  %v10007 = vsel %vm3766, %v9925, %v7721
  %v10008 = vsel %vm3766, %v9926, %v7723
  %v10009 = vsel %vm3766, %v9927, %v7725
  %v10010 = vsel %vm3766, %v9928, %v7727
  %v10011 = vsel %vm3766, %v9929, %v7729
  %v10012 = vsel %vm3766, %v9930, %v7731
  %v10013 = vsel %vm3766, %v9931, %v7733
  %v10014 = vsel %vm3766, %v9932, %v7735
  %v10015 = vsel %vm3766, %v9933, %v7737
  %v10016 = vsel %vm3766, %v9934, %v7739
  %v10017 = vsel %vm3766, %v9935, %v7741
  %v10018 = vsel %vm3766, %v9936, %v7743
  %v10019 = vsel %vm3766, %v9937, %v7745
  %v10020 = vsel %vm3766, %v9938, %v7747
  %v10021 = vsel %vm3766, %v9939, %v7749
  %v10022 = vsel %vm3766, %v9940, %v7751
  %v10023 = vsel %vm3766, %v9941, %v7753
  %v10024 = vsel %vm3766, %v9942, %v7755
  %v10025 = vsel %vm3766, %v9943, %v7757
  %v10026 = vsel %vm3766, %v9944, %v7759
  %v10027 = vsel %vm3766, %v9945, %v7761
  %v10028 = vsel %vm3766, %v9946, %v7763
  %v10029 = vsel %vm3766, %v9947, %v7765
  %v10030 = vsel %vm3766, %v9948, %v7767
  %v10031 = vsel %vm3766, %v9949, %v7769
  %v10032 = vsel %vm3766, %v9950, %v7771
  %v10033 = vsel %vm3766, %v9951, %v7773
  %v10034 = vsel %vm3766, %v9952, %v7775
  %v10035 = vsel %vm3766, %v9953, %v7777
  %v10036 = vsel %vm3766, %v9954, %v7779
  %v10037 = vsel %vm3766, %v9955, %v7781
  %v10038 = vsel %vm3766, %v9956, %v7783
  %v10039 = vsel %vm3766, %v9957, %v7785
  %v10040 = vsel %vm3766, %v9958, %v7787
  %v10041 = vsel %vm3766, %v9959, %v7789
  %v10042 = vsel %vm3766, %v9960, %v7791
  %v10043 = vsel %vm3766, %v9961, %v7793
  %v10044 = vsel %vm3766, %v9962, %v7795
  %v10045 = vsel %vm3766, %v9963, %v7797
  %v10046 = vsel %vm3766, %v9964, %v7799
  %v10047 = vsel %vm3766, %v9965, %v7801
  %v10048 = vsel %vm3766, %v9966, %v7803
  %v10049 = vsel %vm3766, %v9967, %v7805
  %v10050 = vsel %vm3766, %v9968, %v7807
  %v10051 = vsel %vm3766, %v9969, %v7809
  %v10052 = vsel %vm3766, %v9970, %v7811
  %v10053 = vsel %vm3766, %v9971, %v7813
  %v10054 = vsel %vm3766, %v9972, %v7815
  %v10055 = vsel %vm3766, %v9973, %v7817
  %v10056 = vsel %vm3766, %v9974, %v7819
  %v10057 = vsel %vm3766, %v9975, %v7821
  %v10058 = vsel %vm3766, %v9976, %v7823
  %v10059 = vsel %vm3766, %v9977, %v7825
  %v10060 = vsel %vm3766, %v9978, %v7827
  %v10061 = vsel %vm3766, %v9979, %v7829
  %v10062 = vsel %vm3766, %v9980, %v7831
  %v10063 = vsel %vm3766, %v9981, %v7833
  %v10064 = vsel %vm3766, %v9982, %v7835
  %v10065 = vsel %vm3766, %v9983, %v7837
  %v10066 = vsel %vm3766, %v9984, %v7839
  %v10067 = vsel %vm3766, %v9985, %v7841
  %v10068 = vsel %vm3766, %v9986, %v7843
  %v10069 = vsel %vm3766, %v9987, %v7845
  %v10070 = vsel %vm3766, %v9988, %v7847
  %v10071 = vsel %vm3766, %v9989, %v7849
  %v10072 = vsel %vm3766, %v9990, %v7851
  %v10073 = vsel %vm3766, %v9991, %v7853
  %v10074 = vsel %vm3932, %v9992, %v8098
  %v10075 = vsel %vm3932, %v9993, %v8100
  %v10076 = vsel %vm3932, %v9994, %v8102
  %v10077 = vsel %vm3932, %v9995, %v8104
  %v10078 = vsel %vm3932, %v9996, %v8106
  %v10079 = vsel %vm3932, %v9997, %v8108
  %v10080 = vsel %vm3932, %v9998, %v8110
  %v10081 = vsel %vm3932, %v9999, %v8112
  %v10082 = vsel %vm3932, %v10000, %v8114
  %v10083 = vsel %vm3932, %v10001, %v8116
  %v10084 = vsel %vm3932, %v10002, %v8118
  %v10085 = vsel %vm3932, %v10003, %v8120
  %v10086 = vsel %vm3932, %v10004, %v8122
  %v10087 = vsel %vm3932, %v10005, %v8124
  %v10088 = vsel %vm3932, %v10006, %v8126
  %v10089 = vsel %vm3932, %v10007, %v8128
  %v10090 = vsel %vm3932, %v10008, %v8130
  %v10091 = vsel %vm3932, %v10009, %v8132
  %v10092 = vsel %vm3932, %v10010, %v8134
  %v10093 = vsel %vm3932, %v10011, %v8136
  %v10094 = vsel %vm3932, %v10012, %v8138
  %v10095 = vsel %vm3932, %v10013, %v8140
  %v10096 = vsel %vm3932, %v10014, %v8142
  %v10097 = vsel %vm3932, %v10015, %v8144
  %v10098 = vsel %vm3932, %v10016, %v8146
  %v10099 = vsel %vm3932, %v10017, %v8148
  %v10100 = vsel %vm3932, %v10018, %v8150
  %v10101 = vsel %vm3932, %v10019, %v8152
  %v10102 = vsel %vm3932, %v10020, %v8154
  %v10103 = vsel %vm3932, %v10021, %v8156
  %v10104 = vsel %vm3932, %v10022, %v8158
  %v10105 = vsel %vm3932, %v10023, %v8160
  %v10106 = vsel %vm3932, %v10024, %v8162
  %v10107 = vsel %vm3932, %v10025, %v8164
  %v10108 = vsel %vm3932, %v10026, %v8166
  %v10109 = vsel %vm3932, %v10027, %v8168
  %v10110 = vsel %vm3932, %v10028, %v8170
  %v10111 = vsel %vm3932, %v10029, %v8172
  %v10112 = vsel %vm3932, %v10030, %v8174
  %v10113 = vsel %vm3932, %v10031, %v8176
  %v10114 = vsel %vm3932, %v10032, %v8178
  %v10115 = vsel %vm3932, %v10033, %v8180
  %v10116 = vsel %vm3932, %v10034, %v8182
  %v10117 = vsel %vm3932, %v10035, %v8184
  %v10118 = vsel %vm3932, %v10036, %v8186
  %v10119 = vsel %vm3932, %v10037, %v8188
  %v10120 = vsel %vm3932, %v10038, %v8190
  %v10121 = vsel %vm3932, %v10039, %v8192
  %v10122 = vsel %vm3932, %v10040, %v8194
  %v10123 = vsel %vm3932, %v10041, %v8196
  %v10124 = vsel %vm3932, %v10042, %v8198
  %v10125 = vsel %vm3932, %v10043, %v8200
  %v10126 = vsel %vm3932, %v10044, %v8202
  %v10127 = vsel %vm3932, %v10045, %v8204
  %v10128 = vsel %vm3932, %v10046, %v8206
  %v10129 = vsel %vm3932, %v10047, %v8208
  %v10130 = vsel %vm3932, %v10048, %v8210
  %v10131 = vsel %vm3932, %v10049, %v8212
  %v10132 = vsel %vm3932, %v10050, %v8214
  %v10133 = vsel %vm3932, %v10051, %v8216
  %v10134 = vsel %vm3932, %v10052, %v8218
  %v10135 = vsel %vm3932, %v10053, %v8220
  %v10136 = vsel %vm3932, %v10054, %v8222
  %v10137 = vsel %vm3932, %v10055, %v8224
  %v10138 = vsel %vm3932, %v10056, %v8226
  %v10139 = vsel %vm3932, %v10057, %v8228
  %v10140 = vsel %vm3932, %v10058, %v8230
  %v10141 = vsel %vm3932, %v10059, %v8232
  %v10142 = vsel %vm3932, %v10060, %v8234
  %v10143 = vsel %vm3932, %v10061, %v8236
  %v10144 = vsel %vm3932, %v10062, %v8238
  %v10145 = vsel %vm3932, %v10063, %v8240
  %v10146 = vsel %vm3932, %v10064, %v8242
  %v10147 = vsel %vm3932, %v10065, %v8244
  %v10148 = vsel %vm3932, %v10066, %v8246
  %v10149 = vsel %vm3932, %v10067, %v8248
  %v10150 = vsel %vm3932, %v10068, %v8250
  %v10151 = vsel %vm3932, %v10069, %v8252
  %v10152 = vsel %vm3932, %v10070, %v8254
  %v10153 = vsel %vm3932, %v10071, %v8256
  %v10154 = vsel %vm3932, %v10072, %v8258
  %v10155 = vsel %vm3932, %v10073, %v8260
  %vm10156 = vcmask 326656
  %v10157 = vsel %vm10156, %v10074, %v8508
  %v10158 = vsel %vm10156, %v10075, %v8510
  %v10159 = vsel %vm10156, %v10076, %v8512
  %v10160 = vsel %vm10156, %v10077, %v8514
  %v10161 = vsel %vm10156, %v10078, %v8516
  %v10162 = vsel %vm10156, %v10079, %v8518
  %v10163 = vsel %vm10156, %v10080, %v8520
  %v10164 = vsel %vm10156, %v10081, %v8522
  %v10165 = vsel %vm10156, %v10082, %v8524
  %v10166 = vsel %vm10156, %v10083, %v8526
  %v10167 = vsel %vm10156, %v10084, %v8528
  %v10168 = vsel %vm10156, %v10085, %v8530
  %v10169 = vsel %vm10156, %v10086, %v8532
  %v10170 = vsel %vm10156, %v10087, %v8534
  %v10171 = vsel %vm10156, %v10088, %v8536
  %v10172 = vsel %vm10156, %v10089, %v8538
  %v10173 = vsel %vm10156, %v10090, %v8540
  %v10174 = vsel %vm10156, %v10091, %v8542
  %v10175 = vsel %vm10156, %v10092, %v8544
  %v10176 = vsel %vm10156, %v10093, %v8546
  %v10177 = vsel %vm10156, %v10094, %v8548
  %v10178 = vsel %vm10156, %v10095, %v8550
  %v10179 = vsel %vm10156, %v10096, %v8552
  %v10180 = vsel %vm10156, %v10097, %v8554
  %v10181 = vsel %vm10156, %v10098, %v8556
  %v10182 = vsel %vm10156, %v10099, %v8558
  %v10183 = vsel %vm10156, %v10100, %v8560
  %v10184 = vsel %vm10156, %v10101, %v8562
  %v10185 = vsel %vm10156, %v10102, %v8564
  %v10186 = vsel %vm10156, %v10103, %v8566
  %v10187 = vsel %vm10156, %v10104, %v8568
  %v10188 = vsel %vm10156, %v10105, %v8570
  %v10189 = vsel %vm10156, %v10106, %v8572
  %v10190 = vsel %vm10156, %v10107, %v8574
  %v10191 = vsel %vm10156, %v10108, %v8576
  %v10192 = vsel %vm10156, %v10109, %v8578
  %v10193 = vsel %vm10156, %v10110, %v8580
  %v10194 = vsel %vm10156, %v10111, %v8582
  %v10195 = vsel %vm10156, %v10112, %v8584
  %v10196 = vsel %vm10156, %v10113, %v8586
  %v10197 = vsel %vm10156, %v10114, %v8588
  %v10198 = vsel %vm10156, %v10115, %v8590
  %v10199 = vsel %vm10156, %v10116, %v8592
  %v10200 = vsel %vm10156, %v10117, %v8594
  %v10201 = vsel %vm10156, %v10118, %v8596
  %v10202 = vsel %vm10156, %v10119, %v8598
  %v10203 = vsel %vm10156, %v10120, %v8600
  %v10204 = vsel %vm10156, %v10121, %v8602
  %v10205 = vsel %vm10156, %v10122, %v8604
  %v10206 = vsel %vm10156, %v10123, %v8606
  %v10207 = vsel %vm10156, %v10124, %v8608
  %v10208 = vsel %vm10156, %v10125, %v8610
  %v10209 = vsel %vm10156, %v10126, %v8612
  %v10210 = vsel %vm10156, %v10127, %v8614
  %v10211 = vsel %vm10156, %v10128, %v8616
  %v10212 = vsel %vm10156, %v10129, %v8618
  %v10213 = vsel %vm10156, %v10130, %v8620
  %v10214 = vsel %vm10156, %v10131, %v8622
  %v10215 = vsel %vm10156, %v10132, %v8624
  %v10216 = vsel %vm10156, %v10133, %v8626
  %v10217 = vsel %vm10156, %v10134, %v8628
  %v10218 = vsel %vm10156, %v10135, %v8630
  %v10219 = vsel %vm10156, %v10136, %v8632
  %v10220 = vsel %vm10156, %v10137, %v8634
  %v10221 = vsel %vm10156, %v10138, %v8636
  %v10222 = vsel %vm10156, %v10139, %v8638
  %v10223 = vsel %vm10156, %v10140, %v8640
  %v10224 = vsel %vm10156, %v10141, %v8642
  %v10225 = vsel %vm10156, %v10142, %v8644
  %v10226 = vsel %vm10156, %v10143, %v8646
  %v10227 = vsel %vm10156, %v10144, %v8648
  %v10228 = vsel %vm10156, %v10145, %v8650
  %v10229 = vsel %vm10156, %v10146, %v8652
  %v10230 = vsel %vm10156, %v10147, %v8654
  %v10231 = vsel %vm10156, %v10148, %v8656
  %v10232 = vsel %vm10156, %v10149, %v8658
  %v10233 = vsel %vm10156, %v10150, %v8660
  %v10234 = vsel %vm10156, %v10151, %v8662
  %v10235 = vsel %vm10156, %v10152, %v8664
  %v10236 = vsel %vm10156, %v10153, %v8666
  %v10237 = vsel %vm10156, %v10154, %v8668
  %v10238 = vsel %vm10156, %v10155, %v8670
  %vm10239 = vcmask 392192
  %v10240 = vsel %vm10239, %v10157, %v8763
  %v10241 = vsel %vm10239, %v10158, %v8765
  %v10242 = vsel %vm10239, %v10159, %v8767
  %v10243 = vsel %vm10239, %v10160, %v8769
  %v10244 = vsel %vm10239, %v10161, %v8771
  %v10245 = vsel %vm10239, %v10162, %v8773
  %v10246 = vsel %vm10239, %v10163, %v8775
  %v10247 = vsel %vm10239, %v10164, %v8777
  %v10248 = vsel %vm10239, %v10165, %v8779
  %v10249 = vsel %vm10239, %v10166, %v8781
  %v10250 = vsel %vm10239, %v10167, %v8783
  %v10251 = vsel %vm10239, %v10168, %v8785
  %v10252 = vsel %vm10239, %v10169, %v8787
  %v10253 = vsel %vm10239, %v10170, %v8789
  %v10254 = vsel %vm10239, %v10171, %v8791
  %v10255 = vsel %vm10239, %v10172, %v8793
  %v10256 = vsel %vm10239, %v10173, %v8795
  %v10257 = vsel %vm10239, %v10174, %v8797
  %v10258 = vsel %vm10239, %v10175, %v8799
  %v10259 = vsel %vm10239, %v10176, %v8801
  %v10260 = vsel %vm10239, %v10177, %v8803
  %v10261 = vsel %vm10239, %v10178, %v8805
  %v10262 = vsel %vm10239, %v10179, %v8807
  %v10263 = vsel %vm10239, %v10180, %v8809
  %v10264 = vsel %vm10239, %v10181, %v8811
  %v10265 = vsel %vm10239, %v10182, %v8813
  %v10266 = vsel %vm10239, %v10183, %v8815
  %v10267 = vsel %vm10239, %v10184, %v8817
  %v10268 = vsel %vm10239, %v10185, %v8819
  %v10269 = vsel %vm10239, %v10186, %v8821
  %v10270 = vsel %vm10239, %v10187, %v8823
  %v10271 = vsel %vm10239, %v10188, %v8825
  %v10272 = vsel %vm10239, %v10189, %v8827
  %v10273 = vsel %vm10239, %v10190, %v8829
  %v10274 = vsel %vm10239, %v10191, %v8831
  %v10275 = vsel %vm10239, %v10192, %v8833
  %v10276 = vsel %vm10239, %v10193, %v8835
  %v10277 = vsel %vm10239, %v10194, %v8837
  %v10278 = vsel %vm10239, %v10195, %v8839
  %v10279 = vsel %vm10239, %v10196, %v8841
  %v10280 = vsel %vm10239, %v10197, %v8843
  %v10281 = vsel %vm10239, %v10198, %v8845
  %v10282 = vsel %vm10239, %v10199, %v8847
  %v10283 = vsel %vm10239, %v10200, %v8849
  %v10284 = vsel %vm10239, %v10201, %v8851
  %v10285 = vsel %vm10239, %v10202, %v8853
  %v10286 = vsel %vm10239, %v10203, %v8855
  %v10287 = vsel %vm10239, %v10204, %v8857
  %v10288 = vsel %vm10239, %v10205, %v8859
  %v10289 = vsel %vm10239, %v10206, %v8861
  %v10290 = vsel %vm10239, %v10207, %v8863
  %v10291 = vsel %vm10239, %v10208, %v8865
  %v10292 = vsel %vm10239, %v10209, %v8867
  %v10293 = vsel %vm10239, %v10210, %v8869
  %v10294 = vsel %vm10239, %v10211, %v8871
  %v10295 = vsel %vm10239, %v10212, %v8873
  %v10296 = vsel %vm10239, %v10213, %v8875
  %v10297 = vsel %vm10239, %v10214, %v8877
  %v10298 = vsel %vm10239, %v10215, %v8879
  %v10299 = vsel %vm10239, %v10216, %v8881
  %v10300 = vsel %vm10239, %v10217, %v8883
  %v10301 = vsel %vm10239, %v10218, %v8885
  %v10302 = vsel %vm10239, %v10219, %v8887
  %v10303 = vsel %vm10239, %v10220, %v8889
  %v10304 = vsel %vm10239, %v10221, %v8891
  %v10305 = vsel %vm10239, %v10222, %v8893
  %v10306 = vsel %vm10239, %v10223, %v8895
  %v10307 = vsel %vm10239, %v10224, %v8897
  %v10308 = vsel %vm10239, %v10225, %v8899
  %v10309 = vsel %vm10239, %v10226, %v8901
  %v10310 = vsel %vm10239, %v10227, %v8903
  %v10311 = vsel %vm10239, %v10228, %v8905
  %v10312 = vsel %vm10239, %v10229, %v8907
  %v10313 = vsel %vm10239, %v10230, %v8909
  %v10314 = vsel %vm10239, %v10231, %v8911
  %v10315 = vsel %vm10239, %v10232, %v8913
  %v10316 = vsel %vm10239, %v10233, %v8915
  %v10317 = vsel %vm10239, %v10234, %v8917
  %v10318 = vsel %vm10239, %v10235, %v8919
  %v10319 = vsel %vm10239, %v10236, %v8921
  %v10320 = vsel %vm10239, %v10237, %v8923
  %v10321 = vsel %vm10239, %v10238, %v8925
  %vm10322 = vcmask 457728
  %v10323 = vsel %vm10322, %v10240, %v9173
  %v10324 = vsel %vm10322, %v10241, %v9175
  %v10325 = vsel %vm10322, %v10242, %v9177
  %v10326 = vsel %vm10322, %v10243, %v9179
  %v10327 = vsel %vm10322, %v10244, %v9181
  %v10328 = vsel %vm10322, %v10245, %v9183
  %v10329 = vsel %vm10322, %v10246, %v9185
  %v10330 = vsel %vm10322, %v10247, %v9187
  %v10331 = vsel %vm10322, %v10248, %v9189
  %v10332 = vsel %vm10322, %v10249, %v9191
  %v10333 = vsel %vm10322, %v10250, %v9193
  %v10334 = vsel %vm10322, %v10251, %v9195
  %v10335 = vsel %vm10322, %v10252, %v9197
  %v10336 = vsel %vm10322, %v10253, %v9199
  %v10337 = vsel %vm10322, %v10254, %v9201
  %v10338 = vsel %vm10322, %v10255, %v9203
  %v10339 = vsel %vm10322, %v10256, %v9205
  %v10340 = vsel %vm10322, %v10257, %v9207
  %v10341 = vsel %vm10322, %v10258, %v9209
  %v10342 = vsel %vm10322, %v10259, %v9211
  %v10343 = vsel %vm10322, %v10260, %v9213
  %v10344 = vsel %vm10322, %v10261, %v9215
  %v10345 = vsel %vm10322, %v10262, %v9217
  %v10346 = vsel %vm10322, %v10263, %v9219
  %v10347 = vsel %vm10322, %v10264, %v9221
  %v10348 = vsel %vm10322, %v10265, %v9223
  %v10349 = vsel %vm10322, %v10266, %v9225
  %v10350 = vsel %vm10322, %v10267, %v9227
  %v10351 = vsel %vm10322, %v10268, %v9229
  %v10352 = vsel %vm10322, %v10269, %v9231
  %v10353 = vsel %vm10322, %v10270, %v9233
  %v10354 = vsel %vm10322, %v10271, %v9235
  %v10355 = vsel %vm10322, %v10272, %v9237
  %v10356 = vsel %vm10322, %v10273, %v9239
  %v10357 = vsel %vm10322, %v10274, %v9241
  %v10358 = vsel %vm10322, %v10275, %v9243
  %v10359 = vsel %vm10322, %v10276, %v9245
  %v10360 = vsel %vm10322, %v10277, %v9247
  %v10361 = vsel %vm10322, %v10278, %v9249
  %v10362 = vsel %vm10322, %v10279, %v9251
  %v10363 = vsel %vm10322, %v10280, %v9253
  %v10364 = vsel %vm10322, %v10281, %v9255
  %v10365 = vsel %vm10322, %v10282, %v9257
  %v10366 = vsel %vm10322, %v10283, %v9259
  %v10367 = vsel %vm10322, %v10284, %v9261
  %v10368 = vsel %vm10322, %v10285, %v9263
  %v10369 = vsel %vm10322, %v10286, %v9265
  %v10370 = vsel %vm10322, %v10287, %v9267
  %v10371 = vsel %vm10322, %v10288, %v9269
  %v10372 = vsel %vm10322, %v10289, %v9271
  %v10373 = vsel %vm10322, %v10290, %v9273
  %v10374 = vsel %vm10322, %v10291, %v9275
  %v10375 = vsel %vm10322, %v10292, %v9277
  %v10376 = vsel %vm10322, %v10293, %v9279
  %v10377 = vsel %vm10322, %v10294, %v9281
  %v10378 = vsel %vm10322, %v10295, %v9283
  %v10379 = vsel %vm10322, %v10296, %v9285
  %v10380 = vsel %vm10322, %v10297, %v9287
  %v10381 = vsel %vm10322, %v10298, %v9289
  %v10382 = vsel %vm10322, %v10299, %v9291
  %v10383 = vsel %vm10322, %v10300, %v9293
  %v10384 = vsel %vm10322, %v10301, %v9295
  %v10385 = vsel %vm10322, %v10302, %v9297
  %v10386 = vsel %vm10322, %v10303, %v9299
  %v10387 = vsel %vm10322, %v10304, %v9301
  %v10388 = vsel %vm10322, %v10305, %v9303
  %v10389 = vsel %vm10322, %v10306, %v9305
  %v10390 = vsel %vm10322, %v10307, %v9307
  %v10391 = vsel %vm10322, %v10308, %v9309
  %v10392 = vsel %vm10322, %v10309, %v9311
  %v10393 = vsel %vm10322, %v10310, %v9313
  %v10394 = vsel %vm10322, %v10311, %v9315
  %v10395 = vsel %vm10322, %v10312, %v9317
  %v10396 = vsel %vm10322, %v10313, %v9319
  %v10397 = vsel %vm10322, %v10314, %v9321
  %v10398 = vsel %vm10322, %v10315, %v9323
  %v10399 = vsel %vm10322, %v10316, %v9325
  %v10400 = vsel %vm10322, %v10317, %v9327
  %v10401 = vsel %vm10322, %v10318, %v9329
  %v10402 = vsel %vm10322, %v10319, %v9331
  %v10403 = vsel %vm10322, %v10320, %v9333
  %v10404 = vsel %vm10322, %v10321, %v9335
  %vm10405 = vcmask 523264
  %v10406 = vsel %vm10405, %v10323, %v9583
  %v10407 = vsel %vm10405, %v10324, %v9585
  %v10408 = vsel %vm10405, %v10325, %v9587
  %v10409 = vsel %vm10405, %v10326, %v9589
  %v10410 = vsel %vm10405, %v10327, %v9591
  %v10411 = vsel %vm10405, %v10328, %v9593
  %v10412 = vsel %vm10405, %v10329, %v9595
  %v10413 = vsel %vm10405, %v10330, %v9597
  %v10414 = vsel %vm10405, %v10331, %v9599
  %v10415 = vsel %vm10405, %v10332, %v9601
  %v10416 = vsel %vm10405, %v10333, %v9603
  %v10417 = vsel %vm10405, %v10334, %v9605
  %v10418 = vsel %vm10405, %v10335, %v9607
  %v10419 = vsel %vm10405, %v10336, %v9609
  %v10420 = vsel %vm10405, %v10337, %v9611
  %v10421 = vsel %vm10405, %v10338, %v9613
  %v10422 = vsel %vm10405, %v10339, %v9615
  %v10423 = vsel %vm10405, %v10340, %v9617
  %v10424 = vsel %vm10405, %v10341, %v9619
  %v10425 = vsel %vm10405, %v10342, %v9621
  %v10426 = vsel %vm10405, %v10343, %v9623
  %v10427 = vsel %vm10405, %v10344, %v9625
  %v10428 = vsel %vm10405, %v10345, %v9627
  %v10429 = vsel %vm10405, %v10346, %v9629
  %v10430 = vsel %vm10405, %v10347, %v9631
  %v10431 = vsel %vm10405, %v10348, %v9633
  %v10432 = vsel %vm10405, %v10349, %v9635
  %v10433 = vsel %vm10405, %v10350, %v9637
  %v10434 = vsel %vm10405, %v10351, %v9639
  %v10435 = vsel %vm10405, %v10352, %v9641
  %v10436 = vsel %vm10405, %v10353, %v9643
  %v10437 = vsel %vm10405, %v10354, %v9645
  %v10438 = vsel %vm10405, %v10355, %v9647
  %v10439 = vsel %vm10405, %v10356, %v9649
  %v10440 = vsel %vm10405, %v10357, %v9651
  %v10441 = vsel %vm10405, %v10358, %v9653
  %v10442 = vsel %vm10405, %v10359, %v9655
  %v10443 = vsel %vm10405, %v10360, %v9657
  %v10444 = vsel %vm10405, %v10361, %v9659
  %v10445 = vsel %vm10405, %v10362, %v9661
  %v10446 = vsel %vm10405, %v10363, %v9663
  %v10447 = vsel %vm10405, %v10364, %v9665
  %v10448 = vsel %vm10405, %v10365, %v9667
  %v10449 = vsel %vm10405, %v10366, %v9669
  %v10450 = vsel %vm10405, %v10367, %v9671
  %v10451 = vsel %vm10405, %v10368, %v9673
  %v10452 = vsel %vm10405, %v10369, %v9675
  %v10453 = vsel %vm10405, %v10370, %v9677
  %v10454 = vsel %vm10405, %v10371, %v9679
  %v10455 = vsel %vm10405, %v10372, %v9681
  %v10456 = vsel %vm10405, %v10373, %v9683
  %v10457 = vsel %vm10405, %v10374, %v9685
  %v10458 = vsel %vm10405, %v10375, %v9687
  %v10459 = vsel %vm10405, %v10376, %v9689
  %v10460 = vsel %vm10405, %v10377, %v9691
  %v10461 = vsel %vm10405, %v10378, %v9693
  %v10462 = vsel %vm10405, %v10379, %v9695
  %v10463 = vsel %vm10405, %v10380, %v9697
  %v10464 = vsel %vm10405, %v10381, %v9699
  %v10465 = vsel %vm10405, %v10382, %v9701
  %v10466 = vsel %vm10405, %v10383, %v9703
  %v10467 = vsel %vm10405, %v10384, %v9705
  %v10468 = vsel %vm10405, %v10385, %v9707
  %v10469 = vsel %vm10405, %v10386, %v9709
  %v10470 = vsel %vm10405, %v10387, %v9711
  %v10471 = vsel %vm10405, %v10388, %v9713
  %v10472 = vsel %vm10405, %v10389, %v9715
  %v10473 = vsel %vm10405, %v10390, %v9717
  %v10474 = vsel %vm10405, %v10391, %v9719
  %v10475 = vsel %vm10405, %v10392, %v9721
  %v10476 = vsel %vm10405, %v10393, %v9723
  %v10477 = vsel %vm10405, %v10394, %v9725
  %v10478 = vsel %vm10405, %v10395, %v9727
  %v10479 = vsel %vm10405, %v10396, %v9729
  %v10480 = vsel %vm10405, %v10397, %v9731
  %v10481 = vsel %vm10405, %v10398, %v9733
  %v10482 = vsel %vm10405, %v10399, %v9735
  %v10483 = vsel %vm10405, %v10400, %v9737
  %v10484 = vsel %vm10405, %v10401, %v9739
  %v10485 = vsel %vm10405, %v10402, %v9741
  %v10486 = vsel %vm10405, %v10403, %v9743
  %v10487 = vsel %vm10405, %v10404, %v9745
  %v10488 = vpack.c.bf16 %v10407, %v10406
  %v10489 = vpack.c.bf16 %v10409, %v10408
  %v10490 = vpack.c.bf16 %v10411, %v10410
  %v10491 = vpack.c.bf16 %v10413, %v10412
  %v10492 = vpack.c.bf16 %v10415, %v10414
  %v10493 = vpack.c.bf16 %v10417, %v10416
  %v10494 = vpack.c.bf16 %v10419, %v10418
  %v10495 = vpack.c.bf16 %v10421, %v10420
  %v10496 = vpack.c.bf16 %v10423, %v10422
  %v10497 = vpack.c.bf16 %v10425, %v10424
  %v10498 = vpack.c.bf16 %v10427, %v10426
  %v10499 = vpack.c.bf16 %v10429, %v10428
  %v10500 = vpack.c.bf16 %v10431, %v10430
  %v10501 = vpack.c.bf16 %v10433, %v10432
  %v10502 = vpack.c.bf16 %v10435, %v10434
  %v10503 = vpack.c.bf16 %v10437, %v10436
  %v10504 = vpack.c.bf16 %v10439, %v10438
  %v10505 = vpack.c.bf16 %v10441, %v10440
  %v10506 = vpack.c.bf16 %v10443, %v10442
  %v10507 = vpack.c.bf16 %v10445, %v10444
  %v10508 = vpack.c.bf16 %v10447, %v10446
  %v10509 = vpack.c.bf16 %v10449, %v10448
  %v10510 = vpack.c.bf16 %v10451, %v10450
  %v10511 = vpack.c.bf16 %v10453, %v10452
  %v10512 = vpack.c.bf16 %v10455, %v10454
  %v10513 = vpack.c.bf16 %v10457, %v10456
  %v10514 = vpack.c.bf16 %v10459, %v10458
  %v10515 = vpack.c.bf16 %v10461, %v10460
  %v10516 = vpack.c.bf16 %v10463, %v10462
  %v10517 = vpack.c.bf16 %v10465, %v10464
  %v10518 = vpack.c.bf16 %v10467, %v10466
  %v10519 = vpack.c.bf16 %v10469, %v10468
  %v10520 = vpack.c.bf16 %v10471, %v10470
  %v10521 = vpack.c.bf16 %v10473, %v10472
  %v10522 = vpack.c.bf16 %v10475, %v10474
  %v10523 = vpack.c.bf16 %v10477, %v10476
  %v10524 = vpack.c.bf16 %v10479, %v10478
  %v10525 = vpack.c.bf16 %v10481, %v10480
  %v10526 = vpack.c.bf16 %v10483, %v10482
  %v10527 = vpack.c.bf16 %v10485, %v10484
  %v10528 = vpack.c.bf16 %v10487, %v10486
  %v10529 = vld [vmem:[%s5] sm:$0xf]
  %v10530 = vld [vmem:[%s5 + $0x4] sm:$0xf]
  %v10531 = vld [vmem:[%s5 + $0x8] sm:$0xf]
  %v10532 = vld [vmem:[%s5 + $0xc] sm:$0xf]
  %v10533 = vld [vmem:[%s5 + $0x10] sm:$0xf]
  %v10534 = vld [vmem:[%s5 + $0x14] sm:$0xf]
  %v10535 = vld [vmem:[%s5 + $0x18] sm:$0xf]
  %v10536 = vld [vmem:[%s5 + $0x1c] sm:$0xf]
  %v10537 = vld [vmem:[%s5 + $0x20] sm:$0xf]
  %v10539 = vshrl.u32 %v10488, 16
  %v10541 = vrot.slane %v10539, 2
  %v10542 = vshll.u32 %v10488, 16
  %v10544 = vrot.slane %v10542, 3
  %v10545 = vor.u32 %v10541, %v10544
  %v10547 = vshrl.u32 %v10489, 16
  %v10549 = vrot.slane %v10547, 2
  %v10550 = vshll.u32 %v10489, 16
  %v10552 = vrot.slane %v10550, 3
  %v10553 = vor.u32 %v10549, %v10552
  %v10554 = vsel %vm4061, %v10545, %v10553
  %v10556 = vshrl.u32 %v10490, 16
  %v10558 = vrot.slane %v10556, 2
  %v10559 = vshll.u32 %v10490, 16
  %v10561 = vrot.slane %v10559, 3
  %v10562 = vor.u32 %v10558, %v10561
  %v10563 = vsel %vm4061, %v10553, %v10562
  %v10565 = vshrl.u32 %v10491, 16
  %v10567 = vrot.slane %v10565, 2
  %v10568 = vshll.u32 %v10491, 16
  %v10570 = vrot.slane %v10568, 3
  %v10571 = vor.u32 %v10567, %v10570
  %v10572 = vsel %vm4061, %v10562, %v10571
  %v10574 = vshrl.u32 %v10492, 16
  %v10576 = vrot.slane %v10574, 2
  %v10577 = vshll.u32 %v10492, 16
  %v10579 = vrot.slane %v10577, 3
  %v10580 = vor.u32 %v10576, %v10579
  %v10581 = vsel %vm4061, %v10571, %v10580
  %v10583 = vshrl.u32 %v10493, 16
  %v10585 = vrot.slane %v10583, 2
  %v10586 = vshll.u32 %v10493, 16
  %v10588 = vrot.slane %v10586, 3
  %v10589 = vor.u32 %v10585, %v10588
  %v10590 = vsel %vm4061, %v10580, %v10589
  %v10592 = vshrl.u32 %v10494, 16
  %v10594 = vrot.slane %v10592, 2
  %v10595 = vshll.u32 %v10494, 16
  %v10597 = vrot.slane %v10595, 3
  %v10598 = vor.u32 %v10594, %v10597
  %v10599 = vsel %vm4061, %v10589, %v10598
  %v10601 = vshrl.u32 %v10495, 16
  %v10603 = vrot.slane %v10601, 2
  %v10604 = vshll.u32 %v10495, 16
  %v10606 = vrot.slane %v10604, 3
  %v10607 = vor.u32 %v10603, %v10606
  %v10608 = vsel %vm4061, %v10598, %v10607
  %v10610 = vshrl.u32 %v10496, 16
  %v10612 = vrot.slane %v10610, 2
  %v10613 = vshll.u32 %v10496, 16
  %v10615 = vrot.slane %v10613, 3
  %v10616 = vor.u32 %v10612, %v10615
  %v10617 = vsel %vm4061, %v10607, %v10616
  %v10619 = vshrl.u32 %v10497, 16
  %v10621 = vrot.slane %v10619, 2
  %v10622 = vshll.u32 %v10497, 16
  %v10624 = vrot.slane %v10622, 3
  %v10625 = vor.u32 %v10621, %v10624
  %v10626 = vsel %vm4061, %v10616, %v10625
  %v10628 = vshrl.u32 %v10498, 16
  %v10630 = vrot.slane %v10628, 2
  %v10631 = vshll.u32 %v10498, 16
  %v10633 = vrot.slane %v10631, 3
  %v10634 = vor.u32 %v10630, %v10633
  %v10635 = vsel %vm4061, %v10625, %v10634
  %v10637 = vshrl.u32 %v10499, 16
  %v10639 = vrot.slane %v10637, 2
  %v10640 = vshll.u32 %v10499, 16
  %v10642 = vrot.slane %v10640, 3
  %v10643 = vor.u32 %v10639, %v10642
  %v10644 = vsel %vm4061, %v10634, %v10643
  %v10646 = vshrl.u32 %v10500, 16
  %v10648 = vrot.slane %v10646, 2
  %v10649 = vshll.u32 %v10500, 16
  %v10651 = vrot.slane %v10649, 3
  %v10652 = vor.u32 %v10648, %v10651
  %v10653 = vsel %vm4061, %v10643, %v10652
  %v10655 = vshrl.u32 %v10501, 16
  %v10657 = vrot.slane %v10655, 2
  %v10658 = vshll.u32 %v10501, 16
  %v10660 = vrot.slane %v10658, 3
  %v10661 = vor.u32 %v10657, %v10660
  %v10662 = vsel %vm4061, %v10652, %v10661
  %v10664 = vshrl.u32 %v10502, 16
  %v10666 = vrot.slane %v10664, 2
  %v10667 = vshll.u32 %v10502, 16
  %v10669 = vrot.slane %v10667, 3
  %v10670 = vor.u32 %v10666, %v10669
  %v10671 = vsel %vm4061, %v10661, %v10670
  %v10673 = vshrl.u32 %v10503, 16
  %v10675 = vrot.slane %v10673, 2
  %v10676 = vshll.u32 %v10503, 16
  %v10678 = vrot.slane %v10676, 3
  %v10679 = vor.u32 %v10675, %v10678
  %v10680 = vsel %vm4061, %v10670, %v10679
  %v10682 = vshrl.u32 %v10504, 16
  %v10684 = vrot.slane %v10682, 2
  %v10685 = vshll.u32 %v10504, 16
  %v10687 = vrot.slane %v10685, 3
  %v10688 = vor.u32 %v10684, %v10687
  %v10689 = vsel %vm4061, %v10679, %v10688
  %v10691 = vshrl.u32 %v10505, 16
  %v10693 = vrot.slane %v10691, 2
  %v10694 = vshll.u32 %v10505, 16
  %v10696 = vrot.slane %v10694, 3
  %v10697 = vor.u32 %v10693, %v10696
  %v10698 = vsel %vm4061, %v10688, %v10697
  %v10700 = vshrl.u32 %v10506, 16
  %v10702 = vrot.slane %v10700, 2
  %v10703 = vshll.u32 %v10506, 16
  %v10705 = vrot.slane %v10703, 3
  %v10706 = vor.u32 %v10702, %v10705
  %v10707 = vsel %vm4061, %v10697, %v10706
  %v10709 = vshrl.u32 %v10507, 16
  %v10711 = vrot.slane %v10709, 2
  %v10712 = vshll.u32 %v10507, 16
  %v10714 = vrot.slane %v10712, 3
  %v10715 = vor.u32 %v10711, %v10714
  %v10716 = vsel %vm4061, %v10706, %v10715
  %v10718 = vshrl.u32 %v10508, 16
  %v10720 = vrot.slane %v10718, 2
  %v10721 = vshll.u32 %v10508, 16
  %v10723 = vrot.slane %v10721, 3
  %v10724 = vor.u32 %v10720, %v10723
  %v10725 = vsel %vm4061, %v10715, %v10724
  %v10727 = vshrl.u32 %v10509, 16
  %v10729 = vrot.slane %v10727, 2
  %v10730 = vshll.u32 %v10509, 16
  %v10732 = vrot.slane %v10730, 3
  %v10733 = vor.u32 %v10729, %v10732
  %v10734 = vsel %vm4061, %v10724, %v10733
  %v10736 = vshrl.u32 %v10510, 16
  %v10738 = vrot.slane %v10736, 2
  %v10739 = vshll.u32 %v10510, 16
  %v10741 = vrot.slane %v10739, 3
  %v10742 = vor.u32 %v10738, %v10741
  %v10743 = vsel %vm4061, %v10733, %v10742
  %v10745 = vshrl.u32 %v10511, 16
  %v10747 = vrot.slane %v10745, 2
  %v10748 = vshll.u32 %v10511, 16
  %v10750 = vrot.slane %v10748, 3
  %v10751 = vor.u32 %v10747, %v10750
  %v10752 = vsel %vm4061, %v10742, %v10751
  %v10754 = vshrl.u32 %v10512, 16
  %v10756 = vrot.slane %v10754, 2
  %v10757 = vshll.u32 %v10512, 16
  %v10759 = vrot.slane %v10757, 3
  %v10760 = vor.u32 %v10756, %v10759
  %v10761 = vsel %vm4061, %v10751, %v10760
  %v10763 = vshrl.u32 %v10513, 16
  %v10765 = vrot.slane %v10763, 2
  %v10766 = vshll.u32 %v10513, 16
  %v10768 = vrot.slane %v10766, 3
  %v10769 = vor.u32 %v10765, %v10768
  %v10770 = vsel %vm4061, %v10760, %v10769
  %v10772 = vshrl.u32 %v10514, 16
  %v10774 = vrot.slane %v10772, 2
  %v10775 = vshll.u32 %v10514, 16
  %v10777 = vrot.slane %v10775, 3
  %v10778 = vor.u32 %v10774, %v10777
  %v10779 = vsel %vm4061, %v10769, %v10778
  %v10781 = vshrl.u32 %v10515, 16
  %v10783 = vrot.slane %v10781, 2
  %v10784 = vshll.u32 %v10515, 16
  %v10786 = vrot.slane %v10784, 3
  %v10787 = vor.u32 %v10783, %v10786
  %v10788 = vsel %vm4061, %v10778, %v10787
  %v10790 = vshrl.u32 %v10516, 16
  %v10792 = vrot.slane %v10790, 2
  %v10793 = vshll.u32 %v10516, 16
  %v10795 = vrot.slane %v10793, 3
  %v10796 = vor.u32 %v10792, %v10795
  %v10797 = vsel %vm4061, %v10787, %v10796
  %v10799 = vshrl.u32 %v10517, 16
  %v10801 = vrot.slane %v10799, 2
  %v10802 = vshll.u32 %v10517, 16
  %v10804 = vrot.slane %v10802, 3
  %v10805 = vor.u32 %v10801, %v10804
  %v10806 = vsel %vm4061, %v10796, %v10805
  %v10808 = vshrl.u32 %v10518, 16
  %v10810 = vrot.slane %v10808, 2
  %v10811 = vshll.u32 %v10518, 16
  %v10813 = vrot.slane %v10811, 3
  %v10814 = vor.u32 %v10810, %v10813
  %v10815 = vsel %vm4061, %v10805, %v10814
  %v10817 = vshrl.u32 %v10519, 16
  %v10819 = vrot.slane %v10817, 2
  %v10820 = vshll.u32 %v10519, 16
  %v10822 = vrot.slane %v10820, 3
  %v10823 = vor.u32 %v10819, %v10822
  %v10824 = vsel %vm4061, %v10814, %v10823
  %v10826 = vshrl.u32 %v10520, 16
  %v10828 = vrot.slane %v10826, 2
  %v10829 = vshll.u32 %v10520, 16
  %v10831 = vrot.slane %v10829, 3
  %v10832 = vor.u32 %v10828, %v10831
  %v10833 = vsel %vm4061, %v10823, %v10832
  %v10835 = vshrl.u32 %v10521, 16
  %v10837 = vrot.slane %v10835, 2
  %v10838 = vshll.u32 %v10521, 16
  %v10840 = vrot.slane %v10838, 3
  %v10841 = vor.u32 %v10837, %v10840
  %v10842 = vsel %vm4061, %v10832, %v10841
  %v10844 = vshrl.u32 %v10522, 16
  %v10846 = vrot.slane %v10844, 2
  %v10847 = vshll.u32 %v10522, 16
  %v10849 = vrot.slane %v10847, 3
  %v10850 = vor.u32 %v10846, %v10849
  %v10851 = vsel %vm4061, %v10841, %v10850
  %v10853 = vshrl.u32 %v10523, 16
  %v10855 = vrot.slane %v10853, 2
  %v10856 = vshll.u32 %v10523, 16
  %v10858 = vrot.slane %v10856, 3
  %v10859 = vor.u32 %v10855, %v10858
  %v10860 = vsel %vm4061, %v10850, %v10859
  %v10862 = vshrl.u32 %v10524, 16
  %v10864 = vrot.slane %v10862, 2
  %v10865 = vshll.u32 %v10524, 16
  %v10867 = vrot.slane %v10865, 3
  %v10868 = vor.u32 %v10864, %v10867
  %v10869 = vsel %vm4061, %v10859, %v10868
  %v10871 = vshrl.u32 %v10525, 16
  %v10873 = vrot.slane %v10871, 2
  %v10874 = vshll.u32 %v10525, 16
  %v10876 = vrot.slane %v10874, 3
  %v10877 = vor.u32 %v10873, %v10876
  %v10878 = vsel %vm4061, %v10868, %v10877
  %v10880 = vshrl.u32 %v10526, 16
  %v10882 = vrot.slane %v10880, 2
  %v10883 = vshll.u32 %v10526, 16
  %v10885 = vrot.slane %v10883, 3
  %v10886 = vor.u32 %v10882, %v10885
  %v10887 = vsel %vm4061, %v10877, %v10886
  %v10889 = vshrl.u32 %v10527, 16
  %v10891 = vrot.slane %v10889, 2
  %v10892 = vshll.u32 %v10527, 16
  %v10894 = vrot.slane %v10892, 3
  %v10895 = vor.u32 %v10891, %v10894
  %v10896 = vsel %vm4061, %v10886, %v10895
  %v10898 = vshrl.u32 %v10528, 16
  %v10900 = vrot.slane %v10898, 2
  %v10901 = vshll.u32 %v10528, 16
  %v10903 = vrot.slane %v10901, 3
  %v10904 = vor.u32 %v10900, %v10903
  %v10905 = vsel %vm4061, %v10895, %v10904
  %v10915 = vunpack.c.l.b16 %v10529
  %v10916 = vunpack.c.l.b16 %v10530
  %v10917 = vunpack.c.l.b16 %v10531
  %v10918 = vunpack.c.l.b16 %v10532
  %v10919 = vunpack.c.l.b16 %v10533
  %v10920 = vunpack.c.l.b16 %v10534
  %v10921 = vunpack.c.l.b16 %v10535
  %v10922 = vunpack.c.l.b16 %v10536
  %v10923 = vunpack.c.l.b16 %v10537
  %v10924 = vpack.c.b16 %v10916, %v10915
  %v10925 = vpack.c.b16 %v10918, %v10917
  %v10926 = vpack.c.b16 %v10920, %v10919
  %v10927 = vpack.c.b16 %v10922, %v10921
  %v10928 = vpack.c.b16 %v10923, %v10923
  %vm10933 = vcmask 588800
  %v10935 = vsel %vm10933, %v10554, 0
  %v10938 = vsel %vm10933, %v10563, 0
  %v10941 = vsel %vm10933, %v10572, 0
  %v10944 = vsel %vm10933, %v10581, 0
  %v10947 = vsel %vm10933, %v10590, 0
  %v10950 = vsel %vm10933, %v10599, 0
  %v10953 = vsel %vm10933, %v10608, 0
  %v10956 = vsel %vm10933, %v10617, 0
  %v10959 = vsel %vm10933, %v10626, 0
  %v10962 = vsel %vm10933, %v10635, 0
  %v10965 = vsel %vm10933, %v10644, 0
  %v10968 = vsel %vm10933, %v10653, 0
  %v10971 = vsel %vm10933, %v10662, 0
  %v10974 = vsel %vm10933, %v10671, 0
  %v10977 = vsel %vm10933, %v10680, 0
  %v10980 = vsel %vm10933, %v10689, 0
  %v10983 = vsel %vm10933, %v10698, 0
  %v10986 = vsel %vm10933, %v10707, 0
  %v10989 = vsel %vm10933, %v10716, 0
  %v10992 = vsel %vm10933, %v10725, 0
  %v10995 = vsel %vm10933, %v10734, 0
  %v10998 = vsel %vm10933, %v10743, 0
  %v11001 = vsel %vm10933, %v10752, 0
  %v11004 = vsel %vm10933, %v10761, 0
  %v11007 = vsel %vm10933, %v10770, 0
  %v11010 = vsel %vm10933, %v10779, 0
  %v11013 = vsel %vm10933, %v10788, 0
  %v11016 = vsel %vm10933, %v10797, 0
  %v11019 = vsel %vm10933, %v10806, 0
  %v11022 = vsel %vm10933, %v10815, 0
  %v11025 = vsel %vm10933, %v10824, 0
  %v11028 = vsel %vm10933, %v10833, 0
  %v11031 = vsel %vm10933, %v10842, 0
  %v11034 = vsel %vm10933, %v10851, 0
  %v11037 = vsel %vm10933, %v10860, 0
  %v11040 = vsel %vm10933, %v10869, 0
  %v11043 = vsel %vm10933, %v10878, 0
  %v11046 = vsel %vm10933, %v10887, 0
  %v11049 = vsel %vm10933, %v10896, 0
  %v11052 = vsel %vm10933, %v10905, 0
  %v11055 = vsel %vm10933, %v10904, 0
  %v11058 = vsel %vm1864, %v10928, 0
  %11060 = vmatprep.subr.bf16.mxu0 0
  %11061 = vmatpush1.bf16.msra.mxu0 %v10924
  %11062 = vmatprep.subr.bf16.mxu0 0
  %11063 = vmatpush1.bf16.msra.mxu0 %v10925
  %11064 = vmatprep.subr.bf16.mxu0 0
  %11065 = vmatpush1.bf16.msra.mxu0 %v10926
  %11066 = vmatprep.subr.bf16.mxu0 0
  %11067 = vmatpush1.bf16.msra.mxu0 %v10927
  %11068 = vmatprep.subr.bf16.mxu0 0
  %11069 = vmatpush1.bf16.msra.mxu0 %v11058
  %11070 = vmatprep.subr.bf16.mxu0 0
  %11071 = vmatpush1.bf16.msra.mxu0 0
  %11072 = vmatprep.subr.bf16.mxu0 0
  %11073 = vmatpush1.bf16.msra.mxu0 0
  %11074 = vmatprep.subr.bf16.mxu0 0
  %11075 = vmatpush1.bf16.msra.mxu0 0
  %11076 = vmatprep.subr.bf16.mxu0 0
  %11077 = vmatpush1.bf16.msra.mxu0 0
  %11078 = vmatprep.subr.bf16.mxu0 0
  %11079 = vmatpush1.bf16.msra.mxu0 0
  %11080 = vmatprep.subr.bf16.mxu0 0
  %11081 = vmatpush1.bf16.msra.mxu0 0
  %11082 = vmatprep.subr.bf16.mxu0 0
  %11083 = vmatpush1.bf16.msra.mxu0 0
  %11084 = vmatprep.subr.bf16.mxu0 0
  %11085 = vmatpush1.bf16.msra.mxu0 0
  %11086 = vmatprep.subr.bf16.mxu0 0
  %11087 = vmatpush1.bf16.msra.mxu0 0
  %11088 = vmatprep.subr.bf16.mxu0 0
  %11089 = vmatpush1.bf16.msra.mxu0 0
  %11090 = vmatprep.subr.bf16.mxu0 0
  %11091 = vmatpush1.bf16.msra.mxu0 0
  %11092 = vmatprep.mubr.bf16.mxu0 0
  %11093 = vmatmul.mubr.bf16.gmra.mrb[0].mxu0 %v10935
  %v11094 = vpop.f32.mrb[0].mxu0
  %v11095 = vadd.f32 0.0, %v11094
  %v11096 = vpop.f32.mrb[0].mxu0
  %v11097 = vpop.f32.mrb[0].mxu0
  %v11098 = vadd.f32 0.0, %v11097
  %v11099 = vpop.f32.mrb[0].mxu0
  %11100 = vmatprep.mubr.bf16.mxu0 0
  %11101 = vmatmul.mubr.bf16.gmra.mrb[0].mxu0 %v10938
  %v11102 = vpop.f32.mrb[0].mxu0
  %v11103 = vadd.f32 0.0, %v11102
  %v11104 = vpop.f32.mrb[0].mxu0
  %v11105 = vpop.f32.mrb[0].mxu0
  %v11106 = vadd.f32 0.0, %v11105
  %v11107 = vpop.f32.mrb[0].mxu0
  %11108 = vmatprep.mubr.bf16.mxu0 0
  %11109 = vmatmul.mubr.bf16.gmra.mrb[0].mxu0 %v10941
  %v11110 = vpop.f32.mrb[0].mxu0
  %v11111 = vadd.f32 0.0, %v11110
  %v11112 = vpop.f32.mrb[0].mxu0
  %v11113 = vpop.f32.mrb[0].mxu0
  %v11114 = vadd.f32 0.0, %v11113
  %v11115 = vpop.f32.mrb[0].mxu0
  %11116 = vmatprep.mubr.bf16.mxu0 0
  %11117 = vmatmul.mubr.bf16.gmra.mrb[0].mxu0 %v10944
  %v11118 = vpop.f32.mrb[0].mxu0
  %v11119 = vadd.f32 0.0, %v11118
  %v11120 = vpop.f32.mrb[0].mxu0
  %v11121 = vpop.f32.mrb[0].mxu0
  %v11122 = vadd.f32 0.0, %v11121
  %v11123 = vpop.f32.mrb[0].mxu0
  %11124 = vmatprep.mubr.bf16.mxu0 0
  %11125 = vmatmul.mubr.bf16.gmra.mrb[0].mxu0 %v10947
  %v11126 = vpop.f32.mrb[0].mxu0
  %v11127 = vadd.f32 0.0, %v11126
  %v11128 = vpop.f32.mrb[0].mxu0
  %v11129 = vpop.f32.mrb[0].mxu0
  %v11130 = vadd.f32 0.0, %v11129
  %v11131 = vpop.f32.mrb[0].mxu0
  %11132 = vmatprep.mubr.bf16.mxu0 0
  %11133 = vmatmul.mubr.bf16.gmra.mrb[0].mxu0 %v10950
  %v11134 = vpop.f32.mrb[0].mxu0
  %v11135 = vadd.f32 0.0, %v11134
  %v11136 = vpop.f32.mrb[0].mxu0
  %v11137 = vpop.f32.mrb[0].mxu0
  %v11138 = vadd.f32 0.0, %v11137
  %v11139 = vpop.f32.mrb[0].mxu0
  %11140 = vmatprep.mubr.bf16.mxu0 0
  %11141 = vmatmul.mubr.bf16.gmra.mrb[0].mxu0 %v10953
  %v11142 = vpop.f32.mrb[0].mxu0
  %v11143 = vadd.f32 0.0, %v11142
  %v11144 = vpop.f32.mrb[0].mxu0
  %v11145 = vpop.f32.mrb[0].mxu0
  %v11146 = vadd.f32 0.0, %v11145
  %v11147 = vpop.f32.mrb[0].mxu0
  %11148 = vmatprep.mubr.bf16.mxu0 0
  %11149 = vmatmul.mubr.bf16.gmra.mrb[0].mxu0 %v10956
  %v11150 = vpop.f32.mrb[0].mxu0
  %v11151 = vadd.f32 0.0, %v11150
  %v11152 = vpop.f32.mrb[0].mxu0
  %v11153 = vpop.f32.mrb[0].mxu0
  %v11154 = vadd.f32 0.0, %v11153
  %v11155 = vpop.f32.mrb[0].mxu0
  %11156 = vmatprep.mubr.bf16.mxu0 0
  %11157 = vmatmul.mubr.bf16.gmra.mrb[0].mxu0 %v10959
  %v11158 = vpop.f32.mrb[0].mxu0
  %v11159 = vadd.f32 0.0, %v11158
  %v11160 = vpop.f32.mrb[0].mxu0
  %v11161 = vpop.f32.mrb[0].mxu0
  %v11162 = vadd.f32 0.0, %v11161
  %v11163 = vpop.f32.mrb[0].mxu0
  %11164 = vmatprep.mubr.bf16.mxu0 0
  %11165 = vmatmul.mubr.bf16.gmra.mrb[0].mxu0 %v10962
  %v11166 = vpop.f32.mrb[0].mxu0
  %v11167 = vadd.f32 0.0, %v11166
  %v11168 = vpop.f32.mrb[0].mxu0
  %v11169 = vpop.f32.mrb[0].mxu0
  %v11170 = vadd.f32 0.0, %v11169
  %v11171 = vpop.f32.mrb[0].mxu0
  %11172 = vmatprep.mubr.bf16.mxu0 0
  %11173 = vmatmul.mubr.bf16.gmra.mrb[0].mxu0 %v10965
  %v11174 = vpop.f32.mrb[0].mxu0
  %v11175 = vadd.f32 0.0, %v11174
  %v11176 = vpop.f32.mrb[0].mxu0
  %v11177 = vpop.f32.mrb[0].mxu0
  %v11178 = vadd.f32 0.0, %v11177
  %v11179 = vpop.f32.mrb[0].mxu0
  %11180 = vmatprep.mubr.bf16.mxu0 0
  %11181 = vmatmul.mubr.bf16.gmra.mrb[0].mxu0 %v10968
  %v11182 = vpop.f32.mrb[0].mxu0
  %v11183 = vadd.f32 0.0, %v11182
  %v11184 = vpop.f32.mrb[0].mxu0
  %v11185 = vpop.f32.mrb[0].mxu0
  %v11186 = vadd.f32 0.0, %v11185
  %v11187 = vpop.f32.mrb[0].mxu0
  %11188 = vmatprep.mubr.bf16.mxu0 0
  %11189 = vmatmul.mubr.bf16.gmra.mrb[0].mxu0 %v10971
  %v11190 = vpop.f32.mrb[0].mxu0
  %v11191 = vadd.f32 0.0, %v11190
  %v11192 = vpop.f32.mrb[0].mxu0
  %v11193 = vpop.f32.mrb[0].mxu0
  %v11194 = vadd.f32 0.0, %v11193
  %v11195 = vpop.f32.mrb[0].mxu0
  %11196 = vmatprep.mubr.bf16.mxu0 0
  %11197 = vmatmul.mubr.bf16.gmra.mrb[0].mxu0 %v10974
  %v11198 = vpop.f32.mrb[0].mxu0
  %v11199 = vadd.f32 0.0, %v11198
  %v11200 = vpop.f32.mrb[0].mxu0
  %v11201 = vpop.f32.mrb[0].mxu0
  %v11202 = vadd.f32 0.0, %v11201
  %v11203 = vpop.f32.mrb[0].mxu0
  %11204 = vmatprep.mubr.bf16.mxu0 0
  %11205 = vmatmul.mubr.bf16.gmra.mrb[0].mxu0 %v10977
  %v11206 = vpop.f32.mrb[0].mxu0
  %v11207 = vadd.f32 0.0, %v11206
  %v11208 = vpop.f32.mrb[0].mxu0
  %v11209 = vpop.f32.mrb[0].mxu0
  %v11210 = vadd.f32 0.0, %v11209
  %v11211 = vpop.f32.mrb[0].mxu0
  %11212 = vmatprep.mubr.bf16.mxu0 0
  %11213 = vmatmul.mubr.bf16.gmra.mrb[0].mxu0 %v10980
  %v11214 = vpop.f32.mrb[0].mxu0
  %v11215 = vadd.f32 0.0, %v11214
  %v11216 = vpop.f32.mrb[0].mxu0
  %v11217 = vpop.f32.mrb[0].mxu0
  %v11218 = vadd.f32 0.0, %v11217
  %v11219 = vpop.f32.mrb[0].mxu0
  %11220 = vmatprep.mubr.bf16.mxu0 0
  %11221 = vmatmul.mubr.bf16.gmra.mrb[0].mxu0 %v10983
  %v11222 = vpop.f32.mrb[0].mxu0
  %v11223 = vadd.f32 0.0, %v11222
  %v11224 = vpop.f32.mrb[0].mxu0
  %v11225 = vpop.f32.mrb[0].mxu0
  %v11226 = vadd.f32 0.0, %v11225
  %v11227 = vpop.f32.mrb[0].mxu0
  %11228 = vmatprep.mubr.bf16.mxu0 0
  %11229 = vmatmul.mubr.bf16.gmra.mrb[0].mxu0 %v10986
  %v11230 = vpop.f32.mrb[0].mxu0
  %v11231 = vadd.f32 0.0, %v11230
  %v11232 = vpop.f32.mrb[0].mxu0
  %v11233 = vpop.f32.mrb[0].mxu0
  %v11234 = vadd.f32 0.0, %v11233
  %v11235 = vpop.f32.mrb[0].mxu0
  %11236 = vmatprep.mubr.bf16.mxu0 0
  %11237 = vmatmul.mubr.bf16.gmra.mrb[0].mxu0 %v10989
  %v11238 = vpop.f32.mrb[0].mxu0
  %v11239 = vadd.f32 0.0, %v11238
  %v11240 = vpop.f32.mrb[0].mxu0
  %v11241 = vpop.f32.mrb[0].mxu0
  %v11242 = vadd.f32 0.0, %v11241
  %v11243 = vpop.f32.mrb[0].mxu0
  %11244 = vmatprep.mubr.bf16.mxu0 0
  %11245 = vmatmul.mubr.bf16.gmra.mrb[0].mxu0 %v10992
  %v11246 = vpop.f32.mrb[0].mxu0
  %v11247 = vadd.f32 0.0, %v11246
  %v11248 = vpop.f32.mrb[0].mxu0
  %v11249 = vpop.f32.mrb[0].mxu0
  %v11250 = vadd.f32 0.0, %v11249
  %v11251 = vpop.f32.mrb[0].mxu0
  %11252 = vmatprep.mubr.bf16.mxu0 0
  %11253 = vmatmul.mubr.bf16.gmra.mrb[0].mxu0 %v10995
  %v11254 = vpop.f32.mrb[0].mxu0
  %v11255 = vadd.f32 0.0, %v11254
  %v11256 = vpop.f32.mrb[0].mxu0
  %v11257 = vpop.f32.mrb[0].mxu0
  %v11258 = vadd.f32 0.0, %v11257
  %v11259 = vpop.f32.mrb[0].mxu0
  %11260 = vmatprep.mubr.bf16.mxu0 0
  %11261 = vmatmul.mubr.bf16.gmra.mrb[0].mxu0 %v10998
  %v11262 = vpop.f32.mrb[0].mxu0
  %v11263 = vadd.f32 0.0, %v11262
  %v11264 = vpop.f32.mrb[0].mxu0
  %v11265 = vpop.f32.mrb[0].mxu0
  %v11266 = vadd.f32 0.0, %v11265
  %v11267 = vpop.f32.mrb[0].mxu0
  %11268 = vmatprep.mubr.bf16.mxu0 0
  %11269 = vmatmul.mubr.bf16.gmra.mrb[0].mxu0 %v11001
  %v11270 = vpop.f32.mrb[0].mxu0
  %v11271 = vadd.f32 0.0, %v11270
  %v11272 = vpop.f32.mrb[0].mxu0
  %v11273 = vpop.f32.mrb[0].mxu0
  %v11274 = vadd.f32 0.0, %v11273
  %v11275 = vpop.f32.mrb[0].mxu0
  %11276 = vmatprep.mubr.bf16.mxu0 0
  %11277 = vmatmul.mubr.bf16.gmra.mrb[0].mxu0 %v11004
  %v11278 = vpop.f32.mrb[0].mxu0
  %v11279 = vadd.f32 0.0, %v11278
  %v11280 = vpop.f32.mrb[0].mxu0
  %v11281 = vpop.f32.mrb[0].mxu0
  %v11282 = vadd.f32 0.0, %v11281
  %v11283 = vpop.f32.mrb[0].mxu0
  %11284 = vmatprep.mubr.bf16.mxu0 0
  %11285 = vmatmul.mubr.bf16.gmra.mrb[0].mxu0 %v11007
  %v11286 = vpop.f32.mrb[0].mxu0
  %v11287 = vadd.f32 0.0, %v11286
  %v11288 = vpop.f32.mrb[0].mxu0
  %v11289 = vpop.f32.mrb[0].mxu0
  %v11290 = vadd.f32 0.0, %v11289
  %v11291 = vpop.f32.mrb[0].mxu0
  %11292 = vmatprep.mubr.bf16.mxu0 0
  %11293 = vmatmul.mubr.bf16.gmra.mrb[0].mxu0 %v11010
  %v11294 = vpop.f32.mrb[0].mxu0
  %v11295 = vadd.f32 0.0, %v11294
  %v11296 = vpop.f32.mrb[0].mxu0
  %v11297 = vpop.f32.mrb[0].mxu0
  %v11298 = vadd.f32 0.0, %v11297
  %v11299 = vpop.f32.mrb[0].mxu0
  %11300 = vmatprep.mubr.bf16.mxu0 0
  %11301 = vmatmul.mubr.bf16.gmra.mrb[0].mxu0 %v11013
  %v11302 = vpop.f32.mrb[0].mxu0
  %v11303 = vadd.f32 0.0, %v11302
  %v11304 = vpop.f32.mrb[0].mxu0
  %v11305 = vpop.f32.mrb[0].mxu0
  %v11306 = vadd.f32 0.0, %v11305
  %v11307 = vpop.f32.mrb[0].mxu0
  %11308 = vmatprep.mubr.bf16.mxu0 0
  %11309 = vmatmul.mubr.bf16.gmra.mrb[0].mxu0 %v11016
  %v11310 = vpop.f32.mrb[0].mxu0
  %v11311 = vadd.f32 0.0, %v11310
  %v11312 = vpop.f32.mrb[0].mxu0
  %v11313 = vpop.f32.mrb[0].mxu0
  %v11314 = vadd.f32 0.0, %v11313
  %v11315 = vpop.f32.mrb[0].mxu0
  %11316 = vmatprep.mubr.bf16.mxu0 0
  %11317 = vmatmul.mubr.bf16.gmra.mrb[0].mxu0 %v11019
  %v11318 = vpop.f32.mrb[0].mxu0
  %v11319 = vadd.f32 0.0, %v11318
  %v11320 = vpop.f32.mrb[0].mxu0
  %v11321 = vpop.f32.mrb[0].mxu0
  %v11322 = vadd.f32 0.0, %v11321
  %v11323 = vpop.f32.mrb[0].mxu0
  %11324 = vmatprep.mubr.bf16.mxu0 0
  %11325 = vmatmul.mubr.bf16.gmra.mrb[0].mxu0 %v11022
  %v11326 = vpop.f32.mrb[0].mxu0
  %v11327 = vadd.f32 0.0, %v11326
  %v11328 = vpop.f32.mrb[0].mxu0
  %v11329 = vpop.f32.mrb[0].mxu0
  %v11330 = vadd.f32 0.0, %v11329
  %v11331 = vpop.f32.mrb[0].mxu0
  %11332 = vmatprep.mubr.bf16.mxu0 0
  %11333 = vmatmul.mubr.bf16.gmra.mrb[0].mxu0 %v11025
  %v11334 = vpop.f32.mrb[0].mxu0
  %v11335 = vadd.f32 0.0, %v11334
  %v11336 = vpop.f32.mrb[0].mxu0
  %v11337 = vpop.f32.mrb[0].mxu0
  %v11338 = vadd.f32 0.0, %v11337
  %v11339 = vpop.f32.mrb[0].mxu0
  %11340 = vmatprep.mubr.bf16.mxu0 0
  %11341 = vmatmul.mubr.bf16.gmra.mrb[0].mxu0 %v11028
  %v11342 = vpop.f32.mrb[0].mxu0
  %v11343 = vadd.f32 0.0, %v11342
  %v11344 = vpop.f32.mrb[0].mxu0
  %v11345 = vpop.f32.mrb[0].mxu0
  %v11346 = vadd.f32 0.0, %v11345
  %v11347 = vpop.f32.mrb[0].mxu0
  %11348 = vmatprep.mubr.bf16.mxu0 0
  %11349 = vmatmul.mubr.bf16.gmra.mrb[0].mxu0 %v11031
  %v11350 = vpop.f32.mrb[0].mxu0
  %v11351 = vadd.f32 0.0, %v11350
  %v11352 = vpop.f32.mrb[0].mxu0
  %v11353 = vpop.f32.mrb[0].mxu0
  %v11354 = vadd.f32 0.0, %v11353
  %v11355 = vpop.f32.mrb[0].mxu0
  %11356 = vmatprep.mubr.bf16.mxu0 0
  %11357 = vmatmul.mubr.bf16.gmra.mrb[0].mxu0 %v11034
  %v11358 = vpop.f32.mrb[0].mxu0
  %v11359 = vadd.f32 0.0, %v11358
  %v11360 = vpop.f32.mrb[0].mxu0
  %v11361 = vpop.f32.mrb[0].mxu0
  %v11362 = vadd.f32 0.0, %v11361
  %v11363 = vpop.f32.mrb[0].mxu0
  %11364 = vmatprep.mubr.bf16.mxu0 0
  %11365 = vmatmul.mubr.bf16.gmra.mrb[0].mxu0 %v11037
  %v11366 = vpop.f32.mrb[0].mxu0
  %v11367 = vadd.f32 0.0, %v11366
  %v11368 = vpop.f32.mrb[0].mxu0
  %v11369 = vpop.f32.mrb[0].mxu0
  %v11370 = vadd.f32 0.0, %v11369
  %v11371 = vpop.f32.mrb[0].mxu0
  %11372 = vmatprep.mubr.bf16.mxu0 0
  %11373 = vmatmul.mubr.bf16.gmra.mrb[0].mxu0 %v11040
  %v11374 = vpop.f32.mrb[0].mxu0
  %v11375 = vadd.f32 0.0, %v11374
  %v11376 = vpop.f32.mrb[0].mxu0
  %v11377 = vpop.f32.mrb[0].mxu0
  %v11378 = vadd.f32 0.0, %v11377
  %v11379 = vpop.f32.mrb[0].mxu0
  %11380 = vmatprep.mubr.bf16.mxu0 0
  %11381 = vmatmul.mubr.bf16.gmra.mrb[0].mxu0 %v11043
  %v11382 = vpop.f32.mrb[0].mxu0
  %v11383 = vadd.f32 0.0, %v11382
  %v11384 = vpop.f32.mrb[0].mxu0
  %v11385 = vpop.f32.mrb[0].mxu0
  %v11386 = vadd.f32 0.0, %v11385
  %v11387 = vpop.f32.mrb[0].mxu0
  %11388 = vmatprep.mubr.bf16.mxu0 0
  %11389 = vmatmul.mubr.bf16.gmra.mrb[0].mxu0 %v11046
  %v11390 = vpop.f32.mrb[0].mxu0
  %v11391 = vadd.f32 0.0, %v11390
  %v11392 = vpop.f32.mrb[0].mxu0
  %v11393 = vpop.f32.mrb[0].mxu0
  %v11394 = vadd.f32 0.0, %v11393
  %v11395 = vpop.f32.mrb[0].mxu0
  %11396 = vmatprep.mubr.bf16.mxu0 0
  %11397 = vmatmul.mubr.bf16.gmra.mrb[0].mxu0 %v11049
  %v11398 = vpop.f32.mrb[0].mxu0
  %v11399 = vadd.f32 0.0, %v11398
  %v11400 = vpop.f32.mrb[0].mxu0
  %v11401 = vpop.f32.mrb[0].mxu0
  %v11402 = vadd.f32 0.0, %v11401
  %v11403 = vpop.f32.mrb[0].mxu0
  %11404 = vmatprep.mubr.bf16.mxu0 0
  %11405 = vmatmul.mubr.bf16.gmra.mrb[0].mxu0 %v11052
  %v11406 = vpop.f32.mrb[0].mxu0
  %v11407 = vadd.f32 0.0, %v11406
  %v11408 = vpop.f32.mrb[0].mxu0
  %v11409 = vpop.f32.mrb[0].mxu0
  %v11410 = vadd.f32 0.0, %v11409
  %v11411 = vpop.f32.mrb[0].mxu0
  %11412 = vmatprep.mubr.bf16.mxu0 0
  %11413 = vmatmul.mubr.bf16.gmra.mrb[0].mxu0 %v11055
  %v11414 = vpop.f32.mrb[0].mxu0
  %v11415 = vadd.f32 0.0, %v11414
  %v11416 = vpop.f32.mrb[0].mxu0
  %v11417 = vpop.f32.mrb[0].mxu0
  %v11418 = vpop.f32.mrb[0].mxu0
  %11419 = vdwg.mxu0
  %v11420 = vmul.f32 %v11095, %v4935
  %v11421 = vmul.f32 %v11098, %v4940
  %v11422 = vmul.f32 %v11103, %v4945
  %v11423 = vmul.f32 %v11106, %v4950
  %v11424 = vmul.f32 %v11111, %v4955
  %v11425 = vmul.f32 %v11114, %v4960
  %v11426 = vmul.f32 %v11119, %v4965
  %v11427 = vmul.f32 %v11122, %v4970
  %v11428 = vmul.f32 %v11127, %v4975
  %v11429 = vmul.f32 %v11130, %v4980
  %v11430 = vmul.f32 %v11135, %v4985
  %v11431 = vmul.f32 %v11138, %v4990
  %v11432 = vmul.f32 %v11143, %v4995
  %v11433 = vmul.f32 %v11146, %v5000
  %v11434 = vmul.f32 %v11151, %v5005
  %v11435 = vmul.f32 %v11154, %v5010
  %v11436 = vmul.f32 %v11159, %v5015
  %v11437 = vmul.f32 %v11162, %v5020
  %v11438 = vmul.f32 %v11167, %v5025
  %v11439 = vmul.f32 %v11170, %v5030
  %v11440 = vmul.f32 %v11175, %v5035
  %v11441 = vmul.f32 %v11178, %v5040
  %v11442 = vmul.f32 %v11183, %v5045
  %v11443 = vmul.f32 %v11186, %v5050
  %v11444 = vmul.f32 %v11191, %v5055
  %v11445 = vmul.f32 %v11194, %v5060
  %v11446 = vmul.f32 %v11199, %v5065
  %v11447 = vmul.f32 %v11202, %v5070
  %v11448 = vmul.f32 %v11207, %v5075
  %v11449 = vmul.f32 %v11210, %v5080
  %v11450 = vmul.f32 %v11215, %v5085
  %v11451 = vmul.f32 %v11218, %v5090
  %v11452 = vmul.f32 %v11223, %v5095
  %v11453 = vmul.f32 %v11226, %v5100
  %v11454 = vmul.f32 %v11231, %v5105
  %v11455 = vmul.f32 %v11234, %v5110
  %v11456 = vmul.f32 %v11239, %v5115
  %v11457 = vmul.f32 %v11242, %v5120
  %v11458 = vmul.f32 %v11247, %v5125
  %v11459 = vmul.f32 %v11250, %v5130
  %v11460 = vmul.f32 %v11255, %v5135
  %v11461 = vmul.f32 %v11258, %v5140
  %v11462 = vmul.f32 %v11263, %v5145
  %v11463 = vmul.f32 %v11266, %v5150
  %v11464 = vmul.f32 %v11271, %v5155
  %v11465 = vmul.f32 %v11274, %v5160
  %v11466 = vmul.f32 %v11279, %v5165
  %v11467 = vmul.f32 %v11282, %v5170
  %v11468 = vmul.f32 %v11287, %v5175
  %v11469 = vmul.f32 %v11290, %v5180
  %v11470 = vmul.f32 %v11295, %v5185
  %v11471 = vmul.f32 %v11298, %v5190
  %v11472 = vmul.f32 %v11303, %v5195
  %v11473 = vmul.f32 %v11306, %v5200
  %v11474 = vmul.f32 %v11311, %v5205
  %v11475 = vmul.f32 %v11314, %v5210
  %v11476 = vmul.f32 %v11319, %v5215
  %v11477 = vmul.f32 %v11322, %v5220
  %v11478 = vmul.f32 %v11327, %v5225
  %v11479 = vmul.f32 %v11330, %v5230
  %v11480 = vmul.f32 %v11335, %v5235
  %v11481 = vmul.f32 %v11338, %v5240
  %v11482 = vmul.f32 %v11343, %v5245
  %v11483 = vmul.f32 %v11346, %v5250
  %v11484 = vmul.f32 %v11351, %v5255
  %v11485 = vmul.f32 %v11354, %v5260
  %v11486 = vmul.f32 %v11359, %v5265
  %v11487 = vmul.f32 %v11362, %v5270
  %v11488 = vmul.f32 %v11367, %v5275
  %v11489 = vmul.f32 %v11370, %v5280
  %v11490 = vmul.f32 %v11375, %v5285
  %v11491 = vmul.f32 %v11378, %v5290
  %v11492 = vmul.f32 %v11383, %v5295
  %v11493 = vmul.f32 %v11386, %v5300
  %v11494 = vmul.f32 %v11391, %v5305
  %v11495 = vmul.f32 %v11394, %v5310
  %v11496 = vmul.f32 %v11399, %v5315
  %v11497 = vmul.f32 %v11402, %v5320
  %v11498 = vmul.f32 %v11407, %v5325
  %v11499 = vmul.f32 %v11410, %v5330
  %v11500 = vmul.f32 %v11415, %v5335
  %v11501 = vsel %vm3434, %v11420, 0.0
  %v11502 = vsel %vm3434, %v11421, 0.0
  %v11503 = vadd.f32 %v11501, %v11502
  %v11504 = vsel %vm3434, %v11422, 0.0
  %v11505 = vadd.f32 %v11503, %v11504
  %v11506 = vsel %vm3434, %v11423, 0.0
  %v11507 = vadd.f32 %v11505, %v11506
  %v11508 = vsel %vm3434, %v11424, 0.0
  %v11509 = vadd.f32 %v11507, %v11508
  %v11510 = vsel %vm3434, %v11425, 0.0
  %v11511 = vadd.f32 %v11509, %v11510
  %v11512 = vsel %vm3434, %v11426, 0.0
  %v11513 = vadd.f32 %v11511, %v11512
  %v11514 = vsel %vm3434, %v11427, 0.0
  %v11515 = vadd.f32 %v11513, %v11514
  %v11516 = vsel %vm3434, %v11428, 0.0
  %v11517 = vadd.f32 %v11515, %v11516
  %v11518 = vsel %vm3434, %v11429, 0.0
  %v11519 = vadd.f32 %v11517, %v11518
  %v11520 = vsel %vm3434, %v11430, 0.0
  %v11521 = vadd.f32 %v11519, %v11520
  %v11522 = vsel %vm3434, %v11431, 0.0
  %v11523 = vadd.f32 %v11521, %v11522
  %v11524 = vsel %vm3434, %v11432, 0.0
  %v11525 = vadd.f32 %v11523, %v11524
  %v11526 = vsel %vm3434, %v11433, 0.0
  %v11527 = vadd.f32 %v11525, %v11526
  %v11528 = vsel %vm3434, %v11434, 0.0
  %v11529 = vadd.f32 %v11527, %v11528
  %v11530 = vsel %vm3434, %v11435, 0.0
  %v11531 = vadd.f32 %v11529, %v11530
  %v11532 = vsel %vm3434, %v11436, 0.0
  %v11533 = vadd.f32 %v11531, %v11532
  %v11534 = vsel %vm3434, %v11437, 0.0
  %v11535 = vadd.f32 %v11533, %v11534
  %v11536 = vsel %vm3434, %v11438, 0.0
  %v11537 = vadd.f32 %v11535, %v11536
  %v11538 = vsel %vm3434, %v11439, 0.0
  %v11539 = vadd.f32 %v11537, %v11538
  %v11540 = vsel %vm3434, %v11440, 0.0
  %v11541 = vadd.f32 %v11539, %v11540
  %v11542 = vsel %vm3434, %v11441, 0.0
  %v11543 = vadd.f32 %v11541, %v11542
  %v11544 = vsel %vm3434, %v11442, 0.0
  %v11545 = vadd.f32 %v11543, %v11544
  %v11546 = vsel %vm3434, %v11443, 0.0
  %v11547 = vadd.f32 %v11545, %v11546
  %v11548 = vsel %vm3434, %v11444, 0.0
  %v11549 = vadd.f32 %v11547, %v11548
  %v11550 = vsel %vm3434, %v11445, 0.0
  %v11551 = vadd.f32 %v11549, %v11550
  %v11552 = vsel %vm3434, %v11446, 0.0
  %v11553 = vadd.f32 %v11551, %v11552
  %v11554 = vsel %vm3434, %v11447, 0.0
  %v11555 = vadd.f32 %v11553, %v11554
  %v11556 = vsel %vm3434, %v11448, 0.0
  %v11557 = vadd.f32 %v11555, %v11556
  %v11558 = vsel %vm3434, %v11449, 0.0
  %v11559 = vadd.f32 %v11557, %v11558
  %v11560 = vsel %vm3434, %v11450, 0.0
  %v11561 = vadd.f32 %v11559, %v11560
  %v11562 = vsel %vm3434, %v11451, 0.0
  %v11563 = vadd.f32 %v11561, %v11562
  %v11564 = vsel %vm3434, %v11452, 0.0
  %v11565 = vadd.f32 %v11563, %v11564
  %v11566 = vsel %vm3434, %v11453, 0.0
  %v11567 = vadd.f32 %v11565, %v11566
  %v11568 = vsel %vm3434, %v11454, 0.0
  %v11569 = vadd.f32 %v11567, %v11568
  %v11570 = vsel %vm3434, %v11455, 0.0
  %v11571 = vadd.f32 %v11569, %v11570
  %v11572 = vsel %vm3434, %v11456, 0.0
  %v11573 = vadd.f32 %v11571, %v11572
  %v11574 = vsel %vm3434, %v11457, 0.0
  %v11575 = vadd.f32 %v11573, %v11574
  %v11576 = vsel %vm3434, %v11458, 0.0
  %v11577 = vadd.f32 %v11575, %v11576
  %v11578 = vsel %vm3434, %v11459, 0.0
  %v11579 = vadd.f32 %v11577, %v11578
  %v11580 = vsel %vm3434, %v11460, 0.0
  %v11581 = vadd.f32 %v11579, %v11580
  %v11582 = vsel %vm3434, %v11461, 0.0
  %v11583 = vadd.f32 %v11581, %v11582
  %v11584 = vsel %vm3434, %v11462, 0.0
  %v11585 = vadd.f32 %v11583, %v11584
  %v11586 = vsel %vm3434, %v11463, 0.0
  %v11587 = vadd.f32 %v11585, %v11586
  %v11588 = vsel %vm3434, %v11464, 0.0
  %v11589 = vadd.f32 %v11587, %v11588
  %v11590 = vsel %vm3434, %v11465, 0.0
  %v11591 = vadd.f32 %v11589, %v11590
  %v11592 = vsel %vm3434, %v11466, 0.0
  %v11593 = vadd.f32 %v11591, %v11592
  %v11594 = vsel %vm3434, %v11467, 0.0
  %v11595 = vadd.f32 %v11593, %v11594
  %v11596 = vsel %vm3434, %v11468, 0.0
  %v11597 = vadd.f32 %v11595, %v11596
  %v11598 = vsel %vm3434, %v11469, 0.0
  %v11599 = vadd.f32 %v11597, %v11598
  %v11600 = vsel %vm3434, %v11470, 0.0
  %v11601 = vadd.f32 %v11599, %v11600
  %v11602 = vsel %vm3434, %v11471, 0.0
  %v11603 = vadd.f32 %v11601, %v11602
  %v11604 = vsel %vm3434, %v11472, 0.0
  %v11605 = vadd.f32 %v11603, %v11604
  %v11606 = vsel %vm3434, %v11473, 0.0
  %v11607 = vadd.f32 %v11605, %v11606
  %v11608 = vsel %vm3434, %v11474, 0.0
  %v11609 = vadd.f32 %v11607, %v11608
  %v11610 = vsel %vm3434, %v11475, 0.0
  %v11611 = vadd.f32 %v11609, %v11610
  %v11612 = vsel %vm3434, %v11476, 0.0
  %v11613 = vadd.f32 %v11611, %v11612
  %v11614 = vsel %vm3434, %v11477, 0.0
  %v11615 = vadd.f32 %v11613, %v11614
  %v11616 = vsel %vm3434, %v11478, 0.0
  %v11617 = vadd.f32 %v11615, %v11616
  %v11618 = vsel %vm3434, %v11479, 0.0
  %v11619 = vadd.f32 %v11617, %v11618
  %v11620 = vsel %vm3434, %v11480, 0.0
  %v11621 = vadd.f32 %v11619, %v11620
  %v11622 = vsel %vm3434, %v11481, 0.0
  %v11623 = vadd.f32 %v11621, %v11622
  %v11624 = vsel %vm3434, %v11482, 0.0
  %v11625 = vadd.f32 %v11623, %v11624
  %v11626 = vsel %vm3434, %v11483, 0.0
  %v11627 = vadd.f32 %v11625, %v11626
  %v11628 = vsel %vm3434, %v11484, 0.0
  %v11629 = vadd.f32 %v11627, %v11628
  %v11630 = vsel %vm3434, %v11485, 0.0
  %v11631 = vadd.f32 %v11629, %v11630
  %v11632 = vsel %vm3434, %v11486, 0.0
  %v11633 = vadd.f32 %v11631, %v11632
  %v11634 = vsel %vm3434, %v11487, 0.0
  %v11635 = vadd.f32 %v11633, %v11634
  %v11636 = vsel %vm3434, %v11488, 0.0
  %v11637 = vadd.f32 %v11635, %v11636
  %v11638 = vsel %vm3434, %v11489, 0.0
  %v11639 = vadd.f32 %v11637, %v11638
  %v11640 = vsel %vm3434, %v11490, 0.0
  %v11641 = vadd.f32 %v11639, %v11640
  %v11642 = vsel %vm3434, %v11491, 0.0
  %v11643 = vadd.f32 %v11641, %v11642
  %v11644 = vsel %vm3434, %v11492, 0.0
  %v11645 = vadd.f32 %v11643, %v11644
  %v11646 = vsel %vm3434, %v11493, 0.0
  %v11647 = vadd.f32 %v11645, %v11646
  %v11648 = vsel %vm3434, %v11494, 0.0
  %v11649 = vadd.f32 %v11647, %v11648
  %v11650 = vsel %vm3434, %v11495, 0.0
  %v11651 = vadd.f32 %v11649, %v11650
  %v11652 = vsel %vm3434, %v11496, 0.0
  %v11653 = vadd.f32 %v11651, %v11652
  %v11654 = vsel %vm3434, %v11497, 0.0
  %v11655 = vadd.f32 %v11653, %v11654
  %v11656 = vsel %vm3434, %v11498, 0.0
  %v11657 = vadd.f32 %v11655, %v11656
  %v11658 = vsel %vm3434, %v11499, 0.0
  %v11659 = vadd.f32 %v11657, %v11658
  %v11660 = vsel %vm3434, %v11500, 0.0
  %v11661 = vadd.f32 %v11659, %v11660
  %v11662 = vrot.slane %v11661, 4
  %v11663 = vadd.f32 %v11661, %v11662
  %v11664 = vrot.slane %v11663, 2
  %v11665 = vadd.f32 %v11663, %v11664
  %v11666 = vrot.slane %v11665, 1
  %v11667 = vadd.f32 %v11665, %v11666
  %v11668 = vmul.f32 %v11420, %v11095
  %v11669 = vmul.f32 %v11421, %v11098
  %v11670 = vmul.f32 %v11422, %v11103
  %v11671 = vmul.f32 %v11423, %v11106
  %v11672 = vmul.f32 %v11424, %v11111
  %v11673 = vmul.f32 %v11425, %v11114
  %v11674 = vmul.f32 %v11426, %v11119
  %v11675 = vmul.f32 %v11427, %v11122
  %v11676 = vmul.f32 %v11428, %v11127
  %v11677 = vmul.f32 %v11429, %v11130
  %v11678 = vmul.f32 %v11430, %v11135
  %v11679 = vmul.f32 %v11431, %v11138
  %v11680 = vmul.f32 %v11432, %v11143
  %v11681 = vmul.f32 %v11433, %v11146
  %v11682 = vmul.f32 %v11434, %v11151
  %v11683 = vmul.f32 %v11435, %v11154
  %v11684 = vmul.f32 %v11436, %v11159
  %v11685 = vmul.f32 %v11437, %v11162
  %v11686 = vmul.f32 %v11438, %v11167
  %v11687 = vmul.f32 %v11439, %v11170
  %v11688 = vmul.f32 %v11440, %v11175
  %v11689 = vmul.f32 %v11441, %v11178
  %v11690 = vmul.f32 %v11442, %v11183
  %v11691 = vmul.f32 %v11443, %v11186
  %v11692 = vmul.f32 %v11444, %v11191
  %v11693 = vmul.f32 %v11445, %v11194
  %v11694 = vmul.f32 %v11446, %v11199
  %v11695 = vmul.f32 %v11447, %v11202
  %v11696 = vmul.f32 %v11448, %v11207
  %v11697 = vmul.f32 %v11449, %v11210
  %v11698 = vmul.f32 %v11450, %v11215
  %v11699 = vmul.f32 %v11451, %v11218
  %v11700 = vmul.f32 %v11452, %v11223
  %v11701 = vmul.f32 %v11453, %v11226
  %v11702 = vmul.f32 %v11454, %v11231
  %v11703 = vmul.f32 %v11455, %v11234
  %v11704 = vmul.f32 %v11456, %v11239
  %v11705 = vmul.f32 %v11457, %v11242
  %v11706 = vmul.f32 %v11458, %v11247
  %v11707 = vmul.f32 %v11459, %v11250
  %v11708 = vmul.f32 %v11460, %v11255
  %v11709 = vmul.f32 %v11461, %v11258
  %v11710 = vmul.f32 %v11462, %v11263
  %v11711 = vmul.f32 %v11463, %v11266
  %v11712 = vmul.f32 %v11464, %v11271
  %v11713 = vmul.f32 %v11465, %v11274
  %v11714 = vmul.f32 %v11466, %v11279
  %v11715 = vmul.f32 %v11467, %v11282
  %v11716 = vmul.f32 %v11468, %v11287
  %v11717 = vmul.f32 %v11469, %v11290
  %v11718 = vmul.f32 %v11470, %v11295
  %v11719 = vmul.f32 %v11471, %v11298
  %v11720 = vmul.f32 %v11472, %v11303
  %v11721 = vmul.f32 %v11473, %v11306
  %v11722 = vmul.f32 %v11474, %v11311
  %v11723 = vmul.f32 %v11475, %v11314
  %v11724 = vmul.f32 %v11476, %v11319
  %v11725 = vmul.f32 %v11477, %v11322
  %v11726 = vmul.f32 %v11478, %v11327
  %v11727 = vmul.f32 %v11479, %v11330
  %v11728 = vmul.f32 %v11480, %v11335
  %v11729 = vmul.f32 %v11481, %v11338
  %v11730 = vmul.f32 %v11482, %v11343
  %v11731 = vmul.f32 %v11483, %v11346
  %v11732 = vmul.f32 %v11484, %v11351
  %v11733 = vmul.f32 %v11485, %v11354
  %v11734 = vmul.f32 %v11486, %v11359
  %v11735 = vmul.f32 %v11487, %v11362
  %v11736 = vmul.f32 %v11488, %v11367
  %v11737 = vmul.f32 %v11489, %v11370
  %v11738 = vmul.f32 %v11490, %v11375
  %v11739 = vmul.f32 %v11491, %v11378
  %v11740 = vmul.f32 %v11492, %v11383
  %v11741 = vmul.f32 %v11493, %v11386
  %v11742 = vmul.f32 %v11494, %v11391
  %v11743 = vmul.f32 %v11495, %v11394
  %v11744 = vmul.f32 %v11496, %v11399
  %v11745 = vmul.f32 %v11497, %v11402
  %v11746 = vmul.f32 %v11498, %v11407
  %v11747 = vmul.f32 %v11499, %v11410
  %v11748 = vmul.f32 %v11500, %v11415
  %v11749 = vsel %vm3434, %v11668, 0.0
  %v11750 = vsel %vm3434, %v11669, 0.0
  %v11751 = vadd.f32 %v11749, %v11750
  %v11752 = vsel %vm3434, %v11670, 0.0
  %v11753 = vadd.f32 %v11751, %v11752
  %v11754 = vsel %vm3434, %v11671, 0.0
  %v11755 = vadd.f32 %v11753, %v11754
  %v11756 = vsel %vm3434, %v11672, 0.0
  %v11757 = vadd.f32 %v11755, %v11756
  %v11758 = vsel %vm3434, %v11673, 0.0
  %v11759 = vadd.f32 %v11757, %v11758
  %v11760 = vsel %vm3434, %v11674, 0.0
  %v11761 = vadd.f32 %v11759, %v11760
  %v11762 = vsel %vm3434, %v11675, 0.0
  %v11763 = vadd.f32 %v11761, %v11762
  %v11764 = vsel %vm3434, %v11676, 0.0
  %v11765 = vadd.f32 %v11763, %v11764
  %v11766 = vsel %vm3434, %v11677, 0.0
  %v11767 = vadd.f32 %v11765, %v11766
  %v11768 = vsel %vm3434, %v11678, 0.0
  %v11769 = vadd.f32 %v11767, %v11768
  %v11770 = vsel %vm3434, %v11679, 0.0
  %v11771 = vadd.f32 %v11769, %v11770
  %v11772 = vsel %vm3434, %v11680, 0.0
  %v11773 = vadd.f32 %v11771, %v11772
  %v11774 = vsel %vm3434, %v11681, 0.0
  %v11775 = vadd.f32 %v11773, %v11774
  %v11776 = vsel %vm3434, %v11682, 0.0
  %v11777 = vadd.f32 %v11775, %v11776
  %v11778 = vsel %vm3434, %v11683, 0.0
  %v11779 = vadd.f32 %v11777, %v11778
  %v11780 = vsel %vm3434, %v11684, 0.0
  %v11781 = vadd.f32 %v11779, %v11780
  %v11782 = vsel %vm3434, %v11685, 0.0
  %v11783 = vadd.f32 %v11781, %v11782
  %v11784 = vsel %vm3434, %v11686, 0.0
  %v11785 = vadd.f32 %v11783, %v11784
  %v11786 = vsel %vm3434, %v11687, 0.0
  %v11787 = vadd.f32 %v11785, %v11786
  %v11788 = vsel %vm3434, %v11688, 0.0
  %v11789 = vadd.f32 %v11787, %v11788
  %v11790 = vsel %vm3434, %v11689, 0.0
  %v11791 = vadd.f32 %v11789, %v11790
  %v11792 = vsel %vm3434, %v11690, 0.0
  %v11793 = vadd.f32 %v11791, %v11792
  %v11794 = vsel %vm3434, %v11691, 0.0
  %v11795 = vadd.f32 %v11793, %v11794
  %v11796 = vsel %vm3434, %v11692, 0.0
  %v11797 = vadd.f32 %v11795, %v11796
  %v11798 = vsel %vm3434, %v11693, 0.0
  %v11799 = vadd.f32 %v11797, %v11798
  %v11800 = vsel %vm3434, %v11694, 0.0
  %v11801 = vadd.f32 %v11799, %v11800
  %v11802 = vsel %vm3434, %v11695, 0.0
  %v11803 = vadd.f32 %v11801, %v11802
  %v11804 = vsel %vm3434, %v11696, 0.0
  %v11805 = vadd.f32 %v11803, %v11804
  %v11806 = vsel %vm3434, %v11697, 0.0
  %v11807 = vadd.f32 %v11805, %v11806
  %v11808 = vsel %vm3434, %v11698, 0.0
  %v11809 = vadd.f32 %v11807, %v11808
  %v11810 = vsel %vm3434, %v11699, 0.0
  %v11811 = vadd.f32 %v11809, %v11810
  %v11812 = vsel %vm3434, %v11700, 0.0
  %v11813 = vadd.f32 %v11811, %v11812
  %v11814 = vsel %vm3434, %v11701, 0.0
  %v11815 = vadd.f32 %v11813, %v11814
  %v11816 = vsel %vm3434, %v11702, 0.0
  %v11817 = vadd.f32 %v11815, %v11816
  %v11818 = vsel %vm3434, %v11703, 0.0
  %v11819 = vadd.f32 %v11817, %v11818
  %v11820 = vsel %vm3434, %v11704, 0.0
  %v11821 = vadd.f32 %v11819, %v11820
  %v11822 = vsel %vm3434, %v11705, 0.0
  %v11823 = vadd.f32 %v11821, %v11822
  %v11824 = vsel %vm3434, %v11706, 0.0
  %v11825 = vadd.f32 %v11823, %v11824
  %v11826 = vsel %vm3434, %v11707, 0.0
  %v11827 = vadd.f32 %v11825, %v11826
  %v11828 = vsel %vm3434, %v11708, 0.0
  %v11829 = vadd.f32 %v11827, %v11828
  %v11830 = vsel %vm3434, %v11709, 0.0
  %v11831 = vadd.f32 %v11829, %v11830
  %v11832 = vsel %vm3434, %v11710, 0.0
  %v11833 = vadd.f32 %v11831, %v11832
  %v11834 = vsel %vm3434, %v11711, 0.0
  %v11835 = vadd.f32 %v11833, %v11834
  %v11836 = vsel %vm3434, %v11712, 0.0
  %v11837 = vadd.f32 %v11835, %v11836
  %v11838 = vsel %vm3434, %v11713, 0.0
  %v11839 = vadd.f32 %v11837, %v11838
  %v11840 = vsel %vm3434, %v11714, 0.0
  %v11841 = vadd.f32 %v11839, %v11840
  %v11842 = vsel %vm3434, %v11715, 0.0
  %v11843 = vadd.f32 %v11841, %v11842
  %v11844 = vsel %vm3434, %v11716, 0.0
  %v11845 = vadd.f32 %v11843, %v11844
  %v11846 = vsel %vm3434, %v11717, 0.0
  %v11847 = vadd.f32 %v11845, %v11846
  %v11848 = vsel %vm3434, %v11718, 0.0
  %v11849 = vadd.f32 %v11847, %v11848
  %v11850 = vsel %vm3434, %v11719, 0.0
  %v11851 = vadd.f32 %v11849, %v11850
  %v11852 = vsel %vm3434, %v11720, 0.0
  %v11853 = vadd.f32 %v11851, %v11852
  %v11854 = vsel %vm3434, %v11721, 0.0
  %v11855 = vadd.f32 %v11853, %v11854
  %v11856 = vsel %vm3434, %v11722, 0.0
  %v11857 = vadd.f32 %v11855, %v11856
  %v11858 = vsel %vm3434, %v11723, 0.0
  %v11859 = vadd.f32 %v11857, %v11858
  %v11860 = vsel %vm3434, %v11724, 0.0
  %v11861 = vadd.f32 %v11859, %v11860
  %v11862 = vsel %vm3434, %v11725, 0.0
  %v11863 = vadd.f32 %v11861, %v11862
  %v11864 = vsel %vm3434, %v11726, 0.0
  %v11865 = vadd.f32 %v11863, %v11864
  %v11866 = vsel %vm3434, %v11727, 0.0
  %v11867 = vadd.f32 %v11865, %v11866
  %v11868 = vsel %vm3434, %v11728, 0.0
  %v11869 = vadd.f32 %v11867, %v11868
  %v11870 = vsel %vm3434, %v11729, 0.0
  %v11871 = vadd.f32 %v11869, %v11870
  %v11872 = vsel %vm3434, %v11730, 0.0
  %v11873 = vadd.f32 %v11871, %v11872
  %v11874 = vsel %vm3434, %v11731, 0.0
  %v11875 = vadd.f32 %v11873, %v11874
  %v11876 = vsel %vm3434, %v11732, 0.0
  %v11877 = vadd.f32 %v11875, %v11876
  %v11878 = vsel %vm3434, %v11733, 0.0
  %v11879 = vadd.f32 %v11877, %v11878
  %v11880 = vsel %vm3434, %v11734, 0.0
  %v11881 = vadd.f32 %v11879, %v11880
  %v11882 = vsel %vm3434, %v11735, 0.0
  %v11883 = vadd.f32 %v11881, %v11882
  %v11884 = vsel %vm3434, %v11736, 0.0
  %v11885 = vadd.f32 %v11883, %v11884
  %v11886 = vsel %vm3434, %v11737, 0.0
  %v11887 = vadd.f32 %v11885, %v11886
  %v11888 = vsel %vm3434, %v11738, 0.0
  %v11889 = vadd.f32 %v11887, %v11888
  %v11890 = vsel %vm3434, %v11739, 0.0
  %v11891 = vadd.f32 %v11889, %v11890
  %v11892 = vsel %vm3434, %v11740, 0.0
  %v11893 = vadd.f32 %v11891, %v11892
  %v11894 = vsel %vm3434, %v11741, 0.0
  %v11895 = vadd.f32 %v11893, %v11894
  %v11896 = vsel %vm3434, %v11742, 0.0
  %v11897 = vadd.f32 %v11895, %v11896
  %v11898 = vsel %vm3434, %v11743, 0.0
  %v11899 = vadd.f32 %v11897, %v11898
  %v11900 = vsel %vm3434, %v11744, 0.0
  %v11901 = vadd.f32 %v11899, %v11900
  %v11902 = vsel %vm3434, %v11745, 0.0
  %v11903 = vadd.f32 %v11901, %v11902
  %v11904 = vsel %vm3434, %v11746, 0.0
  %v11905 = vadd.f32 %v11903, %v11904
  %v11906 = vsel %vm3434, %v11747, 0.0
  %v11907 = vadd.f32 %v11905, %v11906
  %v11908 = vsel %vm3434, %v11748, 0.0
  %v11909 = vadd.f32 %v11907, %v11908
  %v11910 = vrot.slane %v11909, 4
  %v11911 = vadd.f32 %v11909, %v11910
  %v11912 = vrot.slane %v11911, 2
  %v11913 = vadd.f32 %v11911, %v11912
  %v11914 = vrot.slane %v11913, 1
  %v11915 = vadd.f32 %v11913, %v11914
  %v11916 = vmul.f32 %v11667, 0.001953125
  %v11917 = vmul.f32 %v11915, 0.001953125
  %v11918 = vmul.f32 %v11916, %v11916
  %v11919 = vsub.f32 %v11917, %v11918
  %v11920 = vmax.f32 %v11919, 0.0
  %v11921 = vld [vmem:[%s6] sm:$0x1]
  %v11922 = vadd.f32 %v11920, 1e-05
  %v11923 = vrsqrt.pop %v11922
  %v11924 = vmul.f32 %v11921, %v11923
  %v11925 = vld [vmem:[%s7] sm:$0x1]
  %v11926 = vmul.f32 %v11916, %v11924
  %v11927 = vsub.f32 %v11925, %v11926
  %v11929 = vlaneseq
  %v11930 = vshrl.u32 %v11929, 7
  %v11931 = vsub.s32 0, %v11930
  %v11932 = vrot.slane %v11924, %v11931
  %v11934 = vmul.f32 %v11095, %v11932
  %v11935 = vmul.f32 %v11098, %v11932
  %v11936 = vmul.f32 %v11103, %v11932
  %v11937 = vmul.f32 %v11106, %v11932
  %v11938 = vmul.f32 %v11111, %v11932
  %v11939 = vmul.f32 %v11114, %v11932
  %v11940 = vmul.f32 %v11119, %v11932
  %v11941 = vmul.f32 %v11122, %v11932
  %v11942 = vmul.f32 %v11127, %v11932
  %v11943 = vmul.f32 %v11130, %v11932
  %v11944 = vmul.f32 %v11135, %v11932
  %v11945 = vmul.f32 %v11138, %v11932
  %v11946 = vmul.f32 %v11143, %v11932
  %v11947 = vmul.f32 %v11146, %v11932
  %v11948 = vmul.f32 %v11151, %v11932
  %v11949 = vmul.f32 %v11154, %v11932
  %v11950 = vmul.f32 %v11159, %v11932
  %v11951 = vmul.f32 %v11162, %v11932
  %v11952 = vmul.f32 %v11167, %v11932
  %v11953 = vmul.f32 %v11170, %v11932
  %v11954 = vmul.f32 %v11175, %v11932
  %v11955 = vmul.f32 %v11178, %v11932
  %v11956 = vmul.f32 %v11183, %v11932
  %v11957 = vmul.f32 %v11186, %v11932
  %v11958 = vmul.f32 %v11191, %v11932
  %v11959 = vmul.f32 %v11194, %v11932
  %v11960 = vmul.f32 %v11199, %v11932
  %v11961 = vmul.f32 %v11202, %v11932
  %v11962 = vmul.f32 %v11207, %v11932
  %v11963 = vmul.f32 %v11210, %v11932
  %v11964 = vmul.f32 %v11215, %v11932
  %v11965 = vmul.f32 %v11218, %v11932
  %v11966 = vmul.f32 %v11223, %v11932
  %v11967 = vmul.f32 %v11226, %v11932
  %v11968 = vmul.f32 %v11231, %v11932
  %v11969 = vmul.f32 %v11234, %v11932
  %v11970 = vmul.f32 %v11239, %v11932
  %v11971 = vmul.f32 %v11242, %v11932
  %v11972 = vmul.f32 %v11247, %v11932
  %v11973 = vmul.f32 %v11250, %v11932
  %v11974 = vmul.f32 %v11255, %v11932
  %v11975 = vmul.f32 %v11258, %v11932
  %v11976 = vmul.f32 %v11263, %v11932
  %v11977 = vmul.f32 %v11266, %v11932
  %v11978 = vmul.f32 %v11271, %v11932
  %v11979 = vmul.f32 %v11274, %v11932
  %v11980 = vmul.f32 %v11279, %v11932
  %v11981 = vmul.f32 %v11282, %v11932
  %v11982 = vmul.f32 %v11287, %v11932
  %v11983 = vmul.f32 %v11290, %v11932
  %v11984 = vmul.f32 %v11295, %v11932
  %v11985 = vmul.f32 %v11298, %v11932
  %v11986 = vmul.f32 %v11303, %v11932
  %v11987 = vmul.f32 %v11306, %v11932
  %v11988 = vmul.f32 %v11311, %v11932
  %v11989 = vmul.f32 %v11314, %v11932
  %v11990 = vmul.f32 %v11319, %v11932
  %v11991 = vmul.f32 %v11322, %v11932
  %v11992 = vmul.f32 %v11327, %v11932
  %v11993 = vmul.f32 %v11330, %v11932
  %v11994 = vmul.f32 %v11335, %v11932
  %v11995 = vmul.f32 %v11338, %v11932
  %v11996 = vmul.f32 %v11343, %v11932
  %v11997 = vmul.f32 %v11346, %v11932
  %v11998 = vmul.f32 %v11351, %v11932
  %v11999 = vmul.f32 %v11354, %v11932
  %v12000 = vmul.f32 %v11359, %v11932
  %v12001 = vmul.f32 %v11362, %v11932
  %v12002 = vmul.f32 %v11367, %v11932
  %v12003 = vmul.f32 %v11370, %v11932
  %v12004 = vmul.f32 %v11375, %v11932
  %v12005 = vmul.f32 %v11378, %v11932
  %v12006 = vmul.f32 %v11383, %v11932
  %v12007 = vmul.f32 %v11386, %v11932
  %v12008 = vmul.f32 %v11391, %v11932
  %v12009 = vmul.f32 %v11394, %v11932
  %v12010 = vmul.f32 %v11399, %v11932
  %v12011 = vmul.f32 %v11402, %v11932
  %v12012 = vmul.f32 %v11407, %v11932
  %v12013 = vmul.f32 %v11410, %v11932
  %v12014 = vmul.f32 %v11415, %v11932
  %v12016 = vlaneseq
  %v12017 = vshrl.u32 %v12016, 7
  %v12018 = vsub.s32 0, %v12017
  %v12019 = vrot.slane %v11927, %v12018
  %v12021 = vadd.f32 %v11934, %v12019
  %v12022 = vadd.f32 %v11935, %v12019
  %v12023 = vadd.f32 %v11936, %v12019
  %v12024 = vadd.f32 %v11937, %v12019
  %v12025 = vadd.f32 %v11938, %v12019
  %v12026 = vadd.f32 %v11939, %v12019
  %v12027 = vadd.f32 %v11940, %v12019
  %v12028 = vadd.f32 %v11941, %v12019
  %v12029 = vadd.f32 %v11942, %v12019
  %v12030 = vadd.f32 %v11943, %v12019
  %v12031 = vadd.f32 %v11944, %v12019
  %v12032 = vadd.f32 %v11945, %v12019
  %v12033 = vadd.f32 %v11946, %v12019
  %v12034 = vadd.f32 %v11947, %v12019
  %v12035 = vadd.f32 %v11948, %v12019
  %v12036 = vadd.f32 %v11949, %v12019
  %v12037 = vadd.f32 %v11950, %v12019
  %v12038 = vadd.f32 %v11951, %v12019
  %v12039 = vadd.f32 %v11952, %v12019
  %v12040 = vadd.f32 %v11953, %v12019
  %v12041 = vadd.f32 %v11954, %v12019
  %v12042 = vadd.f32 %v11955, %v12019
  %v12043 = vadd.f32 %v11956, %v12019
  %v12044 = vadd.f32 %v11957, %v12019
  %v12045 = vadd.f32 %v11958, %v12019
  %v12046 = vadd.f32 %v11959, %v12019
  %v12047 = vadd.f32 %v11960, %v12019
  %v12048 = vadd.f32 %v11961, %v12019
  %v12049 = vadd.f32 %v11962, %v12019
  %v12050 = vadd.f32 %v11963, %v12019
  %v12051 = vadd.f32 %v11964, %v12019
  %v12052 = vadd.f32 %v11965, %v12019
  %v12053 = vadd.f32 %v11966, %v12019
  %v12054 = vadd.f32 %v11967, %v12019
  %v12055 = vadd.f32 %v11968, %v12019
  %v12056 = vadd.f32 %v11969, %v12019
  %v12057 = vadd.f32 %v11970, %v12019
  %v12058 = vadd.f32 %v11971, %v12019
  %v12059 = vadd.f32 %v11972, %v12019
  %v12060 = vadd.f32 %v11973, %v12019
  %v12061 = vadd.f32 %v11974, %v12019
  %v12062 = vadd.f32 %v11975, %v12019
  %v12063 = vadd.f32 %v11976, %v12019
  %v12064 = vadd.f32 %v11977, %v12019
  %v12065 = vadd.f32 %v11978, %v12019
  %v12066 = vadd.f32 %v11979, %v12019
  %v12067 = vadd.f32 %v11980, %v12019
  %v12068 = vadd.f32 %v11981, %v12019
  %v12069 = vadd.f32 %v11982, %v12019
  %v12070 = vadd.f32 %v11983, %v12019
  %v12071 = vadd.f32 %v11984, %v12019
  %v12072 = vadd.f32 %v11985, %v12019
  %v12073 = vadd.f32 %v11986, %v12019
  %v12074 = vadd.f32 %v11987, %v12019
  %v12075 = vadd.f32 %v11988, %v12019
  %v12076 = vadd.f32 %v11989, %v12019
  %v12077 = vadd.f32 %v11990, %v12019
  %v12078 = vadd.f32 %v11991, %v12019
  %v12079 = vadd.f32 %v11992, %v12019
  %v12080 = vadd.f32 %v11993, %v12019
  %v12081 = vadd.f32 %v11994, %v12019
  %v12082 = vadd.f32 %v11995, %v12019
  %v12083 = vadd.f32 %v11996, %v12019
  %v12084 = vadd.f32 %v11997, %v12019
  %v12085 = vadd.f32 %v11998, %v12019
  %v12086 = vadd.f32 %v11999, %v12019
  %v12087 = vadd.f32 %v12000, %v12019
  %v12088 = vadd.f32 %v12001, %v12019
  %v12089 = vadd.f32 %v12002, %v12019
  %v12090 = vadd.f32 %v12003, %v12019
  %v12091 = vadd.f32 %v12004, %v12019
  %v12092 = vadd.f32 %v12005, %v12019
  %v12093 = vadd.f32 %v12006, %v12019
  %v12094 = vadd.f32 %v12007, %v12019
  %v12095 = vadd.f32 %v12008, %v12019
  %v12096 = vadd.f32 %v12009, %v12019
  %v12097 = vadd.f32 %v12010, %v12019
  %v12098 = vadd.f32 %v12011, %v12019
  %v12099 = vadd.f32 %v12012, %v12019
  %v12100 = vadd.f32 %v12013, %v12019
  %v12101 = vadd.f32 %v12014, %v12019
  %v12102 = vmax.f32 %v12021, 0.0
  %v12103 = vmax.f32 %v12022, 0.0
  %v12104 = vmax.f32 %v12023, 0.0
  %v12105 = vmax.f32 %v12024, 0.0
  %v12106 = vmax.f32 %v12025, 0.0
  %v12107 = vmax.f32 %v12026, 0.0
  %v12108 = vmax.f32 %v12027, 0.0
  %v12109 = vmax.f32 %v12028, 0.0
  %v12110 = vmax.f32 %v12029, 0.0
  %v12111 = vmax.f32 %v12030, 0.0
  %v12112 = vmax.f32 %v12031, 0.0
  %v12113 = vmax.f32 %v12032, 0.0
  %v12114 = vmax.f32 %v12033, 0.0
  %v12115 = vmax.f32 %v12034, 0.0
  %v12116 = vmax.f32 %v12035, 0.0
  %v12117 = vmax.f32 %v12036, 0.0
  %v12118 = vmax.f32 %v12037, 0.0
  %v12119 = vmax.f32 %v12038, 0.0
  %v12120 = vmax.f32 %v12039, 0.0
  %v12121 = vmax.f32 %v12040, 0.0
  %v12122 = vmax.f32 %v12041, 0.0
  %v12123 = vmax.f32 %v12042, 0.0
  %v12124 = vmax.f32 %v12043, 0.0
  %v12125 = vmax.f32 %v12044, 0.0
  %v12126 = vmax.f32 %v12045, 0.0
  %v12127 = vmax.f32 %v12046, 0.0
  %v12128 = vmax.f32 %v12047, 0.0
  %v12129 = vmax.f32 %v12048, 0.0
  %v12130 = vmax.f32 %v12049, 0.0
  %v12131 = vmax.f32 %v12050, 0.0
  %v12132 = vmax.f32 %v12051, 0.0
  %v12133 = vmax.f32 %v12052, 0.0
  %v12134 = vmax.f32 %v12053, 0.0
  %v12135 = vmax.f32 %v12054, 0.0
  %v12136 = vmax.f32 %v12055, 0.0
  %v12137 = vmax.f32 %v12056, 0.0
  %v12138 = vmax.f32 %v12057, 0.0
  %v12139 = vmax.f32 %v12058, 0.0
  %v12140 = vmax.f32 %v12059, 0.0
  %v12141 = vmax.f32 %v12060, 0.0
  %v12142 = vmax.f32 %v12061, 0.0
  %v12143 = vmax.f32 %v12062, 0.0
  %v12144 = vmax.f32 %v12063, 0.0
  %v12145 = vmax.f32 %v12064, 0.0
  %v12146 = vmax.f32 %v12065, 0.0
  %v12147 = vmax.f32 %v12066, 0.0
  %v12148 = vmax.f32 %v12067, 0.0
  %v12149 = vmax.f32 %v12068, 0.0
  %v12150 = vmax.f32 %v12069, 0.0
  %v12151 = vmax.f32 %v12070, 0.0
  %v12152 = vmax.f32 %v12071, 0.0
  %v12153 = vmax.f32 %v12072, 0.0
  %v12154 = vmax.f32 %v12073, 0.0
  %v12155 = vmax.f32 %v12074, 0.0
  %v12156 = vmax.f32 %v12075, 0.0
  %v12157 = vmax.f32 %v12076, 0.0
  %v12158 = vmax.f32 %v12077, 0.0
  %v12159 = vmax.f32 %v12078, 0.0
  %v12160 = vmax.f32 %v12079, 0.0
  %v12161 = vmax.f32 %v12080, 0.0
  %v12162 = vmax.f32 %v12081, 0.0
  %v12163 = vmax.f32 %v12082, 0.0
  %v12164 = vmax.f32 %v12083, 0.0
  %v12165 = vmax.f32 %v12084, 0.0
  %v12166 = vmax.f32 %v12085, 0.0
  %v12167 = vmax.f32 %v12086, 0.0
  %v12168 = vmax.f32 %v12087, 0.0
  %v12169 = vmax.f32 %v12088, 0.0
  %v12170 = vmax.f32 %v12089, 0.0
  %v12171 = vmax.f32 %v12090, 0.0
  %v12172 = vmax.f32 %v12091, 0.0
  %v12173 = vmax.f32 %v12092, 0.0
  %v12174 = vmax.f32 %v12093, 0.0
  %v12175 = vmax.f32 %v12094, 0.0
  %v12176 = vmax.f32 %v12095, 0.0
  %v12177 = vmax.f32 %v12096, 0.0
  %v12178 = vmax.f32 %v12097, 0.0
  %v12179 = vmax.f32 %v12098, 0.0
  %v12180 = vmax.f32 %v12099, 0.0
  %v12181 = vmax.f32 %v12100, 0.0
  %v12182 = vmax.f32 %v12101, 0.0
  %12183 = vst.msk [vmem:[%s8] sm:$0xff] %vm3434, %v12102
  %12184 = vst.msk [vmem:[%s8 + $0x8] sm:$0xff] %vm3434, %v12103
  %12185 = vst.msk [vmem:[%s8 + $0x10] sm:$0xff] %vm3434, %v12104
  %12186 = vst.msk [vmem:[%s8 + $0x18] sm:$0xff] %vm3434, %v12105
  %12187 = vst.msk [vmem:[%s8 + $0x20] sm:$0xff] %vm3434, %v12106
  %12188 = vst.msk [vmem:[%s8 + $0x28] sm:$0xff] %vm3434, %v12107
  %12189 = vst.msk [vmem:[%s8 + $0x30] sm:$0xff] %vm3434, %v12108
  %12190 = vst.msk [vmem:[%s8 + $0x38] sm:$0xff] %vm3434, %v12109
  %12191 = vst.msk [vmem:[%s8 + $0x40] sm:$0xff] %vm3434, %v12110
  %12192 = vst.msk [vmem:[%s8 + $0x48] sm:$0xff] %vm3434, %v12111
  %12193 = vst.msk [vmem:[%s8 + $0x50] sm:$0xff] %vm3434, %v12112
  %12194 = vst.msk [vmem:[%s8 + $0x58] sm:$0xff] %vm3434, %v12113
  %12195 = vst.msk [vmem:[%s8 + $0x60] sm:$0xff] %vm3434, %v12114
  %12196 = vst.msk [vmem:[%s8 + $0x68] sm:$0xff] %vm3434, %v12115
  %12197 = vst.msk [vmem:[%s8 + $0x70] sm:$0xff] %vm3434, %v12116
  %12198 = vst.msk [vmem:[%s8 + $0x78] sm:$0xff] %vm3434, %v12117
  %12199 = vst.msk [vmem:[%s8 + $0x80] sm:$0xff] %vm3434, %v12118
  %12200 = vst.msk [vmem:[%s8 + $0x88] sm:$0xff] %vm3434, %v12119
  %12201 = vst.msk [vmem:[%s8 + $0x90] sm:$0xff] %vm3434, %v12120
  %12202 = vst.msk [vmem:[%s8 + $0x98] sm:$0xff] %vm3434, %v12121
  %12203 = vst.msk [vmem:[%s8 + $0xa0] sm:$0xff] %vm3434, %v12122
  %12204 = vst.msk [vmem:[%s8 + $0xa8] sm:$0xff] %vm3434, %v12123
  %12205 = vst.msk [vmem:[%s8 + $0xb0] sm:$0xff] %vm3434, %v12124
  %12206 = vst.msk [vmem:[%s8 + $0xb8] sm:$0xff] %vm3434, %v12125
  %12207 = vst.msk [vmem:[%s8 + $0xc0] sm:$0xff] %vm3434, %v12126
  %12208 = vst.msk [vmem:[%s8 + $0xc8] sm:$0xff] %vm3434, %v12127
  %12209 = vst.msk [vmem:[%s8 + $0xd0] sm:$0xff] %vm3434, %v12128
  %12210 = vst.msk [vmem:[%s8 + $0xd8] sm:$0xff] %vm3434, %v12129
  %12211 = vst.msk [vmem:[%s8 + $0xe0] sm:$0xff] %vm3434, %v12130
  %12212 = vst.msk [vmem:[%s8 + $0xe8] sm:$0xff] %vm3434, %v12131
  %12213 = vst.msk [vmem:[%s8 + $0xf0] sm:$0xff] %vm3434, %v12132
  %12214 = vst.msk [vmem:[%s8 + $0xf8] sm:$0xff] %vm3434, %v12133
  %12215 = vst.msk [vmem:[%s8 + $0x100] sm:$0xff] %vm3434, %v12134
  %12216 = vst.msk [vmem:[%s8 + $0x108] sm:$0xff] %vm3434, %v12135
  %12217 = vst.msk [vmem:[%s8 + $0x110] sm:$0xff] %vm3434, %v12136
  %12218 = vst.msk [vmem:[%s8 + $0x118] sm:$0xff] %vm3434, %v12137
  %12219 = vst.msk [vmem:[%s8 + $0x120] sm:$0xff] %vm3434, %v12138
  %12220 = vst.msk [vmem:[%s8 + $0x128] sm:$0xff] %vm3434, %v12139
  %12221 = vst.msk [vmem:[%s8 + $0x130] sm:$0xff] %vm3434, %v12140
  %12222 = vst.msk [vmem:[%s8 + $0x138] sm:$0xff] %vm3434, %v12141
  %12223 = vst.msk [vmem:[%s8 + $0x140] sm:$0xff] %vm3434, %v12142
  %12224 = vst.msk [vmem:[%s8 + $0x148] sm:$0xff] %vm3434, %v12143
  %12225 = vst.msk [vmem:[%s8 + $0x150] sm:$0xff] %vm3434, %v12144
  %12226 = vst.msk [vmem:[%s8 + $0x158] sm:$0xff] %vm3434, %v12145
  %12227 = vst.msk [vmem:[%s8 + $0x160] sm:$0xff] %vm3434, %v12146
  %12228 = vst.msk [vmem:[%s8 + $0x168] sm:$0xff] %vm3434, %v12147
  %12229 = vst.msk [vmem:[%s8 + $0x170] sm:$0xff] %vm3434, %v12148
  %12230 = vst.msk [vmem:[%s8 + $0x178] sm:$0xff] %vm3434, %v12149
  %12231 = vst.msk [vmem:[%s8 + $0x180] sm:$0xff] %vm3434, %v12150
  %12232 = vst.msk [vmem:[%s8 + $0x188] sm:$0xff] %vm3434, %v12151
  %12233 = vst.msk [vmem:[%s8 + $0x190] sm:$0xff] %vm3434, %v12152
  %12234 = vst.msk [vmem:[%s8 + $0x198] sm:$0xff] %vm3434, %v12153
  %12235 = vst.msk [vmem:[%s8 + $0x1a0] sm:$0xff] %vm3434, %v12154
  %12236 = vst.msk [vmem:[%s8 + $0x1a8] sm:$0xff] %vm3434, %v12155
  %12237 = vst.msk [vmem:[%s8 + $0x1b0] sm:$0xff] %vm3434, %v12156
  %12238 = vst.msk [vmem:[%s8 + $0x1b8] sm:$0xff] %vm3434, %v12157
  %12239 = vst.msk [vmem:[%s8 + $0x1c0] sm:$0xff] %vm3434, %v12158
  %12240 = vst.msk [vmem:[%s8 + $0x1c8] sm:$0xff] %vm3434, %v12159
  %12241 = vst.msk [vmem:[%s8 + $0x1d0] sm:$0xff] %vm3434, %v12160
  %12242 = vst.msk [vmem:[%s8 + $0x1d8] sm:$0xff] %vm3434, %v12161
  %12243 = vst.msk [vmem:[%s8 + $0x1e0] sm:$0xff] %vm3434, %v12162
  %12244 = vst.msk [vmem:[%s8 + $0x1e8] sm:$0xff] %vm3434, %v12163
  %12245 = vst.msk [vmem:[%s8 + $0x1f0] sm:$0xff] %vm3434, %v12164
  %12246 = vst.msk [vmem:[%s8 + $0x1f8] sm:$0xff] %vm3434, %v12165
  %12247 = vst.msk [vmem:[%s8 + $0x200] sm:$0xff] %vm3434, %v12166
  %12248 = vst.msk [vmem:[%s8 + $0x208] sm:$0xff] %vm3434, %v12167
  %12249 = vst.msk [vmem:[%s8 + $0x210] sm:$0xff] %vm3434, %v12168
  %12250 = vst.msk [vmem:[%s8 + $0x218] sm:$0xff] %vm3434, %v12169
  %12251 = vst.msk [vmem:[%s8 + $0x220] sm:$0xff] %vm3434, %v12170
  %12252 = vst.msk [vmem:[%s8 + $0x228] sm:$0xff] %vm3434, %v12171
  %12253 = vst.msk [vmem:[%s8 + $0x230] sm:$0xff] %vm3434, %v12172
  %12254 = vst.msk [vmem:[%s8 + $0x238] sm:$0xff] %vm3434, %v12173
  %12255 = vst.msk [vmem:[%s8 + $0x240] sm:$0xff] %vm3434, %v12174
  %12256 = vst.msk [vmem:[%s8 + $0x248] sm:$0xff] %vm3434, %v12175
  %12257 = vst.msk [vmem:[%s8 + $0x250] sm:$0xff] %vm3434, %v12176
  %12258 = vst.msk [vmem:[%s8 + $0x258] sm:$0xff] %vm3434, %v12177
  %12259 = vst.msk [vmem:[%s8 + $0x260] sm:$0xff] %vm3434, %v12178
  %12260 = vst.msk [vmem:[%s8 + $0x268] sm:$0xff] %vm3434, %v12179
  %12261 = vst.msk [vmem:[%s8 + $0x270] sm:$0xff] %vm3434, %v12180
  %12262 = vst.msk [vmem:[%s8 + $0x278] sm:$0xff] %vm3434, %v12181
  %12263 = vst.msk [vmem:[%s8 + $0x280] sm:$0xff] %vm3434, %v12182
  // Predicated region
  $region34: #{tpu_custom_call.1} parent=0 // pred_check
    _
  $region35: #{tpu_custom_call.1} parent=0 // pred_check_branch
    %12265 = sbr.rel (0) target = $region37
  $region36: #{tpu_custom_call.1} parent=0 // pred_region
    _
  $region37: #{tpu_custom_call.1} parent=0 // pred_fallthru
    _
  // Predicated region
  $region38: #{tpu_custom_call.1} parent=0 // pred_check
    _
  $region39: #{tpu_custom_call.1} parent=0 // pred_check_branch
    %12267 = sbr.rel (0) target = $region41
  $region40: #{tpu_custom_call.1} parent=0 // pred_region
    _
  $region41: #{tpu_custom_call.1} parent=0 // pred_fallthru
    _

</llo_original>
